<compile_context>
chip_gen: v7x
topology: tpu7x:2x2x1
jax: 0.10.0
libtpu: 0.0.40
codegen_flags: <defaults>
</compile_context>

<pallas_src>
import functools

import numpy as np
import jax
import jax.numpy as jnp
from jax import lax
from jax.experimental import pallas as pl
from jax.experimental.pallas import tpu as pltpu


_MXU_PREC = lax.Precision.HIGHEST  # keep f32 accuracy for the tiny-K pointwise dots

_COMPILER_PARAMS = pltpu.CompilerParams(
    dimension_semantics=("parallel",),
    vmem_limit_bytes=32 * 1024 * 1024,
)


def _out_spatial(D, H, W, stride):
    if stride == 1:
        return D, H, W
    return (D - 1) // 2 + 1, (H - 1) // 2 + 1, (W - 1) // 2 + 1


# ----------------------------------------------------------------------------
# In-kernel helpers (all f32, BatchNorm already folded into the weights)
# ----------------------------------------------------------------------------
def _fill_padded(pad_ref, interior):
    """Write `interior` ([D,H,W,C]) into pad_ref ([D+2,H+2,W+2,C]); zero only the six
    halo faces (the interior is fully overwritten) -> ~half the store traffic of a
    full-block zero fill."""
    D, H, W, C = interior.shape
    f32 = jnp.float32
    pad_ref[0:1, :, :, :] = jnp.zeros((1, H + 2, W + 2, C), f32)
    pad_ref[D + 1:D + 2, :, :, :] = jnp.zeros((1, H + 2, W + 2, C), f32)
    pad_ref[:, 0:1, :, :] = jnp.zeros((D + 2, 1, W + 2, C), f32)
    pad_ref[:, H + 1:H + 2, :, :] = jnp.zeros((D + 2, 1, W + 2, C), f32)
    pad_ref[:, :, 0:1, :] = jnp.zeros((D + 2, H + 2, 1, C), f32)
    pad_ref[:, :, W + 1:W + 2, :] = jnp.zeros((D + 2, H + 2, 1, C), f32)
    pad_ref[1:D + 1, 1:H + 1, 1:W + 1, :] = interior


def _depthwise3(pad_ref, wd, out_spatial, stride):
    """3x3x3 depthwise conv over the zero-padded scratch (channels-last).
    wd: [27, C] with BN scale folded in.  stride==2 reads only the strided taps
    (valid since kd + 2*(Do-1) <= D+1 for k=3, pad=1, s=2).  Three independent
    accumulator chains (one per kd) expose ILP across the VALU slots."""
    Do, Ho, Wo = out_spatial
    partials = []
    for kd in range(3):
        acc = None
        for kh in range(3):
            for kw in range(3):
                if stride == 1:
                    tap = pad_ref[kd:kd + Do, kh:kh + Ho, kw:kw + Wo, :]
                else:
                    tap = pad_ref[pl.ds(kd, Do, 2), pl.ds(kh, Ho, 2),
                                  pl.ds(kw, Wo, 2), :]
                t = kd * 9 + kh * 3 + kw
                term = tap * wd[t:t + 1, :]
                acc = term if acc is None else acc + term
        partials.append(acc)
    return (partials[0] + partials[1]) + partials[2]


def _pw_mc(x_mc, w, b):
    """1x1x1 conv + ReLU on MXU: [M, Cin] @ [Cin, Cout] + [1, Cout] -> [M, Cout]."""
    y = jnp.dot(x_mc, w, precision=_MXU_PREC, preferred_element_type=jnp.float32)
    return jnp.maximum(y + b, 0.0)


def _pw_cm(wt, x_cm, b):
    """1x1x1 conv + ReLU on MXU, lane-dense result: [Cout, Cin] @ [Cin, M] + [Cout, 1]."""
    y = jnp.dot(wt, x_cm, precision=_MXU_PREC, preferred_element_type=jnp.float32)
    return jnp.maximum(y + b, 0.0)


# ----------------------------------------------------------------------------
# Fused kernels (one batch element per grid step, NCDHW-compatible flat layout)
# ----------------------------------------------------------------------------
def _s1_kernel(x_ref, w1_ref, b1_ref, wd_ref, b2_ref, w2t_ref, b3_ref,
               o_ref, pad_ref, *, spatial):
    # x_ref: [C, M]; o_ref: [C/2, 2, M]  (g=0 passthrough half, g=1 branch2)
    D, H, W = spatial
    C, M = x_ref.shape
    Ch = C // 2
    Cm = w1_ref.shape[1]

    # passthrough half -> even output channels (post channel_shuffle), written in-kernel
    o_ref[:, 0, :] = x_ref[0:Ch, :].astype(o_ref.dtype)

    # branch2: 1x1x1(+BN,ReLU) -> dw 3x3x3(+BN) -> 1x1x1(+BN,ReLU)
    x2t = x_ref[Ch:C, :].astype(jnp.float32).T                      # [M, Ch]
    y1 = _pw_mc(x2t, w1_ref[...], b1_ref[...])                      # [M, Cm]
    _fill_padded(pad_ref, y1.reshape(D, H, W, Cm))
    y2 = _depthwise3(pad_ref, wd_ref[...], (D, H, W), 1) + b2_ref[...]
    y3 = _pw_cm(w2t_ref[...], y2.reshape(M, Cm).T, b3_ref[...])     # [Ch, M] lane-dense
    o_ref[:, 1, :] = y3.astype(o_ref.dtype)


def _s2_kernel(x_ref,
               wd1_ref, bd1_ref, wp1t_ref, bp1_ref,                  # branch1: dw -> pw
               w21_ref, b21_ref, wd2_ref, b22_ref, w22t_ref, b23_ref,  # branch2
               o_ref, pad1_ref, pad2_ref, *, spatial, out_spatial):
    # x_ref: [Cin, M]; o_ref: [C/2, 2, Mo]  (g=0 branch1, g=1 branch2)
    D, H, W = spatial
    Do, Ho, Wo = out_spatial
    Cin, M = x_ref.shape
    Mo = Do * Ho * Wo
    Cm = w21_ref.shape[1]

    xt = x_ref[...].astype(jnp.float32).T                            # [M, Cin], shared

    # branch2: 1x1x1(+BN,ReLU) -> dw 3x3x3 s2(+BN) -> 1x1x1(+BN,ReLU)
    y1 = _pw_mc(xt, w21_ref[...], b21_ref[...])                      # [M, Cm]
    _fill_padded(pad2_ref, y1.reshape(D, H, W, Cm))
    y2 = _depthwise3(pad2_ref, wd2_ref[...], (Do, Ho, Wo), 2) + b22_ref[...]
    y3 = _pw_cm(w22t_ref[...], y2.reshape(Mo, Cm).T, b23_ref[...])   # [Ch, Mo]

    # branch1: dw 3x3x3 s2(+BN) -> 1x1x1(+BN,ReLU)
    _fill_padded(pad1_ref, xt.reshape(D, H, W, Cin))
    z1 = _depthwise3(pad1_ref, wd1_ref[...], (Do, Ho, Wo), 2) + bd1_ref[...]
    z2 = _pw_cm(wp1t_ref[...], z1.reshape(Mo, Cin).T, bp1_ref[...])  # [Ch, Mo]

    # concat + channel_shuffle(2) == write branch1 to g=0, branch2 to g=1
    o_ref[:, 0, :] = z2.astype(o_ref.dtype)
    o_ref[:, 1, :] = y3.astype(o_ref.dtype)


# ----------------------------------------------------------------------------
# Wrappers (trace-time BN folding + pallas_call plumbing)
# ----------------------------------------------------------------------------
def _w_spec(a):
    return pl.BlockSpec(a.shape, lambda n: (0, 0))


def inverted_residual_s1(x, p):
    """stride=1 block.  x: [N, C, D, H, W] (NCDHW)."""
    N, C, D, H, W = x.shape
    Ch = C // 2
    M = D * H * W
    Cm = p['pw1_w'].shape[1]

    # fold BN scale into conv weights at trace time (kernel only adds the bias)
    w1 = (p['pw1_w'] * p['bn1_s'][None, :]).astype(jnp.float32)          # [Ch, Cm]
    wd = (p['dw_w'] * p['bn2_s']).reshape(27, Cm).astype(jnp.float32)    # [27, Cm]
    w2t = (p['pw2_w'] * p['bn3_s'][None, :]).T.astype(jnp.float32)       # [Ch, Cm]
    b1 = p['bn1_b'].reshape(1, Cm).astype(jnp.float32)
    b2 = p['bn2_b'].reshape(1, Cm).astype(jnp.float32)
    b3 = p['bn3_b'].reshape(Ch, 1).astype(jnp.float32)

    x_flat = x.reshape(N, C, M)                    # free row-major reshape (no transpose)

    flops = N * (2 * M * Ch * Cm + 27 * 2 * M * Cm + 2 * M * Cm * Ch)
    bytes_accessed = 4 * (2 * N * C * M + w1.size + wd.size + w2t.size + 2 * Cm + Ch)

    kernel = functools.partial(_s1_kernel, spatial=(D, H, W))
    out4 = pl.pallas_call(
        kernel,
        out_shape=jax.ShapeDtypeStruct((N, Ch, 2, M), x.dtype),
        grid=(N,),
        in_specs=[
            pl.BlockSpec((None, C, M), lambda n: (n, 0, 0)),
            _w_spec(w1), _w_spec(b1), _w_spec(wd), _w_spec(b2),
            _w_spec(w2t), _w_spec(b3),
        ],
        out_specs=pl.BlockSpec((None, Ch, 2, M), lambda n: (n, 0, 0, 0)),
        scratch_shapes=[pltpu.VMEM((D + 2, H + 2, W + 2, Cm), jnp.float32)],
        compiler_params=_COMPILER_PARAMS,
        cost_estimate=pl.CostEstimate(flops=flops, transcendentals=0,
                                      bytes_accessed=bytes_accessed),
    )(x_flat, w1, b1, wd, b2, w2t, b3)
    # (N, C/2, 2, M) -> (N, C, D, H, W): free row-major reshape == concat + shuffle(2)
    return out4.reshape(N, C, D, H, W)


def inverted_residual_s2(x, p1, p2):
    """stride=2 block (branch1 + branch2 fused in one pallas_call).  x: [N, Cin, D, H, W]."""
    N, Cin, D, H, W = x.shape
    Ch = p1['pw_w'].shape[1]                       # oup // 2
    Do, Ho, Wo = _out_spatial(D, H, W, 2)
    M, Mo = D * H * W, Do * Ho * Wo
    Cm = p2['pw1_w'].shape[1]

    # branch1 (dw -> pw), BN folded
    wd1 = (p1['dw_w'] * p1['bn1_s']).reshape(27, Cin).astype(jnp.float32)
    bd1 = p1['bn1_b'].reshape(1, Cin).astype(jnp.float32)
    wp1t = (p1['pw_w'] * p1['bn2_s'][None, :]).T.astype(jnp.float32)      # [Ch, Cin]
    bp1 = p1['bn2_b'].reshape(Ch, 1).astype(jnp.float32)
    # branch2 (pw -> dw -> pw), BN folded
    w21 = (p2['pw1_w'] * p2['bn1_s'][None, :]).astype(jnp.float32)        # [Cin, Cm]
    b21 = p2['bn1_b'].reshape(1, Cm).astype(jnp.float32)
    wd2 = (p2['dw_w'] * p2['bn2_s']).reshape(27, Cm).astype(jnp.float32)
    b22 = p2['bn2_b'].reshape(1, Cm).astype(jnp.float32)
    w22t = (p2['pw2_w'] * p2['bn3_s'][None, :]).T.astype(jnp.float32)     # [Ch, Cm]
    b23 = p2['bn3_b'].reshape(Ch, 1).astype(jnp.float32)

    x_flat = x.reshape(N, Cin, M)

    flops = N * (27 * 2 * Mo * Cin + 2 * Mo * Cin * Ch
                 + 2 * M * Cin * Cm + 27 * 2 * Mo * Cm + 2 * Mo * Cm * Ch)
    bytes_accessed = 4 * (N * (Cin * M + 2 * Ch * Mo)
                          + wd1.size + wp1t.size + w21.size + wd2.size + w22t.size
                          + Cin + Ch + 3 * Cm + Ch)

    kernel = functools.partial(_s2_kernel, spatial=(D, H, W), out_spatial=(Do, Ho, Wo))
    out4 = pl.pallas_call(
        kernel,
        out_shape=jax.ShapeDtypeStruct((N, Ch, 2, Mo), x.dtype),
        grid=(N,),
        in_specs=[
            pl.BlockSpec((None, Cin, M), lambda n: (n, 0, 0)),
            _w_spec(wd1), _w_spec(bd1), _w_spec(wp1t), _w_spec(bp1),
            _w_spec(w21), _w_spec(b21), _w_spec(wd2), _w_spec(b22),
            _w_spec(w22t), _w_spec(b23),
        ],
        out_specs=pl.BlockSpec((None, Ch, 2, Mo), lambda n: (n, 0, 0, 0)),
        scratch_shapes=[pltpu.VMEM((D + 2, H + 2, W + 2, Cin), jnp.float32),
                        pltpu.VMEM((D + 2, H + 2, W + 2, Cm), jnp.float32)],
        compiler_params=_COMPILER_PARAMS,
        cost_estimate=pl.CostEstimate(flops=flops, transcendentals=0,
                                      bytes_accessed=bytes_accessed),
    )(x_flat, wd1, bd1, wp1t, bp1, w21, b21, wd2, b22, w22t, b23)
    return out4.reshape(N, 2 * Ch, Do, Ho, Wo)


def inverted_residual_forward(x_ncdhw, params, stride):
    assert stride in (1, 2)
    if stride == 1:
        return inverted_residual_s1(x_ncdhw, params['b2'])
    return inverted_residual_s2(x_ncdhw, params['b1'], params['b2'])


# ----------------------------------------------------------------------------
# Deterministic parameter construction (BN eval semantics -> scale/bias)
# ----------------------------------------------------------------------------
def _make_bn(key, c, eps=1e-5):
    k1, k2, k3, k4 = jax.random.split(key, 4)
    gamma = jax.random.uniform(k1, (c,), minval=0.5, maxval=1.5)
    beta = 0.1 * jax.random.normal(k2, (c,))
    mean = 0.1 * jax.random.normal(k3, (c,))
    var = jax.random.uniform(k4, (c,), minval=0.5, maxval=1.5)
    scale = gamma / jnp.sqrt(var + eps)
    bias = beta - mean * scale
    return scale.astype(jnp.float32), bias.astype(jnp.float32)


def make_params(key, inp, oup, stride):
    oup_inc = oup // 2
    keys = jax.random.split(key, 12)
    params = {}
    cin2 = oup_inc if stride == 1 else inp
    params['b2'] = {
        'pw1_w': (0.1 * jax.random.normal(keys[0], (cin2, oup_inc))).astype(jnp.float32),
        'dw_w': (0.1 * jax.random.normal(keys[1], (3, 3, 3, oup_inc))).astype(jnp.float32),
        'pw2_w': (0.1 * jax.random.normal(keys[2], (oup_inc, oup_inc))).astype(jnp.float32),
    }
    params['b2']['bn1_s'], params['b2']['bn1_b'] = _make_bn(keys[3], oup_inc)
    params['b2']['bn2_s'], params['b2']['bn2_b'] = _make_bn(keys[4], oup_inc)
    params['b2']['bn3_s'], params['b2']['bn3_b'] = _make_bn(keys[5], oup_inc)
    if stride == 2:
        params['b1'] = {
            'dw_w': (0.1 * jax.random.normal(keys[6], (3, 3, 3, inp))).astype(jnp.float32),
            'pw_w': (0.1 * jax.random.normal(keys[7], (inp, oup_inc))).astype(jnp.float32),
        }
        params['b1']['bn1_s'], params['b1']['bn1_b'] = _make_bn(keys[8], inp)
        params['b1']['bn2_s'], params['b1']['bn2_b'] = _make_bn(keys[9], oup_inc)
    return params


# ----------------------------------------------------------------------------
# Pure-JAX NCDHW reference (mirrors the PyTorch module) for verification
# ----------------------------------------------------------------------------
def _ref_conv3d(x, w_oidhw, stride, pad, groups):
    return jax.lax.conv_general_dilated(
        x, w_oidhw, (stride,) * 3, [(pad, pad)] * 3,
        dimension_numbers=('NCDHW', 'OIDHW', 'NCDHW'),
        feature_group_count=groups)


def _ref_bn(x, s, b):
    return x * s[None, :, None, None, None] + b[None, :, None, None, None]


def _ref_branch2(x, p, stride):
    cin = x.shape[1]
    cmid = p['pw1_w'].shape[1]
    w1 = p['pw1_w'].T.reshape(cmid, cin, 1, 1, 1)
    y = jax.nn.relu(_ref_bn(_ref_conv3d(x, w1, 1, 0, 1), p['bn1_s'], p['bn1_b']))
    wd = jnp.transpose(p['dw_w'], (3, 0, 1, 2))[:, None]
    y = _ref_bn(_ref_conv3d(y, wd, stride, 1, cmid), p['bn2_s'], p['bn2_b'])
    w2 = p['pw2_w'].T.reshape(cmid, cmid, 1, 1, 1)
    return jax.nn.relu(_ref_bn(_ref_conv3d(y, w2, 1, 0, 1), p['bn3_s'], p['bn3_b']))


def _ref_branch1(x, p):
    cin = x.shape[1]
    cout = p['pw_w'].shape[1]
    wd = jnp.transpose(p['dw_w'], (3, 0, 1, 2))[:, None]
    y = _ref_bn(_ref_conv3d(x, wd, 2, 1, cin), p['bn1_s'], p['bn1_b'])
    w = p['pw_w'].T.reshape(cout, cin, 1, 1, 1)
    return jax.nn.relu(_ref_bn(_ref_conv3d(y, w, 1, 0, 1), p['bn2_s'], p['bn2_b']))


def ref_forward(x, params, stride):
    if stride == 1:
        c = x.shape[1]
        out = jnp.concatenate([x[:, : c // 2], _ref_branch2(x[:, c // 2:], params['b2'], 1)], axis=1)
    else:
        out = jnp.concatenate([_ref_branch1(x, params['b1']),
                               _ref_branch2(x, params['b2'], 2)], axis=1)
    N, C, D, H, W = out.shape
    out = out.reshape(N, 2, C // 2, D, H, W).transpose(0, 2, 1, 3, 4, 5).reshape(N, C, D, H, W)
    return out


# ----------------------------------------------------------------------------
if __name__ == "__main__":
    key = jax.random.PRNGKey(0)
    kx1, kx2, kp1, kp2 = jax.random.split(key, 4)

    forward = jax.jit(inverted_residual_forward, static_argnums=2)

    # stride=1: inp = oup = 8 (channel split requires inp == oup), x: [N, C, D, H, W]
    x_s1 = jax.random.normal(kx1, (2, 8, 4, 8, 8), jnp.float32)
    params_s1 = make_params(kp1, inp=8, oup=8, stride=1)
    out_s1 = jax.block_until_ready(forward(x_s1, params_s1, 1))
    ref_s1 = ref_forward(x_s1, params_s1, 1)
    assert out_s1.shape == (2, 8, 4, 8, 8)
    np.testing.assert_allclose(np.asarray(out_s1), np.asarray(ref_s1), atol=5e-4, rtol=5e-4)

    # stride=2: inp = 4, oup = 8, spatial downsampled by 2
    x_s2 = jax.random.normal(kx2, (2, 4, 4, 8, 8), jnp.float32)
    params_s2 = make_params(kp2, inp=4, oup=8, stride=2)
    out_s2 = jax.block_until_ready(forward(x_s2, params_s2, 2))
    ref_s2 = ref_forward(x_s2, params_s2, 2)
    assert out_s2.shape == (2, 8, 2, 4, 4)
    np.testing.assert_allclose(np.asarray(out_s2), np.asarray(ref_s2), atol=5e-4, rtol=5e-4)

    print("KERNEL_OK")
</pallas_src>

<mosaic_0001>
module attributes {stable_mosaic.version = 11 : i64} {
  func.func @_s1_kernel(%arg0: i32, %arg1: memref<1x8x256xf32, #tpu.memory_space<vmem>>, %arg2: memref<4x4xf32, #tpu.memory_space<vmem>>, %arg3: memref<1x4xf32, #tpu.memory_space<vmem>>, %arg4: memref<27x4xf32, #tpu.memory_space<vmem>>, %arg5: memref<1x4xf32, #tpu.memory_space<vmem>>, %arg6: memref<4x4xf32, #tpu.memory_space<vmem>>, %arg7: memref<4x1xf32, #tpu.memory_space<vmem>>, %arg8: memref<1x4x2x256xf32, #tpu.memory_space<vmem>>, %arg9: memref<6x10x10x4xf32, #tpu.memory_space<vmem>>) attributes {dimension_semantics = [#tpu.dimension_semantics<parallel>], iteration_bounds = array<i64: 2>, scalar_prefetch = 0 : i64, scratch_operands = 1 : i64, tpu.core_type = #tpu.core_type<tc>, window_params = [{transform_indices = @transform_0, window_bounds = array<i64: 1, 8, 256>}, {pipeline_mode = #tpu.pipeline_mode<synchronous>, transform_indices = @transform_1, window_bounds = array<i64: 4, 4>}, {pipeline_mode = #tpu.pipeline_mode<synchronous>, transform_indices = @transform_2, window_bounds = array<i64: 1, 4>}, {pipeline_mode = #tpu.pipeline_mode<synchronous>, transform_indices = @transform_3, window_bounds = array<i64: 27, 4>}, {pipeline_mode = #tpu.pipeline_mode<synchronous>, transform_indices = @transform_4, window_bounds = array<i64: 1, 4>}, {pipeline_mode = #tpu.pipeline_mode<synchronous>, transform_indices = @transform_5, window_bounds = array<i64: 4, 4>}, {pipeline_mode = #tpu.pipeline_mode<synchronous>, transform_indices = @transform_6, window_bounds = array<i64: 4, 1>}, {transform_indices = @transform_7, window_bounds = array<i64: 1, 4, 2, 256>}]} {
    %c0 = arith.constant 0 : index
    %c0_0 = arith.constant 0 : index
    %c0_1 = arith.constant 0 : index
    %0 = vector.load %arg1[%c0, %c0_0, %c0_1] : memref<1x8x256xf32, #tpu.memory_space<vmem>>, vector<1x4x256xf32>
    %1 = vector.shape_cast %0 : vector<1x4x256xf32> to vector<4x256xf32>
    %c0_2 = arith.constant 0 : index
    %c0_3 = arith.constant 0 : index
    %c0_4 = arith.constant 0 : index
    %c0_5 = arith.constant 0 : index
    %2 = vector.load %arg8[%c0_2, %c0_3, %c0_4, %c0_5] : memref<1x4x2x256xf32, #tpu.memory_space<vmem>>, vector<1x4x1x256xf32>
    %3 = vector.shape_cast %2 : vector<1x4x1x256xf32> to vector<4x256xf32>
    %4 = vector.shape_cast %1 : vector<4x256xf32> to vector<1x4x1x256xf32>
    tpu.vector_store %arg8[%c0_2, %c0_3, %c0_4, %c0_5], %4 {strides = array<i32>} : memref<1x4x2x256xf32, #tpu.memory_space<vmem>>, vector<1x4x1x256xf32>,
    %c0_6 = arith.constant 0 : index
    %c4 = arith.constant 4 : index
    %c0_7 = arith.constant 0 : index
    %5 = vector.load %arg1[%c0_6, %c4, %c0_7] : memref<1x8x256xf32, #tpu.memory_space<vmem>>, vector<1x4x256xf32>
    %6 = vector.shape_cast %5 : vector<1x4x256xf32> to vector<4x256xf32>
    %7 = tpu.transpose %6, [1, 0] : vector<4x256xf32> -> vector<256x4xf32>
    %c0_8 = arith.constant 0 : index
    %c0_9 = arith.constant 0 : index
    %8 = vector.load %arg2[%c0_8, %c0_9] : memref<4x4xf32, #tpu.memory_space<vmem>>, vector<4x4xf32>
    %c0_10 = arith.constant 0 : index
    %c0_11 = arith.constant 0 : index
    %9 = vector.load %arg3[%c0_10, %c0_11] : memref<1x4xf32, #tpu.memory_space<vmem>>, vector<1x4xf32>
    %cst = arith.constant dense<0.000000e+00> : vector<256x4xf32>
    %10 = tpu.matmul %7, %8, %cst {dimension_numbers = #tpu.dot_dimension_numbers<[1], [0], [0], [1], [0, 0, 1, 1], [], []>, precision = #tpu.contract_precision<fp32>} : vector<256x4xf32>, vector<4x4xf32>, vector<256x4xf32> -> vector<256x4xf32>
    %11 = vector.broadcast %9 : vector<1x4xf32> to vector<256x4xf32>
    %12 = arith.addf %10, %11 : vector<256x4xf32>
    %cst_12 = arith.constant 0.000000e+00 : f32
    %13 = vector.broadcast %cst_12 : f32 to vector<256x4xf32>
    %14 = arith.maximumf %12, %13 : vector<256x4xf32>
    %15 = vector.shape_cast %14 : vector<256x4xf32> to vector<4x8x8x4xf32>
    %cst_13 = arith.constant 0.000000e+00 : f32
    %16 = vector.broadcast %cst_13 : f32 to vector<1x10x10x4xf32>
    %c0_14 = arith.constant 0 : index
    %c0_15 = arith.constant 0 : index
    %c0_16 = arith.constant 0 : index
    %c0_17 = arith.constant 0 : index
    %17 = vector.load %arg9[%c0_14, %c0_15, %c0_16, %c0_17] : memref<6x10x10x4xf32, #tpu.memory_space<vmem>>, vector<1x10x10x4xf32>
    tpu.vector_store %arg9[%c0_14, %c0_15, %c0_16, %c0_17], %16 {strides = array<i32>} : memref<6x10x10x4xf32, #tpu.memory_space<vmem>>, vector<1x10x10x4xf32>,
    %cst_18 = arith.constant 0.000000e+00 : f32
    %18 = vector.broadcast %cst_18 : f32 to vector<1x10x10x4xf32>
    %c5 = arith.constant 5 : index
    %c0_19 = arith.constant 0 : index
    %c0_20 = arith.constant 0 : index
    %c0_21 = arith.constant 0 : index
    %19 = vector.load %arg9[%c5, %c0_19, %c0_20, %c0_21] : memref<6x10x10x4xf32, #tpu.memory_space<vmem>>, vector<1x10x10x4xf32>
    tpu.vector_store %arg9[%c5, %c0_19, %c0_20, %c0_21], %18 {strides = array<i32>} : memref<6x10x10x4xf32, #tpu.memory_space<vmem>>, vector<1x10x10x4xf32>,
    %cst_22 = arith.constant 0.000000e+00 : f32
    %20 = vector.broadcast %cst_22 : f32 to vector<6x1x10x4xf32>
    %c0_23 = arith.constant 0 : index
    %c0_24 = arith.constant 0 : index
    %c0_25 = arith.constant 0 : index
    %c0_26 = arith.constant 0 : index
    %21 = vector.load %arg9[%c0_23, %c0_24, %c0_25, %c0_26] : memref<6x10x10x4xf32, #tpu.memory_space<vmem>>, vector<6x1x10x4xf32>
    tpu.vector_store %arg9[%c0_23, %c0_24, %c0_25, %c0_26], %20 {strides = array<i32>} : memref<6x10x10x4xf32, #tpu.memory_space<vmem>>, vector<6x1x10x4xf32>,
    %cst_27 = arith.constant 0.000000e+00 : f32
    %22 = vector.broadcast %cst_27 : f32 to vector<6x1x10x4xf32>
    %c0_28 = arith.constant 0 : index
    %c9 = arith.constant 9 : index
    %c0_29 = arith.constant 0 : index
    %c0_30 = arith.constant 0 : index
    %23 = vector.load %arg9[%c0_28, %c9, %c0_29, %c0_30] : memref<6x10x10x4xf32, #tpu.memory_space<vmem>>, vector<6x1x10x4xf32>
    tpu.vector_store %arg9[%c0_28, %c9, %c0_29, %c0_30], %22 {strides = array<i32>} : memref<6x10x10x4xf32, #tpu.memory_space<vmem>>, vector<6x1x10x4xf32>,
    %cst_31 = arith.constant 0.000000e+00 : f32
    %24 = vector.broadcast %cst_31 : f32 to vector<6x10x1x4xf32>
    %c0_32 = arith.constant 0 : index
    %c0_33 = arith.constant 0 : index
    %c0_34 = arith.constant 0 : index
    %c0_35 = arith.constant 0 : index
    %25 = vector.load %arg9[%c0_32, %c0_33, %c0_34, %c0_35] : memref<6x10x10x4xf32, #tpu.memory_space<vmem>>, vector<6x10x1x4xf32>
    tpu.vector_store %arg9[%c0_32, %c0_33, %c0_34, %c0_35], %24 {strides = array<i32>} : memref<6x10x10x4xf32, #tpu.memory_space<vmem>>, vector<6x10x1x4xf32>,
    %cst_36 = arith.constant 0.000000e+00 : f32
    %26 = vector.broadcast %cst_36 : f32 to vector<6x10x1x4xf32>
    %c0_37 = arith.constant 0 : index
    %c0_38 = arith.constant 0 : index
    %c9_39 = arith.constant 9 : index
    %c0_40 = arith.constant 0 : index
    %27 = vector.load %arg9[%c0_37, %c0_38, %c9_39, %c0_40] : memref<6x10x10x4xf32, #tpu.memory_space<vmem>>, vector<6x10x1x4xf32>
    tpu.vector_store %arg9[%c0_37, %c0_38, %c9_39, %c0_40], %26 {strides = array<i32>} : memref<6x10x10x4xf32, #tpu.memory_space<vmem>>, vector<6x10x1x4xf32>,
    %c1 = arith.constant 1 : index
    %c1_41 = arith.constant 1 : index
    %c1_42 = arith.constant 1 : index
    %c0_43 = arith.constant 0 : index
    %28 = vector.load %arg9[%c1, %c1_41, %c1_42, %c0_43] : memref<6x10x10x4xf32, #tpu.memory_space<vmem>>, vector<4x8x8x4xf32>
    tpu.vector_store %arg9[%c1, %c1_41, %c1_42, %c0_43], %15 {strides = array<i32>} : memref<6x10x10x4xf32, #tpu.memory_space<vmem>>, vector<4x8x8x4xf32>,
    %c0_44 = arith.constant 0 : index
    %c0_45 = arith.constant 0 : index
    %29 = vector.load %arg4[%c0_44, %c0_45] : memref<27x4xf32, #tpu.memory_space<vmem>>, vector<27x4xf32>
    %c0_46 = arith.constant 0 : index
    %c0_47 = arith.constant 0 : index
    %c0_48 = arith.constant 0 : index
    %c0_49 = arith.constant 0 : index
    %30 = vector.load %arg9[%c0_46, %c0_47, %c0_48, %c0_49] : memref<6x10x10x4xf32, #tpu.memory_space<vmem>>, vector<4x8x8x4xf32>
    %31 = vector.extract_strided_slice %29 {offsets = [0, 0], sizes = [1, 4], strides = [1, 1]} : vector<27x4xf32> to vector<1x4xf32>
    %32 = vector.shape_cast %31 : vector<1x4xf32> to vector<1x1x1x4xf32>
    %33 = vector.broadcast %32 : vector<1x1x1x4xf32> to vector<4x8x8x4xf32>
    %34 = arith.mulf %30, %33 : vector<4x8x8x4xf32>
    %c0_50 = arith.constant 0 : index
    %c0_51 = arith.constant 0 : index
    %c1_52 = arith.constant 1 : index
    %c0_53 = arith.constant 0 : index
    %35 = vector.load %arg9[%c0_50, %c0_51, %c1_52, %c0_53] : memref<6x10x10x4xf32, #tpu.memory_space<vmem>>, vector<4x8x8x4xf32>
    %36 = vector.extract_strided_slice %29 {offsets = [1, 0], sizes = [1, 4], strides = [1, 1]} : vector<27x4xf32> to vector<1x4xf32>
    %37 = vector.shape_cast %36 : vector<1x4xf32> to vector<1x1x1x4xf32>
    %38 = vector.broadcast %37 : vector<1x1x1x4xf32> to vector<4x8x8x4xf32>
    %39 = arith.mulf %35, %38 : vector<4x8x8x4xf32>
    %40 = arith.addf %34, %39 : vector<4x8x8x4xf32>
    %c0_54 = arith.constant 0 : index
    %c0_55 = arith.constant 0 : index
    %c2 = arith.constant 2 : index
    %c0_56 = arith.constant 0 : index
    %41 = vector.load %arg9[%c0_54, %c0_55, %c2, %c0_56] : memref<6x10x10x4xf32, #tpu.memory_space<vmem>>, vector<4x8x8x4xf32>
    %42 = vector.extract_strided_slice %29 {offsets = [2, 0], sizes = [1, 4], strides = [1, 1]} : vector<27x4xf32> to vector<1x4xf32>
    %43 = vector.shape_cast %42 : vector<1x4xf32> to vector<1x1x1x4xf32>
    %44 = vector.broadcast %43 : vector<1x1x1x4xf32> to vector<4x8x8x4xf32>
    %45 = arith.mulf %41, %44 : vector<4x8x8x4xf32>
    %46 = arith.addf %40, %45 : vector<4x8x8x4xf32>
    %c0_57 = arith.constant 0 : index
    %c1_58 = arith.constant 1 : index
    %c0_59 = arith.constant 0 : index
    %c0_60 = arith.constant 0 : index
    %47 = vector.load %arg9[%c0_57, %c1_58, %c0_59, %c0_60] : memref<6x10x10x4xf32, #tpu.memory_space<vmem>>, vector<4x8x8x4xf32>
    %48 = vector.extract_strided_slice %29 {offsets = [3, 0], sizes = [1, 4], strides = [1, 1]} : vector<27x4xf32> to vector<1x4xf32>
    %49 = vector.shape_cast %48 : vector<1x4xf32> to vector<1x1x1x4xf32>
    %50 = vector.broadcast %49 : vector<1x1x1x4xf32> to vector<4x8x8x4xf32>
    %51 = arith.mulf %47, %50 : vector<4x8x8x4xf32>
    %52 = arith.addf %46, %51 : vector<4x8x8x4xf32>
    %c0_61 = arith.constant 0 : index
    %c1_62 = arith.constant 1 : index
    %c1_63 = arith.constant 1 : index
    %c0_64 = arith.constant 0 : index
    %53 = vector.load %arg9[%c0_61, %c1_62, %c1_63, %c0_64] : memref<6x10x10x4xf32, #tpu.memory_space<vmem>>, vector<4x8x8x4xf32>
    %54 = vector.extract_strided_slice %29 {offsets = [4, 0], sizes = [1, 4], strides = [1, 1]} : vector<27x4xf32> to vector<1x4xf32>
    %55 = vector.shape_cast %54 : vector<1x4xf32> to vector<1x1x1x4xf32>
    %56 = vector.broadcast %55 : vector<1x1x1x4xf32> to vector<4x8x8x4xf32>
    %57 = arith.mulf %53, %56 : vector<4x8x8x4xf32>
    %58 = arith.addf %52, %57 : vector<4x8x8x4xf32>
    %c0_65 = arith.constant 0 : index
    %c1_66 = arith.constant 1 : index
    %c2_67 = arith.constant 2 : index
    %c0_68 = arith.constant 0 : index
    %59 = vector.load %arg9[%c0_65, %c1_66, %c2_67, %c0_68] : memref<6x10x10x4xf32, #tpu.memory_space<vmem>>, vector<4x8x8x4xf32>
    %60 = vector.extract_strided_slice %29 {offsets = [5, 0], sizes = [1, 4], strides = [1, 1]} : vector<27x4xf32> to vector<1x4xf32>
    %61 = vector.shape_cast %60 : vector<1x4xf32> to vector<1x1x1x4xf32>
    %62 = vector.broadcast %61 : vector<1x1x1x4xf32> to vector<4x8x8x4xf32>
    %63 = arith.mulf %59, %62 : vector<4x8x8x4xf32>
    %64 = arith.addf %58, %63 : vector<4x8x8x4xf32>
    %c0_69 = arith.constant 0 : index
    %c2_70 = arith.constant 2 : index
    %c0_71 = arith.constant 0 : index
    %c0_72 = arith.constant 0 : index
    %65 = vector.load %arg9[%c0_69, %c2_70, %c0_71, %c0_72] : memref<6x10x10x4xf32, #tpu.memory_space<vmem>>, vector<4x8x8x4xf32>
    %66 = vector.extract_strided_slice %29 {offsets = [6, 0], sizes = [1, 4], strides = [1, 1]} : vector<27x4xf32> to vector<1x4xf32>
    %67 = vector.shape_cast %66 : vector<1x4xf32> to vector<1x1x1x4xf32>
    %68 = vector.broadcast %67 : vector<1x1x1x4xf32> to vector<4x8x8x4xf32>
    %69 = arith.mulf %65, %68 : vector<4x8x8x4xf32>
    %70 = arith.addf %64, %69 : vector<4x8x8x4xf32>
    %c0_73 = arith.constant 0 : index
    %c2_74 = arith.constant 2 : index
    %c1_75 = arith.constant 1 : index
    %c0_76 = arith.constant 0 : index
    %71 = vector.load %arg9[%c0_73, %c2_74, %c1_75, %c0_76] : memref<6x10x10x4xf32, #tpu.memory_space<vmem>>, vector<4x8x8x4xf32>
    %72 = vector.extract_strided_slice %29 {offsets = [7, 0], sizes = [1, 4], strides = [1, 1]} : vector<27x4xf32> to vector<1x4xf32>
    %73 = vector.shape_cast %72 : vector<1x4xf32> to vector<1x1x1x4xf32>
    %74 = vector.broadcast %73 : vector<1x1x1x4xf32> to vector<4x8x8x4xf32>
    %75 = arith.mulf %71, %74 : vector<4x8x8x4xf32>
    %76 = arith.addf %70, %75 : vector<4x8x8x4xf32>
    %c0_77 = arith.constant 0 : index
    %c2_78 = arith.constant 2 : index
    %c2_79 = arith.constant 2 : index
    %c0_80 = arith.constant 0 : index
    %77 = vector.load %arg9[%c0_77, %c2_78, %c2_79, %c0_80] : memref<6x10x10x4xf32, #tpu.memory_space<vmem>>, vector<4x8x8x4xf32>
    %78 = vector.extract_strided_slice %29 {offsets = [8, 0], sizes = [1, 4], strides = [1, 1]} : vector<27x4xf32> to vector<1x4xf32>
    %79 = vector.shape_cast %78 : vector<1x4xf32> to vector<1x1x1x4xf32>
    %80 = vector.broadcast %79 : vector<1x1x1x4xf32> to vector<4x8x8x4xf32>
    %81 = arith.mulf %77, %80 : vector<4x8x8x4xf32>
    %82 = arith.addf %76, %81 : vector<4x8x8x4xf32>
    %c1_81 = arith.constant 1 : index
    %c0_82 = arith.constant 0 : index
    %c0_83 = arith.constant 0 : index
    %c0_84 = arith.constant 0 : index
    %83 = vector.load %arg9[%c1_81, %c0_82, %c0_83, %c0_84] : memref<6x10x10x4xf32, #tpu.memory_space<vmem>>, vector<4x8x8x4xf32>
    %84 = vector.extract_strided_slice %29 {offsets = [9, 0], sizes = [1, 4], strides = [1, 1]} : vector<27x4xf32> to vector<1x4xf32>
    %85 = vector.shape_cast %84 : vector<1x4xf32> to vector<1x1x1x4xf32>
    %86 = vector.broadcast %85 : vector<1x1x1x4xf32> to vector<4x8x8x4xf32>
    %87 = arith.mulf %83, %86 : vector<4x8x8x4xf32>
    %c1_85 = arith.constant 1 : index
    %c0_86 = arith.constant 0 : index
    %c1_87 = arith.constant 1 : index
    %c0_88 = arith.constant 0 : index
    %88 = vector.load %arg9[%c1_85, %c0_86, %c1_87, %c0_88] : memref<6x10x10x4xf32, #tpu.memory_space<vmem>>, vector<4x8x8x4xf32>
    %89 = vector.extract_strided_slice %29 {offsets = [10, 0], sizes = [1, 4], strides = [1, 1]} : vector<27x4xf32> to vector<1x4xf32>
    %90 = vector.shape_cast %89 : vector<1x4xf32> to vector<1x1x1x4xf32>
    %91 = vector.broadcast %90 : vector<1x1x1x4xf32> to vector<4x8x8x4xf32>
    %92 = arith.mulf %88, %91 : vector<4x8x8x4xf32>
    %93 = arith.addf %87, %92 : vector<4x8x8x4xf32>
    %c1_89 = arith.constant 1 : index
    %c0_90 = arith.constant 0 : index
    %c2_91 = arith.constant 2 : index
    %c0_92 = arith.constant 0 : index
    %94 = vector.load %arg9[%c1_89, %c0_90, %c2_91, %c0_92] : memref<6x10x10x4xf32, #tpu.memory_space<vmem>>, vector<4x8x8x4xf32>
    %95 = vector.extract_strided_slice %29 {offsets = [11, 0], sizes = [1, 4], strides = [1, 1]} : vector<27x4xf32> to vector<1x4xf32>
    %96 = vector.shape_cast %95 : vector<1x4xf32> to vector<1x1x1x4xf32>
    %97 = vector.broadcast %96 : vector<1x1x1x4xf32> to vector<4x8x8x4xf32>
    %98 = arith.mulf %94, %97 : vector<4x8x8x4xf32>
    %99 = arith.addf %93, %98 : vector<4x8x8x4xf32>
    %c1_93 = arith.constant 1 : index
    %c1_94 = arith.constant 1 : index
    %c0_95 = arith.constant 0 : index
    %c0_96 = arith.constant 0 : index
    %100 = vector.load %arg9[%c1_93, %c1_94, %c0_95, %c0_96] : memref<6x10x10x4xf32, #tpu.memory_space<vmem>>, vector<4x8x8x4xf32>
    %101 = vector.extract_strided_slice %29 {offsets = [12, 0], sizes = [1, 4], strides = [1, 1]} : vector<27x4xf32> to vector<1x4xf32>
    %102 = vector.shape_cast %101 : vector<1x4xf32> to vector<1x1x1x4xf32>
    %103 = vector.broadcast %102 : vector<1x1x1x4xf32> to vector<4x8x8x4xf32>
    %104 = arith.mulf %100, %103 : vector<4x8x8x4xf32>
    %105 = arith.addf %99, %104 : vector<4x8x8x4xf32>
    %c1_97 = arith.constant 1 : index
    %c1_98 = arith.constant 1 : index
    %c1_99 = arith.constant 1 : index
    %c0_100 = arith.constant 0 : index
    %106 = vector.load %arg9[%c1_97, %c1_98, %c1_99, %c0_100] : memref<6x10x10x4xf32, #tpu.memory_space<vmem>>, vector<4x8x8x4xf32>
    %107 = vector.extract_strided_slice %29 {offsets = [13, 0], sizes = [1, 4], strides = [1, 1]} : vector<27x4xf32> to vector<1x4xf32>
    %108 = vector.shape_cast %107 : vector<1x4xf32> to vector<1x1x1x4xf32>
    %109 = vector.broadcast %108 : vector<1x1x1x4xf32> to vector<4x8x8x4xf32>
    %110 = arith.mulf %106, %109 : vector<4x8x8x4xf32>
    %111 = arith.addf %105, %110 : vector<4x8x8x4xf32>
    %c1_101 = arith.constant 1 : index
    %c1_102 = arith.constant 1 : index
    %c2_103 = arith.constant 2 : index
    %c0_104 = arith.constant 0 : index
    %112 = vector.load %arg9[%c1_101, %c1_102, %c2_103, %c0_104] : memref<6x10x10x4xf32, #tpu.memory_space<vmem>>, vector<4x8x8x4xf32>
    %113 = vector.extract_strided_slice %29 {offsets = [14, 0], sizes = [1, 4], strides = [1, 1]} : vector<27x4xf32> to vector<1x4xf32>
    %114 = vector.shape_cast %113 : vector<1x4xf32> to vector<1x1x1x4xf32>
    %115 = vector.broadcast %114 : vector<1x1x1x4xf32> to vector<4x8x8x4xf32>
    %116 = arith.mulf %112, %115 : vector<4x8x8x4xf32>
    %117 = arith.addf %111, %116 : vector<4x8x8x4xf32>
    %c1_105 = arith.constant 1 : index
    %c2_106 = arith.constant 2 : index
    %c0_107 = arith.constant 0 : index
    %c0_108 = arith.constant 0 : index
    %118 = vector.load %arg9[%c1_105, %c2_106, %c0_107, %c0_108] : memref<6x10x10x4xf32, #tpu.memory_space<vmem>>, vector<4x8x8x4xf32>
    %119 = vector.extract_strided_slice %29 {offsets = [15, 0], sizes = [1, 4], strides = [1, 1]} : vector<27x4xf32> to vector<1x4xf32>
    %120 = vector.shape_cast %119 : vector<1x4xf32> to vector<1x1x1x4xf32>
    %121 = vector.broadcast %120 : vector<1x1x1x4xf32> to vector<4x8x8x4xf32>
    %122 = arith.mulf %118, %121 : vector<4x8x8x4xf32>
    %123 = arith.addf %117, %122 : vector<4x8x8x4xf32>
    %c1_109 = arith.constant 1 : index
    %c2_110 = arith.constant 2 : index
    %c1_111 = arith.constant 1 : index
    %c0_112 = arith.constant 0 : index
    %124 = vector.load %arg9[%c1_109, %c2_110, %c1_111, %c0_112] : memref<6x10x10x4xf32, #tpu.memory_space<vmem>>, vector<4x8x8x4xf32>
    %125 = vector.extract_strided_slice %29 {offsets = [16, 0], sizes = [1, 4], strides = [1, 1]} : vector<27x4xf32> to vector<1x4xf32>
    %126 = vector.shape_cast %125 : vector<1x4xf32> to vector<1x1x1x4xf32>
    %127 = vector.broadcast %126 : vector<1x1x1x4xf32> to vector<4x8x8x4xf32>
    %128 = arith.mulf %124, %127 : vector<4x8x8x4xf32>
    %129 = arith.addf %123, %128 : vector<4x8x8x4xf32>
    %c1_113 = arith.constant 1 : index
    %c2_114 = arith.constant 2 : index
    %c2_115 = arith.constant 2 : index
    %c0_116 = arith.constant 0 : index
    %130 = vector.load %arg9[%c1_113, %c2_114, %c2_115, %c0_116] : memref<6x10x10x4xf32, #tpu.memory_space<vmem>>, vector<4x8x8x4xf32>
    %131 = vector.extract_strided_slice %29 {offsets = [17, 0], sizes = [1, 4], strides = [1, 1]} : vector<27x4xf32> to vector<1x4xf32>
    %132 = vector.shape_cast %131 : vector<1x4xf32> to vector<1x1x1x4xf32>
    %133 = vector.broadcast %132 : vector<1x1x1x4xf32> to vector<4x8x8x4xf32>
    %134 = arith.mulf %130, %133 : vector<4x8x8x4xf32>
    %135 = arith.addf %129, %134 : vector<4x8x8x4xf32>
    %c2_117 = arith.constant 2 : index
    %c0_118 = arith.constant 0 : index
    %c0_119 = arith.constant 0 : index
    %c0_120 = arith.constant 0 : index
    %136 = vector.load %arg9[%c2_117, %c0_118, %c0_119, %c0_120] : memref<6x10x10x4xf32, #tpu.memory_space<vmem>>, vector<4x8x8x4xf32>
    %137 = vector.extract_strided_slice %29 {offsets = [18, 0], sizes = [1, 4], strides = [1, 1]} : vector<27x4xf32> to vector<1x4xf32>
    %138 = vector.shape_cast %137 : vector<1x4xf32> to vector<1x1x1x4xf32>
    %139 = vector.broadcast %138 : vector<1x1x1x4xf32> to vector<4x8x8x4xf32>
    %140 = arith.mulf %136, %139 : vector<4x8x8x4xf32>
    %c2_121 = arith.constant 2 : index
    %c0_122 = arith.constant 0 : index
    %c1_123 = arith.constant 1 : index
    %c0_124 = arith.constant 0 : index
    %141 = vector.load %arg9[%c2_121, %c0_122, %c1_123, %c0_124] : memref<6x10x10x4xf32, #tpu.memory_space<vmem>>, vector<4x8x8x4xf32>
    %142 = vector.extract_strided_slice %29 {offsets = [19, 0], sizes = [1, 4], strides = [1, 1]} : vector<27x4xf32> to vector<1x4xf32>
    %143 = vector.shape_cast %142 : vector<1x4xf32> to vector<1x1x1x4xf32>
    %144 = vector.broadcast %143 : vector<1x1x1x4xf32> to vector<4x8x8x4xf32>
    %145 = arith.mulf %141, %144 : vector<4x8x8x4xf32>
    %146 = arith.addf %140, %145 : vector<4x8x8x4xf32>
    %c2_125 = arith.constant 2 : index
    %c0_126 = arith.constant 0 : index
    %c2_127 = arith.constant 2 : index
    %c0_128 = arith.constant 0 : index
    %147 = vector.load %arg9[%c2_125, %c0_126, %c2_127, %c0_128] : memref<6x10x10x4xf32, #tpu.memory_space<vmem>>, vector<4x8x8x4xf32>
    %148 = vector.extract_strided_slice %29 {offsets = [20, 0], sizes = [1, 4], strides = [1, 1]} : vector<27x4xf32> to vector<1x4xf32>
    %149 = vector.shape_cast %148 : vector<1x4xf32> to vector<1x1x1x4xf32>
    %150 = vector.broadcast %149 : vector<1x1x1x4xf32> to vector<4x8x8x4xf32>
    %151 = arith.mulf %147, %150 : vector<4x8x8x4xf32>
    %152 = arith.addf %146, %151 : vector<4x8x8x4xf32>
    %c2_129 = arith.constant 2 : index
    %c1_130 = arith.constant 1 : index
    %c0_131 = arith.constant 0 : index
    %c0_132 = arith.constant 0 : index
    %153 = vector.load %arg9[%c2_129, %c1_130, %c0_131, %c0_132] : memref<6x10x10x4xf32, #tpu.memory_space<vmem>>, vector<4x8x8x4xf32>
    %154 = vector.extract_strided_slice %29 {offsets = [21, 0], sizes = [1, 4], strides = [1, 1]} : vector<27x4xf32> to vector<1x4xf32>
    %155 = vector.shape_cast %154 : vector<1x4xf32> to vector<1x1x1x4xf32>
    %156 = vector.broadcast %155 : vector<1x1x1x4xf32> to vector<4x8x8x4xf32>
    %157 = arith.mulf %153, %156 : vector<4x8x8x4xf32>
    %158 = arith.addf %152, %157 : vector<4x8x8x4xf32>
    %c2_133 = arith.constant 2 : index
    %c1_134 = arith.constant 1 : index
    %c1_135 = arith.constant 1 : index
    %c0_136 = arith.constant 0 : index
    %159 = vector.load %arg9[%c2_133, %c1_134, %c1_135, %c0_136] : memref<6x10x10x4xf32, #tpu.memory_space<vmem>>, vector<4x8x8x4xf32>
    %160 = vector.extract_strided_slice %29 {offsets = [22, 0], sizes = [1, 4], strides = [1, 1]} : vector<27x4xf32> to vector<1x4xf32>
    %161 = vector.shape_cast %160 : vector<1x4xf32> to vector<1x1x1x4xf32>
    %162 = vector.broadcast %161 : vector<1x1x1x4xf32> to vector<4x8x8x4xf32>
    %163 = arith.mulf %159, %162 : vector<4x8x8x4xf32>
    %164 = arith.addf %158, %163 : vector<4x8x8x4xf32>
    %c2_137 = arith.constant 2 : index
    %c1_138 = arith.constant 1 : index
    %c2_139 = arith.constant 2 : index
    %c0_140 = arith.constant 0 : index
    %165 = vector.load %arg9[%c2_137, %c1_138, %c2_139, %c0_140] : memref<6x10x10x4xf32, #tpu.memory_space<vmem>>, vector<4x8x8x4xf32>
    %166 = vector.extract_strided_slice %29 {offsets = [23, 0], sizes = [1, 4], strides = [1, 1]} : vector<27x4xf32> to vector<1x4xf32>
    %167 = vector.shape_cast %166 : vector<1x4xf32> to vector<1x1x1x4xf32>
    %168 = vector.broadcast %167 : vector<1x1x1x4xf32> to vector<4x8x8x4xf32>
    %169 = arith.mulf %165, %168 : vector<4x8x8x4xf32>
    %170 = arith.addf %164, %169 : vector<4x8x8x4xf32>
    %c2_141 = arith.constant 2 : index
    %c2_142 = arith.constant 2 : index
    %c0_143 = arith.constant 0 : index
    %c0_144 = arith.constant 0 : index
    %171 = vector.load %arg9[%c2_141, %c2_142, %c0_143, %c0_144] : memref<6x10x10x4xf32, #tpu.memory_space<vmem>>, vector<4x8x8x4xf32>
    %172 = vector.extract_strided_slice %29 {offsets = [24, 0], sizes = [1, 4], strides = [1, 1]} : vector<27x4xf32> to vector<1x4xf32>
    %173 = vector.shape_cast %172 : vector<1x4xf32> to vector<1x1x1x4xf32>
    %174 = vector.broadcast %173 : vector<1x1x1x4xf32> to vector<4x8x8x4xf32>
    %175 = arith.mulf %171, %174 : vector<4x8x8x4xf32>
    %176 = arith.addf %170, %175 : vector<4x8x8x4xf32>
    %c2_145 = arith.constant 2 : index
    %c2_146 = arith.constant 2 : index
    %c1_147 = arith.constant 1 : index
    %c0_148 = arith.constant 0 : index
    %177 = vector.load %arg9[%c2_145, %c2_146, %c1_147, %c0_148] : memref<6x10x10x4xf32, #tpu.memory_space<vmem>>, vector<4x8x8x4xf32>
    %178 = vector.extract_strided_slice %29 {offsets = [25, 0], sizes = [1, 4], strides = [1, 1]} : vector<27x4xf32> to vector<1x4xf32>
    %179 = vector.shape_cast %178 : vector<1x4xf32> to vector<1x1x1x4xf32>
    %180 = vector.broadcast %179 : vector<1x1x1x4xf32> to vector<4x8x8x4xf32>
    %181 = arith.mulf %177, %180 : vector<4x8x8x4xf32>
    %182 = arith.addf %176, %181 : vector<4x8x8x4xf32>
    %c2_149 = arith.constant 2 : index
    %c2_150 = arith.constant 2 : index
    %c2_151 = arith.constant 2 : index
    %c0_152 = arith.constant 0 : index
    %183 = vector.load %arg9[%c2_149, %c2_150, %c2_151, %c0_152] : memref<6x10x10x4xf32, #tpu.memory_space<vmem>>, vector<4x8x8x4xf32>
    %184 = vector.extract_strided_slice %29 {offsets = [26, 0], sizes = [1, 4], strides = [1, 1]} : vector<27x4xf32> to vector<1x4xf32>
    %185 = vector.shape_cast %184 : vector<1x4xf32> to vector<1x1x1x4xf32>
    %186 = vector.broadcast %185 : vector<1x1x1x4xf32> to vector<4x8x8x4xf32>
    %187 = arith.mulf %183, %186 : vector<4x8x8x4xf32>
    %188 = arith.addf %182, %187 : vector<4x8x8x4xf32>
    %189 = arith.addf %82, %135 : vector<4x8x8x4xf32>
    %190 = arith.addf %189, %188 : vector<4x8x8x4xf32>
    %c0_153 = arith.constant 0 : index
    %c0_154 = arith.constant 0 : index
    %191 = vector.load %arg5[%c0_153, %c0_154] : memref<1x4xf32, #tpu.memory_space<vmem>>, vector<1x4xf32>
    %192 = vector.shape_cast %191 : vector<1x4xf32> to vector<1x1x1x4xf32>
    %193 = vector.broadcast %192 : vector<1x1x1x4xf32> to vector<4x8x8x4xf32>
    %194 = arith.addf %190, %193 : vector<4x8x8x4xf32>
    %c0_155 = arith.constant 0 : index
    %c0_156 = arith.constant 0 : index
    %195 = vector.load %arg6[%c0_155, %c0_156] : memref<4x4xf32, #tpu.memory_space<vmem>>, vector<4x4xf32>
    %196 = vector.shape_cast %194 : vector<4x8x8x4xf32> to vector<256x4xf32>
    %197 = tpu.transpose %196, [1, 0] : vector<256x4xf32> -> vector<4x256xf32>
    %c0_157 = arith.constant 0 : index
    %c0_158 = arith.constant 0 : index
    %198 = vector.load %arg7[%c0_157, %c0_158] : memref<4x1xf32, #tpu.memory_space<vmem>>, vector<4x1xf32>
    %cst_159 = arith.constant dense<0.000000e+00> : vector<4x256xf32>
    %199 = tpu.matmul %195, %197, %cst_159 {dimension_numbers = #tpu.dot_dimension_numbers<[1], [0], [0], [1], [0, 0, 1, 1], [], []>, precision = #tpu.contract_precision<fp32>} : vector<4x4xf32>, vector<4x256xf32>, vector<4x256xf32> -> vector<4x256xf32>
    %200 = vector.broadcast %198 : vector<4x1xf32> to vector<4x256xf32>
    %201 = arith.addf %199, %200 : vector<4x256xf32>
    %cst_160 = arith.constant 0.000000e+00 : f32
    %202 = vector.broadcast %cst_160 : f32 to vector<4x256xf32>
    %203 = arith.maximumf %201, %202 : vector<4x256xf32>
    %c0_161 = arith.constant 0 : index
    %c0_162 = arith.constant 0 : index
    %c1_163 = arith.constant 1 : index
    %c0_164 = arith.constant 0 : index
    %204 = vector.load %arg8[%c0_161, %c0_162, %c1_163, %c0_164] : memref<1x4x2x256xf32, #tpu.memory_space<vmem>>, vector<1x4x1x256xf32>
    %205 = vector.shape_cast %204 : vector<1x4x1x256xf32> to vector<4x256xf32>
    %206 = vector.shape_cast %203 : vector<4x256xf32> to vector<1x4x1x256xf32>
    tpu.vector_store %arg8[%c0_161, %c0_162, %c1_163, %c0_164], %206 {strides = array<i32>} : memref<1x4x2x256xf32, #tpu.memory_space<vmem>>, vector<1x4x1x256xf32>,
    return
  }
  func.func @transform_0(%arg0: i32) -> (i32, i32, i32) {
    %c0_i32 = arith.constant 0 : i32
    %c0_i32_0 = arith.constant 0 : i32
    %c0_i32_1 = arith.constant 0 : i32
    return %arg0, %c0_i32, %c0_i32_0 : i32, i32, i32
  }
  func.func @transform_1(%arg0: i32) -> (i32, i32) {
    %c0_i32 = arith.constant 0 : i32
    %c0_i32_0 = arith.constant 0 : i32
    %c0_i32_1 = arith.constant 0 : i32
    return %c0_i32, %c0_i32_0 : i32, i32
  }
  func.func @transform_2(%arg0: i32) -> (i32, i32) {
    %c0_i32 = arith.constant 0 : i32
    %c0_i32_0 = arith.constant 0 : i32
    %c0_i32_1 = arith.constant 0 : i32
    return %c0_i32, %c0_i32_0 : i32, i32
  }
  func.func @transform_3(%arg0: i32) -> (i32, i32) {
    %c0_i32 = arith.constant 0 : i32
    %c0_i32_0 = arith.constant 0 : i32
    %c0_i32_1 = arith.constant 0 : i32
    return %c0_i32, %c0_i32_0 : i32, i32
  }
  func.func @transform_4(%arg0: i32) -> (i32, i32) {
    %c0_i32 = arith.constant 0 : i32
    %c0_i32_0 = arith.constant 0 : i32
    %c0_i32_1 = arith.constant 0 : i32
    return %c0_i32, %c0_i32_0 : i32, i32
  }
  func.func @transform_5(%arg0: i32) -> (i32, i32) {
    %c0_i32 = arith.constant 0 : i32
    %c0_i32_0 = arith.constant 0 : i32
    %c0_i32_1 = arith.constant 0 : i32
    return %c0_i32, %c0_i32_0 : i32, i32
  }
  func.func @transform_6(%arg0: i32) -> (i32, i32) {
    %c0_i32 = arith.constant 0 : i32
    %c0_i32_0 = arith.constant 0 : i32
    %c0_i32_1 = arith.constant 0 : i32
    return %c0_i32, %c0_i32_0 : i32, i32
  }
  func.func @transform_7(%arg0: i32) -> (i32, i32, i32, i32) {
    %c0_i32 = arith.constant 0 : i32
    %c0_i32_0 = arith.constant 0 : i32
    %c0_i32_1 = arith.constant 0 : i32
    %c0_i32_2 = arith.constant 0 : i32
    return %arg0, %c0_i32, %c0_i32_0, %c0_i32_1 : i32, i32, i32, i32
  }
}

</mosaic_0001>

<llo_original>
// kernel: inverted_residual_forward.1
$region0: #{inverted_residual_forward.1}
  #allocation0 [shape = 'u32[]', space=smem, size = 0x4, offset = 0x4, fixed_abs, tag = 'smem constant byte address 0x4 - core index']
  #allocation1 [shape = 'u32[144,128]{1,0:T(1,128)}', space=vmem, size = 0x12000, scoped, tag = 'internal scratch']
  #allocation2 [shape = 'f32[6,10,10,4]{3,2,1,0:T(8,128)}', space=vmem, size = 0x78000, scoped, tag = 'scratch operand']
  %s0 = inlined_call_operand.vmem [shape: f32[2,8,256], index: 0, kind: input, shape index: {}]
  %s1 = inlined_call_operand.vmem [shape: f32[4,4], index: 1, kind: input, shape index: {}]
  %s2 = inlined_call_operand.vmem [shape: f32[1,4], index: 2, kind: input, shape index: {}]
  %s3 = inlined_call_operand.vmem [shape: f32[27,4], index: 3, kind: input, shape index: {}]
  %s4 = inlined_call_operand.vmem [shape: f32[1,4], index: 4, kind: input, shape index: {}]
  %s5 = inlined_call_operand.vmem [shape: f32[4,4], index: 5, kind: input, shape index: {}]
  %s6 = inlined_call_operand.vmem [shape: f32[4,1], index: 6, kind: input, shape index: {}]
  %s7 = inlined_call_operand.vmem [shape: f32[2,4,2,256], index: 7, kind: output, shape index: {}]
  %s8 = sld [smem:[#allocation0]]
  $region61: #{inverted_residual_forward.1} parent=0
    _
  %s10 = ssub.s32 1, %s8
  %s11 = scalar_select 0, %s10, %s8
  loop: start=0, step=1, limit=4
  $region2: #{inverted_residual_forward.1} parent=0 // loop_pre_header
    _
  $region3: #{inverted_residual_forward.1} parent=0 // loop_header
    %s13 = sphi 0, %s17
    %p14 = scmp.ge.s32.totalorder %s13, 4
    %s23 = sphi 0, %s25
    %s26 = sphi 0, %s23
    %s27 = sphi 0, %s26
    %s43 = sphi 0, %s27
    %s47 = sphi 0, %s47
    %s49 = sphi 0, %s47
    %s50 = sphi 0, %s49
    %s64 = sphi 0, %s50
    %s68 = sphi 0, %s68
    %s70 = sphi 0, %s68
    %s71 = sphi 0, %s70
    %s85 = sphi 0, %s71
    %s89 = sphi 0, %s89
    %s91 = sphi 0, %s89
    %s92 = sphi 0, %s91
    %s106 = sphi 0, %s92
    %s110 = sphi 0, %s110
    %s112 = sphi 0, %s110
    %s113 = sphi 0, %s112
    %s127 = sphi 0, %s113
    %s131 = sphi 0, %s131
    %s133 = sphi 0, %s131
    %s134 = sphi 0, %s133
    %s148 = sphi 0, %s134
    %s152 = sphi 0, %s152
    %s154 = sphi 0, %s152
    %s155 = sphi 0, %s154
    %s169 = sphi 0, %s155
    %s175 = sphi 0, %s177
    %s178 = sphi 0, %s175
    %s179 = sphi 0, %s178
    %s195 = sphi 0, %s179
  $region4: #{inverted_residual_forward.1} parent=0 // loop_header_branch
    %16 = sbr.rel (%p14) target = $region8
  $region5: #{inverted_residual_forward.1} parent=0 // loop_body
    %s18 = ssub.s32 %s13, 1
    %s19 = ssub.s32 %s13, 2
    %s20 = sadd.s32 %s13, 1
    %s21 = ssub.s32 %s13, %s20
    %p22 = scmp.eq.s32.totalorder %s21, 0
    %s24 = sadd.s32 %s23, 1
    %s25 = scalar_select %p22, %s23, %s24
    %p28 = pneg %p22
    %p29 = scmp.eq.s32.totalorder %s13, 1
    %p30 = por %p28, %p29
    %p31 = scmp.ne.s32.totalorder %s23, %s26
    %p32 = scmp.eq.s32.totalorder %s13, 0
    %p33 = por %p31, %p32
    %p34 = scmp.ne.s32.totalorder %s23, %s26
    %p35 = scmp.eq.s32.totalorder %s18, 1
    %p36 = por %p34, %p35
    %p37 = scmp.ne.s32.totalorder %s26, %s27
    %p38 = scmp.eq.s32.totalorder %s18, 0
    %p39 = por %p37, %p38
    %p40 = scmp.ne.s32.totalorder %s26, %s27
    %p41 = scmp.eq.s32.totalorder %s19, 1
    %p42 = por %p40, %p41
    %p44 = scmp.ne.s32.totalorder %s27, %s43
    %p45 = scmp.eq.s32.totalorder %s19, 0
    %p46 = por %p44, %p45
    %s48 = sadd.s32 %s47, 1
    %p51 = scmp.eq.s32.totalorder %s13, 1
    %p52 = scmp.ne.s32.totalorder %s47, %s49
    %p53 = scmp.eq.s32.totalorder %s13, 0
    %p54 = por %p52, %p53
    %p55 = scmp.ne.s32.totalorder %s47, %s49
    %p56 = scmp.eq.s32.totalorder %s18, 1
    %p57 = por %p55, %p56
    %p58 = scmp.ne.s32.totalorder %s49, %s50
    %p59 = scmp.eq.s32.totalorder %s18, 0
    %p60 = por %p58, %p59
    %p61 = scmp.ne.s32.totalorder %s49, %s50
    %p62 = scmp.eq.s32.totalorder %s19, 1
    %p63 = por %p61, %p62
    %p65 = scmp.ne.s32.totalorder %s50, %s64
    %p66 = scmp.eq.s32.totalorder %s19, 0
    %p67 = por %p65, %p66
    %s69 = sadd.s32 %s68, 1
    %p72 = scmp.eq.s32.totalorder %s13, 1
    %p73 = scmp.ne.s32.totalorder %s68, %s70
    %p74 = scmp.eq.s32.totalorder %s13, 0
    %p75 = por %p73, %p74
    %p76 = scmp.ne.s32.totalorder %s68, %s70
    %p77 = scmp.eq.s32.totalorder %s18, 1
    %p78 = por %p76, %p77
    %p79 = scmp.ne.s32.totalorder %s70, %s71
    %p80 = scmp.eq.s32.totalorder %s18, 0
    %p81 = por %p79, %p80
    %p82 = scmp.ne.s32.totalorder %s70, %s71
    %p83 = scmp.eq.s32.totalorder %s19, 1
    %p84 = por %p82, %p83
    %p86 = scmp.ne.s32.totalorder %s71, %s85
    %p87 = scmp.eq.s32.totalorder %s19, 0
    %p88 = por %p86, %p87
    %s90 = sadd.s32 %s89, 1
    %p93 = scmp.eq.s32.totalorder %s13, 1
    %p94 = scmp.ne.s32.totalorder %s89, %s91
    %p95 = scmp.eq.s32.totalorder %s13, 0
    %p96 = por %p94, %p95
    %p97 = scmp.ne.s32.totalorder %s89, %s91
    %p98 = scmp.eq.s32.totalorder %s18, 1
    %p99 = por %p97, %p98
    %p100 = scmp.ne.s32.totalorder %s91, %s92
    %p101 = scmp.eq.s32.totalorder %s18, 0
    %p102 = por %p100, %p101
    %p103 = scmp.ne.s32.totalorder %s91, %s92
    %p104 = scmp.eq.s32.totalorder %s19, 1
    %p105 = por %p103, %p104
    %p107 = scmp.ne.s32.totalorder %s92, %s106
    %p108 = scmp.eq.s32.totalorder %s19, 0
    %p109 = por %p107, %p108
    %s111 = sadd.s32 %s110, 1
    %p114 = scmp.eq.s32.totalorder %s13, 1
    %p115 = scmp.ne.s32.totalorder %s110, %s112
    %p116 = scmp.eq.s32.totalorder %s13, 0
    %p117 = por %p115, %p116
    %p118 = scmp.ne.s32.totalorder %s110, %s112
    %p119 = scmp.eq.s32.totalorder %s18, 1
    %p120 = por %p118, %p119
    %p121 = scmp.ne.s32.totalorder %s112, %s113
    %p122 = scmp.eq.s32.totalorder %s18, 0
    %p123 = por %p121, %p122
    %p124 = scmp.ne.s32.totalorder %s112, %s113
    %p125 = scmp.eq.s32.totalorder %s19, 1
    %p126 = por %p124, %p125
    %p128 = scmp.ne.s32.totalorder %s113, %s127
    %p129 = scmp.eq.s32.totalorder %s19, 0
    %p130 = por %p128, %p129
    %s132 = sadd.s32 %s131, 1
    %p135 = scmp.eq.s32.totalorder %s13, 1
    %p136 = scmp.ne.s32.totalorder %s131, %s133
    %p137 = scmp.eq.s32.totalorder %s13, 0
    %p138 = por %p136, %p137
    %p139 = scmp.ne.s32.totalorder %s131, %s133
    %p140 = scmp.eq.s32.totalorder %s18, 1
    %p141 = por %p139, %p140
    %p142 = scmp.ne.s32.totalorder %s133, %s134
    %p143 = scmp.eq.s32.totalorder %s18, 0
    %p144 = por %p142, %p143
    %p145 = scmp.ne.s32.totalorder %s133, %s134
    %p146 = scmp.eq.s32.totalorder %s19, 1
    %p147 = por %p145, %p146
    %p149 = scmp.ne.s32.totalorder %s134, %s148
    %p150 = scmp.eq.s32.totalorder %s19, 0
    %p151 = por %p149, %p150
    %s153 = sadd.s32 %s152, 1
    %p156 = scmp.eq.s32.totalorder %s13, 1
    %p157 = scmp.ne.s32.totalorder %s152, %s154
    %p158 = scmp.eq.s32.totalorder %s13, 0
    %p159 = por %p157, %p158
    %p160 = scmp.ne.s32.totalorder %s152, %s154
    %p161 = scmp.eq.s32.totalorder %s18, 1
    %p162 = por %p160, %p161
    %p163 = scmp.ne.s32.totalorder %s154, %s155
    %p164 = scmp.eq.s32.totalorder %s18, 0
    %p165 = por %p163, %p164
    %p166 = scmp.ne.s32.totalorder %s154, %s155
    %p167 = scmp.eq.s32.totalorder %s19, 1
    %p168 = por %p166, %p167
    %p170 = scmp.ne.s32.totalorder %s155, %s169
    %p171 = scmp.eq.s32.totalorder %s19, 0
    %p172 = por %p170, %p171
    %s173 = ssub.s32 %s13, %s20
    %p174 = scmp.eq.s32.totalorder %s173, 0
    %s176 = sadd.s32 %s175, 1
    %s177 = scalar_select %p174, %s175, %s176
    %p180 = pneg %p174
    %p181 = scmp.eq.s32.totalorder %s13, 1
    %p182 = por %p180, %p181
    %p183 = scmp.ne.s32.totalorder %s175, %s178
    %p184 = scmp.eq.s32.totalorder %s13, 0
    %p185 = por %p183, %p184
    %p186 = scmp.ne.s32.totalorder %s175, %s178
    %p187 = scmp.eq.s32.totalorder %s18, 1
    %p188 = por %p186, %p187
    %p189 = scmp.ne.s32.totalorder %s178, %s179
    %p190 = scmp.eq.s32.totalorder %s18, 0
    %p191 = por %p189, %p190
    %p192 = scmp.ne.s32.totalorder %s178, %s179
    %p193 = scmp.eq.s32.totalorder %s19, 1
    %p194 = por %p192, %p193
    %p196 = scmp.ne.s32.totalorder %s179, %s195
    %p197 = scmp.eq.s32.totalorder %s19, 0
    %p198 = por %p196, %p197
    %p199 = scmp.le.s32.totalorder 1, %s13
    %p200 = scmp.lt.s32.totalorder %s13, 3
    %p201 = pnand %p199, %p200
    %p202 = pneg %p201
    // Predicated region
    $region9: #{inverted_residual_forward.1} parent=5 // pred_check
      _
    $region10: #{inverted_residual_forward.1} parent=5 // pred_check_branch
      %204 = sbr.rel (%p201) target = $region12
    $region11: #{inverted_residual_forward.1} parent=5 // pred_region
      %s205 = ssub.s32 %s13, 1
      // Predicated region
      $region13: #{inverted_residual_forward.1} parent=11 // pred_check
        %p206 = pneg %p60
      $region14: #{inverted_residual_forward.1} parent=11 // pred_check_branch
        %208 = sbr.rel (%p206) target = $region16
      $region15: #{inverted_residual_forward.1} parent=11 // pred_region
        _
      $region16: #{inverted_residual_forward.1} parent=11 // pred_fallthru
        _
      // Predicated region
      $region17: #{inverted_residual_forward.1} parent=11 // pred_check
        %p209 = pneg %p81
      $region18: #{inverted_residual_forward.1} parent=11 // pred_check_branch
        %211 = sbr.rel (%p209) target = $region20
      $region19: #{inverted_residual_forward.1} parent=11 // pred_region
        _
      $region20: #{inverted_residual_forward.1} parent=11 // pred_fallthru
        _
      // Predicated region
      $region21: #{inverted_residual_forward.1} parent=11 // pred_check
        %p212 = pneg %p102
      $region22: #{inverted_residual_forward.1} parent=11 // pred_check_branch
        %214 = sbr.rel (%p212) target = $region24
      $region23: #{inverted_residual_forward.1} parent=11 // pred_region
        _
      $region24: #{inverted_residual_forward.1} parent=11 // pred_fallthru
        _
      // Predicated region
      $region25: #{inverted_residual_forward.1} parent=11 // pred_check
        %p215 = pneg %p123
      $region26: #{inverted_residual_forward.1} parent=11 // pred_check_branch
        %217 = sbr.rel (%p215) target = $region28
      $region27: #{inverted_residual_forward.1} parent=11 // pred_region
        _
      $region28: #{inverted_residual_forward.1} parent=11 // pred_fallthru
        _
      // Predicated region
      $region29: #{inverted_residual_forward.1} parent=11 // pred_check
        %p218 = pneg %p144
      $region30: #{inverted_residual_forward.1} parent=11 // pred_check_branch
        %220 = sbr.rel (%p218) target = $region32
      $region31: #{inverted_residual_forward.1} parent=11 // pred_region
        _
      $region32: #{inverted_residual_forward.1} parent=11 // pred_fallthru
        _
      // Predicated region
      $region33: #{inverted_residual_forward.1} parent=11 // pred_check
        %p221 = pneg %p165
      $region34: #{inverted_residual_forward.1} parent=11 // pred_check_branch
        %223 = sbr.rel (%p221) target = $region36
      $region35: #{inverted_residual_forward.1} parent=11 // pred_region
        _
      $region36: #{inverted_residual_forward.1} parent=11 // pred_fallthru
        _
    $region12: #{inverted_residual_forward.1} parent=5 // pred_fallthru
      _
    %p224 = scmp.lt.s32.totalorder %s13, 2
    // Predicated region
    $region37: #{inverted_residual_forward.1} parent=5 // pred_check
      %p225 = pneg %p224
    $region38: #{inverted_residual_forward.1} parent=5 // pred_check_branch
      %227 = sbr.rel (%p225) target = $region40
    $region39: #{inverted_residual_forward.1} parent=5 // pred_region
      // Predicated region
      $region41: #{inverted_residual_forward.1} parent=39 // pred_check
        %p228 = pneg %p33
      $region42: #{inverted_residual_forward.1} parent=39 // pred_check_branch
        %230 = sbr.rel (%p228) target = $region44
      $region43: #{inverted_residual_forward.1} parent=39 // pred_region
        %p231 = scmp.lt.s32.totalorder %s13, 1
        %s232 = scalar_select %p231, %s13, 1
        %s233 = smul.addr %s232, 2
        %s234 = smul.addr %s233, 8
        %s235 = scalar_lea.vmem %s0, %s234
      $region44: #{inverted_residual_forward.1} parent=39 // pred_fallthru
        _
    $region40: #{inverted_residual_forward.1} parent=5 // pred_fallthru
      _
    %p236 = scmp.le.s32.totalorder 1, %s13
    %p237 = scmp.lt.s32.totalorder %s13, 3
    %p238 = pnand %p236, %p237
    %p239 = pneg %p238
    // Predicated region
    $region45: #{inverted_residual_forward.1} parent=5 // pred_check
      _
    $region46: #{inverted_residual_forward.1} parent=5 // pred_check_branch
      %241 = sbr.rel (%p238) target = $region48
    $region47: #{inverted_residual_forward.1} parent=5 // pred_region
      %s242 = ssub.s32 %s13, 1
      %p243 = scmp.lt.s32.totalorder %s18, 1
      %s244 = scalar_select %p243, %s18, 1
      %s245 = smul.addr %s244, 2
      %s246 = smul.addr %s245, 8
      %s247 = scalar_lea.vmem %s0, %s246
      %p248 = pneg %p39
      %p249 = pneg %p36
      %p250 = pneg %p60
      %p251 = pneg %p57
      %p252 = pneg %p81
      %p253 = pneg %p78
      %p254 = pneg %p102
      %p255 = pneg %p99
      %p256 = pneg %p123
      %p257 = pneg %p120
      %p258 = pneg %p144
      %p259 = pneg %p141
      %p260 = pneg %p165
      %p261 = pneg %p162
      %p262 = pneg %p191
      %p263 = pneg %p188
      %p264 = scmp.lt.s32.totalorder %s18, 1
      %s265 = scalar_select %p264, %s18, 1
      %s266 = smul.addr %s265, 8
      %s267 = smul.addr %s266, 2
      %s268 = scalar_lea.vmem %s7, %s267
      %p269 = scmp.lt.s32.totalorder %s18, 1
      %s270 = scalar_select %p269, %s18, 1
      %s271 = smul.addr %s270, 2
      %s272 = smul.addr %s271, 8
      %s273 = scalar_lea.vmem %s0, %s272
      %p274 = scmp.lt.s32.totalorder %s18, 1
      %s275 = scalar_select %p274, %s18, 1
      %s276 = smul.addr %s275, 8
      %s277 = smul.addr %s276, 2
      %s278 = scalar_lea.vmem %s7, %s277
      %v279 = vld [vmem:[%s273] sm:$0xf]
      %v280 = vld [vmem:[%s273 + $0x8] sm:$0xf]
      %v283 = vcombine.low %v279, %v280
      %v285 = vunpack.c.l.s4 1966171168
      %v286 = vunpack.c.0.s8 %v285
      %v287 = vlaneseq
      %v288 = vshrl.u32 %v287, 7
      %v289 = vsub.s32 %v286, %v288
      %v290 = vrot.slane %v283, %v289
      %v291 = vcombine.high %v290, %v290
      %v293 = vunpack.c.l.s4 1966171168
      %v294 = vunpack.c.0.s8 %v293
      %v295 = vlaneseq
      %v296 = vshrl.u32 %v295, 7
      %v297 = vsub.s32 %v294, %v296
      %v298 = vrot.slane %v290, %v297
      %v300 = vunpack.c.l.s4 1966171168
      %v301 = vunpack.c.0.s8 %v300
      %v302 = vlaneseq
      %v303 = vshrl.u32 %v302, 7
      %v304 = vsub.s32 %v301, %v303
      %v305 = vrot.slane %v291, %v304
      %v306 = vcombine.high %v298, %v298
      %v307 = vcombine.high %v305, %v305
      %v312 = vlaneseq
      %vm313 = vcmp.ge.s32.totalorder %v312, 0
      %vm314 = vcmp.lt.s32.totalorder %v312, 256
      %vm315 = vmand %vm313, %vm314
      %316 = vst.msk [vmem:[%s278] ss:$2 sm:$0x3] %vm315, %v298
      %s317 = scalar_lea.vmem %s278, 4
      %318 = vst.msk [vmem:[%s317] ss:$2 sm:$0x3] %vm315, %v305
      %s319 = scalar_lea.vmem %s278, 8
      %320 = vst.msk [vmem:[%s319] ss:$2 sm:$0x3] %vm315, %v306
      %s321 = scalar_lea.vmem %s278, 12
      %322 = vst.msk [vmem:[%s321] ss:$2 sm:$0x3] %vm315, %v307
      %v323 = vld [vmem:[%s273] sm:$0xf0]
      %v324 = vld [vmem:[%s273 + $0x8] sm:$0xf0]
      %v327 = vrot.slane %v323, 4
      %v328 = vrot.slane %v324, 4
      %331 = vxpose.xlu0.b32.start [1/16] %v327, 128
      %332 = vxpose.xlu0.b32.cont [2/16] 0.0, 128
      %333 = vxpose.xlu0.b32.cont [3/16] 0.0, 128
      %334 = vxpose.xlu0.b32.cont [4/16] 0.0, 128
      %335 = vxpose.xlu0.b32.cont [5/16] 0.0, 128
      %336 = vxpose.xlu0.b32.cont [6/16] 0.0, 128
      %337 = vxpose.xlu0.b32.cont [7/16] 0.0, 128
      %338 = vxpose.xlu0.b32.cont [8/16] 0.0, 128
      %339 = vxpose.xlu0.b32.cont [9/16] 0.0, 128
      %340 = vxpose.xlu0.b32.cont [10/16] 0.0, 128
      %341 = vxpose.xlu0.b32.cont [11/16] 0.0, 128
      %342 = vxpose.xlu0.b32.cont [12/16] 0.0, 128
      %343 = vxpose.xlu0.b32.cont [13/16] 0.0, 128
      %344 = vxpose.xlu0.b32.cont [14/16] 0.0, 128
      %345 = vxpose.xlu0.b32.cont [15/16] 0.0, 128
      %346 = vxpose.xlu0.b32.end [16/16] 0.0, 128
      %v347 = vpop.trf.xlu0
      %v348 = vpop.trf.xlu0
      %v349 = vpop.trf.xlu0
      %v350 = vpop.trf.xlu0
      %v351 = vpop.trf.xlu0
      %v352 = vpop.trf.xlu0
      %v353 = vpop.trf.xlu0
      %v354 = vpop.trf.xlu0
      %v355 = vpop.trf.xlu0
      %v356 = vpop.trf.xlu0
      %v357 = vpop.trf.xlu0
      %v358 = vpop.trf.xlu0
      %v359 = vpop.trf.xlu0
      %v360 = vpop.trf.xlu0
      %v361 = vpop.trf.xlu0
      %v362 = vpop.trf.xlu0
      %363 = vxpose.xlu0.b32.start [1/16] %v328, 128
      %364 = vxpose.xlu0.b32.cont [2/16] 0.0, 128
      %365 = vxpose.xlu0.b32.cont [3/16] 0.0, 128
      %366 = vxpose.xlu0.b32.cont [4/16] 0.0, 128
      %367 = vxpose.xlu0.b32.cont [5/16] 0.0, 128
      %368 = vxpose.xlu0.b32.cont [6/16] 0.0, 128
      %369 = vxpose.xlu0.b32.cont [7/16] 0.0, 128
      %370 = vxpose.xlu0.b32.cont [8/16] 0.0, 128
      %371 = vxpose.xlu0.b32.cont [9/16] 0.0, 128
      %372 = vxpose.xlu0.b32.cont [10/16] 0.0, 128
      %373 = vxpose.xlu0.b32.cont [11/16] 0.0, 128
      %374 = vxpose.xlu0.b32.cont [12/16] 0.0, 128
      %375 = vxpose.xlu0.b32.cont [13/16] 0.0, 128
      %376 = vxpose.xlu0.b32.cont [14/16] 0.0, 128
      %377 = vxpose.xlu0.b32.cont [15/16] 0.0, 128
      %378 = vxpose.xlu0.b32.end [16/16] 0.0, 128
      %v379 = vpop.trf.xlu0
      %v380 = vpop.trf.xlu0
      %v381 = vpop.trf.xlu0
      %v382 = vpop.trf.xlu0
      %v383 = vpop.trf.xlu0
      %v384 = vpop.trf.xlu0
      %v385 = vpop.trf.xlu0
      %v386 = vpop.trf.xlu0
      %v387 = vpop.trf.xlu0
      %v388 = vpop.trf.xlu0
      %v389 = vpop.trf.xlu0
      %v390 = vpop.trf.xlu0
      %v391 = vpop.trf.xlu0
      %v392 = vpop.trf.xlu0
      %v393 = vpop.trf.xlu0
      %v394 = vpop.trf.xlu0
      %v395 = vld [vmem:[%s1] sm:$0xf]
      %v396 = vld [vmem:[%s2] sm:$0x1]
      %v398 = vlaneseq
      %v399 = vshrl.u32 %v398, 7
      %v400 = vsub.s32 0, %v399
      %v401 = vrot.slane %v396, %v400
      %vm403 = vcmask 31744
      %v405 = vsel %vm403, %v347, 0
      %v408 = vsel %vm403, %v348, 0
      %v411 = vsel %vm403, %v349, 0
      %v414 = vsel %vm403, %v350, 0
      %v417 = vsel %vm403, %v351, 0
      %v420 = vsel %vm403, %v352, 0
      %v423 = vsel %vm403, %v353, 0
      %v426 = vsel %vm403, %v354, 0
      %v429 = vsel %vm403, %v355, 0
      %v432 = vsel %vm403, %v356, 0
      %v435 = vsel %vm403, %v357, 0
      %v438 = vsel %vm403, %v358, 0
      %v441 = vsel %vm403, %v359, 0
      %v444 = vsel %vm403, %v360, 0
      %v447 = vsel %vm403, %v361, 0
      %v450 = vsel %vm403, %v362, 0
      %v453 = vsel %vm403, %v379, 0
      %v456 = vsel %vm403, %v380, 0
      %v459 = vsel %vm403, %v381, 0
      %v462 = vsel %vm403, %v382, 0
      %v465 = vsel %vm403, %v383, 0
      %v468 = vsel %vm403, %v384, 0
      %v471 = vsel %vm403, %v385, 0
      %v474 = vsel %vm403, %v386, 0
      %v477 = vsel %vm403, %v387, 0
      %v480 = vsel %vm403, %v388, 0
      %v483 = vsel %vm403, %v389, 0
      %v486 = vsel %vm403, %v390, 0
      %v489 = vsel %vm403, %v391, 0
      %v492 = vsel %vm403, %v392, 0
      %v495 = vsel %vm403, %v393, 0
      %v498 = vsel %vm403, %v394, 0
      %vm500 = vcmask 1043456
      %v502 = vsel %vm500, %v395, 0
      %504 = vmatprep.subr.mxu0 0.0
      %v505 = vand.u32 %v502, 4294901760
      %506 = vmatpush1.msra.mxu0 %v505
      %507 = vmatprep.subr.mxu0 0.0
      %508 = vmatpush1.msra.mxu0 0.0
      %509 = vmatprep.subr.mxu0 0.0
      %510 = vmatpush1.msra.mxu0 0.0
      %511 = vmatprep.subr.mxu0 0.0
      %512 = vmatpush1.msra.mxu0 0.0
      %513 = vmatprep.subr.mxu0 0.0
      %514 = vmatpush1.msra.mxu0 0.0
      %515 = vmatprep.subr.mxu0 0.0
      %516 = vmatpush1.msra.mxu0 0.0
      %517 = vmatprep.subr.mxu0 0.0
      %518 = vmatpush1.msra.mxu0 0.0
      %519 = vmatprep.subr.mxu0 0.0
      %520 = vmatpush1.msra.mxu0 0.0
      %521 = vmatprep.subr.mxu0 0.0
      %522 = vmatpush1.msra.mxu0 0.0
      %523 = vmatprep.subr.mxu0 0.0
      %524 = vmatpush1.msra.mxu0 0.0
      %525 = vmatprep.subr.mxu0 0.0
      %526 = vmatpush1.msra.mxu0 0.0
      %527 = vmatprep.subr.mxu0 0.0
      %528 = vmatpush1.msra.mxu0 0.0
      %529 = vmatprep.subr.mxu0 0.0
      %530 = vmatpush1.msra.mxu0 0.0
      %531 = vmatprep.subr.mxu0 0.0
      %532 = vmatpush1.msra.mxu0 0.0
      %533 = vmatprep.subr.mxu0 0.0
      %534 = vmatpush1.msra.mxu0 0.0
      %535 = vmatprep.subr.mxu0 0.0
      %536 = vmatpush1.msra.mxu0 0.0
      %537 = vmatprep.subr.mxu0 0.0
      %538 = vmatpush1.msra.mxu0 0.0
      %539 = vmatprep.subr.mxu0 0.0
      %540 = vmatpush1.msra.mxu0 0.0
      %541 = vmatprep.subr.mxu0 0.0
      %542 = vmatpush1.msra.mxu0 0.0
      %543 = vmatprep.subr.mxu0 0.0
      %544 = vmatpush1.msra.mxu0 0.0
      %545 = vmatprep.subr.mxu0 0.0
      %546 = vmatpush1.msra.mxu0 0.0
      %547 = vmatprep.subr.mxu0 0.0
      %548 = vmatpush1.msra.mxu0 0.0
      %549 = vmatprep.subr.mxu0 0.0
      %550 = vmatpush1.msra.mxu0 0.0
      %551 = vmatprep.subr.mxu0 0.0
      %552 = vmatpush1.msra.mxu0 0.0
      %553 = vmatprep.subr.mxu0 0.0
      %554 = vmatpush1.msra.mxu0 0.0
      %555 = vmatprep.subr.mxu0 0.0
      %556 = vmatpush1.msra.mxu0 0.0
      %557 = vmatprep.subr.mxu0 0.0
      %558 = vmatpush1.msra.mxu0 0.0
      %559 = vmatprep.subr.mxu0 0.0
      %560 = vmatpush1.msra.mxu0 0.0
      %561 = vmatprep.subr.mxu0 0.0
      %562 = vmatpush1.msra.mxu0 0.0
      %563 = vmatprep.subr.mxu0 0.0
      %564 = vmatpush1.msra.mxu0 0.0
      %565 = vmatprep.subr.mxu0 0.0
      %566 = vmatpush1.msra.mxu0 0.0
      %567 = vmatprep.subr.mxu0 0.0
      %568 = vmatpush1.msra.mxu0 0.0
      %569 = vmatprep.mubr.f32.mxu0 0.0
      %v570 = vand.u32 %v405, 4294901760
      %v571 = vsub.f32 %v405, %v570
      %v572 = vand.u32 %v571, 4294901760
      %v573 = vsub.f32 %v571, %v572
      %v574 = vand.u32 %v573, 4294901760
      %575 = vmatmul.mubr.f32.gmra.mrb[0].mxu0 %v574
      %v576 = vpop.f32.mrb[0].mxu0
      %v577 = vadd.f32 %v401, %v576
      %v578 = vpop.f32.mrb[0].mxu0
      %579 = vmatprep.mubr.f32.mxu0 0.0
      %v580 = vand.u32 %v408, 4294901760
      %v581 = vsub.f32 %v408, %v580
      %v582 = vand.u32 %v581, 4294901760
      %v583 = vsub.f32 %v581, %v582
      %v584 = vand.u32 %v583, 4294901760
      %585 = vmatmul.mubr.f32.gmra.mrb[0].mxu0 %v584
      %v586 = vpop.f32.mrb[0].mxu0
      %v587 = vadd.f32 %v401, %v586
      %v588 = vpop.f32.mrb[0].mxu0
      %589 = vmatprep.mubr.f32.mxu0 0.0
      %v590 = vand.u32 %v411, 4294901760
      %v591 = vsub.f32 %v411, %v590
      %v592 = vand.u32 %v591, 4294901760
      %v593 = vsub.f32 %v591, %v592
      %v594 = vand.u32 %v593, 4294901760
      %595 = vmatmul.mubr.f32.gmra.mrb[0].mxu0 %v594
      %v596 = vpop.f32.mrb[0].mxu0
      %v597 = vadd.f32 %v401, %v596
      %v598 = vpop.f32.mrb[0].mxu0
      %599 = vmatprep.mubr.f32.mxu0 0.0
      %v600 = vand.u32 %v414, 4294901760
      %v601 = vsub.f32 %v414, %v600
      %v602 = vand.u32 %v601, 4294901760
      %v603 = vsub.f32 %v601, %v602
      %v604 = vand.u32 %v603, 4294901760
      %605 = vmatmul.mubr.f32.gmra.mrb[0].mxu0 %v604
      %v606 = vpop.f32.mrb[0].mxu0
      %v607 = vadd.f32 %v401, %v606
      %v608 = vpop.f32.mrb[0].mxu0
      %609 = vmatprep.mubr.f32.mxu0 0.0
      %v610 = vand.u32 %v417, 4294901760
      %v611 = vsub.f32 %v417, %v610
      %v612 = vand.u32 %v611, 4294901760
      %v613 = vsub.f32 %v611, %v612
      %v614 = vand.u32 %v613, 4294901760
      %615 = vmatmul.mubr.f32.gmra.mrb[0].mxu0 %v614
      %v616 = vpop.f32.mrb[0].mxu0
      %v617 = vadd.f32 %v401, %v616
      %v618 = vpop.f32.mrb[0].mxu0
      %619 = vmatprep.mubr.f32.mxu0 0.0
      %v620 = vand.u32 %v420, 4294901760
      %v621 = vsub.f32 %v420, %v620
      %v622 = vand.u32 %v621, 4294901760
      %v623 = vsub.f32 %v621, %v622
      %v624 = vand.u32 %v623, 4294901760
      %625 = vmatmul.mubr.f32.gmra.mrb[0].mxu0 %v624
      %v626 = vpop.f32.mrb[0].mxu0
      %v627 = vadd.f32 %v401, %v626
      %v628 = vpop.f32.mrb[0].mxu0
      %629 = vmatprep.mubr.f32.mxu0 0.0
      %v630 = vand.u32 %v423, 4294901760
      %v631 = vsub.f32 %v423, %v630
      %v632 = vand.u32 %v631, 4294901760
      %v633 = vsub.f32 %v631, %v632
      %v634 = vand.u32 %v633, 4294901760
      %635 = vmatmul.mubr.f32.gmra.mrb[0].mxu0 %v634
      %v636 = vpop.f32.mrb[0].mxu0
      %v637 = vadd.f32 %v401, %v636
      %v638 = vpop.f32.mrb[0].mxu0
      %639 = vmatprep.mubr.f32.mxu0 0.0
      %v640 = vand.u32 %v426, 4294901760
      %v641 = vsub.f32 %v426, %v640
      %v642 = vand.u32 %v641, 4294901760
      %v643 = vsub.f32 %v641, %v642
      %v644 = vand.u32 %v643, 4294901760
      %645 = vmatmul.mubr.f32.gmra.mrb[0].mxu0 %v644
      %v646 = vpop.f32.mrb[0].mxu0
      %v647 = vadd.f32 %v401, %v646
      %v648 = vpop.f32.mrb[0].mxu0
      %649 = vmatprep.mubr.f32.mxu0 0.0
      %v650 = vand.u32 %v429, 4294901760
      %v651 = vsub.f32 %v429, %v650
      %v652 = vand.u32 %v651, 4294901760
      %v653 = vsub.f32 %v651, %v652
      %v654 = vand.u32 %v653, 4294901760
      %655 = vmatmul.mubr.f32.gmra.mrb[0].mxu0 %v654
      %v656 = vpop.f32.mrb[0].mxu0
      %v657 = vadd.f32 %v401, %v656
      %v658 = vpop.f32.mrb[0].mxu0
      %659 = vmatprep.mubr.f32.mxu0 0.0
      %v660 = vand.u32 %v432, 4294901760
      %v661 = vsub.f32 %v432, %v660
      %v662 = vand.u32 %v661, 4294901760
      %v663 = vsub.f32 %v661, %v662
      %v664 = vand.u32 %v663, 4294901760
      %665 = vmatmul.mubr.f32.gmra.mrb[0].mxu0 %v664
      %v666 = vpop.f32.mrb[0].mxu0
      %v667 = vadd.f32 %v401, %v666
      %v668 = vpop.f32.mrb[0].mxu0
      %669 = vmatprep.mubr.f32.mxu0 0.0
      %v670 = vand.u32 %v435, 4294901760
      %v671 = vsub.f32 %v435, %v670
      %v672 = vand.u32 %v671, 4294901760
      %v673 = vsub.f32 %v671, %v672
      %v674 = vand.u32 %v673, 4294901760
      %675 = vmatmul.mubr.f32.gmra.mrb[0].mxu0 %v674
      %v676 = vpop.f32.mrb[0].mxu0
      %v677 = vadd.f32 %v401, %v676
      %v678 = vpop.f32.mrb[0].mxu0
      %679 = vmatprep.mubr.f32.mxu0 0.0
      %v680 = vand.u32 %v438, 4294901760
      %v681 = vsub.f32 %v438, %v680
      %v682 = vand.u32 %v681, 4294901760
      %v683 = vsub.f32 %v681, %v682
      %v684 = vand.u32 %v683, 4294901760
      %685 = vmatmul.mubr.f32.gmra.mrb[0].mxu0 %v684
      %v686 = vpop.f32.mrb[0].mxu0
      %v687 = vadd.f32 %v401, %v686
      %v688 = vpop.f32.mrb[0].mxu0
      %689 = vmatprep.mubr.f32.mxu0 0.0
      %v690 = vand.u32 %v441, 4294901760
      %v691 = vsub.f32 %v441, %v690
      %v692 = vand.u32 %v691, 4294901760
      %v693 = vsub.f32 %v691, %v692
      %v694 = vand.u32 %v693, 4294901760
      %695 = vmatmul.mubr.f32.gmra.mrb[0].mxu0 %v694
      %v696 = vpop.f32.mrb[0].mxu0
      %v697 = vadd.f32 %v401, %v696
      %v698 = vpop.f32.mrb[0].mxu0
      %699 = vmatprep.mubr.f32.mxu0 0.0
      %v700 = vand.u32 %v444, 4294901760
      %v701 = vsub.f32 %v444, %v700
      %v702 = vand.u32 %v701, 4294901760
      %v703 = vsub.f32 %v701, %v702
      %v704 = vand.u32 %v703, 4294901760
      %705 = vmatmul.mubr.f32.gmra.mrb[0].mxu0 %v704
      %v706 = vpop.f32.mrb[0].mxu0
      %v707 = vadd.f32 %v401, %v706
      %v708 = vpop.f32.mrb[0].mxu0
      %709 = vmatprep.mubr.f32.mxu0 0.0
      %v710 = vand.u32 %v447, 4294901760
      %v711 = vsub.f32 %v447, %v710
      %v712 = vand.u32 %v711, 4294901760
      %v713 = vsub.f32 %v711, %v712
      %v714 = vand.u32 %v713, 4294901760
      %715 = vmatmul.mubr.f32.gmra.mrb[0].mxu0 %v714
      %v716 = vpop.f32.mrb[0].mxu0
      %v717 = vadd.f32 %v401, %v716
      %v718 = vpop.f32.mrb[0].mxu0
      %719 = vmatprep.mubr.f32.mxu0 0.0
      %v720 = vand.u32 %v450, 4294901760
      %v721 = vsub.f32 %v450, %v720
      %v722 = vand.u32 %v721, 4294901760
      %v723 = vsub.f32 %v721, %v722
      %v724 = vand.u32 %v723, 4294901760
      %725 = vmatmul.mubr.f32.gmra.mrb[0].mxu0 %v724
      %v726 = vpop.f32.mrb[0].mxu0
      %v727 = vadd.f32 %v401, %v726
      %v728 = vpop.f32.mrb[0].mxu0
      %729 = vmatprep.mubr.f32.mxu0 0.0
      %v730 = vand.u32 %v453, 4294901760
      %v731 = vsub.f32 %v453, %v730
      %v732 = vand.u32 %v731, 4294901760
      %v733 = vsub.f32 %v731, %v732
      %v734 = vand.u32 %v733, 4294901760
      %735 = vmatmul.mubr.f32.gmra.mrb[0].mxu0 %v734
      %v736 = vpop.f32.mrb[0].mxu0
      %v737 = vadd.f32 %v401, %v736
      %v738 = vpop.f32.mrb[0].mxu0
      %739 = vmatprep.mubr.f32.mxu0 0.0
      %v740 = vand.u32 %v456, 4294901760
      %v741 = vsub.f32 %v456, %v740
      %v742 = vand.u32 %v741, 4294901760
      %v743 = vsub.f32 %v741, %v742
      %v744 = vand.u32 %v743, 4294901760
      %745 = vmatmul.mubr.f32.gmra.mrb[0].mxu0 %v744
      %v746 = vpop.f32.mrb[0].mxu0
      %v747 = vadd.f32 %v401, %v746
      %v748 = vpop.f32.mrb[0].mxu0
      %749 = vmatprep.mubr.f32.mxu0 0.0
      %v750 = vand.u32 %v459, 4294901760
      %v751 = vsub.f32 %v459, %v750
      %v752 = vand.u32 %v751, 4294901760
      %v753 = vsub.f32 %v751, %v752
      %v754 = vand.u32 %v753, 4294901760
      %755 = vmatmul.mubr.f32.gmra.mrb[0].mxu0 %v754
      %v756 = vpop.f32.mrb[0].mxu0
      %v757 = vadd.f32 %v401, %v756
      %v758 = vpop.f32.mrb[0].mxu0
      %759 = vmatprep.mubr.f32.mxu0 0.0
      %v760 = vand.u32 %v462, 4294901760
      %v761 = vsub.f32 %v462, %v760
      %v762 = vand.u32 %v761, 4294901760
      %v763 = vsub.f32 %v761, %v762
      %v764 = vand.u32 %v763, 4294901760
      %765 = vmatmul.mubr.f32.gmra.mrb[0].mxu0 %v764
      %v766 = vpop.f32.mrb[0].mxu0
      %v767 = vadd.f32 %v401, %v766
      %v768 = vpop.f32.mrb[0].mxu0
      %769 = vmatprep.mubr.f32.mxu0 0.0
      %v770 = vand.u32 %v465, 4294901760
      %v771 = vsub.f32 %v465, %v770
      %v772 = vand.u32 %v771, 4294901760
      %v773 = vsub.f32 %v771, %v772
      %v774 = vand.u32 %v773, 4294901760
      %775 = vmatmul.mubr.f32.gmra.mrb[0].mxu0 %v774
      %v776 = vpop.f32.mrb[0].mxu0
      %v777 = vadd.f32 %v401, %v776
      %v778 = vpop.f32.mrb[0].mxu0
      %779 = vmatprep.mubr.f32.mxu0 0.0
      %v780 = vand.u32 %v468, 4294901760
      %v781 = vsub.f32 %v468, %v780
      %v782 = vand.u32 %v781, 4294901760
      %v783 = vsub.f32 %v781, %v782
      %v784 = vand.u32 %v783, 4294901760
      %785 = vmatmul.mubr.f32.gmra.mrb[0].mxu0 %v784
      %v786 = vpop.f32.mrb[0].mxu0
      %v787 = vadd.f32 %v401, %v786
      %v788 = vpop.f32.mrb[0].mxu0
      %789 = vmatprep.mubr.f32.mxu0 0.0
      %v790 = vand.u32 %v471, 4294901760
      %v791 = vsub.f32 %v471, %v790
      %v792 = vand.u32 %v791, 4294901760
      %v793 = vsub.f32 %v791, %v792
      %v794 = vand.u32 %v793, 4294901760
      %795 = vmatmul.mubr.f32.gmra.mrb[0].mxu0 %v794
      %v796 = vpop.f32.mrb[0].mxu0
      %v797 = vadd.f32 %v401, %v796
      %v798 = vpop.f32.mrb[0].mxu0
      %799 = vmatprep.mubr.f32.mxu0 0.0
      %v800 = vand.u32 %v474, 4294901760
      %v801 = vsub.f32 %v474, %v800
      %v802 = vand.u32 %v801, 4294901760
      %v803 = vsub.f32 %v801, %v802
      %v804 = vand.u32 %v803, 4294901760
      %805 = vmatmul.mubr.f32.gmra.mrb[0].mxu0 %v804
      %v806 = vpop.f32.mrb[0].mxu0
      %v807 = vadd.f32 %v401, %v806
      %v808 = vpop.f32.mrb[0].mxu0
      %809 = vmatprep.mubr.f32.mxu0 0.0
      %v810 = vand.u32 %v477, 4294901760
      %v811 = vsub.f32 %v477, %v810
      %v812 = vand.u32 %v811, 4294901760
      %v813 = vsub.f32 %v811, %v812
      %v814 = vand.u32 %v813, 4294901760
      %815 = vmatmul.mubr.f32.gmra.mrb[0].mxu0 %v814
      %v816 = vpop.f32.mrb[0].mxu0
      %v817 = vadd.f32 %v401, %v816
      %v818 = vpop.f32.mrb[0].mxu0
      %819 = vmatprep.mubr.f32.mxu0 0.0
      %v820 = vand.u32 %v480, 4294901760
      %v821 = vsub.f32 %v480, %v820
      %v822 = vand.u32 %v821, 4294901760
      %v823 = vsub.f32 %v821, %v822
      %v824 = vand.u32 %v823, 4294901760
      %825 = vmatmul.mubr.f32.gmra.mrb[0].mxu0 %v824
      %v826 = vpop.f32.mrb[0].mxu0
      %v827 = vadd.f32 %v401, %v826
      %v828 = vpop.f32.mrb[0].mxu0
      %829 = vmatprep.mubr.f32.mxu0 0.0
      %v830 = vand.u32 %v483, 4294901760
      %v831 = vsub.f32 %v483, %v830
      %v832 = vand.u32 %v831, 4294901760
      %v833 = vsub.f32 %v831, %v832
      %v834 = vand.u32 %v833, 4294901760
      %835 = vmatmul.mubr.f32.gmra.mrb[0].mxu0 %v834
      %v836 = vpop.f32.mrb[0].mxu0
      %v837 = vadd.f32 %v401, %v836
      %v838 = vpop.f32.mrb[0].mxu0
      %839 = vmatprep.mubr.f32.mxu0 0.0
      %v840 = vand.u32 %v486, 4294901760
      %v841 = vsub.f32 %v486, %v840
      %v842 = vand.u32 %v841, 4294901760
      %v843 = vsub.f32 %v841, %v842
      %v844 = vand.u32 %v843, 4294901760
      %845 = vmatmul.mubr.f32.gmra.mrb[0].mxu0 %v844
      %v846 = vpop.f32.mrb[0].mxu0
      %v847 = vadd.f32 %v401, %v846
      %v848 = vpop.f32.mrb[0].mxu0
      %849 = vmatprep.mubr.f32.mxu0 0.0
      %v850 = vand.u32 %v489, 4294901760
      %v851 = vsub.f32 %v489, %v850
      %v852 = vand.u32 %v851, 4294901760
      %v853 = vsub.f32 %v851, %v852
      %v854 = vand.u32 %v853, 4294901760
      %855 = vmatmul.mubr.f32.gmra.mrb[0].mxu0 %v854
      %v856 = vpop.f32.mrb[0].mxu0
      %v857 = vadd.f32 %v401, %v856
      %v858 = vpop.f32.mrb[0].mxu0
      %859 = vmatprep.mubr.f32.mxu0 0.0
      %v860 = vand.u32 %v492, 4294901760
      %v861 = vsub.f32 %v492, %v860
      %v862 = vand.u32 %v861, 4294901760
      %v863 = vsub.f32 %v861, %v862
      %v864 = vand.u32 %v863, 4294901760
      %865 = vmatmul.mubr.f32.gmra.mrb[0].mxu0 %v864
      %v866 = vpop.f32.mrb[0].mxu0
      %v867 = vadd.f32 %v401, %v866
      %v868 = vpop.f32.mrb[0].mxu0
      %869 = vmatprep.mubr.f32.mxu0 0.0
      %v870 = vand.u32 %v495, 4294901760
      %v871 = vsub.f32 %v495, %v870
      %v872 = vand.u32 %v871, 4294901760
      %v873 = vsub.f32 %v871, %v872
      %v874 = vand.u32 %v873, 4294901760
      %875 = vmatmul.mubr.f32.gmra.mrb[0].mxu0 %v874
      %v876 = vpop.f32.mrb[0].mxu0
      %v877 = vadd.f32 %v401, %v876
      %v878 = vpop.f32.mrb[0].mxu0
      %879 = vmatprep.mubr.f32.mxu0 0.0
      %v880 = vand.u32 %v498, 4294901760
      %v881 = vsub.f32 %v498, %v880
      %v882 = vand.u32 %v881, 4294901760
      %v883 = vsub.f32 %v881, %v882
      %v884 = vand.u32 %v883, 4294901760
      %885 = vmatmul.mubr.f32.gmra.mrb[0].mxu0 %v884
      %v886 = vpop.f32.mrb[0].mxu0
      %v887 = vadd.f32 %v401, %v886
      %v888 = vpop.f32.mrb[0].mxu0
      %889 = vdwg.mxu0
      %890 = vmatprep.subr.mxu0 0.0
      %v891 = vand.u32 %v502, 4294901760
      %v892 = vsub.f32 %v502, %v891
      %v893 = vand.u32 %v892, 4294901760
      %v894 = vsub.f32 %v892, %v893
      %v895 = vand.u32 %v894, 4294901760
      %896 = vmatpush1.msra.mxu0 %v895
      %897 = vmatprep.subr.mxu0 0.0
      %898 = vmatpush1.msra.mxu0 0.0
      %899 = vmatprep.subr.mxu0 0.0
      %900 = vmatpush1.msra.mxu0 0.0
      %901 = vmatprep.subr.mxu0 0.0
      %902 = vmatpush1.msra.mxu0 0.0
      %903 = vmatprep.subr.mxu0 0.0
      %904 = vmatpush1.msra.mxu0 0.0
      %905 = vmatprep.subr.mxu0 0.0
      %906 = vmatpush1.msra.mxu0 0.0
      %907 = vmatprep.subr.mxu0 0.0
      %908 = vmatpush1.msra.mxu0 0.0
      %909 = vmatprep.subr.mxu0 0.0
      %910 = vmatpush1.msra.mxu0 0.0
      %911 = vmatprep.subr.mxu0 0.0
      %912 = vmatpush1.msra.mxu0 0.0
      %913 = vmatprep.subr.mxu0 0.0
      %914 = vmatpush1.msra.mxu0 0.0
      %915 = vmatprep.subr.mxu0 0.0
      %916 = vmatpush1.msra.mxu0 0.0
      %917 = vmatprep.subr.mxu0 0.0
      %918 = vmatpush1.msra.mxu0 0.0
      %919 = vmatprep.subr.mxu0 0.0
      %920 = vmatpush1.msra.mxu0 0.0
      %921 = vmatprep.subr.mxu0 0.0
      %922 = vmatpush1.msra.mxu0 0.0
      %923 = vmatprep.subr.mxu0 0.0
      %924 = vmatpush1.msra.mxu0 0.0
      %925 = vmatprep.subr.mxu0 0.0
      %926 = vmatpush1.msra.mxu0 0.0
      %927 = vmatprep.subr.mxu0 0.0
      %928 = vmatpush1.msra.mxu0 0.0
      %929 = vmatprep.subr.mxu0 0.0
      %930 = vmatpush1.msra.mxu0 0.0
      %931 = vmatprep.subr.mxu0 0.0
      %932 = vmatpush1.msra.mxu0 0.0
      %933 = vmatprep.subr.mxu0 0.0
      %934 = vmatpush1.msra.mxu0 0.0
      %935 = vmatprep.subr.mxu0 0.0
      %936 = vmatpush1.msra.mxu0 0.0
      %937 = vmatprep.subr.mxu0 0.0
      %938 = vmatpush1.msra.mxu0 0.0
      %939 = vmatprep.subr.mxu0 0.0
      %940 = vmatpush1.msra.mxu0 0.0
      %941 = vmatprep.subr.mxu0 0.0
      %942 = vmatpush1.msra.mxu0 0.0
      %943 = vmatprep.subr.mxu0 0.0
      %944 = vmatpush1.msra.mxu0 0.0
      %945 = vmatprep.subr.mxu0 0.0
      %946 = vmatpush1.msra.mxu0 0.0
      %947 = vmatprep.subr.mxu0 0.0
      %948 = vmatpush1.msra.mxu0 0.0
      %949 = vmatprep.subr.mxu0 0.0
      %950 = vmatpush1.msra.mxu0 0.0
      %951 = vmatprep.subr.mxu0 0.0
      %952 = vmatpush1.msra.mxu0 0.0
      %953 = vmatprep.subr.mxu0 0.0
      %954 = vmatpush1.msra.mxu0 0.0
      %955 = vmatprep.subr.mxu0 0.0
      %956 = vmatpush1.msra.mxu0 0.0
      %957 = vmatprep.subr.mxu0 0.0
      %958 = vmatpush1.msra.mxu0 0.0
      %959 = vmatprep.mubr.f32.mxu0 0.0
      %v960 = vand.u32 %v405, 4294901760
      %961 = vmatmul.mubr.f32.gmra.mrb[0].mxu0 %v960
      %v962 = vpop.f32.mrb[0].mxu0
      %v963 = vadd.f32 %v577, %v962
      %v964 = vpop.f32.mrb[0].mxu0
      %965 = vmatprep.mubr.f32.mxu0 0.0
      %v966 = vand.u32 %v408, 4294901760
      %967 = vmatmul.mubr.f32.gmra.mrb[0].mxu0 %v966
      %v968 = vpop.f32.mrb[0].mxu0
      %v969 = vadd.f32 %v587, %v968
      %v970 = vpop.f32.mrb[0].mxu0
      %971 = vmatprep.mubr.f32.mxu0 0.0
      %v972 = vand.u32 %v411, 4294901760
      %973 = vmatmul.mubr.f32.gmra.mrb[0].mxu0 %v972
      %v974 = vpop.f32.mrb[0].mxu0
      %v975 = vadd.f32 %v597, %v974
      %v976 = vpop.f32.mrb[0].mxu0
      %977 = vmatprep.mubr.f32.mxu0 0.0
      %v978 = vand.u32 %v414, 4294901760
      %979 = vmatmul.mubr.f32.gmra.mrb[0].mxu0 %v978
      %v980 = vpop.f32.mrb[0].mxu0
      %v981 = vadd.f32 %v607, %v980
      %v982 = vpop.f32.mrb[0].mxu0
      %983 = vmatprep.mubr.f32.mxu0 0.0
      %v984 = vand.u32 %v417, 4294901760
      %985 = vmatmul.mubr.f32.gmra.mrb[0].mxu0 %v984
      %v986 = vpop.f32.mrb[0].mxu0
      %v987 = vadd.f32 %v617, %v986
      %v988 = vpop.f32.mrb[0].mxu0
      %989 = vmatprep.mubr.f32.mxu0 0.0
      %v990 = vand.u32 %v420, 4294901760
      %991 = vmatmul.mubr.f32.gmra.mrb[0].mxu0 %v990
      %v992 = vpop.f32.mrb[0].mxu0
      %v993 = vadd.f32 %v627, %v992
      %v994 = vpop.f32.mrb[0].mxu0
      %995 = vmatprep.mubr.f32.mxu0 0.0
      %v996 = vand.u32 %v423, 4294901760
      %997 = vmatmul.mubr.f32.gmra.mrb[0].mxu0 %v996
      %v998 = vpop.f32.mrb[0].mxu0
      %v999 = vadd.f32 %v637, %v998
      %v1000 = vpop.f32.mrb[0].mxu0
      %1001 = vmatprep.mubr.f32.mxu0 0.0
      %v1002 = vand.u32 %v426, 4294901760
      %1003 = vmatmul.mubr.f32.gmra.mrb[0].mxu0 %v1002
      %v1004 = vpop.f32.mrb[0].mxu0
      %v1005 = vadd.f32 %v647, %v1004
      %v1006 = vpop.f32.mrb[0].mxu0
      %1007 = vmatprep.mubr.f32.mxu0 0.0
      %v1008 = vand.u32 %v429, 4294901760
      %1009 = vmatmul.mubr.f32.gmra.mrb[0].mxu0 %v1008
      %v1010 = vpop.f32.mrb[0].mxu0
      %v1011 = vadd.f32 %v657, %v1010
      %v1012 = vpop.f32.mrb[0].mxu0
      %1013 = vmatprep.mubr.f32.mxu0 0.0
      %v1014 = vand.u32 %v432, 4294901760
      %1015 = vmatmul.mubr.f32.gmra.mrb[0].mxu0 %v1014
      %v1016 = vpop.f32.mrb[0].mxu0
      %v1017 = vadd.f32 %v667, %v1016
      %v1018 = vpop.f32.mrb[0].mxu0
      %1019 = vmatprep.mubr.f32.mxu0 0.0
      %v1020 = vand.u32 %v435, 4294901760
      %1021 = vmatmul.mubr.f32.gmra.mrb[0].mxu0 %v1020
      %v1022 = vpop.f32.mrb[0].mxu0
      %v1023 = vadd.f32 %v677, %v1022
      %v1024 = vpop.f32.mrb[0].mxu0
      %1025 = vmatprep.mubr.f32.mxu0 0.0
      %v1026 = vand.u32 %v438, 4294901760
      %1027 = vmatmul.mubr.f32.gmra.mrb[0].mxu0 %v1026
      %v1028 = vpop.f32.mrb[0].mxu0
      %v1029 = vadd.f32 %v687, %v1028
      %v1030 = vpop.f32.mrb[0].mxu0
      %1031 = vmatprep.mubr.f32.mxu0 0.0
      %v1032 = vand.u32 %v441, 4294901760
      %1033 = vmatmul.mubr.f32.gmra.mrb[0].mxu0 %v1032
      %v1034 = vpop.f32.mrb[0].mxu0
      %v1035 = vadd.f32 %v697, %v1034
      %v1036 = vpop.f32.mrb[0].mxu0
      %1037 = vmatprep.mubr.f32.mxu0 0.0
      %v1038 = vand.u32 %v444, 4294901760
      %1039 = vmatmul.mubr.f32.gmra.mrb[0].mxu0 %v1038
      %v1040 = vpop.f32.mrb[0].mxu0
      %v1041 = vadd.f32 %v707, %v1040
      %v1042 = vpop.f32.mrb[0].mxu0
      %1043 = vmatprep.mubr.f32.mxu0 0.0
      %v1044 = vand.u32 %v447, 4294901760
      %1045 = vmatmul.mubr.f32.gmra.mrb[0].mxu0 %v1044
      %v1046 = vpop.f32.mrb[0].mxu0
      %v1047 = vadd.f32 %v717, %v1046
      %v1048 = vpop.f32.mrb[0].mxu0
      %1049 = vmatprep.mubr.f32.mxu0 0.0
      %v1050 = vand.u32 %v450, 4294901760
      %1051 = vmatmul.mubr.f32.gmra.mrb[0].mxu0 %v1050
      %v1052 = vpop.f32.mrb[0].mxu0
      %v1053 = vadd.f32 %v727, %v1052
      %v1054 = vpop.f32.mrb[0].mxu0
      %1055 = vmatprep.mubr.f32.mxu0 0.0
      %v1056 = vand.u32 %v453, 4294901760
      %1057 = vmatmul.mubr.f32.gmra.mrb[0].mxu0 %v1056
      %v1058 = vpop.f32.mrb[0].mxu0
      %v1059 = vadd.f32 %v737, %v1058
      %v1060 = vpop.f32.mrb[0].mxu0
      %1061 = vmatprep.mubr.f32.mxu0 0.0
      %v1062 = vand.u32 %v456, 4294901760
      %1063 = vmatmul.mubr.f32.gmra.mrb[0].mxu0 %v1062
      %v1064 = vpop.f32.mrb[0].mxu0
      %v1065 = vadd.f32 %v747, %v1064
      %v1066 = vpop.f32.mrb[0].mxu0
      %1067 = vmatprep.mubr.f32.mxu0 0.0
      %v1068 = vand.u32 %v459, 4294901760
      %1069 = vmatmul.mubr.f32.gmra.mrb[0].mxu0 %v1068
      %v1070 = vpop.f32.mrb[0].mxu0
      %v1071 = vadd.f32 %v757, %v1070
      %v1072 = vpop.f32.mrb[0].mxu0
      %1073 = vmatprep.mubr.f32.mxu0 0.0
      %v1074 = vand.u32 %v462, 4294901760
      %1075 = vmatmul.mubr.f32.gmra.mrb[0].mxu0 %v1074
      %v1076 = vpop.f32.mrb[0].mxu0
      %v1077 = vadd.f32 %v767, %v1076
      %v1078 = vpop.f32.mrb[0].mxu0
      %1079 = vmatprep.mubr.f32.mxu0 0.0
      %v1080 = vand.u32 %v465, 4294901760
      %1081 = vmatmul.mubr.f32.gmra.mrb[0].mxu0 %v1080
      %v1082 = vpop.f32.mrb[0].mxu0
      %v1083 = vadd.f32 %v777, %v1082
      %v1084 = vpop.f32.mrb[0].mxu0
      %1085 = vmatprep.mubr.f32.mxu0 0.0
      %v1086 = vand.u32 %v468, 4294901760
      %1087 = vmatmul.mubr.f32.gmra.mrb[0].mxu0 %v1086
      %v1088 = vpop.f32.mrb[0].mxu0
      %v1089 = vadd.f32 %v787, %v1088
      %v1090 = vpop.f32.mrb[0].mxu0
      %1091 = vmatprep.mubr.f32.mxu0 0.0
      %v1092 = vand.u32 %v471, 4294901760
      %1093 = vmatmul.mubr.f32.gmra.mrb[0].mxu0 %v1092
      %v1094 = vpop.f32.mrb[0].mxu0
      %v1095 = vadd.f32 %v797, %v1094
      %v1096 = vpop.f32.mrb[0].mxu0
      %1097 = vmatprep.mubr.f32.mxu0 0.0
      %v1098 = vand.u32 %v474, 4294901760
      %1099 = vmatmul.mubr.f32.gmra.mrb[0].mxu0 %v1098
      %v1100 = vpop.f32.mrb[0].mxu0
      %v1101 = vadd.f32 %v807, %v1100
      %v1102 = vpop.f32.mrb[0].mxu0
      %1103 = vmatprep.mubr.f32.mxu0 0.0
      %v1104 = vand.u32 %v477, 4294901760
      %1105 = vmatmul.mubr.f32.gmra.mrb[0].mxu0 %v1104
      %v1106 = vpop.f32.mrb[0].mxu0
      %v1107 = vadd.f32 %v817, %v1106
      %v1108 = vpop.f32.mrb[0].mxu0
      %1109 = vmatprep.mubr.f32.mxu0 0.0
      %v1110 = vand.u32 %v480, 4294901760
      %1111 = vmatmul.mubr.f32.gmra.mrb[0].mxu0 %v1110
      %v1112 = vpop.f32.mrb[0].mxu0
      %v1113 = vadd.f32 %v827, %v1112
      %v1114 = vpop.f32.mrb[0].mxu0
      %1115 = vmatprep.mubr.f32.mxu0 0.0
      %v1116 = vand.u32 %v483, 4294901760
      %1117 = vmatmul.mubr.f32.gmra.mrb[0].mxu0 %v1116
      %v1118 = vpop.f32.mrb[0].mxu0
      %v1119 = vadd.f32 %v837, %v1118
      %v1120 = vpop.f32.mrb[0].mxu0
      %1121 = vmatprep.mubr.f32.mxu0 0.0
      %v1122 = vand.u32 %v486, 4294901760
      %1123 = vmatmul.mubr.f32.gmra.mrb[0].mxu0 %v1122
      %v1124 = vpop.f32.mrb[0].mxu0
      %v1125 = vadd.f32 %v847, %v1124
      %v1126 = vpop.f32.mrb[0].mxu0
      %1127 = vmatprep.mubr.f32.mxu0 0.0
      %v1128 = vand.u32 %v489, 4294901760
      %1129 = vmatmul.mubr.f32.gmra.mrb[0].mxu0 %v1128
      %v1130 = vpop.f32.mrb[0].mxu0
      %v1131 = vadd.f32 %v857, %v1130
      %v1132 = vpop.f32.mrb[0].mxu0
      %1133 = vmatprep.mubr.f32.mxu0 0.0
      %v1134 = vand.u32 %v492, 4294901760
      %1135 = vmatmul.mubr.f32.gmra.mrb[0].mxu0 %v1134
      %v1136 = vpop.f32.mrb[0].mxu0
      %v1137 = vadd.f32 %v867, %v1136
      %v1138 = vpop.f32.mrb[0].mxu0
      %1139 = vmatprep.mubr.f32.mxu0 0.0
      %v1140 = vand.u32 %v495, 4294901760
      %1141 = vmatmul.mubr.f32.gmra.mrb[0].mxu0 %v1140
      %v1142 = vpop.f32.mrb[0].mxu0
      %v1143 = vadd.f32 %v877, %v1142
      %v1144 = vpop.f32.mrb[0].mxu0
      %1145 = vmatprep.mubr.f32.mxu0 0.0
      %v1146 = vand.u32 %v498, 4294901760
      %1147 = vmatmul.mubr.f32.gmra.mrb[0].mxu0 %v1146
      %v1148 = vpop.f32.mrb[0].mxu0
      %v1149 = vadd.f32 %v887, %v1148
      %v1150 = vpop.f32.mrb[0].mxu0
      %1151 = vdwg.mxu0
      %1152 = vmatprep.subr.mxu0 0.0
      %v1153 = vand.u32 %v502, 4294901760
      %v1154 = vsub.f32 %v502, %v1153
      %1155 = vmatpush1.msra.mxu0 %v1154
      %1156 = vmatprep.subr.mxu0 0.0
      %1157 = vmatpush1.msra.mxu0 0.0
      %1158 = vmatprep.subr.mxu0 0.0
      %1159 = vmatpush1.msra.mxu0 0.0
      %1160 = vmatprep.subr.mxu0 0.0
      %1161 = vmatpush1.msra.mxu0 0.0
      %1162 = vmatprep.subr.mxu0 0.0
      %1163 = vmatpush1.msra.mxu0 0.0
      %1164 = vmatprep.subr.mxu0 0.0
      %1165 = vmatpush1.msra.mxu0 0.0
      %1166 = vmatprep.subr.mxu0 0.0
      %1167 = vmatpush1.msra.mxu0 0.0
      %1168 = vmatprep.subr.mxu0 0.0
      %1169 = vmatpush1.msra.mxu0 0.0
      %1170 = vmatprep.subr.mxu0 0.0
      %1171 = vmatpush1.msra.mxu0 0.0
      %1172 = vmatprep.subr.mxu0 0.0
      %1173 = vmatpush1.msra.mxu0 0.0
      %1174 = vmatprep.subr.mxu0 0.0
      %1175 = vmatpush1.msra.mxu0 0.0
      %1176 = vmatprep.subr.mxu0 0.0
      %1177 = vmatpush1.msra.mxu0 0.0
      %1178 = vmatprep.subr.mxu0 0.0
      %1179 = vmatpush1.msra.mxu0 0.0
      %1180 = vmatprep.subr.mxu0 0.0
      %1181 = vmatpush1.msra.mxu0 0.0
      %1182 = vmatprep.subr.mxu0 0.0
      %1183 = vmatpush1.msra.mxu0 0.0
      %1184 = vmatprep.subr.mxu0 0.0
      %1185 = vmatpush1.msra.mxu0 0.0
      %1186 = vmatprep.subr.mxu0 0.0
      %1187 = vmatpush1.msra.mxu0 0.0
      %1188 = vmatprep.subr.mxu0 0.0
      %1189 = vmatpush1.msra.mxu0 0.0
      %1190 = vmatprep.subr.mxu0 0.0
      %1191 = vmatpush1.msra.mxu0 0.0
      %1192 = vmatprep.subr.mxu0 0.0
      %1193 = vmatpush1.msra.mxu0 0.0
      %1194 = vmatprep.subr.mxu0 0.0
      %1195 = vmatpush1.msra.mxu0 0.0
      %1196 = vmatprep.subr.mxu0 0.0
      %1197 = vmatpush1.msra.mxu0 0.0
      %1198 = vmatprep.subr.mxu0 0.0
      %1199 = vmatpush1.msra.mxu0 0.0
      %1200 = vmatprep.subr.mxu0 0.0
      %1201 = vmatpush1.msra.mxu0 0.0
      %1202 = vmatprep.subr.mxu0 0.0
      %1203 = vmatpush1.msra.mxu0 0.0
      %1204 = vmatprep.subr.mxu0 0.0
      %1205 = vmatpush1.msra.mxu0 0.0
      %1206 = vmatprep.subr.mxu0 0.0
      %1207 = vmatpush1.msra.mxu0 0.0
      %1208 = vmatprep.subr.mxu0 0.0
      %1209 = vmatpush1.msra.mxu0 0.0
      %1210 = vmatprep.subr.mxu0 0.0
      %1211 = vmatpush1.msra.mxu0 0.0
      %1212 = vmatprep.subr.mxu0 0.0
      %1213 = vmatpush1.msra.mxu0 0.0
      %1214 = vmatprep.subr.mxu0 0.0
      %1215 = vmatpush1.msra.mxu0 0.0
      %1216 = vmatprep.subr.mxu0 0.0
      %1217 = vmatpush1.msra.mxu0 0.0
      %1218 = vmatprep.mubr.f32.mxu0 0.0
      %v1219 = vand.u32 %v405, 4294901760
      %v1220 = vsub.f32 %v405, %v1219
      %1221 = vmatmul.mubr.f32.gmra.mrb[0].mxu0 %v1220
      %v1222 = vpop.f32.mrb[0].mxu0
      %v1223 = vadd.f32 %v963, %v1222
      %v1224 = vpop.f32.mrb[0].mxu0
      %1225 = vmatprep.mubr.f32.mxu0 0.0
      %v1226 = vand.u32 %v408, 4294901760
      %v1227 = vsub.f32 %v408, %v1226
      %1228 = vmatmul.mubr.f32.gmra.mrb[0].mxu0 %v1227
      %v1229 = vpop.f32.mrb[0].mxu0
      %v1230 = vadd.f32 %v969, %v1229
      %v1231 = vpop.f32.mrb[0].mxu0
      %1232 = vmatprep.mubr.f32.mxu0 0.0
      %v1233 = vand.u32 %v411, 4294901760
      %v1234 = vsub.f32 %v411, %v1233
      %1235 = vmatmul.mubr.f32.gmra.mrb[0].mxu0 %v1234
      %v1236 = vpop.f32.mrb[0].mxu0
      %v1237 = vadd.f32 %v975, %v1236
      %v1238 = vpop.f32.mrb[0].mxu0
      %1239 = vmatprep.mubr.f32.mxu0 0.0
      %v1240 = vand.u32 %v414, 4294901760
      %v1241 = vsub.f32 %v414, %v1240
      %1242 = vmatmul.mubr.f32.gmra.mrb[0].mxu0 %v1241
      %v1243 = vpop.f32.mrb[0].mxu0
      %v1244 = vadd.f32 %v981, %v1243
      %v1245 = vpop.f32.mrb[0].mxu0
      %1246 = vmatprep.mubr.f32.mxu0 0.0
      %v1247 = vand.u32 %v417, 4294901760
      %v1248 = vsub.f32 %v417, %v1247
      %1249 = vmatmul.mubr.f32.gmra.mrb[0].mxu0 %v1248
      %v1250 = vpop.f32.mrb[0].mxu0
      %v1251 = vadd.f32 %v987, %v1250
      %v1252 = vpop.f32.mrb[0].mxu0
      %1253 = vmatprep.mubr.f32.mxu0 0.0
      %v1254 = vand.u32 %v420, 4294901760
      %v1255 = vsub.f32 %v420, %v1254
      %1256 = vmatmul.mubr.f32.gmra.mrb[0].mxu0 %v1255
      %v1257 = vpop.f32.mrb[0].mxu0
      %v1258 = vadd.f32 %v993, %v1257
      %v1259 = vpop.f32.mrb[0].mxu0
      %1260 = vmatprep.mubr.f32.mxu0 0.0
      %v1261 = vand.u32 %v423, 4294901760
      %v1262 = vsub.f32 %v423, %v1261
      %1263 = vmatmul.mubr.f32.gmra.mrb[0].mxu0 %v1262
      %v1264 = vpop.f32.mrb[0].mxu0
      %v1265 = vadd.f32 %v999, %v1264
      %v1266 = vpop.f32.mrb[0].mxu0
      %1267 = vmatprep.mubr.f32.mxu0 0.0
      %v1268 = vand.u32 %v426, 4294901760
      %v1269 = vsub.f32 %v426, %v1268
      %1270 = vmatmul.mubr.f32.gmra.mrb[0].mxu0 %v1269
      %v1271 = vpop.f32.mrb[0].mxu0
      %v1272 = vadd.f32 %v1005, %v1271
      %v1273 = vpop.f32.mrb[0].mxu0
      %1274 = vmatprep.mubr.f32.mxu0 0.0
      %v1275 = vand.u32 %v429, 4294901760
      %v1276 = vsub.f32 %v429, %v1275
      %1277 = vmatmul.mubr.f32.gmra.mrb[0].mxu0 %v1276
      %v1278 = vpop.f32.mrb[0].mxu0
      %v1279 = vadd.f32 %v1011, %v1278
      %v1280 = vpop.f32.mrb[0].mxu0
      %1281 = vmatprep.mubr.f32.mxu0 0.0
      %v1282 = vand.u32 %v432, 4294901760
      %v1283 = vsub.f32 %v432, %v1282
      %1284 = vmatmul.mubr.f32.gmra.mrb[0].mxu0 %v1283
      %v1285 = vpop.f32.mrb[0].mxu0
      %v1286 = vadd.f32 %v1017, %v1285
      %v1287 = vpop.f32.mrb[0].mxu0
      %1288 = vmatprep.mubr.f32.mxu0 0.0
      %v1289 = vand.u32 %v435, 4294901760
      %v1290 = vsub.f32 %v435, %v1289
      %1291 = vmatmul.mubr.f32.gmra.mrb[0].mxu0 %v1290
      %v1292 = vpop.f32.mrb[0].mxu0
      %v1293 = vadd.f32 %v1023, %v1292
      %v1294 = vpop.f32.mrb[0].mxu0
      %1295 = vmatprep.mubr.f32.mxu0 0.0
      %v1296 = vand.u32 %v438, 4294901760
      %v1297 = vsub.f32 %v438, %v1296
      %1298 = vmatmul.mubr.f32.gmra.mrb[0].mxu0 %v1297
      %v1299 = vpop.f32.mrb[0].mxu0
      %v1300 = vadd.f32 %v1029, %v1299
      %v1301 = vpop.f32.mrb[0].mxu0
      %1302 = vmatprep.mubr.f32.mxu0 0.0
      %v1303 = vand.u32 %v441, 4294901760
      %v1304 = vsub.f32 %v441, %v1303
      %1305 = vmatmul.mubr.f32.gmra.mrb[0].mxu0 %v1304
      %v1306 = vpop.f32.mrb[0].mxu0
      %v1307 = vadd.f32 %v1035, %v1306
      %v1308 = vpop.f32.mrb[0].mxu0
      %1309 = vmatprep.mubr.f32.mxu0 0.0
      %v1310 = vand.u32 %v444, 4294901760
      %v1311 = vsub.f32 %v444, %v1310
      %1312 = vmatmul.mubr.f32.gmra.mrb[0].mxu0 %v1311
      %v1313 = vpop.f32.mrb[0].mxu0
      %v1314 = vadd.f32 %v1041, %v1313
      %v1315 = vpop.f32.mrb[0].mxu0
      %1316 = vmatprep.mubr.f32.mxu0 0.0
      %v1317 = vand.u32 %v447, 4294901760
      %v1318 = vsub.f32 %v447, %v1317
      %1319 = vmatmul.mubr.f32.gmra.mrb[0].mxu0 %v1318
      %v1320 = vpop.f32.mrb[0].mxu0
      %v1321 = vadd.f32 %v1047, %v1320
      %v1322 = vpop.f32.mrb[0].mxu0
      %1323 = vmatprep.mubr.f32.mxu0 0.0
      %v1324 = vand.u32 %v450, 4294901760
      %v1325 = vsub.f32 %v450, %v1324
      %1326 = vmatmul.mubr.f32.gmra.mrb[0].mxu0 %v1325
      %v1327 = vpop.f32.mrb[0].mxu0
      %v1328 = vadd.f32 %v1053, %v1327
      %v1329 = vpop.f32.mrb[0].mxu0
      %1330 = vmatprep.mubr.f32.mxu0 0.0
      %v1331 = vand.u32 %v453, 4294901760
      %v1332 = vsub.f32 %v453, %v1331
      %1333 = vmatmul.mubr.f32.gmra.mrb[0].mxu0 %v1332
      %v1334 = vpop.f32.mrb[0].mxu0
      %v1335 = vadd.f32 %v1059, %v1334
      %v1336 = vpop.f32.mrb[0].mxu0
      %1337 = vmatprep.mubr.f32.mxu0 0.0
      %v1338 = vand.u32 %v456, 4294901760
      %v1339 = vsub.f32 %v456, %v1338
      %1340 = vmatmul.mubr.f32.gmra.mrb[0].mxu0 %v1339
      %v1341 = vpop.f32.mrb[0].mxu0
      %v1342 = vadd.f32 %v1065, %v1341
      %v1343 = vpop.f32.mrb[0].mxu0
      %1344 = vmatprep.mubr.f32.mxu0 0.0
      %v1345 = vand.u32 %v459, 4294901760
      %v1346 = vsub.f32 %v459, %v1345
      %1347 = vmatmul.mubr.f32.gmra.mrb[0].mxu0 %v1346
      %v1348 = vpop.f32.mrb[0].mxu0
      %v1349 = vadd.f32 %v1071, %v1348
      %v1350 = vpop.f32.mrb[0].mxu0
      %1351 = vmatprep.mubr.f32.mxu0 0.0
      %v1352 = vand.u32 %v462, 4294901760
      %v1353 = vsub.f32 %v462, %v1352
      %1354 = vmatmul.mubr.f32.gmra.mrb[0].mxu0 %v1353
      %v1355 = vpop.f32.mrb[0].mxu0
      %v1356 = vadd.f32 %v1077, %v1355
      %v1357 = vpop.f32.mrb[0].mxu0
      %1358 = vmatprep.mubr.f32.mxu0 0.0
      %v1359 = vand.u32 %v465, 4294901760
      %v1360 = vsub.f32 %v465, %v1359
      %1361 = vmatmul.mubr.f32.gmra.mrb[0].mxu0 %v1360
      %v1362 = vpop.f32.mrb[0].mxu0
      %v1363 = vadd.f32 %v1083, %v1362
      %v1364 = vpop.f32.mrb[0].mxu0
      %1365 = vmatprep.mubr.f32.mxu0 0.0
      %v1366 = vand.u32 %v468, 4294901760
      %v1367 = vsub.f32 %v468, %v1366
      %1368 = vmatmul.mubr.f32.gmra.mrb[0].mxu0 %v1367
      %v1369 = vpop.f32.mrb[0].mxu0
      %v1370 = vadd.f32 %v1089, %v1369
      %v1371 = vpop.f32.mrb[0].mxu0
      %1372 = vmatprep.mubr.f32.mxu0 0.0
      %v1373 = vand.u32 %v471, 4294901760
      %v1374 = vsub.f32 %v471, %v1373
      %1375 = vmatmul.mubr.f32.gmra.mrb[0].mxu0 %v1374
      %v1376 = vpop.f32.mrb[0].mxu0
      %v1377 = vadd.f32 %v1095, %v1376
      %v1378 = vpop.f32.mrb[0].mxu0
      %1379 = vmatprep.mubr.f32.mxu0 0.0
      %v1380 = vand.u32 %v474, 4294901760
      %v1381 = vsub.f32 %v474, %v1380
      %1382 = vmatmul.mubr.f32.gmra.mrb[0].mxu0 %v1381
      %v1383 = vpop.f32.mrb[0].mxu0
      %v1384 = vadd.f32 %v1101, %v1383
      %v1385 = vpop.f32.mrb[0].mxu0
      %1386 = vmatprep.mubr.f32.mxu0 0.0
      %v1387 = vand.u32 %v477, 4294901760
      %v1388 = vsub.f32 %v477, %v1387
      %1389 = vmatmul.mubr.f32.gmra.mrb[0].mxu0 %v1388
      %v1390 = vpop.f32.mrb[0].mxu0
      %v1391 = vadd.f32 %v1107, %v1390
      %v1392 = vpop.f32.mrb[0].mxu0
      %1393 = vmatprep.mubr.f32.mxu0 0.0
      %v1394 = vand.u32 %v480, 4294901760
      %v1395 = vsub.f32 %v480, %v1394
      %1396 = vmatmul.mubr.f32.gmra.mrb[0].mxu0 %v1395
      %v1397 = vpop.f32.mrb[0].mxu0
      %v1398 = vadd.f32 %v1113, %v1397
      %v1399 = vpop.f32.mrb[0].mxu0
      %1400 = vmatprep.mubr.f32.mxu0 0.0
      %v1401 = vand.u32 %v483, 4294901760
      %v1402 = vsub.f32 %v483, %v1401
      %1403 = vmatmul.mubr.f32.gmra.mrb[0].mxu0 %v1402
      %v1404 = vpop.f32.mrb[0].mxu0
      %v1405 = vadd.f32 %v1119, %v1404
      %v1406 = vpop.f32.mrb[0].mxu0
      %1407 = vmatprep.mubr.f32.mxu0 0.0
      %v1408 = vand.u32 %v486, 4294901760
      %v1409 = vsub.f32 %v486, %v1408
      %1410 = vmatmul.mubr.f32.gmra.mrb[0].mxu0 %v1409
      %v1411 = vpop.f32.mrb[0].mxu0
      %v1412 = vadd.f32 %v1125, %v1411
      %v1413 = vpop.f32.mrb[0].mxu0
      %1414 = vmatprep.mubr.f32.mxu0 0.0
      %v1415 = vand.u32 %v489, 4294901760
      %v1416 = vsub.f32 %v489, %v1415
      %1417 = vmatmul.mubr.f32.gmra.mrb[0].mxu0 %v1416
      %v1418 = vpop.f32.mrb[0].mxu0
      %v1419 = vadd.f32 %v1131, %v1418
      %v1420 = vpop.f32.mrb[0].mxu0
      %1421 = vmatprep.mubr.f32.mxu0 0.0
      %v1422 = vand.u32 %v492, 4294901760
      %v1423 = vsub.f32 %v492, %v1422
      %1424 = vmatmul.mubr.f32.gmra.mrb[0].mxu0 %v1423
      %v1425 = vpop.f32.mrb[0].mxu0
      %v1426 = vadd.f32 %v1137, %v1425
      %v1427 = vpop.f32.mrb[0].mxu0
      %1428 = vmatprep.mubr.f32.mxu0 0.0
      %v1429 = vand.u32 %v495, 4294901760
      %v1430 = vsub.f32 %v495, %v1429
      %1431 = vmatmul.mubr.f32.gmra.mrb[0].mxu0 %v1430
      %v1432 = vpop.f32.mrb[0].mxu0
      %v1433 = vadd.f32 %v1143, %v1432
      %v1434 = vpop.f32.mrb[0].mxu0
      %1435 = vmatprep.mubr.f32.mxu0 0.0
      %v1436 = vand.u32 %v498, 4294901760
      %v1437 = vsub.f32 %v498, %v1436
      %1438 = vmatmul.mubr.f32.gmra.mrb[0].mxu0 %v1437
      %v1439 = vpop.f32.mrb[0].mxu0
      %v1440 = vadd.f32 %v1149, %v1439
      %v1441 = vpop.f32.mrb[0].mxu0
      %1442 = vdwg.mxu0
      %1443 = vmatprep.subr.mxu0 0.0
      %v1444 = vand.u32 %v502, 4294901760
      %1445 = vmatpush1.msra.mxu0 %v1444
      %1446 = vmatprep.subr.mxu0 0.0
      %1447 = vmatpush1.msra.mxu0 0.0
      %1448 = vmatprep.subr.mxu0 0.0
      %1449 = vmatpush1.msra.mxu0 0.0
      %1450 = vmatprep.subr.mxu0 0.0
      %1451 = vmatpush1.msra.mxu0 0.0
      %1452 = vmatprep.subr.mxu0 0.0
      %1453 = vmatpush1.msra.mxu0 0.0
      %1454 = vmatprep.subr.mxu0 0.0
      %1455 = vmatpush1.msra.mxu0 0.0
      %1456 = vmatprep.subr.mxu0 0.0
      %1457 = vmatpush1.msra.mxu0 0.0
      %1458 = vmatprep.subr.mxu0 0.0
      %1459 = vmatpush1.msra.mxu0 0.0
      %1460 = vmatprep.subr.mxu0 0.0
      %1461 = vmatpush1.msra.mxu0 0.0
      %1462 = vmatprep.subr.mxu0 0.0
      %1463 = vmatpush1.msra.mxu0 0.0
      %1464 = vmatprep.subr.mxu0 0.0
      %1465 = vmatpush1.msra.mxu0 0.0
      %1466 = vmatprep.subr.mxu0 0.0
      %1467 = vmatpush1.msra.mxu0 0.0
      %1468 = vmatprep.subr.mxu0 0.0
      %1469 = vmatpush1.msra.mxu0 0.0
      %1470 = vmatprep.subr.mxu0 0.0
      %1471 = vmatpush1.msra.mxu0 0.0
      %1472 = vmatprep.subr.mxu0 0.0
      %1473 = vmatpush1.msra.mxu0 0.0
      %1474 = vmatprep.subr.mxu0 0.0
      %1475 = vmatpush1.msra.mxu0 0.0
      %1476 = vmatprep.subr.mxu0 0.0
      %1477 = vmatpush1.msra.mxu0 0.0
      %1478 = vmatprep.subr.mxu0 0.0
      %1479 = vmatpush1.msra.mxu0 0.0
      %1480 = vmatprep.subr.mxu0 0.0
      %1481 = vmatpush1.msra.mxu0 0.0
      %1482 = vmatprep.subr.mxu0 0.0
      %1483 = vmatpush1.msra.mxu0 0.0
      %1484 = vmatprep.subr.mxu0 0.0
      %1485 = vmatpush1.msra.mxu0 0.0
      %1486 = vmatprep.subr.mxu0 0.0
      %1487 = vmatpush1.msra.mxu0 0.0
      %1488 = vmatprep.subr.mxu0 0.0
      %1489 = vmatpush1.msra.mxu0 0.0
      %1490 = vmatprep.subr.mxu0 0.0
      %1491 = vmatpush1.msra.mxu0 0.0
      %1492 = vmatprep.subr.mxu0 0.0
      %1493 = vmatpush1.msra.mxu0 0.0
      %1494 = vmatprep.subr.mxu0 0.0
      %1495 = vmatpush1.msra.mxu0 0.0
      %1496 = vmatprep.subr.mxu0 0.0
      %1497 = vmatpush1.msra.mxu0 0.0
      %1498 = vmatprep.subr.mxu0 0.0
      %1499 = vmatpush1.msra.mxu0 0.0
      %1500 = vmatprep.subr.mxu0 0.0
      %1501 = vmatpush1.msra.mxu0 0.0
      %1502 = vmatprep.subr.mxu0 0.0
      %1503 = vmatpush1.msra.mxu0 0.0
      %1504 = vmatprep.subr.mxu0 0.0
      %1505 = vmatpush1.msra.mxu0 0.0
      %1506 = vmatprep.subr.mxu0 0.0
      %1507 = vmatpush1.msra.mxu0 0.0
      %1508 = vmatprep.mubr.f32.mxu0 0.0
      %v1509 = vand.u32 %v405, 4294901760
      %v1510 = vsub.f32 %v405, %v1509
      %v1511 = vand.u32 %v1510, 4294901760
      %1512 = vmatmul.mubr.f32.gmra.mrb[0].mxu0 %v1511
      %v1513 = vpop.f32.mrb[0].mxu0
      %v1514 = vadd.f32 %v1223, %v1513
      %v1515 = vpop.f32.mrb[0].mxu0
      %1516 = vmatprep.mubr.f32.mxu0 0.0
      %v1517 = vand.u32 %v408, 4294901760
      %v1518 = vsub.f32 %v408, %v1517
      %v1519 = vand.u32 %v1518, 4294901760
      %1520 = vmatmul.mubr.f32.gmra.mrb[0].mxu0 %v1519
      %v1521 = vpop.f32.mrb[0].mxu0
      %v1522 = vadd.f32 %v1230, %v1521
      %v1523 = vpop.f32.mrb[0].mxu0
      %1524 = vmatprep.mubr.f32.mxu0 0.0
      %v1525 = vand.u32 %v411, 4294901760
      %v1526 = vsub.f32 %v411, %v1525
      %v1527 = vand.u32 %v1526, 4294901760
      %1528 = vmatmul.mubr.f32.gmra.mrb[0].mxu0 %v1527
      %v1529 = vpop.f32.mrb[0].mxu0
      %v1530 = vadd.f32 %v1237, %v1529
      %v1531 = vpop.f32.mrb[0].mxu0
      %1532 = vmatprep.mubr.f32.mxu0 0.0
      %v1533 = vand.u32 %v414, 4294901760
      %v1534 = vsub.f32 %v414, %v1533
      %v1535 = vand.u32 %v1534, 4294901760
      %1536 = vmatmul.mubr.f32.gmra.mrb[0].mxu0 %v1535
      %v1537 = vpop.f32.mrb[0].mxu0
      %v1538 = vadd.f32 %v1244, %v1537
      %v1539 = vpop.f32.mrb[0].mxu0
      %1540 = vmatprep.mubr.f32.mxu0 0.0
      %v1541 = vand.u32 %v417, 4294901760
      %v1542 = vsub.f32 %v417, %v1541
      %v1543 = vand.u32 %v1542, 4294901760
      %1544 = vmatmul.mubr.f32.gmra.mrb[0].mxu0 %v1543
      %v1545 = vpop.f32.mrb[0].mxu0
      %v1546 = vadd.f32 %v1251, %v1545
      %v1547 = vpop.f32.mrb[0].mxu0
      %1548 = vmatprep.mubr.f32.mxu0 0.0
      %v1549 = vand.u32 %v420, 4294901760
      %v1550 = vsub.f32 %v420, %v1549
      %v1551 = vand.u32 %v1550, 4294901760
      %1552 = vmatmul.mubr.f32.gmra.mrb[0].mxu0 %v1551
      %v1553 = vpop.f32.mrb[0].mxu0
      %v1554 = vadd.f32 %v1258, %v1553
      %v1555 = vpop.f32.mrb[0].mxu0
      %1556 = vmatprep.mubr.f32.mxu0 0.0
      %v1557 = vand.u32 %v423, 4294901760
      %v1558 = vsub.f32 %v423, %v1557
      %v1559 = vand.u32 %v1558, 4294901760
      %1560 = vmatmul.mubr.f32.gmra.mrb[0].mxu0 %v1559
      %v1561 = vpop.f32.mrb[0].mxu0
      %v1562 = vadd.f32 %v1265, %v1561
      %v1563 = vpop.f32.mrb[0].mxu0
      %1564 = vmatprep.mubr.f32.mxu0 0.0
      %v1565 = vand.u32 %v426, 4294901760
      %v1566 = vsub.f32 %v426, %v1565
      %v1567 = vand.u32 %v1566, 4294901760
      %1568 = vmatmul.mubr.f32.gmra.mrb[0].mxu0 %v1567
      %v1569 = vpop.f32.mrb[0].mxu0
      %v1570 = vadd.f32 %v1272, %v1569
      %v1571 = vpop.f32.mrb[0].mxu0
      %1572 = vmatprep.mubr.f32.mxu0 0.0
      %v1573 = vand.u32 %v429, 4294901760
      %v1574 = vsub.f32 %v429, %v1573
      %v1575 = vand.u32 %v1574, 4294901760
      %1576 = vmatmul.mubr.f32.gmra.mrb[0].mxu0 %v1575
      %v1577 = vpop.f32.mrb[0].mxu0
      %v1578 = vadd.f32 %v1279, %v1577
      %v1579 = vpop.f32.mrb[0].mxu0
      %1580 = vmatprep.mubr.f32.mxu0 0.0
      %v1581 = vand.u32 %v432, 4294901760
      %v1582 = vsub.f32 %v432, %v1581
      %v1583 = vand.u32 %v1582, 4294901760
      %1584 = vmatmul.mubr.f32.gmra.mrb[0].mxu0 %v1583
      %v1585 = vpop.f32.mrb[0].mxu0
      %v1586 = vadd.f32 %v1286, %v1585
      %v1587 = vpop.f32.mrb[0].mxu0
      %1588 = vmatprep.mubr.f32.mxu0 0.0
      %v1589 = vand.u32 %v435, 4294901760
      %v1590 = vsub.f32 %v435, %v1589
      %v1591 = vand.u32 %v1590, 4294901760
      %1592 = vmatmul.mubr.f32.gmra.mrb[0].mxu0 %v1591
      %v1593 = vpop.f32.mrb[0].mxu0
      %v1594 = vadd.f32 %v1293, %v1593
      %v1595 = vpop.f32.mrb[0].mxu0
      %1596 = vmatprep.mubr.f32.mxu0 0.0
      %v1597 = vand.u32 %v438, 4294901760
      %v1598 = vsub.f32 %v438, %v1597
      %v1599 = vand.u32 %v1598, 4294901760
      %1600 = vmatmul.mubr.f32.gmra.mrb[0].mxu0 %v1599
      %v1601 = vpop.f32.mrb[0].mxu0
      %v1602 = vadd.f32 %v1300, %v1601
      %v1603 = vpop.f32.mrb[0].mxu0
      %1604 = vmatprep.mubr.f32.mxu0 0.0
      %v1605 = vand.u32 %v441, 4294901760
      %v1606 = vsub.f32 %v441, %v1605
      %v1607 = vand.u32 %v1606, 4294901760
      %1608 = vmatmul.mubr.f32.gmra.mrb[0].mxu0 %v1607
      %v1609 = vpop.f32.mrb[0].mxu0
      %v1610 = vadd.f32 %v1307, %v1609
      %v1611 = vpop.f32.mrb[0].mxu0
      %1612 = vmatprep.mubr.f32.mxu0 0.0
      %v1613 = vand.u32 %v444, 4294901760
      %v1614 = vsub.f32 %v444, %v1613
      %v1615 = vand.u32 %v1614, 4294901760
      %1616 = vmatmul.mubr.f32.gmra.mrb[0].mxu0 %v1615
      %v1617 = vpop.f32.mrb[0].mxu0
      %v1618 = vadd.f32 %v1314, %v1617
      %v1619 = vpop.f32.mrb[0].mxu0
      %1620 = vmatprep.mubr.f32.mxu0 0.0
      %v1621 = vand.u32 %v447, 4294901760
      %v1622 = vsub.f32 %v447, %v1621
      %v1623 = vand.u32 %v1622, 4294901760
      %1624 = vmatmul.mubr.f32.gmra.mrb[0].mxu0 %v1623
      %v1625 = vpop.f32.mrb[0].mxu0
      %v1626 = vadd.f32 %v1321, %v1625
      %v1627 = vpop.f32.mrb[0].mxu0
      %1628 = vmatprep.mubr.f32.mxu0 0.0
      %v1629 = vand.u32 %v450, 4294901760
      %v1630 = vsub.f32 %v450, %v1629
      %v1631 = vand.u32 %v1630, 4294901760
      %1632 = vmatmul.mubr.f32.gmra.mrb[0].mxu0 %v1631
      %v1633 = vpop.f32.mrb[0].mxu0
      %v1634 = vadd.f32 %v1328, %v1633
      %v1635 = vpop.f32.mrb[0].mxu0
      %1636 = vmatprep.mubr.f32.mxu0 0.0
      %v1637 = vand.u32 %v453, 4294901760
      %v1638 = vsub.f32 %v453, %v1637
      %v1639 = vand.u32 %v1638, 4294901760
      %1640 = vmatmul.mubr.f32.gmra.mrb[0].mxu0 %v1639
      %v1641 = vpop.f32.mrb[0].mxu0
      %v1642 = vadd.f32 %v1335, %v1641
      %v1643 = vpop.f32.mrb[0].mxu0
      %1644 = vmatprep.mubr.f32.mxu0 0.0
      %v1645 = vand.u32 %v456, 4294901760
      %v1646 = vsub.f32 %v456, %v1645
      %v1647 = vand.u32 %v1646, 4294901760
      %1648 = vmatmul.mubr.f32.gmra.mrb[0].mxu0 %v1647
      %v1649 = vpop.f32.mrb[0].mxu0
      %v1650 = vadd.f32 %v1342, %v1649
      %v1651 = vpop.f32.mrb[0].mxu0
      %1652 = vmatprep.mubr.f32.mxu0 0.0
      %v1653 = vand.u32 %v459, 4294901760
      %v1654 = vsub.f32 %v459, %v1653
      %v1655 = vand.u32 %v1654, 4294901760
      %1656 = vmatmul.mubr.f32.gmra.mrb[0].mxu0 %v1655
      %v1657 = vpop.f32.mrb[0].mxu0
      %v1658 = vadd.f32 %v1349, %v1657
      %v1659 = vpop.f32.mrb[0].mxu0
      %1660 = vmatprep.mubr.f32.mxu0 0.0
      %v1661 = vand.u32 %v462, 4294901760
      %v1662 = vsub.f32 %v462, %v1661
      %v1663 = vand.u32 %v1662, 4294901760
      %1664 = vmatmul.mubr.f32.gmra.mrb[0].mxu0 %v1663
      %v1665 = vpop.f32.mrb[0].mxu0
      %v1666 = vadd.f32 %v1356, %v1665
      %v1667 = vpop.f32.mrb[0].mxu0
      %1668 = vmatprep.mubr.f32.mxu0 0.0
      %v1669 = vand.u32 %v465, 4294901760
      %v1670 = vsub.f32 %v465, %v1669
      %v1671 = vand.u32 %v1670, 4294901760
      %1672 = vmatmul.mubr.f32.gmra.mrb[0].mxu0 %v1671
      %v1673 = vpop.f32.mrb[0].mxu0
      %v1674 = vadd.f32 %v1363, %v1673
      %v1675 = vpop.f32.mrb[0].mxu0
      %1676 = vmatprep.mubr.f32.mxu0 0.0
      %v1677 = vand.u32 %v468, 4294901760
      %v1678 = vsub.f32 %v468, %v1677
      %v1679 = vand.u32 %v1678, 4294901760
      %1680 = vmatmul.mubr.f32.gmra.mrb[0].mxu0 %v1679
      %v1681 = vpop.f32.mrb[0].mxu0
      %v1682 = vadd.f32 %v1370, %v1681
      %v1683 = vpop.f32.mrb[0].mxu0
      %1684 = vmatprep.mubr.f32.mxu0 0.0
      %v1685 = vand.u32 %v471, 4294901760
      %v1686 = vsub.f32 %v471, %v1685
      %v1687 = vand.u32 %v1686, 4294901760
      %1688 = vmatmul.mubr.f32.gmra.mrb[0].mxu0 %v1687
      %v1689 = vpop.f32.mrb[0].mxu0
      %v1690 = vadd.f32 %v1377, %v1689
      %v1691 = vpop.f32.mrb[0].mxu0
      %1692 = vmatprep.mubr.f32.mxu0 0.0
      %v1693 = vand.u32 %v474, 4294901760
      %v1694 = vsub.f32 %v474, %v1693
      %v1695 = vand.u32 %v1694, 4294901760
      %1696 = vmatmul.mubr.f32.gmra.mrb[0].mxu0 %v1695
      %v1697 = vpop.f32.mrb[0].mxu0
      %v1698 = vadd.f32 %v1384, %v1697
      %v1699 = vpop.f32.mrb[0].mxu0
      %1700 = vmatprep.mubr.f32.mxu0 0.0
      %v1701 = vand.u32 %v477, 4294901760
      %v1702 = vsub.f32 %v477, %v1701
      %v1703 = vand.u32 %v1702, 4294901760
      %1704 = vmatmul.mubr.f32.gmra.mrb[0].mxu0 %v1703
      %v1705 = vpop.f32.mrb[0].mxu0
      %v1706 = vadd.f32 %v1391, %v1705
      %v1707 = vpop.f32.mrb[0].mxu0
      %1708 = vmatprep.mubr.f32.mxu0 0.0
      %v1709 = vand.u32 %v480, 4294901760
      %v1710 = vsub.f32 %v480, %v1709
      %v1711 = vand.u32 %v1710, 4294901760
      %1712 = vmatmul.mubr.f32.gmra.mrb[0].mxu0 %v1711
      %v1713 = vpop.f32.mrb[0].mxu0
      %v1714 = vadd.f32 %v1398, %v1713
      %v1715 = vpop.f32.mrb[0].mxu0
      %1716 = vmatprep.mubr.f32.mxu0 0.0
      %v1717 = vand.u32 %v483, 4294901760
      %v1718 = vsub.f32 %v483, %v1717
      %v1719 = vand.u32 %v1718, 4294901760
      %1720 = vmatmul.mubr.f32.gmra.mrb[0].mxu0 %v1719
      %v1721 = vpop.f32.mrb[0].mxu0
      %v1722 = vadd.f32 %v1405, %v1721
      %v1723 = vpop.f32.mrb[0].mxu0
      %1724 = vmatprep.mubr.f32.mxu0 0.0
      %v1725 = vand.u32 %v486, 4294901760
      %v1726 = vsub.f32 %v486, %v1725
      %v1727 = vand.u32 %v1726, 4294901760
      %1728 = vmatmul.mubr.f32.gmra.mrb[0].mxu0 %v1727
      %v1729 = vpop.f32.mrb[0].mxu0
      %v1730 = vadd.f32 %v1412, %v1729
      %v1731 = vpop.f32.mrb[0].mxu0
      %1732 = vmatprep.mubr.f32.mxu0 0.0
      %v1733 = vand.u32 %v489, 4294901760
      %v1734 = vsub.f32 %v489, %v1733
      %v1735 = vand.u32 %v1734, 4294901760
      %1736 = vmatmul.mubr.f32.gmra.mrb[0].mxu0 %v1735
      %v1737 = vpop.f32.mrb[0].mxu0
      %v1738 = vadd.f32 %v1419, %v1737
      %v1739 = vpop.f32.mrb[0].mxu0
      %1740 = vmatprep.mubr.f32.mxu0 0.0
      %v1741 = vand.u32 %v492, 4294901760
      %v1742 = vsub.f32 %v492, %v1741
      %v1743 = vand.u32 %v1742, 4294901760
      %1744 = vmatmul.mubr.f32.gmra.mrb[0].mxu0 %v1743
      %v1745 = vpop.f32.mrb[0].mxu0
      %v1746 = vadd.f32 %v1426, %v1745
      %v1747 = vpop.f32.mrb[0].mxu0
      %1748 = vmatprep.mubr.f32.mxu0 0.0
      %v1749 = vand.u32 %v495, 4294901760
      %v1750 = vsub.f32 %v495, %v1749
      %v1751 = vand.u32 %v1750, 4294901760
      %1752 = vmatmul.mubr.f32.gmra.mrb[0].mxu0 %v1751
      %v1753 = vpop.f32.mrb[0].mxu0
      %v1754 = vadd.f32 %v1433, %v1753
      %v1755 = vpop.f32.mrb[0].mxu0
      %1756 = vmatprep.mubr.f32.mxu0 0.0
      %v1757 = vand.u32 %v498, 4294901760
      %v1758 = vsub.f32 %v498, %v1757
      %v1759 = vand.u32 %v1758, 4294901760
      %1760 = vmatmul.mubr.f32.gmra.mrb[0].mxu0 %v1759
      %v1761 = vpop.f32.mrb[0].mxu0
      %v1762 = vadd.f32 %v1440, %v1761
      %v1763 = vpop.f32.mrb[0].mxu0
      %1764 = vdwg.mxu0
      %1765 = vmatprep.subr.mxu0 0.0
      %v1766 = vand.u32 %v502, 4294901760
      %v1767 = vsub.f32 %v502, %v1766
      %v1768 = vand.u32 %v1767, 4294901760
      %1769 = vmatpush1.msra.mxu0 %v1768
      %1770 = vmatprep.subr.mxu0 0.0
      %1771 = vmatpush1.msra.mxu0 0.0
      %1772 = vmatprep.subr.mxu0 0.0
      %1773 = vmatpush1.msra.mxu0 0.0
      %1774 = vmatprep.subr.mxu0 0.0
      %1775 = vmatpush1.msra.mxu0 0.0
      %1776 = vmatprep.subr.mxu0 0.0
      %1777 = vmatpush1.msra.mxu0 0.0
      %1778 = vmatprep.subr.mxu0 0.0
      %1779 = vmatpush1.msra.mxu0 0.0
      %1780 = vmatprep.subr.mxu0 0.0
      %1781 = vmatpush1.msra.mxu0 0.0
      %1782 = vmatprep.subr.mxu0 0.0
      %1783 = vmatpush1.msra.mxu0 0.0
      %1784 = vmatprep.subr.mxu0 0.0
      %1785 = vmatpush1.msra.mxu0 0.0
      %1786 = vmatprep.subr.mxu0 0.0
      %1787 = vmatpush1.msra.mxu0 0.0
      %1788 = vmatprep.subr.mxu0 0.0
      %1789 = vmatpush1.msra.mxu0 0.0
      %1790 = vmatprep.subr.mxu0 0.0
      %1791 = vmatpush1.msra.mxu0 0.0
      %1792 = vmatprep.subr.mxu0 0.0
      %1793 = vmatpush1.msra.mxu0 0.0
      %1794 = vmatprep.subr.mxu0 0.0
      %1795 = vmatpush1.msra.mxu0 0.0
      %1796 = vmatprep.subr.mxu0 0.0
      %1797 = vmatpush1.msra.mxu0 0.0
      %1798 = vmatprep.subr.mxu0 0.0
      %1799 = vmatpush1.msra.mxu0 0.0
      %1800 = vmatprep.subr.mxu0 0.0
      %1801 = vmatpush1.msra.mxu0 0.0
      %1802 = vmatprep.subr.mxu0 0.0
      %1803 = vmatpush1.msra.mxu0 0.0
      %1804 = vmatprep.subr.mxu0 0.0
      %1805 = vmatpush1.msra.mxu0 0.0
      %1806 = vmatprep.subr.mxu0 0.0
      %1807 = vmatpush1.msra.mxu0 0.0
      %1808 = vmatprep.subr.mxu0 0.0
      %1809 = vmatpush1.msra.mxu0 0.0
      %1810 = vmatprep.subr.mxu0 0.0
      %1811 = vmatpush1.msra.mxu0 0.0
      %1812 = vmatprep.subr.mxu0 0.0
      %1813 = vmatpush1.msra.mxu0 0.0
      %1814 = vmatprep.subr.mxu0 0.0
      %1815 = vmatpush1.msra.mxu0 0.0
      %1816 = vmatprep.subr.mxu0 0.0
      %1817 = vmatpush1.msra.mxu0 0.0
      %1818 = vmatprep.subr.mxu0 0.0
      %1819 = vmatpush1.msra.mxu0 0.0
      %1820 = vmatprep.subr.mxu0 0.0
      %1821 = vmatpush1.msra.mxu0 0.0
      %1822 = vmatprep.subr.mxu0 0.0
      %1823 = vmatpush1.msra.mxu0 0.0
      %1824 = vmatprep.subr.mxu0 0.0
      %1825 = vmatpush1.msra.mxu0 0.0
      %1826 = vmatprep.subr.mxu0 0.0
      %1827 = vmatpush1.msra.mxu0 0.0
      %1828 = vmatprep.subr.mxu0 0.0
      %1829 = vmatpush1.msra.mxu0 0.0
      %1830 = vmatprep.subr.mxu0 0.0
      %1831 = vmatpush1.msra.mxu0 0.0
      %1832 = vmatprep.mubr.f32.mxu0 0.0
      %v1833 = vand.u32 %v405, 4294901760
      %1834 = vmatmul.mubr.f32.gmra.mrb[0].mxu0 %v1833
      %v1835 = vpop.f32.mrb[0].mxu0
      %v1836 = vadd.f32 %v1514, %v1835
      %v1837 = vpop.f32.mrb[0].mxu0
      %1838 = vmatprep.mubr.f32.mxu0 0.0
      %v1839 = vand.u32 %v408, 4294901760
      %1840 = vmatmul.mubr.f32.gmra.mrb[0].mxu0 %v1839
      %v1841 = vpop.f32.mrb[0].mxu0
      %v1842 = vadd.f32 %v1522, %v1841
      %v1843 = vpop.f32.mrb[0].mxu0
      %1844 = vmatprep.mubr.f32.mxu0 0.0
      %v1845 = vand.u32 %v411, 4294901760
      %1846 = vmatmul.mubr.f32.gmra.mrb[0].mxu0 %v1845
      %v1847 = vpop.f32.mrb[0].mxu0
      %v1848 = vadd.f32 %v1530, %v1847
      %v1849 = vpop.f32.mrb[0].mxu0
      %1850 = vmatprep.mubr.f32.mxu0 0.0
      %v1851 = vand.u32 %v414, 4294901760
      %1852 = vmatmul.mubr.f32.gmra.mrb[0].mxu0 %v1851
      %v1853 = vpop.f32.mrb[0].mxu0
      %v1854 = vadd.f32 %v1538, %v1853
      %v1855 = vpop.f32.mrb[0].mxu0
      %1856 = vmatprep.mubr.f32.mxu0 0.0
      %v1857 = vand.u32 %v417, 4294901760
      %1858 = vmatmul.mubr.f32.gmra.mrb[0].mxu0 %v1857
      %v1859 = vpop.f32.mrb[0].mxu0
      %v1860 = vadd.f32 %v1546, %v1859
      %v1861 = vpop.f32.mrb[0].mxu0
      %1862 = vmatprep.mubr.f32.mxu0 0.0
      %v1863 = vand.u32 %v420, 4294901760
      %1864 = vmatmul.mubr.f32.gmra.mrb[0].mxu0 %v1863
      %v1865 = vpop.f32.mrb[0].mxu0
      %v1866 = vadd.f32 %v1554, %v1865
      %v1867 = vpop.f32.mrb[0].mxu0
      %1868 = vmatprep.mubr.f32.mxu0 0.0
      %v1869 = vand.u32 %v423, 4294901760
      %1870 = vmatmul.mubr.f32.gmra.mrb[0].mxu0 %v1869
      %v1871 = vpop.f32.mrb[0].mxu0
      %v1872 = vadd.f32 %v1562, %v1871
      %v1873 = vpop.f32.mrb[0].mxu0
      %1874 = vmatprep.mubr.f32.mxu0 0.0
      %v1875 = vand.u32 %v426, 4294901760
      %1876 = vmatmul.mubr.f32.gmra.mrb[0].mxu0 %v1875
      %v1877 = vpop.f32.mrb[0].mxu0
      %v1878 = vadd.f32 %v1570, %v1877
      %v1879 = vpop.f32.mrb[0].mxu0
      %1880 = vmatprep.mubr.f32.mxu0 0.0
      %v1881 = vand.u32 %v429, 4294901760
      %1882 = vmatmul.mubr.f32.gmra.mrb[0].mxu0 %v1881
      %v1883 = vpop.f32.mrb[0].mxu0
      %v1884 = vadd.f32 %v1578, %v1883
      %v1885 = vpop.f32.mrb[0].mxu0
      %1886 = vmatprep.mubr.f32.mxu0 0.0
      %v1887 = vand.u32 %v432, 4294901760
      %1888 = vmatmul.mubr.f32.gmra.mrb[0].mxu0 %v1887
      %v1889 = vpop.f32.mrb[0].mxu0
      %v1890 = vadd.f32 %v1586, %v1889
      %v1891 = vpop.f32.mrb[0].mxu0
      %1892 = vmatprep.mubr.f32.mxu0 0.0
      %v1893 = vand.u32 %v435, 4294901760
      %1894 = vmatmul.mubr.f32.gmra.mrb[0].mxu0 %v1893
      %v1895 = vpop.f32.mrb[0].mxu0
      %v1896 = vadd.f32 %v1594, %v1895
      %v1897 = vpop.f32.mrb[0].mxu0
      %1898 = vmatprep.mubr.f32.mxu0 0.0
      %v1899 = vand.u32 %v438, 4294901760
      %1900 = vmatmul.mubr.f32.gmra.mrb[0].mxu0 %v1899
      %v1901 = vpop.f32.mrb[0].mxu0
      %v1902 = vadd.f32 %v1602, %v1901
      %v1903 = vpop.f32.mrb[0].mxu0
      %1904 = vmatprep.mubr.f32.mxu0 0.0
      %v1905 = vand.u32 %v441, 4294901760
      %1906 = vmatmul.mubr.f32.gmra.mrb[0].mxu0 %v1905
      %v1907 = vpop.f32.mrb[0].mxu0
      %v1908 = vadd.f32 %v1610, %v1907
      %v1909 = vpop.f32.mrb[0].mxu0
      %1910 = vmatprep.mubr.f32.mxu0 0.0
      %v1911 = vand.u32 %v444, 4294901760
      %1912 = vmatmul.mubr.f32.gmra.mrb[0].mxu0 %v1911
      %v1913 = vpop.f32.mrb[0].mxu0
      %v1914 = vadd.f32 %v1618, %v1913
      %v1915 = vpop.f32.mrb[0].mxu0
      %1916 = vmatprep.mubr.f32.mxu0 0.0
      %v1917 = vand.u32 %v447, 4294901760
      %1918 = vmatmul.mubr.f32.gmra.mrb[0].mxu0 %v1917
      %v1919 = vpop.f32.mrb[0].mxu0
      %v1920 = vadd.f32 %v1626, %v1919
      %v1921 = vpop.f32.mrb[0].mxu0
      %1922 = vmatprep.mubr.f32.mxu0 0.0
      %v1923 = vand.u32 %v450, 4294901760
      %1924 = vmatmul.mubr.f32.gmra.mrb[0].mxu0 %v1923
      %v1925 = vpop.f32.mrb[0].mxu0
      %v1926 = vadd.f32 %v1634, %v1925
      %v1927 = vpop.f32.mrb[0].mxu0
      %1928 = vmatprep.mubr.f32.mxu0 0.0
      %v1929 = vand.u32 %v453, 4294901760
      %1930 = vmatmul.mubr.f32.gmra.mrb[0].mxu0 %v1929
      %v1931 = vpop.f32.mrb[0].mxu0
      %v1932 = vadd.f32 %v1642, %v1931
      %v1933 = vpop.f32.mrb[0].mxu0
      %1934 = vmatprep.mubr.f32.mxu0 0.0
      %v1935 = vand.u32 %v456, 4294901760
      %1936 = vmatmul.mubr.f32.gmra.mrb[0].mxu0 %v1935
      %v1937 = vpop.f32.mrb[0].mxu0
      %v1938 = vadd.f32 %v1650, %v1937
      %v1939 = vpop.f32.mrb[0].mxu0
      %1940 = vmatprep.mubr.f32.mxu0 0.0
      %v1941 = vand.u32 %v459, 4294901760
      %1942 = vmatmul.mubr.f32.gmra.mrb[0].mxu0 %v1941
      %v1943 = vpop.f32.mrb[0].mxu0
      %v1944 = vadd.f32 %v1658, %v1943
      %v1945 = vpop.f32.mrb[0].mxu0
      %1946 = vmatprep.mubr.f32.mxu0 0.0
      %v1947 = vand.u32 %v462, 4294901760
      %1948 = vmatmul.mubr.f32.gmra.mrb[0].mxu0 %v1947
      %v1949 = vpop.f32.mrb[0].mxu0
      %v1950 = vadd.f32 %v1666, %v1949
      %v1951 = vpop.f32.mrb[0].mxu0
      %1952 = vmatprep.mubr.f32.mxu0 0.0
      %v1953 = vand.u32 %v465, 4294901760
      %1954 = vmatmul.mubr.f32.gmra.mrb[0].mxu0 %v1953
      %v1955 = vpop.f32.mrb[0].mxu0
      %v1956 = vadd.f32 %v1674, %v1955
      %v1957 = vpop.f32.mrb[0].mxu0
      %1958 = vmatprep.mubr.f32.mxu0 0.0
      %v1959 = vand.u32 %v468, 4294901760
      %1960 = vmatmul.mubr.f32.gmra.mrb[0].mxu0 %v1959
      %v1961 = vpop.f32.mrb[0].mxu0
      %v1962 = vadd.f32 %v1682, %v1961
      %v1963 = vpop.f32.mrb[0].mxu0
      %1964 = vmatprep.mubr.f32.mxu0 0.0
      %v1965 = vand.u32 %v471, 4294901760
      %1966 = vmatmul.mubr.f32.gmra.mrb[0].mxu0 %v1965
      %v1967 = vpop.f32.mrb[0].mxu0
      %v1968 = vadd.f32 %v1690, %v1967
      %v1969 = vpop.f32.mrb[0].mxu0
      %1970 = vmatprep.mubr.f32.mxu0 0.0
      %v1971 = vand.u32 %v474, 4294901760
      %1972 = vmatmul.mubr.f32.gmra.mrb[0].mxu0 %v1971
      %v1973 = vpop.f32.mrb[0].mxu0
      %v1974 = vadd.f32 %v1698, %v1973
      %v1975 = vpop.f32.mrb[0].mxu0
      %1976 = vmatprep.mubr.f32.mxu0 0.0
      %v1977 = vand.u32 %v477, 4294901760
      %1978 = vmatmul.mubr.f32.gmra.mrb[0].mxu0 %v1977
      %v1979 = vpop.f32.mrb[0].mxu0
      %v1980 = vadd.f32 %v1706, %v1979
      %v1981 = vpop.f32.mrb[0].mxu0
      %1982 = vmatprep.mubr.f32.mxu0 0.0
      %v1983 = vand.u32 %v480, 4294901760
      %1984 = vmatmul.mubr.f32.gmra.mrb[0].mxu0 %v1983
      %v1985 = vpop.f32.mrb[0].mxu0
      %v1986 = vadd.f32 %v1714, %v1985
      %v1987 = vpop.f32.mrb[0].mxu0
      %1988 = vmatprep.mubr.f32.mxu0 0.0
      %v1989 = vand.u32 %v483, 4294901760
      %1990 = vmatmul.mubr.f32.gmra.mrb[0].mxu0 %v1989
      %v1991 = vpop.f32.mrb[0].mxu0
      %v1992 = vadd.f32 %v1722, %v1991
      %v1993 = vpop.f32.mrb[0].mxu0
      %1994 = vmatprep.mubr.f32.mxu0 0.0
      %v1995 = vand.u32 %v486, 4294901760
      %1996 = vmatmul.mubr.f32.gmra.mrb[0].mxu0 %v1995
      %v1997 = vpop.f32.mrb[0].mxu0
      %v1998 = vadd.f32 %v1730, %v1997
      %v1999 = vpop.f32.mrb[0].mxu0
      %2000 = vmatprep.mubr.f32.mxu0 0.0
      %v2001 = vand.u32 %v489, 4294901760
      %2002 = vmatmul.mubr.f32.gmra.mrb[0].mxu0 %v2001
      %v2003 = vpop.f32.mrb[0].mxu0
      %v2004 = vadd.f32 %v1738, %v2003
      %v2005 = vpop.f32.mrb[0].mxu0
      %2006 = vmatprep.mubr.f32.mxu0 0.0
      %v2007 = vand.u32 %v492, 4294901760
      %2008 = vmatmul.mubr.f32.gmra.mrb[0].mxu0 %v2007
      %v2009 = vpop.f32.mrb[0].mxu0
      %v2010 = vadd.f32 %v1746, %v2009
      %v2011 = vpop.f32.mrb[0].mxu0
      %2012 = vmatprep.mubr.f32.mxu0 0.0
      %v2013 = vand.u32 %v495, 4294901760
      %2014 = vmatmul.mubr.f32.gmra.mrb[0].mxu0 %v2013
      %v2015 = vpop.f32.mrb[0].mxu0
      %v2016 = vadd.f32 %v1754, %v2015
      %v2017 = vpop.f32.mrb[0].mxu0
      %2018 = vmatprep.mubr.f32.mxu0 0.0
      %v2019 = vand.u32 %v498, 4294901760
      %2020 = vmatmul.mubr.f32.gmra.mrb[0].mxu0 %v2019
      %v2021 = vpop.f32.mrb[0].mxu0
      %v2022 = vadd.f32 %v1762, %v2021
      %v2023 = vpop.f32.mrb[0].mxu0
      %2024 = vdwg.mxu0
      %2025 = vmatprep.subr.mxu0 0.0
      %v2026 = vand.u32 %v502, 4294901760
      %2027 = vmatpush1.msra.mxu0 %v2026
      %2028 = vmatprep.subr.mxu0 0.0
      %2029 = vmatpush1.msra.mxu0 0.0
      %2030 = vmatprep.subr.mxu0 0.0
      %2031 = vmatpush1.msra.mxu0 0.0
      %2032 = vmatprep.subr.mxu0 0.0
      %2033 = vmatpush1.msra.mxu0 0.0
      %2034 = vmatprep.subr.mxu0 0.0
      %2035 = vmatpush1.msra.mxu0 0.0
      %2036 = vmatprep.subr.mxu0 0.0
      %2037 = vmatpush1.msra.mxu0 0.0
      %2038 = vmatprep.subr.mxu0 0.0
      %2039 = vmatpush1.msra.mxu0 0.0
      %2040 = vmatprep.subr.mxu0 0.0
      %2041 = vmatpush1.msra.mxu0 0.0
      %2042 = vmatprep.subr.mxu0 0.0
      %2043 = vmatpush1.msra.mxu0 0.0
      %2044 = vmatprep.subr.mxu0 0.0
      %2045 = vmatpush1.msra.mxu0 0.0
      %2046 = vmatprep.subr.mxu0 0.0
      %2047 = vmatpush1.msra.mxu0 0.0
      %2048 = vmatprep.subr.mxu0 0.0
      %2049 = vmatpush1.msra.mxu0 0.0
      %2050 = vmatprep.subr.mxu0 0.0
      %2051 = vmatpush1.msra.mxu0 0.0
      %2052 = vmatprep.subr.mxu0 0.0
      %2053 = vmatpush1.msra.mxu0 0.0
      %2054 = vmatprep.subr.mxu0 0.0
      %2055 = vmatpush1.msra.mxu0 0.0
      %2056 = vmatprep.subr.mxu0 0.0
      %2057 = vmatpush1.msra.mxu0 0.0
      %2058 = vmatprep.subr.mxu0 0.0
      %2059 = vmatpush1.msra.mxu0 0.0
      %2060 = vmatprep.subr.mxu0 0.0
      %2061 = vmatpush1.msra.mxu0 0.0
      %2062 = vmatprep.subr.mxu0 0.0
      %2063 = vmatpush1.msra.mxu0 0.0
      %2064 = vmatprep.subr.mxu0 0.0
      %2065 = vmatpush1.msra.mxu0 0.0
      %2066 = vmatprep.subr.mxu0 0.0
      %2067 = vmatpush1.msra.mxu0 0.0
      %2068 = vmatprep.subr.mxu0 0.0
      %2069 = vmatpush1.msra.mxu0 0.0
      %2070 = vmatprep.subr.mxu0 0.0
      %2071 = vmatpush1.msra.mxu0 0.0
      %2072 = vmatprep.subr.mxu0 0.0
      %2073 = vmatpush1.msra.mxu0 0.0
      %2074 = vmatprep.subr.mxu0 0.0
      %2075 = vmatpush1.msra.mxu0 0.0
      %2076 = vmatprep.subr.mxu0 0.0
      %2077 = vmatpush1.msra.mxu0 0.0
      %2078 = vmatprep.subr.mxu0 0.0
      %2079 = vmatpush1.msra.mxu0 0.0
      %2080 = vmatprep.subr.mxu0 0.0
      %2081 = vmatpush1.msra.mxu0 0.0
      %2082 = vmatprep.subr.mxu0 0.0
      %2083 = vmatpush1.msra.mxu0 0.0
      %2084 = vmatprep.subr.mxu0 0.0
      %2085 = vmatpush1.msra.mxu0 0.0
      %2086 = vmatprep.subr.mxu0 0.0
      %2087 = vmatpush1.msra.mxu0 0.0
      %2088 = vmatprep.subr.mxu0 0.0
      %2089 = vmatpush1.msra.mxu0 0.0
      %2090 = vmatprep.mubr.f32.mxu0 0.0
      %v2091 = vand.u32 %v405, 4294901760
      %2092 = vmatmul.mubr.f32.gmra.mrb[0].mxu0 %v2091
      %v2093 = vpop.f32.mrb[0].mxu0
      %v2094 = vadd.f32 %v1836, %v2093
      %v2095 = vpop.f32.mrb[0].mxu0
      %2096 = vmatprep.mubr.f32.mxu0 0.0
      %v2097 = vand.u32 %v408, 4294901760
      %2098 = vmatmul.mubr.f32.gmra.mrb[0].mxu0 %v2097
      %v2099 = vpop.f32.mrb[0].mxu0
      %v2100 = vadd.f32 %v1842, %v2099
      %v2101 = vpop.f32.mrb[0].mxu0
      %2102 = vmatprep.mubr.f32.mxu0 0.0
      %v2103 = vand.u32 %v411, 4294901760
      %2104 = vmatmul.mubr.f32.gmra.mrb[0].mxu0 %v2103
      %v2105 = vpop.f32.mrb[0].mxu0
      %v2106 = vadd.f32 %v1848, %v2105
      %v2107 = vpop.f32.mrb[0].mxu0
      %2108 = vmatprep.mubr.f32.mxu0 0.0
      %v2109 = vand.u32 %v414, 4294901760
      %2110 = vmatmul.mubr.f32.gmra.mrb[0].mxu0 %v2109
      %v2111 = vpop.f32.mrb[0].mxu0
      %v2112 = vadd.f32 %v1854, %v2111
      %v2113 = vpop.f32.mrb[0].mxu0
      %2114 = vmatprep.mubr.f32.mxu0 0.0
      %v2115 = vand.u32 %v417, 4294901760
      %2116 = vmatmul.mubr.f32.gmra.mrb[0].mxu0 %v2115
      %v2117 = vpop.f32.mrb[0].mxu0
      %v2118 = vadd.f32 %v1860, %v2117
      %v2119 = vpop.f32.mrb[0].mxu0
      %2120 = vmatprep.mubr.f32.mxu0 0.0
      %v2121 = vand.u32 %v420, 4294901760
      %2122 = vmatmul.mubr.f32.gmra.mrb[0].mxu0 %v2121
      %v2123 = vpop.f32.mrb[0].mxu0
      %v2124 = vadd.f32 %v1866, %v2123
      %v2125 = vpop.f32.mrb[0].mxu0
      %2126 = vmatprep.mubr.f32.mxu0 0.0
      %v2127 = vand.u32 %v423, 4294901760
      %2128 = vmatmul.mubr.f32.gmra.mrb[0].mxu0 %v2127
      %v2129 = vpop.f32.mrb[0].mxu0
      %v2130 = vadd.f32 %v1872, %v2129
      %v2131 = vpop.f32.mrb[0].mxu0
      %2132 = vmatprep.mubr.f32.mxu0 0.0
      %v2133 = vand.u32 %v426, 4294901760
      %2134 = vmatmul.mubr.f32.gmra.mrb[0].mxu0 %v2133
      %v2135 = vpop.f32.mrb[0].mxu0
      %v2136 = vadd.f32 %v1878, %v2135
      %v2137 = vpop.f32.mrb[0].mxu0
      %2138 = vmatprep.mubr.f32.mxu0 0.0
      %v2139 = vand.u32 %v429, 4294901760
      %2140 = vmatmul.mubr.f32.gmra.mrb[0].mxu0 %v2139
      %v2141 = vpop.f32.mrb[0].mxu0
      %v2142 = vadd.f32 %v1884, %v2141
      %v2143 = vpop.f32.mrb[0].mxu0
      %2144 = vmatprep.mubr.f32.mxu0 0.0
      %v2145 = vand.u32 %v432, 4294901760
      %2146 = vmatmul.mubr.f32.gmra.mrb[0].mxu0 %v2145
      %v2147 = vpop.f32.mrb[0].mxu0
      %v2148 = vadd.f32 %v1890, %v2147
      %v2149 = vpop.f32.mrb[0].mxu0
      %2150 = vmatprep.mubr.f32.mxu0 0.0
      %v2151 = vand.u32 %v435, 4294901760
      %2152 = vmatmul.mubr.f32.gmra.mrb[0].mxu0 %v2151
      %v2153 = vpop.f32.mrb[0].mxu0
      %v2154 = vadd.f32 %v1896, %v2153
      %v2155 = vpop.f32.mrb[0].mxu0
      %2156 = vmatprep.mubr.f32.mxu0 0.0
      %v2157 = vand.u32 %v438, 4294901760
      %2158 = vmatmul.mubr.f32.gmra.mrb[0].mxu0 %v2157
      %v2159 = vpop.f32.mrb[0].mxu0
      %v2160 = vadd.f32 %v1902, %v2159
      %v2161 = vpop.f32.mrb[0].mxu0
      %2162 = vmatprep.mubr.f32.mxu0 0.0
      %v2163 = vand.u32 %v441, 4294901760
      %2164 = vmatmul.mubr.f32.gmra.mrb[0].mxu0 %v2163
      %v2165 = vpop.f32.mrb[0].mxu0
      %v2166 = vadd.f32 %v1908, %v2165
      %v2167 = vpop.f32.mrb[0].mxu0
      %2168 = vmatprep.mubr.f32.mxu0 0.0
      %v2169 = vand.u32 %v444, 4294901760
      %2170 = vmatmul.mubr.f32.gmra.mrb[0].mxu0 %v2169
      %v2171 = vpop.f32.mrb[0].mxu0
      %v2172 = vadd.f32 %v1914, %v2171
      %v2173 = vpop.f32.mrb[0].mxu0
      %2174 = vmatprep.mubr.f32.mxu0 0.0
      %v2175 = vand.u32 %v447, 4294901760
      %2176 = vmatmul.mubr.f32.gmra.mrb[0].mxu0 %v2175
      %v2177 = vpop.f32.mrb[0].mxu0
      %v2178 = vadd.f32 %v1920, %v2177
      %v2179 = vpop.f32.mrb[0].mxu0
      %2180 = vmatprep.mubr.f32.mxu0 0.0
      %v2181 = vand.u32 %v450, 4294901760
      %2182 = vmatmul.mubr.f32.gmra.mrb[0].mxu0 %v2181
      %v2183 = vpop.f32.mrb[0].mxu0
      %v2184 = vadd.f32 %v1926, %v2183
      %v2185 = vpop.f32.mrb[0].mxu0
      %2186 = vmatprep.mubr.f32.mxu0 0.0
      %v2187 = vand.u32 %v453, 4294901760
      %2188 = vmatmul.mubr.f32.gmra.mrb[0].mxu0 %v2187
      %v2189 = vpop.f32.mrb[0].mxu0
      %v2190 = vadd.f32 %v1932, %v2189
      %v2191 = vpop.f32.mrb[0].mxu0
      %2192 = vmatprep.mubr.f32.mxu0 0.0
      %v2193 = vand.u32 %v456, 4294901760
      %2194 = vmatmul.mubr.f32.gmra.mrb[0].mxu0 %v2193
      %v2195 = vpop.f32.mrb[0].mxu0
      %v2196 = vadd.f32 %v1938, %v2195
      %v2197 = vpop.f32.mrb[0].mxu0
      %2198 = vmatprep.mubr.f32.mxu0 0.0
      %v2199 = vand.u32 %v459, 4294901760
      %2200 = vmatmul.mubr.f32.gmra.mrb[0].mxu0 %v2199
      %v2201 = vpop.f32.mrb[0].mxu0
      %v2202 = vadd.f32 %v1944, %v2201
      %v2203 = vpop.f32.mrb[0].mxu0
      %2204 = vmatprep.mubr.f32.mxu0 0.0
      %v2205 = vand.u32 %v462, 4294901760
      %2206 = vmatmul.mubr.f32.gmra.mrb[0].mxu0 %v2205
      %v2207 = vpop.f32.mrb[0].mxu0
      %v2208 = vadd.f32 %v1950, %v2207
      %v2209 = vpop.f32.mrb[0].mxu0
      %2210 = vmatprep.mubr.f32.mxu0 0.0
      %v2211 = vand.u32 %v465, 4294901760
      %2212 = vmatmul.mubr.f32.gmra.mrb[0].mxu0 %v2211
      %v2213 = vpop.f32.mrb[0].mxu0
      %v2214 = vadd.f32 %v1956, %v2213
      %v2215 = vpop.f32.mrb[0].mxu0
      %2216 = vmatprep.mubr.f32.mxu0 0.0
      %v2217 = vand.u32 %v468, 4294901760
      %2218 = vmatmul.mubr.f32.gmra.mrb[0].mxu0 %v2217
      %v2219 = vpop.f32.mrb[0].mxu0
      %v2220 = vadd.f32 %v1962, %v2219
      %v2221 = vpop.f32.mrb[0].mxu0
      %2222 = vmatprep.mubr.f32.mxu0 0.0
      %v2223 = vand.u32 %v471, 4294901760
      %2224 = vmatmul.mubr.f32.gmra.mrb[0].mxu0 %v2223
      %v2225 = vpop.f32.mrb[0].mxu0
      %v2226 = vadd.f32 %v1968, %v2225
      %v2227 = vpop.f32.mrb[0].mxu0
      %2228 = vmatprep.mubr.f32.mxu0 0.0
      %v2229 = vand.u32 %v474, 4294901760
      %2230 = vmatmul.mubr.f32.gmra.mrb[0].mxu0 %v2229
      %v2231 = vpop.f32.mrb[0].mxu0
      %v2232 = vadd.f32 %v1974, %v2231
      %v2233 = vpop.f32.mrb[0].mxu0
      %2234 = vmatprep.mubr.f32.mxu0 0.0
      %v2235 = vand.u32 %v477, 4294901760
      %2236 = vmatmul.mubr.f32.gmra.mrb[0].mxu0 %v2235
      %v2237 = vpop.f32.mrb[0].mxu0
      %v2238 = vadd.f32 %v1980, %v2237
      %v2239 = vpop.f32.mrb[0].mxu0
      %2240 = vmatprep.mubr.f32.mxu0 0.0
      %v2241 = vand.u32 %v480, 4294901760
      %2242 = vmatmul.mubr.f32.gmra.mrb[0].mxu0 %v2241
      %v2243 = vpop.f32.mrb[0].mxu0
      %v2244 = vadd.f32 %v1986, %v2243
      %v2245 = vpop.f32.mrb[0].mxu0
      %2246 = vmatprep.mubr.f32.mxu0 0.0
      %v2247 = vand.u32 %v483, 4294901760
      %2248 = vmatmul.mubr.f32.gmra.mrb[0].mxu0 %v2247
      %v2249 = vpop.f32.mrb[0].mxu0
      %v2250 = vadd.f32 %v1992, %v2249
      %v2251 = vpop.f32.mrb[0].mxu0
      %2252 = vmatprep.mubr.f32.mxu0 0.0
      %v2253 = vand.u32 %v486, 4294901760
      %2254 = vmatmul.mubr.f32.gmra.mrb[0].mxu0 %v2253
      %v2255 = vpop.f32.mrb[0].mxu0
      %v2256 = vadd.f32 %v1998, %v2255
      %v2257 = vpop.f32.mrb[0].mxu0
      %2258 = vmatprep.mubr.f32.mxu0 0.0
      %v2259 = vand.u32 %v489, 4294901760
      %2260 = vmatmul.mubr.f32.gmra.mrb[0].mxu0 %v2259
      %v2261 = vpop.f32.mrb[0].mxu0
      %v2262 = vadd.f32 %v2004, %v2261
      %v2263 = vpop.f32.mrb[0].mxu0
      %2264 = vmatprep.mubr.f32.mxu0 0.0
      %v2265 = vand.u32 %v492, 4294901760
      %2266 = vmatmul.mubr.f32.gmra.mrb[0].mxu0 %v2265
      %v2267 = vpop.f32.mrb[0].mxu0
      %v2268 = vadd.f32 %v2010, %v2267
      %v2269 = vpop.f32.mrb[0].mxu0
      %2270 = vmatprep.mubr.f32.mxu0 0.0
      %v2271 = vand.u32 %v495, 4294901760
      %2272 = vmatmul.mubr.f32.gmra.mrb[0].mxu0 %v2271
      %v2273 = vpop.f32.mrb[0].mxu0
      %v2274 = vadd.f32 %v2016, %v2273
      %v2275 = vpop.f32.mrb[0].mxu0
      %2276 = vmatprep.mubr.f32.mxu0 0.0
      %v2277 = vand.u32 %v498, 4294901760
      %2278 = vmatmul.mubr.f32.gmra.mrb[0].mxu0 %v2277
      %v2279 = vpop.f32.mrb[0].mxu0
      %v2280 = vadd.f32 %v2022, %v2279
      %v2281 = vpop.f32.mrb[0].mxu0
      %2282 = vdwg.mxu0
      %v2283 = vmax.f32 %v2094, 0.0
      %v2284 = vmax.f32 %v2100, 0.0
      %v2285 = vmax.f32 %v2106, 0.0
      %v2286 = vmax.f32 %v2112, 0.0
      %v2287 = vmax.f32 %v2118, 0.0
      %v2288 = vmax.f32 %v2124, 0.0
      %v2289 = vmax.f32 %v2130, 0.0
      %v2290 = vmax.f32 %v2136, 0.0
      %v2291 = vmax.f32 %v2142, 0.0
      %v2292 = vmax.f32 %v2148, 0.0
      %v2293 = vmax.f32 %v2154, 0.0
      %v2294 = vmax.f32 %v2160, 0.0
      %v2295 = vmax.f32 %v2166, 0.0
      %v2296 = vmax.f32 %v2172, 0.0
      %v2297 = vmax.f32 %v2178, 0.0
      %v2298 = vmax.f32 %v2184, 0.0
      %v2299 = vmax.f32 %v2190, 0.0
      %v2300 = vmax.f32 %v2196, 0.0
      %v2301 = vmax.f32 %v2202, 0.0
      %v2302 = vmax.f32 %v2208, 0.0
      %v2303 = vmax.f32 %v2214, 0.0
      %v2304 = vmax.f32 %v2220, 0.0
      %v2305 = vmax.f32 %v2226, 0.0
      %v2306 = vmax.f32 %v2232, 0.0
      %v2307 = vmax.f32 %v2238, 0.0
      %v2308 = vmax.f32 %v2244, 0.0
      %v2309 = vmax.f32 %v2250, 0.0
      %v2310 = vmax.f32 %v2256, 0.0
      %v2311 = vmax.f32 %v2262, 0.0
      %v2312 = vmax.f32 %v2268, 0.0
      %v2313 = vmax.f32 %v2274, 0.0
      %v2314 = vmax.f32 %v2280, 0.0
      %2315 = vst.msk [vmem:[#allocation2] sm:$0xff] %vm403, 0.0
      %vm2316 = vcmask 25600
      %2317 = vst.msk [vmem:[#allocation2 + $0x8] sm:$0x3] %vm2316, 0.0
      %2318 = vst.msk [vmem:[#allocation2 + $0x10] sm:$0xff] %vm403, 0.0
      %2319 = vst.msk [vmem:[#allocation2 + $0x18] sm:$0x3] %vm2316, 0.0
      %2320 = vst.msk [vmem:[#allocation2 + $0x20] sm:$0xff] %vm403, 0.0
      %2321 = vst.msk [vmem:[#allocation2 + $0x28] sm:$0x3] %vm2316, 0.0
      %2322 = vst.msk [vmem:[#allocation2 + $0x30] sm:$0xff] %vm403, 0.0
      %2323 = vst.msk [vmem:[#allocation2 + $0x38] sm:$0x3] %vm2316, 0.0
      %2324 = vst.msk [vmem:[#allocation2 + $0x40] sm:$0xff] %vm403, 0.0
      %2325 = vst.msk [vmem:[#allocation2 + $0x48] sm:$0x3] %vm2316, 0.0
      %2326 = vst.msk [vmem:[#allocation2 + $0x50] sm:$0xff] %vm403, 0.0
      %2327 = vst.msk [vmem:[#allocation2 + $0x58] sm:$0x3] %vm2316, 0.0
      %2328 = vst.msk [vmem:[#allocation2 + $0x60] sm:$0xff] %vm403, 0.0
      %2329 = vst.msk [vmem:[#allocation2 + $0x68] sm:$0x3] %vm2316, 0.0
      %2330 = vst.msk [vmem:[#allocation2 + $0x70] sm:$0xff] %vm403, 0.0
      %2331 = vst.msk [vmem:[#allocation2 + $0x78] sm:$0x3] %vm2316, 0.0
      %2332 = vst.msk [vmem:[#allocation2 + $0x80] sm:$0xff] %vm403, 0.0
      %2333 = vst.msk [vmem:[#allocation2 + $0x88] sm:$0x3] %vm2316, 0.0
      %2334 = vst.msk [vmem:[#allocation2 + $0x90] sm:$0xff] %vm403, 0.0
      %2335 = vst.msk [vmem:[#allocation2 + $0x98] sm:$0x3] %vm2316, 0.0
      %s2336 = scalar_lea.vmem [#allocation2], 800
      %2337 = vst.msk [vmem:[%s2336] sm:$0xff] %vm403, 0.0
      %2338 = vst.msk [vmem:[%s2336 + $0x8] sm:$0x3] %vm2316, 0.0
      %2339 = vst.msk [vmem:[%s2336 + $0x10] sm:$0xff] %vm403, 0.0
      %2340 = vst.msk [vmem:[%s2336 + $0x18] sm:$0x3] %vm2316, 0.0
      %2341 = vst.msk [vmem:[%s2336 + $0x20] sm:$0xff] %vm403, 0.0
      %2342 = vst.msk [vmem:[%s2336 + $0x28] sm:$0x3] %vm2316, 0.0
      %2343 = vst.msk [vmem:[%s2336 + $0x30] sm:$0xff] %vm403, 0.0
      %2344 = vst.msk [vmem:[%s2336 + $0x38] sm:$0x3] %vm2316, 0.0
      %2345 = vst.msk [vmem:[%s2336 + $0x40] sm:$0xff] %vm403, 0.0
      %2346 = vst.msk [vmem:[%s2336 + $0x48] sm:$0x3] %vm2316, 0.0
      %2347 = vst.msk [vmem:[%s2336 + $0x50] sm:$0xff] %vm403, 0.0
      %2348 = vst.msk [vmem:[%s2336 + $0x58] sm:$0x3] %vm2316, 0.0
      %2349 = vst.msk [vmem:[%s2336 + $0x60] sm:$0xff] %vm403, 0.0
      %2350 = vst.msk [vmem:[%s2336 + $0x68] sm:$0x3] %vm2316, 0.0
      %2351 = vst.msk [vmem:[%s2336 + $0x70] sm:$0xff] %vm403, 0.0
      %2352 = vst.msk [vmem:[%s2336 + $0x78] sm:$0x3] %vm2316, 0.0
      %2353 = vst.msk [vmem:[%s2336 + $0x80] sm:$0xff] %vm403, 0.0
      %2354 = vst.msk [vmem:[%s2336 + $0x88] sm:$0x3] %vm2316, 0.0
      %2355 = vst.msk [vmem:[%s2336 + $0x90] sm:$0xff] %vm403, 0.0
      %2356 = vst.msk [vmem:[%s2336 + $0x98] sm:$0x3] %vm2316, 0.0
      %2357 = vst.msk [vmem:[#allocation2] sm:$0xff] %vm403, 0.0
      %2358 = vst.msk [vmem:[#allocation2 + $0x8] sm:$0x3] %vm2316, 0.0
      %2359 = vst.msk [vmem:[#allocation2 + $0xa0] sm:$0xff] %vm403, 0.0
      %2360 = vst.msk [vmem:[#allocation2 + $0xa8] sm:$0x3] %vm2316, 0.0
      %2361 = vst.msk [vmem:[#allocation2 + $0x140] sm:$0xff] %vm403, 0.0
      %2362 = vst.msk [vmem:[#allocation2 + $0x148] sm:$0x3] %vm2316, 0.0
      %2363 = vst.msk [vmem:[#allocation2 + $0x1e0] sm:$0xff] %vm403, 0.0
      %2364 = vst.msk [vmem:[#allocation2 + $0x1e8] sm:$0x3] %vm2316, 0.0
      %2365 = vst.msk [vmem:[#allocation2 + $0x280] sm:$0xff] %vm403, 0.0
      %2366 = vst.msk [vmem:[#allocation2 + $0x288] sm:$0x3] %vm2316, 0.0
      %2367 = vst.msk [vmem:[#allocation2 + $0x320] sm:$0xff] %vm403, 0.0
      %2368 = vst.msk [vmem:[#allocation2 + $0x328] sm:$0x3] %vm2316, 0.0
      %s2369 = scalar_lea.vmem [#allocation2], 144
      %2370 = vst.msk [vmem:[%s2369] sm:$0xff] %vm403, 0.0
      %2371 = vst.msk [vmem:[%s2369 + $0x8] sm:$0x3] %vm2316, 0.0
      %2372 = vst.msk [vmem:[%s2369 + $0xa0] sm:$0xff] %vm403, 0.0
      %2373 = vst.msk [vmem:[%s2369 + $0xa8] sm:$0x3] %vm2316, 0.0
      %2374 = vst.msk [vmem:[%s2369 + $0x140] sm:$0xff] %vm403, 0.0
      %2375 = vst.msk [vmem:[%s2369 + $0x148] sm:$0x3] %vm2316, 0.0
      %2376 = vst.msk [vmem:[%s2369 + $0x1e0] sm:$0xff] %vm403, 0.0
      %2377 = vst.msk [vmem:[%s2369 + $0x1e8] sm:$0x3] %vm2316, 0.0
      %2378 = vst.msk [vmem:[%s2369 + $0x280] sm:$0xff] %vm403, 0.0
      %2379 = vst.msk [vmem:[%s2369 + $0x288] sm:$0x3] %vm2316, 0.0
      %2380 = vst.msk [vmem:[%s2369 + $0x320] sm:$0xff] %vm403, 0.0
      %2381 = vst.msk [vmem:[%s2369 + $0x328] sm:$0x3] %vm2316, 0.0
      %vm2382 = vcmask 24576
      %2383 = vst.msk [vmem:[#allocation2] sm:$0x1] %vm2382, 0.0
      %2384 = vst.msk [vmem:[#allocation2 + $0x10] sm:$0x1] %vm2382, 0.0
      %2385 = vst.msk [vmem:[#allocation2 + $0x20] sm:$0x1] %vm2382, 0.0
      %2386 = vst.msk [vmem:[#allocation2 + $0x30] sm:$0x1] %vm2382, 0.0
      %2387 = vst.msk [vmem:[#allocation2 + $0x40] sm:$0x1] %vm2382, 0.0
      %2388 = vst.msk [vmem:[#allocation2 + $0x50] sm:$0x1] %vm2382, 0.0
      %2389 = vst.msk [vmem:[#allocation2 + $0x60] sm:$0x1] %vm2382, 0.0
      %2390 = vst.msk [vmem:[#allocation2 + $0x70] sm:$0x1] %vm2382, 0.0
      %2391 = vst.msk [vmem:[#allocation2 + $0x80] sm:$0x1] %vm2382, 0.0
      %2392 = vst.msk [vmem:[#allocation2 + $0x90] sm:$0x1] %vm2382, 0.0
      %2393 = vst.msk [vmem:[#allocation2 + $0xa0] sm:$0x1] %vm2382, 0.0
      %2394 = vst.msk [vmem:[#allocation2 + $0xb0] sm:$0x1] %vm2382, 0.0
      %2395 = vst.msk [vmem:[#allocation2 + $0xc0] sm:$0x1] %vm2382, 0.0
      %2396 = vst.msk [vmem:[#allocation2 + $0xd0] sm:$0x1] %vm2382, 0.0
      %2397 = vst.msk [vmem:[#allocation2 + $0xe0] sm:$0x1] %vm2382, 0.0
      %2398 = vst.msk [vmem:[#allocation2 + $0xf0] sm:$0x1] %vm2382, 0.0
      %2399 = vst.msk [vmem:[#allocation2 + $0x100] sm:$0x1] %vm2382, 0.0
      %2400 = vst.msk [vmem:[#allocation2 + $0x110] sm:$0x1] %vm2382, 0.0
      %2401 = vst.msk [vmem:[#allocation2 + $0x120] sm:$0x1] %vm2382, 0.0
      %2402 = vst.msk [vmem:[#allocation2 + $0x130] sm:$0x1] %vm2382, 0.0
      %2403 = vst.msk [vmem:[#allocation2 + $0x140] sm:$0x1] %vm2382, 0.0
      %2404 = vst.msk [vmem:[#allocation2 + $0x150] sm:$0x1] %vm2382, 0.0
      %2405 = vst.msk [vmem:[#allocation2 + $0x160] sm:$0x1] %vm2382, 0.0
      %2406 = vst.msk [vmem:[#allocation2 + $0x170] sm:$0x1] %vm2382, 0.0
      %2407 = vst.msk [vmem:[#allocation2 + $0x180] sm:$0x1] %vm2382, 0.0
      %2408 = vst.msk [vmem:[#allocation2 + $0x190] sm:$0x1] %vm2382, 0.0
      %2409 = vst.msk [vmem:[#allocation2 + $0x1a0] sm:$0x1] %vm2382, 0.0
      %2410 = vst.msk [vmem:[#allocation2 + $0x1b0] sm:$0x1] %vm2382, 0.0
      %2411 = vst.msk [vmem:[#allocation2 + $0x1c0] sm:$0x1] %vm2382, 0.0
      %2412 = vst.msk [vmem:[#allocation2 + $0x1d0] sm:$0x1] %vm2382, 0.0
      %2413 = vst.msk [vmem:[#allocation2 + $0x1e0] sm:$0x1] %vm2382, 0.0
      %2414 = vst.msk [vmem:[#allocation2 + $0x1f0] sm:$0x1] %vm2382, 0.0
      %2415 = vst.msk [vmem:[#allocation2 + $0x200] sm:$0x1] %vm2382, 0.0
      %2416 = vst.msk [vmem:[#allocation2 + $0x210] sm:$0x1] %vm2382, 0.0
      %2417 = vst.msk [vmem:[#allocation2 + $0x220] sm:$0x1] %vm2382, 0.0
      %2418 = vst.msk [vmem:[#allocation2 + $0x230] sm:$0x1] %vm2382, 0.0
      %2419 = vst.msk [vmem:[#allocation2 + $0x240] sm:$0x1] %vm2382, 0.0
      %2420 = vst.msk [vmem:[#allocation2 + $0x250] sm:$0x1] %vm2382, 0.0
      %2421 = vst.msk [vmem:[#allocation2 + $0x260] sm:$0x1] %vm2382, 0.0
      %2422 = vst.msk [vmem:[#allocation2 + $0x270] sm:$0x1] %vm2382, 0.0
      %2423 = vst.msk [vmem:[#allocation2 + $0x280] sm:$0x1] %vm2382, 0.0
      %2424 = vst.msk [vmem:[#allocation2 + $0x290] sm:$0x1] %vm2382, 0.0
      %2425 = vst.msk [vmem:[#allocation2 + $0x2a0] sm:$0x1] %vm2382, 0.0
      %2426 = vst.msk [vmem:[#allocation2 + $0x2b0] sm:$0x1] %vm2382, 0.0
      %2427 = vst.msk [vmem:[#allocation2 + $0x2c0] sm:$0x1] %vm2382, 0.0
      %2428 = vst.msk [vmem:[#allocation2 + $0x2d0] sm:$0x1] %vm2382, 0.0
      %2429 = vst.msk [vmem:[#allocation2 + $0x2e0] sm:$0x1] %vm2382, 0.0
      %2430 = vst.msk [vmem:[#allocation2 + $0x2f0] sm:$0x1] %vm2382, 0.0
      %2431 = vst.msk [vmem:[#allocation2 + $0x300] sm:$0x1] %vm2382, 0.0
      %2432 = vst.msk [vmem:[#allocation2 + $0x310] sm:$0x1] %vm2382, 0.0
      %2433 = vst.msk [vmem:[#allocation2 + $0x320] sm:$0x1] %vm2382, 0.0
      %2434 = vst.msk [vmem:[#allocation2 + $0x330] sm:$0x1] %vm2382, 0.0
      %2435 = vst.msk [vmem:[#allocation2 + $0x340] sm:$0x1] %vm2382, 0.0
      %2436 = vst.msk [vmem:[#allocation2 + $0x350] sm:$0x1] %vm2382, 0.0
      %2437 = vst.msk [vmem:[#allocation2 + $0x360] sm:$0x1] %vm2382, 0.0
      %2438 = vst.msk [vmem:[#allocation2 + $0x370] sm:$0x1] %vm2382, 0.0
      %2439 = vst.msk [vmem:[#allocation2 + $0x380] sm:$0x1] %vm2382, 0.0
      %2440 = vst.msk [vmem:[#allocation2 + $0x390] sm:$0x1] %vm2382, 0.0
      %2441 = vst.msk [vmem:[#allocation2 + $0x3a0] sm:$0x1] %vm2382, 0.0
      %2442 = vst.msk [vmem:[#allocation2 + $0x3b0] sm:$0x1] %vm2382, 0.0
      %2443 = vst.msk [vmem:[#allocation2 + $0x9] sm:$0x1] %vm2382, 0.0
      %2444 = vst.msk [vmem:[#allocation2 + $0x19] sm:$0x1] %vm2382, 0.0
      %2445 = vst.msk [vmem:[#allocation2 + $0x29] sm:$0x1] %vm2382, 0.0
      %2446 = vst.msk [vmem:[#allocation2 + $0x39] sm:$0x1] %vm2382, 0.0
      %2447 = vst.msk [vmem:[#allocation2 + $0x49] sm:$0x1] %vm2382, 0.0
      %2448 = vst.msk [vmem:[#allocation2 + $0x59] sm:$0x1] %vm2382, 0.0
      %2449 = vst.msk [vmem:[#allocation2 + $0x69] sm:$0x1] %vm2382, 0.0
      %2450 = vst.msk [vmem:[#allocation2 + $0x79] sm:$0x1] %vm2382, 0.0
      %2451 = vst.msk [vmem:[#allocation2 + $0x89] sm:$0x1] %vm2382, 0.0
      %2452 = vst.msk [vmem:[#allocation2 + $0x99] sm:$0x1] %vm2382, 0.0
      %2453 = vst.msk [vmem:[#allocation2 + $0xa9] sm:$0x1] %vm2382, 0.0
      %2454 = vst.msk [vmem:[#allocation2 + $0xb9] sm:$0x1] %vm2382, 0.0
      %2455 = vst.msk [vmem:[#allocation2 + $0xc9] sm:$0x1] %vm2382, 0.0
      %2456 = vst.msk [vmem:[#allocation2 + $0xd9] sm:$0x1] %vm2382, 0.0
      %2457 = vst.msk [vmem:[#allocation2 + $0xe9] sm:$0x1] %vm2382, 0.0
      %2458 = vst.msk [vmem:[#allocation2 + $0xf9] sm:$0x1] %vm2382, 0.0
      %2459 = vst.msk [vmem:[#allocation2 + $0x109] sm:$0x1] %vm2382, 0.0
      %2460 = vst.msk [vmem:[#allocation2 + $0x119] sm:$0x1] %vm2382, 0.0
      %2461 = vst.msk [vmem:[#allocation2 + $0x129] sm:$0x1] %vm2382, 0.0
      %2462 = vst.msk [vmem:[#allocation2 + $0x139] sm:$0x1] %vm2382, 0.0
      %2463 = vst.msk [vmem:[#allocation2 + $0x149] sm:$0x1] %vm2382, 0.0
      %2464 = vst.msk [vmem:[#allocation2 + $0x159] sm:$0x1] %vm2382, 0.0
      %2465 = vst.msk [vmem:[#allocation2 + $0x169] sm:$0x1] %vm2382, 0.0
      %2466 = vst.msk [vmem:[#allocation2 + $0x179] sm:$0x1] %vm2382, 0.0
      %2467 = vst.msk [vmem:[#allocation2 + $0x189] sm:$0x1] %vm2382, 0.0
      %2468 = vst.msk [vmem:[#allocation2 + $0x199] sm:$0x1] %vm2382, 0.0
      %2469 = vst.msk [vmem:[#allocation2 + $0x1a9] sm:$0x1] %vm2382, 0.0
      %2470 = vst.msk [vmem:[#allocation2 + $0x1b9] sm:$0x1] %vm2382, 0.0
      %2471 = vst.msk [vmem:[#allocation2 + $0x1c9] sm:$0x1] %vm2382, 0.0
      %2472 = vst.msk [vmem:[#allocation2 + $0x1d9] sm:$0x1] %vm2382, 0.0
      %2473 = vst.msk [vmem:[#allocation2 + $0x1e9] sm:$0x1] %vm2382, 0.0
      %2474 = vst.msk [vmem:[#allocation2 + $0x1f9] sm:$0x1] %vm2382, 0.0
      %2475 = vst.msk [vmem:[#allocation2 + $0x209] sm:$0x1] %vm2382, 0.0
      %2476 = vst.msk [vmem:[#allocation2 + $0x219] sm:$0x1] %vm2382, 0.0
      %2477 = vst.msk [vmem:[#allocation2 + $0x229] sm:$0x1] %vm2382, 0.0
      %2478 = vst.msk [vmem:[#allocation2 + $0x239] sm:$0x1] %vm2382, 0.0
      %2479 = vst.msk [vmem:[#allocation2 + $0x249] sm:$0x1] %vm2382, 0.0
      %2480 = vst.msk [vmem:[#allocation2 + $0x259] sm:$0x1] %vm2382, 0.0
      %2481 = vst.msk [vmem:[#allocation2 + $0x269] sm:$0x1] %vm2382, 0.0
      %2482 = vst.msk [vmem:[#allocation2 + $0x279] sm:$0x1] %vm2382, 0.0
      %2483 = vst.msk [vmem:[#allocation2 + $0x289] sm:$0x1] %vm2382, 0.0
      %2484 = vst.msk [vmem:[#allocation2 + $0x299] sm:$0x1] %vm2382, 0.0
      %2485 = vst.msk [vmem:[#allocation2 + $0x2a9] sm:$0x1] %vm2382, 0.0
      %2486 = vst.msk [vmem:[#allocation2 + $0x2b9] sm:$0x1] %vm2382, 0.0
      %2487 = vst.msk [vmem:[#allocation2 + $0x2c9] sm:$0x1] %vm2382, 0.0
      %2488 = vst.msk [vmem:[#allocation2 + $0x2d9] sm:$0x1] %vm2382, 0.0
      %2489 = vst.msk [vmem:[#allocation2 + $0x2e9] sm:$0x1] %vm2382, 0.0
      %2490 = vst.msk [vmem:[#allocation2 + $0x2f9] sm:$0x1] %vm2382, 0.0
      %2491 = vst.msk [vmem:[#allocation2 + $0x309] sm:$0x1] %vm2382, 0.0
      %2492 = vst.msk [vmem:[#allocation2 + $0x319] sm:$0x1] %vm2382, 0.0
      %2493 = vst.msk [vmem:[#allocation2 + $0x329] sm:$0x1] %vm2382, 0.0
      %2494 = vst.msk [vmem:[#allocation2 + $0x339] sm:$0x1] %vm2382, 0.0
      %2495 = vst.msk [vmem:[#allocation2 + $0x349] sm:$0x1] %vm2382, 0.0
      %2496 = vst.msk [vmem:[#allocation2 + $0x359] sm:$0x1] %vm2382, 0.0
      %2497 = vst.msk [vmem:[#allocation2 + $0x369] sm:$0x1] %vm2382, 0.0
      %2498 = vst.msk [vmem:[#allocation2 + $0x379] sm:$0x1] %vm2382, 0.0
      %2499 = vst.msk [vmem:[#allocation2 + $0x389] sm:$0x1] %vm2382, 0.0
      %2500 = vst.msk [vmem:[#allocation2 + $0x399] sm:$0x1] %vm2382, 0.0
      %2501 = vst.msk [vmem:[#allocation2 + $0x3a9] sm:$0x1] %vm2382, 0.0
      %2502 = vst.msk [vmem:[#allocation2 + $0x3b9] sm:$0x1] %vm2382, 0.0
      %s2503 = scalar_lea.vmem [#allocation2], 176
      %2504 = vst.msk [vmem:[%s2503 + $0x1] sm:$0xff] %vm403, %v2283
      %2505 = vst.msk [vmem:[%s2503 + $0x11] sm:$0xff] %vm403, %v2284
      %2506 = vst.msk [vmem:[%s2503 + $0x21] sm:$0xff] %vm403, %v2285
      %2507 = vst.msk [vmem:[%s2503 + $0x31] sm:$0xff] %vm403, %v2286
      %2508 = vst.msk [vmem:[%s2503 + $0x41] sm:$0xff] %vm403, %v2287
      %2509 = vst.msk [vmem:[%s2503 + $0x51] sm:$0xff] %vm403, %v2288
      %2510 = vst.msk [vmem:[%s2503 + $0x61] sm:$0xff] %vm403, %v2289
      %2511 = vst.msk [vmem:[%s2503 + $0x71] sm:$0xff] %vm403, %v2290
      %2512 = vst.msk [vmem:[%s2503 + $0xa1] sm:$0xff] %vm403, %v2291
      %2513 = vst.msk [vmem:[%s2503 + $0xb1] sm:$0xff] %vm403, %v2292
      %2514 = vst.msk [vmem:[%s2503 + $0xc1] sm:$0xff] %vm403, %v2293
      %2515 = vst.msk [vmem:[%s2503 + $0xd1] sm:$0xff] %vm403, %v2294
      %2516 = vst.msk [vmem:[%s2503 + $0xe1] sm:$0xff] %vm403, %v2295
      %2517 = vst.msk [vmem:[%s2503 + $0xf1] sm:$0xff] %vm403, %v2296
      %2518 = vst.msk [vmem:[%s2503 + $0x101] sm:$0xff] %vm403, %v2297
      %2519 = vst.msk [vmem:[%s2503 + $0x111] sm:$0xff] %vm403, %v2298
      %2520 = vst.msk [vmem:[%s2503 + $0x141] sm:$0xff] %vm403, %v2299
      %2521 = vst.msk [vmem:[%s2503 + $0x151] sm:$0xff] %vm403, %v2300
      %2522 = vst.msk [vmem:[%s2503 + $0x161] sm:$0xff] %vm403, %v2301
      %2523 = vst.msk [vmem:[%s2503 + $0x171] sm:$0xff] %vm403, %v2302
      %2524 = vst.msk [vmem:[%s2503 + $0x181] sm:$0xff] %vm403, %v2303
      %2525 = vst.msk [vmem:[%s2503 + $0x191] sm:$0xff] %vm403, %v2304
      %2526 = vst.msk [vmem:[%s2503 + $0x1a1] sm:$0xff] %vm403, %v2305
      %2527 = vst.msk [vmem:[%s2503 + $0x1b1] sm:$0xff] %vm403, %v2306
      %2528 = vst.msk [vmem:[%s2503 + $0x1e1] sm:$0xff] %vm403, %v2307
      %2529 = vst.msk [vmem:[%s2503 + $0x1f1] sm:$0xff] %vm403, %v2308
      %2530 = vst.msk [vmem:[%s2503 + $0x201] sm:$0xff] %vm403, %v2309
      %2531 = vst.msk [vmem:[%s2503 + $0x211] sm:$0xff] %vm403, %v2310
      %2532 = vst.msk [vmem:[%s2503 + $0x221] sm:$0xff] %vm403, %v2311
      %2533 = vst.msk [vmem:[%s2503 + $0x231] sm:$0xff] %vm403, %v2312
      %2534 = vst.msk [vmem:[%s2503 + $0x241] sm:$0xff] %vm403, %v2313
      %2535 = vst.msk [vmem:[%s2503 + $0x251] sm:$0xff] %vm403, %v2314
      %v2536 = vld [vmem:[%s3] sm:$0xff]
      %v2537 = vld [vmem:[%s3 + $0x8] sm:$0xff]
      %v2538 = vld [vmem:[%s3 + $0x10] sm:$0xff]
      %v2539 = vld [vmem:[%s3 + $0x18] sm:$0x7]
      %v2540 = vld [vmem:[#allocation2] sm:$0xff]
      %v2541 = vld [vmem:[#allocation2 + $0x10] sm:$0xff]
      %v2542 = vld [vmem:[#allocation2 + $0x20] sm:$0xff]
      %v2543 = vld [vmem:[#allocation2 + $0x30] sm:$0xff]
      %v2544 = vld [vmem:[#allocation2 + $0x40] sm:$0xff]
      %v2545 = vld [vmem:[#allocation2 + $0x50] sm:$0xff]
      %v2546 = vld [vmem:[#allocation2 + $0x60] sm:$0xff]
      %v2547 = vld [vmem:[#allocation2 + $0x70] sm:$0xff]
      %v2548 = vld [vmem:[#allocation2 + $0xa0] sm:$0xff]
      %v2549 = vld [vmem:[#allocation2 + $0xb0] sm:$0xff]
      %v2550 = vld [vmem:[#allocation2 + $0xc0] sm:$0xff]
      %v2551 = vld [vmem:[#allocation2 + $0xd0] sm:$0xff]
      %v2552 = vld [vmem:[#allocation2 + $0xe0] sm:$0xff]
      %v2553 = vld [vmem:[#allocation2 + $0xf0] sm:$0xff]
      %v2554 = vld [vmem:[#allocation2 + $0x100] sm:$0xff]
      %v2555 = vld [vmem:[#allocation2 + $0x110] sm:$0xff]
      %v2556 = vld [vmem:[#allocation2 + $0x140] sm:$0xff]
      %v2557 = vld [vmem:[#allocation2 + $0x150] sm:$0xff]
      %v2558 = vld [vmem:[#allocation2 + $0x160] sm:$0xff]
      %v2559 = vld [vmem:[#allocation2 + $0x170] sm:$0xff]
      %v2560 = vld [vmem:[#allocation2 + $0x180] sm:$0xff]
      %v2561 = vld [vmem:[#allocation2 + $0x190] sm:$0xff]
      %v2562 = vld [vmem:[#allocation2 + $0x1a0] sm:$0xff]
      %v2563 = vld [vmem:[#allocation2 + $0x1b0] sm:$0xff]
      %v2564 = vld [vmem:[#allocation2 + $0x1e0] sm:$0xff]
      %v2565 = vld [vmem:[#allocation2 + $0x1f0] sm:$0xff]
      %v2566 = vld [vmem:[#allocation2 + $0x200] sm:$0xff]
      %v2567 = vld [vmem:[#allocation2 + $0x210] sm:$0xff]
      %v2568 = vld [vmem:[#allocation2 + $0x220] sm:$0xff]
      %v2569 = vld [vmem:[#allocation2 + $0x230] sm:$0xff]
      %v2570 = vld [vmem:[#allocation2 + $0x240] sm:$0xff]
      %v2571 = vld [vmem:[#allocation2 + $0x250] sm:$0xff]
      %v2572 = vlaneseq
      %v2573 = vshrl.u32 %v2572, 7
      %v2574 = vsub.s32 0, %v2573
      %v2575 = vrot.slane %v2536, %v2574
      %v2576 = vmul.f32 %v2540, %v2575
      %v2577 = vmul.f32 %v2541, %v2575
      %v2578 = vmul.f32 %v2542, %v2575
      %v2579 = vmul.f32 %v2543, %v2575
      %v2580 = vmul.f32 %v2544, %v2575
      %v2581 = vmul.f32 %v2545, %v2575
      %v2582 = vmul.f32 %v2546, %v2575
      %v2583 = vmul.f32 %v2547, %v2575
      %v2584 = vmul.f32 %v2548, %v2575
      %v2585 = vmul.f32 %v2549, %v2575
      %v2586 = vmul.f32 %v2550, %v2575
      %v2587 = vmul.f32 %v2551, %v2575
      %v2588 = vmul.f32 %v2552, %v2575
      %v2589 = vmul.f32 %v2553, %v2575
      %v2590 = vmul.f32 %v2554, %v2575
      %v2591 = vmul.f32 %v2555, %v2575
      %v2592 = vmul.f32 %v2556, %v2575
      %v2593 = vmul.f32 %v2557, %v2575
      %v2594 = vmul.f32 %v2558, %v2575
      %v2595 = vmul.f32 %v2559, %v2575
      %v2596 = vmul.f32 %v2560, %v2575
      %v2597 = vmul.f32 %v2561, %v2575
      %v2598 = vmul.f32 %v2562, %v2575
      %v2599 = vmul.f32 %v2563, %v2575
      %v2600 = vmul.f32 %v2564, %v2575
      %v2601 = vmul.f32 %v2565, %v2575
      %v2602 = vmul.f32 %v2566, %v2575
      %v2603 = vmul.f32 %v2567, %v2575
      %v2604 = vmul.f32 %v2568, %v2575
      %v2605 = vmul.f32 %v2569, %v2575
      %v2606 = vmul.f32 %v2570, %v2575
      %v2607 = vmul.f32 %v2571, %v2575
      %v2608 = vld [vmem:[#allocation2 + $0x1] sm:$0xff]
      %v2609 = vld [vmem:[#allocation2 + $0x11] sm:$0xff]
      %v2610 = vld [vmem:[#allocation2 + $0x21] sm:$0xff]
      %v2611 = vld [vmem:[#allocation2 + $0x31] sm:$0xff]
      %v2612 = vld [vmem:[#allocation2 + $0x41] sm:$0xff]
      %v2613 = vld [vmem:[#allocation2 + $0x51] sm:$0xff]
      %v2614 = vld [vmem:[#allocation2 + $0x61] sm:$0xff]
      %v2615 = vld [vmem:[#allocation2 + $0x71] sm:$0xff]
      %v2616 = vld [vmem:[#allocation2 + $0xa1] sm:$0xff]
      %v2617 = vld [vmem:[#allocation2 + $0xb1] sm:$0xff]
      %v2618 = vld [vmem:[#allocation2 + $0xc1] sm:$0xff]
      %v2619 = vld [vmem:[#allocation2 + $0xd1] sm:$0xff]
      %v2620 = vld [vmem:[#allocation2 + $0xe1] sm:$0xff]
      %v2621 = vld [vmem:[#allocation2 + $0xf1] sm:$0xff]
      %v2622 = vld [vmem:[#allocation2 + $0x101] sm:$0xff]
      %v2623 = vld [vmem:[#allocation2 + $0x111] sm:$0xff]
      %v2624 = vld [vmem:[#allocation2 + $0x141] sm:$0xff]
      %v2625 = vld [vmem:[#allocation2 + $0x151] sm:$0xff]
      %v2626 = vld [vmem:[#allocation2 + $0x161] sm:$0xff]
      %v2627 = vld [vmem:[#allocation2 + $0x171] sm:$0xff]
      %v2628 = vld [vmem:[#allocation2 + $0x181] sm:$0xff]
      %v2629 = vld [vmem:[#allocation2 + $0x191] sm:$0xff]
      %v2630 = vld [vmem:[#allocation2 + $0x1a1] sm:$0xff]
      %v2631 = vld [vmem:[#allocation2 + $0x1b1] sm:$0xff]
      %v2632 = vld [vmem:[#allocation2 + $0x1e1] sm:$0xff]
      %v2633 = vld [vmem:[#allocation2 + $0x1f1] sm:$0xff]
      %v2634 = vld [vmem:[#allocation2 + $0x201] sm:$0xff]
      %v2635 = vld [vmem:[#allocation2 + $0x211] sm:$0xff]
      %v2636 = vld [vmem:[#allocation2 + $0x221] sm:$0xff]
      %v2637 = vld [vmem:[#allocation2 + $0x231] sm:$0xff]
      %v2638 = vld [vmem:[#allocation2 + $0x241] sm:$0xff]
      %v2639 = vld [vmem:[#allocation2 + $0x251] sm:$0xff]
      %v2640 = vlaneseq
      %v2641 = vshrl.u32 %v2640, 7
      %v2642 = vsub.s32 1, %v2641
      %v2643 = vrot.slane %v2536, %v2642
      %v2644 = vmul.f32 %v2608, %v2643
      %v2645 = vmul.f32 %v2609, %v2643
      %v2646 = vmul.f32 %v2610, %v2643
      %v2647 = vmul.f32 %v2611, %v2643
      %v2648 = vmul.f32 %v2612, %v2643
      %v2649 = vmul.f32 %v2613, %v2643
      %v2650 = vmul.f32 %v2614, %v2643
      %v2651 = vmul.f32 %v2615, %v2643
      %v2652 = vmul.f32 %v2616, %v2643
      %v2653 = vmul.f32 %v2617, %v2643
      %v2654 = vmul.f32 %v2618, %v2643
      %v2655 = vmul.f32 %v2619, %v2643
      %v2656 = vmul.f32 %v2620, %v2643
      %v2657 = vmul.f32 %v2621, %v2643
      %v2658 = vmul.f32 %v2622, %v2643
      %v2659 = vmul.f32 %v2623, %v2643
      %v2660 = vmul.f32 %v2624, %v2643
      %v2661 = vmul.f32 %v2625, %v2643
      %v2662 = vmul.f32 %v2626, %v2643
      %v2663 = vmul.f32 %v2627, %v2643
      %v2664 = vmul.f32 %v2628, %v2643
      %v2665 = vmul.f32 %v2629, %v2643
      %v2666 = vmul.f32 %v2630, %v2643
      %v2667 = vmul.f32 %v2631, %v2643
      %v2668 = vmul.f32 %v2632, %v2643
      %v2669 = vmul.f32 %v2633, %v2643
      %v2670 = vmul.f32 %v2634, %v2643
      %v2671 = vmul.f32 %v2635, %v2643
      %v2672 = vmul.f32 %v2636, %v2643
      %v2673 = vmul.f32 %v2637, %v2643
      %v2674 = vmul.f32 %v2638, %v2643
      %v2675 = vmul.f32 %v2639, %v2643
      %v2676 = vadd.f32 %v2576, %v2644
      %v2677 = vadd.f32 %v2577, %v2645
      %v2678 = vadd.f32 %v2578, %v2646
      %v2679 = vadd.f32 %v2579, %v2647
      %v2680 = vadd.f32 %v2580, %v2648
      %v2681 = vadd.f32 %v2581, %v2649
      %v2682 = vadd.f32 %v2582, %v2650
      %v2683 = vadd.f32 %v2583, %v2651
      %v2684 = vadd.f32 %v2584, %v2652
      %v2685 = vadd.f32 %v2585, %v2653
      %v2686 = vadd.f32 %v2586, %v2654
      %v2687 = vadd.f32 %v2587, %v2655
      %v2688 = vadd.f32 %v2588, %v2656
      %v2689 = vadd.f32 %v2589, %v2657
      %v2690 = vadd.f32 %v2590, %v2658
      %v2691 = vadd.f32 %v2591, %v2659
      %v2692 = vadd.f32 %v2592, %v2660
      %v2693 = vadd.f32 %v2593, %v2661
      %v2694 = vadd.f32 %v2594, %v2662
      %v2695 = vadd.f32 %v2595, %v2663
      %v2696 = vadd.f32 %v2596, %v2664
      %v2697 = vadd.f32 %v2597, %v2665
      %v2698 = vadd.f32 %v2598, %v2666
      %v2699 = vadd.f32 %v2599, %v2667
      %v2700 = vadd.f32 %v2600, %v2668
      %v2701 = vadd.f32 %v2601, %v2669
      %v2702 = vadd.f32 %v2602, %v2670
      %v2703 = vadd.f32 %v2603, %v2671
      %v2704 = vadd.f32 %v2604, %v2672
      %v2705 = vadd.f32 %v2605, %v2673
      %v2706 = vadd.f32 %v2606, %v2674
      %v2707 = vadd.f32 %v2607, %v2675
      %v2708 = vld [vmem:[#allocation2 + $0x2] sm:$0xff]
      %v2709 = vld [vmem:[#allocation2 + $0x12] sm:$0xff]
      %v2710 = vld [vmem:[#allocation2 + $0x22] sm:$0xff]
      %v2711 = vld [vmem:[#allocation2 + $0x32] sm:$0xff]
      %v2712 = vld [vmem:[#allocation2 + $0x42] sm:$0xff]
      %v2713 = vld [vmem:[#allocation2 + $0x52] sm:$0xff]
      %v2714 = vld [vmem:[#allocation2 + $0x62] sm:$0xff]
      %v2715 = vld [vmem:[#allocation2 + $0x72] sm:$0xff]
      %v2716 = vld [vmem:[#allocation2 + $0xa2] sm:$0xff]
      %v2717 = vld [vmem:[#allocation2 + $0xb2] sm:$0xff]
      %v2718 = vld [vmem:[#allocation2 + $0xc2] sm:$0xff]
      %v2719 = vld [vmem:[#allocation2 + $0xd2] sm:$0xff]
      %v2720 = vld [vmem:[#allocation2 + $0xe2] sm:$0xff]
      %v2721 = vld [vmem:[#allocation2 + $0xf2] sm:$0xff]
      %v2722 = vld [vmem:[#allocation2 + $0x102] sm:$0xff]
      %v2723 = vld [vmem:[#allocation2 + $0x112] sm:$0xff]
      %v2724 = vld [vmem:[#allocation2 + $0x142] sm:$0xff]
      %v2725 = vld [vmem:[#allocation2 + $0x152] sm:$0xff]
      %v2726 = vld [vmem:[#allocation2 + $0x162] sm:$0xff]
      %v2727 = vld [vmem:[#allocation2 + $0x172] sm:$0xff]
      %v2728 = vld [vmem:[#allocation2 + $0x182] sm:$0xff]
      %v2729 = vld [vmem:[#allocation2 + $0x192] sm:$0xff]
      %v2730 = vld [vmem:[#allocation2 + $0x1a2] sm:$0xff]
      %v2731 = vld [vmem:[#allocation2 + $0x1b2] sm:$0xff]
      %v2732 = vld [vmem:[#allocation2 + $0x1e2] sm:$0xff]
      %v2733 = vld [vmem:[#allocation2 + $0x1f2] sm:$0xff]
      %v2734 = vld [vmem:[#allocation2 + $0x202] sm:$0xff]
      %v2735 = vld [vmem:[#allocation2 + $0x212] sm:$0xff]
      %v2736 = vld [vmem:[#allocation2 + $0x222] sm:$0xff]
      %v2737 = vld [vmem:[#allocation2 + $0x232] sm:$0xff]
      %v2738 = vld [vmem:[#allocation2 + $0x242] sm:$0xff]
      %v2739 = vld [vmem:[#allocation2 + $0x252] sm:$0xff]
      %v2740 = vlaneseq
      %v2741 = vshrl.u32 %v2740, 7
      %v2742 = vsub.s32 2, %v2741
      %v2743 = vrot.slane %v2536, %v2742
      %v2744 = vmul.f32 %v2708, %v2743
      %v2745 = vmul.f32 %v2709, %v2743
      %v2746 = vmul.f32 %v2710, %v2743
      %v2747 = vmul.f32 %v2711, %v2743
      %v2748 = vmul.f32 %v2712, %v2743
      %v2749 = vmul.f32 %v2713, %v2743
      %v2750 = vmul.f32 %v2714, %v2743
      %v2751 = vmul.f32 %v2715, %v2743
      %v2752 = vmul.f32 %v2716, %v2743
      %v2753 = vmul.f32 %v2717, %v2743
      %v2754 = vmul.f32 %v2718, %v2743
      %v2755 = vmul.f32 %v2719, %v2743
      %v2756 = vmul.f32 %v2720, %v2743
      %v2757 = vmul.f32 %v2721, %v2743
      %v2758 = vmul.f32 %v2722, %v2743
      %v2759 = vmul.f32 %v2723, %v2743
      %v2760 = vmul.f32 %v2724, %v2743
      %v2761 = vmul.f32 %v2725, %v2743
      %v2762 = vmul.f32 %v2726, %v2743
      %v2763 = vmul.f32 %v2727, %v2743
      %v2764 = vmul.f32 %v2728, %v2743
      %v2765 = vmul.f32 %v2729, %v2743
      %v2766 = vmul.f32 %v2730, %v2743
      %v2767 = vmul.f32 %v2731, %v2743
      %v2768 = vmul.f32 %v2732, %v2743
      %v2769 = vmul.f32 %v2733, %v2743
      %v2770 = vmul.f32 %v2734, %v2743
      %v2771 = vmul.f32 %v2735, %v2743
      %v2772 = vmul.f32 %v2736, %v2743
      %v2773 = vmul.f32 %v2737, %v2743
      %v2774 = vmul.f32 %v2738, %v2743
      %v2775 = vmul.f32 %v2739, %v2743
      %v2776 = vadd.f32 %v2676, %v2744
      %v2777 = vadd.f32 %v2677, %v2745
      %v2778 = vadd.f32 %v2678, %v2746
      %v2779 = vadd.f32 %v2679, %v2747
      %v2780 = vadd.f32 %v2680, %v2748
      %v2781 = vadd.f32 %v2681, %v2749
      %v2782 = vadd.f32 %v2682, %v2750
      %v2783 = vadd.f32 %v2683, %v2751
      %v2784 = vadd.f32 %v2684, %v2752
      %v2785 = vadd.f32 %v2685, %v2753
      %v2786 = vadd.f32 %v2686, %v2754
      %v2787 = vadd.f32 %v2687, %v2755
      %v2788 = vadd.f32 %v2688, %v2756
      %v2789 = vadd.f32 %v2689, %v2757
      %v2790 = vadd.f32 %v2690, %v2758
      %v2791 = vadd.f32 %v2691, %v2759
      %v2792 = vadd.f32 %v2692, %v2760
      %v2793 = vadd.f32 %v2693, %v2761
      %v2794 = vadd.f32 %v2694, %v2762
      %v2795 = vadd.f32 %v2695, %v2763
      %v2796 = vadd.f32 %v2696, %v2764
      %v2797 = vadd.f32 %v2697, %v2765
      %v2798 = vadd.f32 %v2698, %v2766
      %v2799 = vadd.f32 %v2699, %v2767
      %v2800 = vadd.f32 %v2700, %v2768
      %v2801 = vadd.f32 %v2701, %v2769
      %v2802 = vadd.f32 %v2702, %v2770
      %v2803 = vadd.f32 %v2703, %v2771
      %v2804 = vadd.f32 %v2704, %v2772
      %v2805 = vadd.f32 %v2705, %v2773
      %v2806 = vadd.f32 %v2706, %v2774
      %v2807 = vadd.f32 %v2707, %v2775
      %s2808 = scalar_lea.vmem [#allocation2], 16
      %v2809 = vld [vmem:[%s2808] sm:$0xff]
      %v2810 = vld [vmem:[%s2808 + $0x10] sm:$0xff]
      %v2811 = vld [vmem:[%s2808 + $0x20] sm:$0xff]
      %v2812 = vld [vmem:[%s2808 + $0x30] sm:$0xff]
      %v2813 = vld [vmem:[%s2808 + $0x40] sm:$0xff]
      %v2814 = vld [vmem:[%s2808 + $0x50] sm:$0xff]
      %v2815 = vld [vmem:[%s2808 + $0x60] sm:$0xff]
      %v2816 = vld [vmem:[%s2808 + $0x70] sm:$0xff]
      %v2817 = vld [vmem:[%s2808 + $0xa0] sm:$0xff]
      %v2818 = vld [vmem:[%s2808 + $0xb0] sm:$0xff]
      %v2819 = vld [vmem:[%s2808 + $0xc0] sm:$0xff]
      %v2820 = vld [vmem:[%s2808 + $0xd0] sm:$0xff]
      %v2821 = vld [vmem:[%s2808 + $0xe0] sm:$0xff]
      %v2822 = vld [vmem:[%s2808 + $0xf0] sm:$0xff]
      %v2823 = vld [vmem:[%s2808 + $0x100] sm:$0xff]
      %v2824 = vld [vmem:[%s2808 + $0x110] sm:$0xff]
      %v2825 = vld [vmem:[%s2808 + $0x140] sm:$0xff]
      %v2826 = vld [vmem:[%s2808 + $0x150] sm:$0xff]
      %v2827 = vld [vmem:[%s2808 + $0x160] sm:$0xff]
      %v2828 = vld [vmem:[%s2808 + $0x170] sm:$0xff]
      %v2829 = vld [vmem:[%s2808 + $0x180] sm:$0xff]
      %v2830 = vld [vmem:[%s2808 + $0x190] sm:$0xff]
      %v2831 = vld [vmem:[%s2808 + $0x1a0] sm:$0xff]
      %v2832 = vld [vmem:[%s2808 + $0x1b0] sm:$0xff]
      %v2833 = vld [vmem:[%s2808 + $0x1e0] sm:$0xff]
      %v2834 = vld [vmem:[%s2808 + $0x1f0] sm:$0xff]
      %v2835 = vld [vmem:[%s2808 + $0x200] sm:$0xff]
      %v2836 = vld [vmem:[%s2808 + $0x210] sm:$0xff]
      %v2837 = vld [vmem:[%s2808 + $0x220] sm:$0xff]
      %v2838 = vld [vmem:[%s2808 + $0x230] sm:$0xff]
      %v2839 = vld [vmem:[%s2808 + $0x240] sm:$0xff]
      %v2840 = vld [vmem:[%s2808 + $0x250] sm:$0xff]
      %v2841 = vlaneseq
      %v2842 = vshrl.u32 %v2841, 7
      %v2843 = vsub.s32 3, %v2842
      %v2844 = vrot.slane %v2536, %v2843
      %v2845 = vmul.f32 %v2809, %v2844
      %v2846 = vmul.f32 %v2810, %v2844
      %v2847 = vmul.f32 %v2811, %v2844
      %v2848 = vmul.f32 %v2812, %v2844
      %v2849 = vmul.f32 %v2813, %v2844
      %v2850 = vmul.f32 %v2814, %v2844
      %v2851 = vmul.f32 %v2815, %v2844
      %v2852 = vmul.f32 %v2816, %v2844
      %v2853 = vmul.f32 %v2817, %v2844
      %v2854 = vmul.f32 %v2818, %v2844
      %v2855 = vmul.f32 %v2819, %v2844
      %v2856 = vmul.f32 %v2820, %v2844
      %v2857 = vmul.f32 %v2821, %v2844
      %v2858 = vmul.f32 %v2822, %v2844
      %v2859 = vmul.f32 %v2823, %v2844
      %v2860 = vmul.f32 %v2824, %v2844
      %v2861 = vmul.f32 %v2825, %v2844
      %v2862 = vmul.f32 %v2826, %v2844
      %v2863 = vmul.f32 %v2827, %v2844
      %v2864 = vmul.f32 %v2828, %v2844
      %v2865 = vmul.f32 %v2829, %v2844
      %v2866 = vmul.f32 %v2830, %v2844
      %v2867 = vmul.f32 %v2831, %v2844
      %v2868 = vmul.f32 %v2832, %v2844
      %v2869 = vmul.f32 %v2833, %v2844
      %v2870 = vmul.f32 %v2834, %v2844
      %v2871 = vmul.f32 %v2835, %v2844
      %v2872 = vmul.f32 %v2836, %v2844
      %v2873 = vmul.f32 %v2837, %v2844
      %v2874 = vmul.f32 %v2838, %v2844
      %v2875 = vmul.f32 %v2839, %v2844
      %v2876 = vmul.f32 %v2840, %v2844
      %v2877 = vadd.f32 %v2776, %v2845
      %v2878 = vadd.f32 %v2777, %v2846
      %v2879 = vadd.f32 %v2778, %v2847
      %v2880 = vadd.f32 %v2779, %v2848
      %v2881 = vadd.f32 %v2780, %v2849
      %v2882 = vadd.f32 %v2781, %v2850
      %v2883 = vadd.f32 %v2782, %v2851
      %v2884 = vadd.f32 %v2783, %v2852
      %v2885 = vadd.f32 %v2784, %v2853
      %v2886 = vadd.f32 %v2785, %v2854
      %v2887 = vadd.f32 %v2786, %v2855
      %v2888 = vadd.f32 %v2787, %v2856
      %v2889 = vadd.f32 %v2788, %v2857
      %v2890 = vadd.f32 %v2789, %v2858
      %v2891 = vadd.f32 %v2790, %v2859
      %v2892 = vadd.f32 %v2791, %v2860
      %v2893 = vadd.f32 %v2792, %v2861
      %v2894 = vadd.f32 %v2793, %v2862
      %v2895 = vadd.f32 %v2794, %v2863
      %v2896 = vadd.f32 %v2795, %v2864
      %v2897 = vadd.f32 %v2796, %v2865
      %v2898 = vadd.f32 %v2797, %v2866
      %v2899 = vadd.f32 %v2798, %v2867
      %v2900 = vadd.f32 %v2799, %v2868
      %v2901 = vadd.f32 %v2800, %v2869
      %v2902 = vadd.f32 %v2801, %v2870
      %v2903 = vadd.f32 %v2802, %v2871
      %v2904 = vadd.f32 %v2803, %v2872
      %v2905 = vadd.f32 %v2804, %v2873
      %v2906 = vadd.f32 %v2805, %v2874
      %v2907 = vadd.f32 %v2806, %v2875
      %v2908 = vadd.f32 %v2807, %v2876
      %v2909 = vld [vmem:[%s2808 + $0x1] sm:$0xff]
      %v2910 = vld [vmem:[%s2808 + $0x11] sm:$0xff]
      %v2911 = vld [vmem:[%s2808 + $0x21] sm:$0xff]
      %v2912 = vld [vmem:[%s2808 + $0x31] sm:$0xff]
      %v2913 = vld [vmem:[%s2808 + $0x41] sm:$0xff]
      %v2914 = vld [vmem:[%s2808 + $0x51] sm:$0xff]
      %v2915 = vld [vmem:[%s2808 + $0x61] sm:$0xff]
      %v2916 = vld [vmem:[%s2808 + $0x71] sm:$0xff]
      %v2917 = vld [vmem:[%s2808 + $0xa1] sm:$0xff]
      %v2918 = vld [vmem:[%s2808 + $0xb1] sm:$0xff]
      %v2919 = vld [vmem:[%s2808 + $0xc1] sm:$0xff]
      %v2920 = vld [vmem:[%s2808 + $0xd1] sm:$0xff]
      %v2921 = vld [vmem:[%s2808 + $0xe1] sm:$0xff]
      %v2922 = vld [vmem:[%s2808 + $0xf1] sm:$0xff]
      %v2923 = vld [vmem:[%s2808 + $0x101] sm:$0xff]
      %v2924 = vld [vmem:[%s2808 + $0x111] sm:$0xff]
      %v2925 = vld [vmem:[%s2808 + $0x141] sm:$0xff]
      %v2926 = vld [vmem:[%s2808 + $0x151] sm:$0xff]
      %v2927 = vld [vmem:[%s2808 + $0x161] sm:$0xff]
      %v2928 = vld [vmem:[%s2808 + $0x171] sm:$0xff]
      %v2929 = vld [vmem:[%s2808 + $0x181] sm:$0xff]
      %v2930 = vld [vmem:[%s2808 + $0x191] sm:$0xff]
      %v2931 = vld [vmem:[%s2808 + $0x1a1] sm:$0xff]
      %v2932 = vld [vmem:[%s2808 + $0x1b1] sm:$0xff]
      %v2933 = vld [vmem:[%s2808 + $0x1e1] sm:$0xff]
      %v2934 = vld [vmem:[%s2808 + $0x1f1] sm:$0xff]
      %v2935 = vld [vmem:[%s2808 + $0x201] sm:$0xff]
      %v2936 = vld [vmem:[%s2808 + $0x211] sm:$0xff]
      %v2937 = vld [vmem:[%s2808 + $0x221] sm:$0xff]
      %v2938 = vld [vmem:[%s2808 + $0x231] sm:$0xff]
      %v2939 = vld [vmem:[%s2808 + $0x241] sm:$0xff]
      %v2940 = vld [vmem:[%s2808 + $0x251] sm:$0xff]
      %v2941 = vlaneseq
      %v2942 = vshrl.u32 %v2941, 7
      %v2943 = vsub.s32 4, %v2942
      %v2944 = vrot.slane %v2536, %v2943
      %v2945 = vmul.f32 %v2909, %v2944
      %v2946 = vmul.f32 %v2910, %v2944
      %v2947 = vmul.f32 %v2911, %v2944
      %v2948 = vmul.f32 %v2912, %v2944
      %v2949 = vmul.f32 %v2913, %v2944
      %v2950 = vmul.f32 %v2914, %v2944
      %v2951 = vmul.f32 %v2915, %v2944
      %v2952 = vmul.f32 %v2916, %v2944
      %v2953 = vmul.f32 %v2917, %v2944
      %v2954 = vmul.f32 %v2918, %v2944
      %v2955 = vmul.f32 %v2919, %v2944
      %v2956 = vmul.f32 %v2920, %v2944
      %v2957 = vmul.f32 %v2921, %v2944
      %v2958 = vmul.f32 %v2922, %v2944
      %v2959 = vmul.f32 %v2923, %v2944
      %v2960 = vmul.f32 %v2924, %v2944
      %v2961 = vmul.f32 %v2925, %v2944
      %v2962 = vmul.f32 %v2926, %v2944
      %v2963 = vmul.f32 %v2927, %v2944
      %v2964 = vmul.f32 %v2928, %v2944
      %v2965 = vmul.f32 %v2929, %v2944
      %v2966 = vmul.f32 %v2930, %v2944
      %v2967 = vmul.f32 %v2931, %v2944
      %v2968 = vmul.f32 %v2932, %v2944
      %v2969 = vmul.f32 %v2933, %v2944
      %v2970 = vmul.f32 %v2934, %v2944
      %v2971 = vmul.f32 %v2935, %v2944
      %v2972 = vmul.f32 %v2936, %v2944
      %v2973 = vmul.f32 %v2937, %v2944
      %v2974 = vmul.f32 %v2938, %v2944
      %v2975 = vmul.f32 %v2939, %v2944
      %v2976 = vmul.f32 %v2940, %v2944
      %v2977 = vadd.f32 %v2877, %v2945
      %v2978 = vadd.f32 %v2878, %v2946
      %v2979 = vadd.f32 %v2879, %v2947
      %v2980 = vadd.f32 %v2880, %v2948
      %v2981 = vadd.f32 %v2881, %v2949
      %v2982 = vadd.f32 %v2882, %v2950
      %v2983 = vadd.f32 %v2883, %v2951
      %v2984 = vadd.f32 %v2884, %v2952
      %v2985 = vadd.f32 %v2885, %v2953
      %v2986 = vadd.f32 %v2886, %v2954
      %v2987 = vadd.f32 %v2887, %v2955
      %v2988 = vadd.f32 %v2888, %v2956
      %v2989 = vadd.f32 %v2889, %v2957
      %v2990 = vadd.f32 %v2890, %v2958
      %v2991 = vadd.f32 %v2891, %v2959
      %v2992 = vadd.f32 %v2892, %v2960
      %v2993 = vadd.f32 %v2893, %v2961
      %v2994 = vadd.f32 %v2894, %v2962
      %v2995 = vadd.f32 %v2895, %v2963
      %v2996 = vadd.f32 %v2896, %v2964
      %v2997 = vadd.f32 %v2897, %v2965
      %v2998 = vadd.f32 %v2898, %v2966
      %v2999 = vadd.f32 %v2899, %v2967
      %v3000 = vadd.f32 %v2900, %v2968
      %v3001 = vadd.f32 %v2901, %v2969
      %v3002 = vadd.f32 %v2902, %v2970
      %v3003 = vadd.f32 %v2903, %v2971
      %v3004 = vadd.f32 %v2904, %v2972
      %v3005 = vadd.f32 %v2905, %v2973
      %v3006 = vadd.f32 %v2906, %v2974
      %v3007 = vadd.f32 %v2907, %v2975
      %v3008 = vadd.f32 %v2908, %v2976
      %v3009 = vld [vmem:[%s2808 + $0x2] sm:$0xff]
      %v3010 = vld [vmem:[%s2808 + $0x12] sm:$0xff]
      %v3011 = vld [vmem:[%s2808 + $0x22] sm:$0xff]
      %v3012 = vld [vmem:[%s2808 + $0x32] sm:$0xff]
      %v3013 = vld [vmem:[%s2808 + $0x42] sm:$0xff]
      %v3014 = vld [vmem:[%s2808 + $0x52] sm:$0xff]
      %v3015 = vld [vmem:[%s2808 + $0x62] sm:$0xff]
      %v3016 = vld [vmem:[%s2808 + $0x72] sm:$0xff]
      %v3017 = vld [vmem:[%s2808 + $0xa2] sm:$0xff]
      %v3018 = vld [vmem:[%s2808 + $0xb2] sm:$0xff]
      %v3019 = vld [vmem:[%s2808 + $0xc2] sm:$0xff]
      %v3020 = vld [vmem:[%s2808 + $0xd2] sm:$0xff]
      %v3021 = vld [vmem:[%s2808 + $0xe2] sm:$0xff]
      %v3022 = vld [vmem:[%s2808 + $0xf2] sm:$0xff]
      %v3023 = vld [vmem:[%s2808 + $0x102] sm:$0xff]
      %v3024 = vld [vmem:[%s2808 + $0x112] sm:$0xff]
      %v3025 = vld [vmem:[%s2808 + $0x142] sm:$0xff]
      %v3026 = vld [vmem:[%s2808 + $0x152] sm:$0xff]
      %v3027 = vld [vmem:[%s2808 + $0x162] sm:$0xff]
      %v3028 = vld [vmem:[%s2808 + $0x172] sm:$0xff]
      %v3029 = vld [vmem:[%s2808 + $0x182] sm:$0xff]
      %v3030 = vld [vmem:[%s2808 + $0x192] sm:$0xff]
      %v3031 = vld [vmem:[%s2808 + $0x1a2] sm:$0xff]
      %v3032 = vld [vmem:[%s2808 + $0x1b2] sm:$0xff]
      %v3033 = vld [vmem:[%s2808 + $0x1e2] sm:$0xff]
      %v3034 = vld [vmem:[%s2808 + $0x1f2] sm:$0xff]
      %v3035 = vld [vmem:[%s2808 + $0x202] sm:$0xff]
      %v3036 = vld [vmem:[%s2808 + $0x212] sm:$0xff]
      %v3037 = vld [vmem:[%s2808 + $0x222] sm:$0xff]
      %v3038 = vld [vmem:[%s2808 + $0x232] sm:$0xff]
      %v3039 = vld [vmem:[%s2808 + $0x242] sm:$0xff]
      %v3040 = vld [vmem:[%s2808 + $0x252] sm:$0xff]
      %v3041 = vlaneseq
      %v3042 = vshrl.u32 %v3041, 7
      %v3043 = vsub.s32 5, %v3042
      %v3044 = vrot.slane %v2536, %v3043
      %v3045 = vmul.f32 %v3009, %v3044
      %v3046 = vmul.f32 %v3010, %v3044
      %v3047 = vmul.f32 %v3011, %v3044
      %v3048 = vmul.f32 %v3012, %v3044
      %v3049 = vmul.f32 %v3013, %v3044
      %v3050 = vmul.f32 %v3014, %v3044
      %v3051 = vmul.f32 %v3015, %v3044
      %v3052 = vmul.f32 %v3016, %v3044
      %v3053 = vmul.f32 %v3017, %v3044
      %v3054 = vmul.f32 %v3018, %v3044
      %v3055 = vmul.f32 %v3019, %v3044
      %v3056 = vmul.f32 %v3020, %v3044
      %v3057 = vmul.f32 %v3021, %v3044
      %v3058 = vmul.f32 %v3022, %v3044
      %v3059 = vmul.f32 %v3023, %v3044
      %v3060 = vmul.f32 %v3024, %v3044
      %v3061 = vmul.f32 %v3025, %v3044
      %v3062 = vmul.f32 %v3026, %v3044
      %v3063 = vmul.f32 %v3027, %v3044
      %v3064 = vmul.f32 %v3028, %v3044
      %v3065 = vmul.f32 %v3029, %v3044
      %v3066 = vmul.f32 %v3030, %v3044
      %v3067 = vmul.f32 %v3031, %v3044
      %v3068 = vmul.f32 %v3032, %v3044
      %v3069 = vmul.f32 %v3033, %v3044
      %v3070 = vmul.f32 %v3034, %v3044
      %v3071 = vmul.f32 %v3035, %v3044
      %v3072 = vmul.f32 %v3036, %v3044
      %v3073 = vmul.f32 %v3037, %v3044
      %v3074 = vmul.f32 %v3038, %v3044
      %v3075 = vmul.f32 %v3039, %v3044
      %v3076 = vmul.f32 %v3040, %v3044
      %v3077 = vadd.f32 %v2977, %v3045
      %v3078 = vadd.f32 %v2978, %v3046
      %v3079 = vadd.f32 %v2979, %v3047
      %v3080 = vadd.f32 %v2980, %v3048
      %v3081 = vadd.f32 %v2981, %v3049
      %v3082 = vadd.f32 %v2982, %v3050
      %v3083 = vadd.f32 %v2983, %v3051
      %v3084 = vadd.f32 %v2984, %v3052
      %v3085 = vadd.f32 %v2985, %v3053
      %v3086 = vadd.f32 %v2986, %v3054
      %v3087 = vadd.f32 %v2987, %v3055
      %v3088 = vadd.f32 %v2988, %v3056
      %v3089 = vadd.f32 %v2989, %v3057
      %v3090 = vadd.f32 %v2990, %v3058
      %v3091 = vadd.f32 %v2991, %v3059
      %v3092 = vadd.f32 %v2992, %v3060
      %v3093 = vadd.f32 %v2993, %v3061
      %v3094 = vadd.f32 %v2994, %v3062
      %v3095 = vadd.f32 %v2995, %v3063
      %v3096 = vadd.f32 %v2996, %v3064
      %v3097 = vadd.f32 %v2997, %v3065
      %v3098 = vadd.f32 %v2998, %v3066
      %v3099 = vadd.f32 %v2999, %v3067
      %v3100 = vadd.f32 %v3000, %v3068
      %v3101 = vadd.f32 %v3001, %v3069
      %v3102 = vadd.f32 %v3002, %v3070
      %v3103 = vadd.f32 %v3003, %v3071
      %v3104 = vadd.f32 %v3004, %v3072
      %v3105 = vadd.f32 %v3005, %v3073
      %v3106 = vadd.f32 %v3006, %v3074
      %v3107 = vadd.f32 %v3007, %v3075
      %v3108 = vadd.f32 %v3008, %v3076
      %s3109 = scalar_lea.vmem [#allocation2], 32
      %v3110 = vld [vmem:[%s3109] sm:$0xff]
      %v3111 = vld [vmem:[%s3109 + $0x10] sm:$0xff]
      %v3112 = vld [vmem:[%s3109 + $0x20] sm:$0xff]
      %v3113 = vld [vmem:[%s3109 + $0x30] sm:$0xff]
      %v3114 = vld [vmem:[%s3109 + $0x40] sm:$0xff]
      %v3115 = vld [vmem:[%s3109 + $0x50] sm:$0xff]
      %v3116 = vld [vmem:[%s3109 + $0x60] sm:$0xff]
      %v3117 = vld [vmem:[%s3109 + $0x70] sm:$0xff]
      %v3118 = vld [vmem:[%s3109 + $0xa0] sm:$0xff]
      %v3119 = vld [vmem:[%s3109 + $0xb0] sm:$0xff]
      %v3120 = vld [vmem:[%s3109 + $0xc0] sm:$0xff]
      %v3121 = vld [vmem:[%s3109 + $0xd0] sm:$0xff]
      %v3122 = vld [vmem:[%s3109 + $0xe0] sm:$0xff]
      %v3123 = vld [vmem:[%s3109 + $0xf0] sm:$0xff]
      %v3124 = vld [vmem:[%s3109 + $0x100] sm:$0xff]
      %v3125 = vld [vmem:[%s3109 + $0x110] sm:$0xff]
      %v3126 = vld [vmem:[%s3109 + $0x140] sm:$0xff]
      %v3127 = vld [vmem:[%s3109 + $0x150] sm:$0xff]
      %v3128 = vld [vmem:[%s3109 + $0x160] sm:$0xff]
      %v3129 = vld [vmem:[%s3109 + $0x170] sm:$0xff]
      %v3130 = vld [vmem:[%s3109 + $0x180] sm:$0xff]
      %v3131 = vld [vmem:[%s3109 + $0x190] sm:$0xff]
      %v3132 = vld [vmem:[%s3109 + $0x1a0] sm:$0xff]
      %v3133 = vld [vmem:[%s3109 + $0x1b0] sm:$0xff]
      %v3134 = vld [vmem:[%s3109 + $0x1e0] sm:$0xff]
      %v3135 = vld [vmem:[%s3109 + $0x1f0] sm:$0xff]
      %v3136 = vld [vmem:[%s3109 + $0x200] sm:$0xff]
      %v3137 = vld [vmem:[%s3109 + $0x210] sm:$0xff]
      %v3138 = vld [vmem:[%s3109 + $0x220] sm:$0xff]
      %v3139 = vld [vmem:[%s3109 + $0x230] sm:$0xff]
      %v3140 = vld [vmem:[%s3109 + $0x240] sm:$0xff]
      %v3141 = vld [vmem:[%s3109 + $0x250] sm:$0xff]
      %v3142 = vlaneseq
      %v3143 = vshrl.u32 %v3142, 7
      %v3144 = vsub.s32 6, %v3143
      %v3145 = vrot.slane %v2536, %v3144
      %v3146 = vmul.f32 %v3110, %v3145
      %v3147 = vmul.f32 %v3111, %v3145
      %v3148 = vmul.f32 %v3112, %v3145
      %v3149 = vmul.f32 %v3113, %v3145
      %v3150 = vmul.f32 %v3114, %v3145
      %v3151 = vmul.f32 %v3115, %v3145
      %v3152 = vmul.f32 %v3116, %v3145
      %v3153 = vmul.f32 %v3117, %v3145
      %v3154 = vmul.f32 %v3118, %v3145
      %v3155 = vmul.f32 %v3119, %v3145
      %v3156 = vmul.f32 %v3120, %v3145
      %v3157 = vmul.f32 %v3121, %v3145
      %v3158 = vmul.f32 %v3122, %v3145
      %v3159 = vmul.f32 %v3123, %v3145
      %v3160 = vmul.f32 %v3124, %v3145
      %v3161 = vmul.f32 %v3125, %v3145
      %v3162 = vmul.f32 %v3126, %v3145
      %v3163 = vmul.f32 %v3127, %v3145
      %v3164 = vmul.f32 %v3128, %v3145
      %v3165 = vmul.f32 %v3129, %v3145
      %v3166 = vmul.f32 %v3130, %v3145
      %v3167 = vmul.f32 %v3131, %v3145
      %v3168 = vmul.f32 %v3132, %v3145
      %v3169 = vmul.f32 %v3133, %v3145
      %v3170 = vmul.f32 %v3134, %v3145
      %v3171 = vmul.f32 %v3135, %v3145
      %v3172 = vmul.f32 %v3136, %v3145
      %v3173 = vmul.f32 %v3137, %v3145
      %v3174 = vmul.f32 %v3138, %v3145
      %v3175 = vmul.f32 %v3139, %v3145
      %v3176 = vmul.f32 %v3140, %v3145
      %v3177 = vmul.f32 %v3141, %v3145
      %v3178 = vadd.f32 %v3077, %v3146
      %v3179 = vadd.f32 %v3078, %v3147
      %v3180 = vadd.f32 %v3079, %v3148
      %v3181 = vadd.f32 %v3080, %v3149
      %v3182 = vadd.f32 %v3081, %v3150
      %v3183 = vadd.f32 %v3082, %v3151
      %v3184 = vadd.f32 %v3083, %v3152
      %v3185 = vadd.f32 %v3084, %v3153
      %v3186 = vadd.f32 %v3085, %v3154
      %v3187 = vadd.f32 %v3086, %v3155
      %v3188 = vadd.f32 %v3087, %v3156
      %v3189 = vadd.f32 %v3088, %v3157
      %v3190 = vadd.f32 %v3089, %v3158
      %v3191 = vadd.f32 %v3090, %v3159
      %v3192 = vadd.f32 %v3091, %v3160
      %v3193 = vadd.f32 %v3092, %v3161
      %v3194 = vadd.f32 %v3093, %v3162
      %v3195 = vadd.f32 %v3094, %v3163
      %v3196 = vadd.f32 %v3095, %v3164
      %v3197 = vadd.f32 %v3096, %v3165
      %v3198 = vadd.f32 %v3097, %v3166
      %v3199 = vadd.f32 %v3098, %v3167
      %v3200 = vadd.f32 %v3099, %v3168
      %v3201 = vadd.f32 %v3100, %v3169
      %v3202 = vadd.f32 %v3101, %v3170
      %v3203 = vadd.f32 %v3102, %v3171
      %v3204 = vadd.f32 %v3103, %v3172
      %v3205 = vadd.f32 %v3104, %v3173
      %v3206 = vadd.f32 %v3105, %v3174
      %v3207 = vadd.f32 %v3106, %v3175
      %v3208 = vadd.f32 %v3107, %v3176
      %v3209 = vadd.f32 %v3108, %v3177
      %v3210 = vld [vmem:[%s3109 + $0x1] sm:$0xff]
      %v3211 = vld [vmem:[%s3109 + $0x11] sm:$0xff]
      %v3212 = vld [vmem:[%s3109 + $0x21] sm:$0xff]
      %v3213 = vld [vmem:[%s3109 + $0x31] sm:$0xff]
      %v3214 = vld [vmem:[%s3109 + $0x41] sm:$0xff]
      %v3215 = vld [vmem:[%s3109 + $0x51] sm:$0xff]
      %v3216 = vld [vmem:[%s3109 + $0x61] sm:$0xff]
      %v3217 = vld [vmem:[%s3109 + $0x71] sm:$0xff]
      %v3218 = vld [vmem:[%s3109 + $0xa1] sm:$0xff]
      %v3219 = vld [vmem:[%s3109 + $0xb1] sm:$0xff]
      %v3220 = vld [vmem:[%s3109 + $0xc1] sm:$0xff]
      %v3221 = vld [vmem:[%s3109 + $0xd1] sm:$0xff]
      %v3222 = vld [vmem:[%s3109 + $0xe1] sm:$0xff]
      %v3223 = vld [vmem:[%s3109 + $0xf1] sm:$0xff]
      %v3224 = vld [vmem:[%s3109 + $0x101] sm:$0xff]
      %v3225 = vld [vmem:[%s3109 + $0x111] sm:$0xff]
      %v3226 = vld [vmem:[%s3109 + $0x141] sm:$0xff]
      %v3227 = vld [vmem:[%s3109 + $0x151] sm:$0xff]
      %v3228 = vld [vmem:[%s3109 + $0x161] sm:$0xff]
      %v3229 = vld [vmem:[%s3109 + $0x171] sm:$0xff]
      %v3230 = vld [vmem:[%s3109 + $0x181] sm:$0xff]
      %v3231 = vld [vmem:[%s3109 + $0x191] sm:$0xff]
      %v3232 = vld [vmem:[%s3109 + $0x1a1] sm:$0xff]
      %v3233 = vld [vmem:[%s3109 + $0x1b1] sm:$0xff]
      %v3234 = vld [vmem:[%s3109 + $0x1e1] sm:$0xff]
      %v3235 = vld [vmem:[%s3109 + $0x1f1] sm:$0xff]
      %v3236 = vld [vmem:[%s3109 + $0x201] sm:$0xff]
      %v3237 = vld [vmem:[%s3109 + $0x211] sm:$0xff]
      %v3238 = vld [vmem:[%s3109 + $0x221] sm:$0xff]
      %v3239 = vld [vmem:[%s3109 + $0x231] sm:$0xff]
      %v3240 = vld [vmem:[%s3109 + $0x241] sm:$0xff]
      %v3241 = vld [vmem:[%s3109 + $0x251] sm:$0xff]
      %v3242 = vlaneseq
      %v3243 = vshrl.u32 %v3242, 7
      %v3244 = vsub.s32 7, %v3243
      %v3245 = vrot.slane %v2536, %v3244
      %v3246 = vmul.f32 %v3210, %v3245
      %v3247 = vmul.f32 %v3211, %v3245
      %v3248 = vmul.f32 %v3212, %v3245
      %v3249 = vmul.f32 %v3213, %v3245
      %v3250 = vmul.f32 %v3214, %v3245
      %v3251 = vmul.f32 %v3215, %v3245
      %v3252 = vmul.f32 %v3216, %v3245
      %v3253 = vmul.f32 %v3217, %v3245
      %v3254 = vmul.f32 %v3218, %v3245
      %v3255 = vmul.f32 %v3219, %v3245
      %v3256 = vmul.f32 %v3220, %v3245
      %v3257 = vmul.f32 %v3221, %v3245
      %v3258 = vmul.f32 %v3222, %v3245
      %v3259 = vmul.f32 %v3223, %v3245
      %v3260 = vmul.f32 %v3224, %v3245
      %v3261 = vmul.f32 %v3225, %v3245
      %v3262 = vmul.f32 %v3226, %v3245
      %v3263 = vmul.f32 %v3227, %v3245
      %v3264 = vmul.f32 %v3228, %v3245
      %v3265 = vmul.f32 %v3229, %v3245
      %v3266 = vmul.f32 %v3230, %v3245
      %v3267 = vmul.f32 %v3231, %v3245
      %v3268 = vmul.f32 %v3232, %v3245
      %v3269 = vmul.f32 %v3233, %v3245
      %v3270 = vmul.f32 %v3234, %v3245
      %v3271 = vmul.f32 %v3235, %v3245
      %v3272 = vmul.f32 %v3236, %v3245
      %v3273 = vmul.f32 %v3237, %v3245
      %v3274 = vmul.f32 %v3238, %v3245
      %v3275 = vmul.f32 %v3239, %v3245
      %v3276 = vmul.f32 %v3240, %v3245
      %v3277 = vmul.f32 %v3241, %v3245
      %v3278 = vadd.f32 %v3178, %v3246
      %v3279 = vadd.f32 %v3179, %v3247
      %v3280 = vadd.f32 %v3180, %v3248
      %v3281 = vadd.f32 %v3181, %v3249
      %v3282 = vadd.f32 %v3182, %v3250
      %v3283 = vadd.f32 %v3183, %v3251
      %v3284 = vadd.f32 %v3184, %v3252
      %v3285 = vadd.f32 %v3185, %v3253
      %v3286 = vadd.f32 %v3186, %v3254
      %v3287 = vadd.f32 %v3187, %v3255
      %v3288 = vadd.f32 %v3188, %v3256
      %v3289 = vadd.f32 %v3189, %v3257
      %v3290 = vadd.f32 %v3190, %v3258
      %v3291 = vadd.f32 %v3191, %v3259
      %v3292 = vadd.f32 %v3192, %v3260
      %v3293 = vadd.f32 %v3193, %v3261
      %v3294 = vadd.f32 %v3194, %v3262
      %v3295 = vadd.f32 %v3195, %v3263
      %v3296 = vadd.f32 %v3196, %v3264
      %v3297 = vadd.f32 %v3197, %v3265
      %v3298 = vadd.f32 %v3198, %v3266
      %v3299 = vadd.f32 %v3199, %v3267
      %v3300 = vadd.f32 %v3200, %v3268
      %v3301 = vadd.f32 %v3201, %v3269
      %v3302 = vadd.f32 %v3202, %v3270
      %v3303 = vadd.f32 %v3203, %v3271
      %v3304 = vadd.f32 %v3204, %v3272
      %v3305 = vadd.f32 %v3205, %v3273
      %v3306 = vadd.f32 %v3206, %v3274
      %v3307 = vadd.f32 %v3207, %v3275
      %v3308 = vadd.f32 %v3208, %v3276
      %v3309 = vadd.f32 %v3209, %v3277
      %v3310 = vld [vmem:[%s3109 + $0x2] sm:$0xff]
      %v3311 = vld [vmem:[%s3109 + $0x12] sm:$0xff]
      %v3312 = vld [vmem:[%s3109 + $0x22] sm:$0xff]
      %v3313 = vld [vmem:[%s3109 + $0x32] sm:$0xff]
      %v3314 = vld [vmem:[%s3109 + $0x42] sm:$0xff]
      %v3315 = vld [vmem:[%s3109 + $0x52] sm:$0xff]
      %v3316 = vld [vmem:[%s3109 + $0x62] sm:$0xff]
      %v3317 = vld [vmem:[%s3109 + $0x72] sm:$0xff]
      %v3318 = vld [vmem:[%s3109 + $0xa2] sm:$0xff]
      %v3319 = vld [vmem:[%s3109 + $0xb2] sm:$0xff]
      %v3320 = vld [vmem:[%s3109 + $0xc2] sm:$0xff]
      %v3321 = vld [vmem:[%s3109 + $0xd2] sm:$0xff]
      %v3322 = vld [vmem:[%s3109 + $0xe2] sm:$0xff]
      %v3323 = vld [vmem:[%s3109 + $0xf2] sm:$0xff]
      %v3324 = vld [vmem:[%s3109 + $0x102] sm:$0xff]
      %v3325 = vld [vmem:[%s3109 + $0x112] sm:$0xff]
      %v3326 = vld [vmem:[%s3109 + $0x142] sm:$0xff]
      %v3327 = vld [vmem:[%s3109 + $0x152] sm:$0xff]
      %v3328 = vld [vmem:[%s3109 + $0x162] sm:$0xff]
      %v3329 = vld [vmem:[%s3109 + $0x172] sm:$0xff]
      %v3330 = vld [vmem:[%s3109 + $0x182] sm:$0xff]
      %v3331 = vld [vmem:[%s3109 + $0x192] sm:$0xff]
      %v3332 = vld [vmem:[%s3109 + $0x1a2] sm:$0xff]
      %v3333 = vld [vmem:[%s3109 + $0x1b2] sm:$0xff]
      %v3334 = vld [vmem:[%s3109 + $0x1e2] sm:$0xff]
      %v3335 = vld [vmem:[%s3109 + $0x1f2] sm:$0xff]
      %v3336 = vld [vmem:[%s3109 + $0x202] sm:$0xff]
      %v3337 = vld [vmem:[%s3109 + $0x212] sm:$0xff]
      %v3338 = vld [vmem:[%s3109 + $0x222] sm:$0xff]
      %v3339 = vld [vmem:[%s3109 + $0x232] sm:$0xff]
      %v3340 = vld [vmem:[%s3109 + $0x242] sm:$0xff]
      %v3341 = vld [vmem:[%s3109 + $0x252] sm:$0xff]
      %v3342 = vlaneseq
      %v3343 = vshrl.u32 %v3342, 7
      %v3344 = vsub.s32 0, %v3343
      %v3345 = vrot.slane %v2537, %v3344
      %v3346 = vmul.f32 %v3310, %v3345
      %v3347 = vmul.f32 %v3311, %v3345
      %v3348 = vmul.f32 %v3312, %v3345
      %v3349 = vmul.f32 %v3313, %v3345
      %v3350 = vmul.f32 %v3314, %v3345
      %v3351 = vmul.f32 %v3315, %v3345
      %v3352 = vmul.f32 %v3316, %v3345
      %v3353 = vmul.f32 %v3317, %v3345
      %v3354 = vmul.f32 %v3318, %v3345
      %v3355 = vmul.f32 %v3319, %v3345
      %v3356 = vmul.f32 %v3320, %v3345
      %v3357 = vmul.f32 %v3321, %v3345
      %v3358 = vmul.f32 %v3322, %v3345
      %v3359 = vmul.f32 %v3323, %v3345
      %v3360 = vmul.f32 %v3324, %v3345
      %v3361 = vmul.f32 %v3325, %v3345
      %v3362 = vmul.f32 %v3326, %v3345
      %v3363 = vmul.f32 %v3327, %v3345
      %v3364 = vmul.f32 %v3328, %v3345
      %v3365 = vmul.f32 %v3329, %v3345
      %v3366 = vmul.f32 %v3330, %v3345
      %v3367 = vmul.f32 %v3331, %v3345
      %v3368 = vmul.f32 %v3332, %v3345
      %v3369 = vmul.f32 %v3333, %v3345
      %v3370 = vmul.f32 %v3334, %v3345
      %v3371 = vmul.f32 %v3335, %v3345
      %v3372 = vmul.f32 %v3336, %v3345
      %v3373 = vmul.f32 %v3337, %v3345
      %v3374 = vmul.f32 %v3338, %v3345
      %v3375 = vmul.f32 %v3339, %v3345
      %v3376 = vmul.f32 %v3340, %v3345
      %v3377 = vmul.f32 %v3341, %v3345
      %v3378 = vadd.f32 %v3278, %v3346
      %v3379 = vadd.f32 %v3279, %v3347
      %v3380 = vadd.f32 %v3280, %v3348
      %v3381 = vadd.f32 %v3281, %v3349
      %v3382 = vadd.f32 %v3282, %v3350
      %v3383 = vadd.f32 %v3283, %v3351
      %v3384 = vadd.f32 %v3284, %v3352
      %v3385 = vadd.f32 %v3285, %v3353
      %v3386 = vadd.f32 %v3286, %v3354
      %v3387 = vadd.f32 %v3287, %v3355
      %v3388 = vadd.f32 %v3288, %v3356
      %v3389 = vadd.f32 %v3289, %v3357
      %v3390 = vadd.f32 %v3290, %v3358
      %v3391 = vadd.f32 %v3291, %v3359
      %v3392 = vadd.f32 %v3292, %v3360
      %v3393 = vadd.f32 %v3293, %v3361
      %v3394 = vadd.f32 %v3294, %v3362
      %v3395 = vadd.f32 %v3295, %v3363
      %v3396 = vadd.f32 %v3296, %v3364
      %v3397 = vadd.f32 %v3297, %v3365
      %v3398 = vadd.f32 %v3298, %v3366
      %v3399 = vadd.f32 %v3299, %v3367
      %v3400 = vadd.f32 %v3300, %v3368
      %v3401 = vadd.f32 %v3301, %v3369
      %v3402 = vadd.f32 %v3302, %v3370
      %v3403 = vadd.f32 %v3303, %v3371
      %v3404 = vadd.f32 %v3304, %v3372
      %v3405 = vadd.f32 %v3305, %v3373
      %v3406 = vadd.f32 %v3306, %v3374
      %v3407 = vadd.f32 %v3307, %v3375
      %v3408 = vadd.f32 %v3308, %v3376
      %v3409 = vadd.f32 %v3309, %v3377
      %s3410 = scalar_lea.vmem [#allocation2], 160
      %v3411 = vld [vmem:[%s3410] sm:$0xff]
      %v3412 = vld [vmem:[%s3410 + $0x10] sm:$0xff]
      %v3413 = vld [vmem:[%s3410 + $0x20] sm:$0xff]
      %v3414 = vld [vmem:[%s3410 + $0x30] sm:$0xff]
      %v3415 = vld [vmem:[%s3410 + $0x40] sm:$0xff]
      %v3416 = vld [vmem:[%s3410 + $0x50] sm:$0xff]
      %v3417 = vld [vmem:[%s3410 + $0x60] sm:$0xff]
      %v3418 = vld [vmem:[%s3410 + $0x70] sm:$0xff]
      %v3419 = vld [vmem:[%s3410 + $0xa0] sm:$0xff]
      %v3420 = vld [vmem:[%s3410 + $0xb0] sm:$0xff]
      %v3421 = vld [vmem:[%s3410 + $0xc0] sm:$0xff]
      %v3422 = vld [vmem:[%s3410 + $0xd0] sm:$0xff]
      %v3423 = vld [vmem:[%s3410 + $0xe0] sm:$0xff]
      %v3424 = vld [vmem:[%s3410 + $0xf0] sm:$0xff]
      %v3425 = vld [vmem:[%s3410 + $0x100] sm:$0xff]
      %v3426 = vld [vmem:[%s3410 + $0x110] sm:$0xff]
      %v3427 = vld [vmem:[%s3410 + $0x140] sm:$0xff]
      %v3428 = vld [vmem:[%s3410 + $0x150] sm:$0xff]
      %v3429 = vld [vmem:[%s3410 + $0x160] sm:$0xff]
      %v3430 = vld [vmem:[%s3410 + $0x170] sm:$0xff]
      %v3431 = vld [vmem:[%s3410 + $0x180] sm:$0xff]
      %v3432 = vld [vmem:[%s3410 + $0x190] sm:$0xff]
      %v3433 = vld [vmem:[%s3410 + $0x1a0] sm:$0xff]
      %v3434 = vld [vmem:[%s3410 + $0x1b0] sm:$0xff]
      %v3435 = vld [vmem:[%s3410 + $0x1e0] sm:$0xff]
      %v3436 = vld [vmem:[%s3410 + $0x1f0] sm:$0xff]
      %v3437 = vld [vmem:[%s3410 + $0x200] sm:$0xff]
      %v3438 = vld [vmem:[%s3410 + $0x210] sm:$0xff]
      %v3439 = vld [vmem:[%s3410 + $0x220] sm:$0xff]
      %v3440 = vld [vmem:[%s3410 + $0x230] sm:$0xff]
      %v3441 = vld [vmem:[%s3410 + $0x240] sm:$0xff]
      %v3442 = vld [vmem:[%s3410 + $0x250] sm:$0xff]
      %v3443 = vlaneseq
      %v3444 = vshrl.u32 %v3443, 7
      %v3445 = vsub.s32 1, %v3444
      %v3446 = vrot.slane %v2537, %v3445
      %v3447 = vmul.f32 %v3411, %v3446
      %v3448 = vmul.f32 %v3412, %v3446
      %v3449 = vmul.f32 %v3413, %v3446
      %v3450 = vmul.f32 %v3414, %v3446
      %v3451 = vmul.f32 %v3415, %v3446
      %v3452 = vmul.f32 %v3416, %v3446
      %v3453 = vmul.f32 %v3417, %v3446
      %v3454 = vmul.f32 %v3418, %v3446
      %v3455 = vmul.f32 %v3419, %v3446
      %v3456 = vmul.f32 %v3420, %v3446
      %v3457 = vmul.f32 %v3421, %v3446
      %v3458 = vmul.f32 %v3422, %v3446
      %v3459 = vmul.f32 %v3423, %v3446
      %v3460 = vmul.f32 %v3424, %v3446
      %v3461 = vmul.f32 %v3425, %v3446
      %v3462 = vmul.f32 %v3426, %v3446
      %v3463 = vmul.f32 %v3427, %v3446
      %v3464 = vmul.f32 %v3428, %v3446
      %v3465 = vmul.f32 %v3429, %v3446
      %v3466 = vmul.f32 %v3430, %v3446
      %v3467 = vmul.f32 %v3431, %v3446
      %v3468 = vmul.f32 %v3432, %v3446
      %v3469 = vmul.f32 %v3433, %v3446
      %v3470 = vmul.f32 %v3434, %v3446
      %v3471 = vmul.f32 %v3435, %v3446
      %v3472 = vmul.f32 %v3436, %v3446
      %v3473 = vmul.f32 %v3437, %v3446
      %v3474 = vmul.f32 %v3438, %v3446
      %v3475 = vmul.f32 %v3439, %v3446
      %v3476 = vmul.f32 %v3440, %v3446
      %v3477 = vmul.f32 %v3441, %v3446
      %v3478 = vmul.f32 %v3442, %v3446
      %v3479 = vld [vmem:[%s3410 + $0x1] sm:$0xff]
      %v3480 = vld [vmem:[%s3410 + $0x11] sm:$0xff]
      %v3481 = vld [vmem:[%s3410 + $0x21] sm:$0xff]
      %v3482 = vld [vmem:[%s3410 + $0x31] sm:$0xff]
      %v3483 = vld [vmem:[%s3410 + $0x41] sm:$0xff]
      %v3484 = vld [vmem:[%s3410 + $0x51] sm:$0xff]
      %v3485 = vld [vmem:[%s3410 + $0x61] sm:$0xff]
      %v3486 = vld [vmem:[%s3410 + $0x71] sm:$0xff]
      %v3487 = vld [vmem:[%s3410 + $0xa1] sm:$0xff]
      %v3488 = vld [vmem:[%s3410 + $0xb1] sm:$0xff]
      %v3489 = vld [vmem:[%s3410 + $0xc1] sm:$0xff]
      %v3490 = vld [vmem:[%s3410 + $0xd1] sm:$0xff]
      %v3491 = vld [vmem:[%s3410 + $0xe1] sm:$0xff]
      %v3492 = vld [vmem:[%s3410 + $0xf1] sm:$0xff]
      %v3493 = vld [vmem:[%s3410 + $0x101] sm:$0xff]
      %v3494 = vld [vmem:[%s3410 + $0x111] sm:$0xff]
      %v3495 = vld [vmem:[%s3410 + $0x141] sm:$0xff]
      %v3496 = vld [vmem:[%s3410 + $0x151] sm:$0xff]
      %v3497 = vld [vmem:[%s3410 + $0x161] sm:$0xff]
      %v3498 = vld [vmem:[%s3410 + $0x171] sm:$0xff]
      %v3499 = vld [vmem:[%s3410 + $0x181] sm:$0xff]
      %v3500 = vld [vmem:[%s3410 + $0x191] sm:$0xff]
      %v3501 = vld [vmem:[%s3410 + $0x1a1] sm:$0xff]
      %v3502 = vld [vmem:[%s3410 + $0x1b1] sm:$0xff]
      %v3503 = vld [vmem:[%s3410 + $0x1e1] sm:$0xff]
      %v3504 = vld [vmem:[%s3410 + $0x1f1] sm:$0xff]
      %v3505 = vld [vmem:[%s3410 + $0x201] sm:$0xff]
      %v3506 = vld [vmem:[%s3410 + $0x211] sm:$0xff]
      %v3507 = vld [vmem:[%s3410 + $0x221] sm:$0xff]
      %v3508 = vld [vmem:[%s3410 + $0x231] sm:$0xff]
      %v3509 = vld [vmem:[%s3410 + $0x241] sm:$0xff]
      %v3510 = vld [vmem:[%s3410 + $0x251] sm:$0xff]
      %v3511 = vlaneseq
      %v3512 = vshrl.u32 %v3511, 7
      %v3513 = vsub.s32 2, %v3512
      %v3514 = vrot.slane %v2537, %v3513
      %v3515 = vmul.f32 %v3479, %v3514
      %v3516 = vmul.f32 %v3480, %v3514
      %v3517 = vmul.f32 %v3481, %v3514
      %v3518 = vmul.f32 %v3482, %v3514
      %v3519 = vmul.f32 %v3483, %v3514
      %v3520 = vmul.f32 %v3484, %v3514
      %v3521 = vmul.f32 %v3485, %v3514
      %v3522 = vmul.f32 %v3486, %v3514
      %v3523 = vmul.f32 %v3487, %v3514
      %v3524 = vmul.f32 %v3488, %v3514
      %v3525 = vmul.f32 %v3489, %v3514
      %v3526 = vmul.f32 %v3490, %v3514
      %v3527 = vmul.f32 %v3491, %v3514
      %v3528 = vmul.f32 %v3492, %v3514
      %v3529 = vmul.f32 %v3493, %v3514
      %v3530 = vmul.f32 %v3494, %v3514
      %v3531 = vmul.f32 %v3495, %v3514
      %v3532 = vmul.f32 %v3496, %v3514
      %v3533 = vmul.f32 %v3497, %v3514
      %v3534 = vmul.f32 %v3498, %v3514
      %v3535 = vmul.f32 %v3499, %v3514
      %v3536 = vmul.f32 %v3500, %v3514
      %v3537 = vmul.f32 %v3501, %v3514
      %v3538 = vmul.f32 %v3502, %v3514
      %v3539 = vmul.f32 %v3503, %v3514
      %v3540 = vmul.f32 %v3504, %v3514
      %v3541 = vmul.f32 %v3505, %v3514
      %v3542 = vmul.f32 %v3506, %v3514
      %v3543 = vmul.f32 %v3507, %v3514
      %v3544 = vmul.f32 %v3508, %v3514
      %v3545 = vmul.f32 %v3509, %v3514
      %v3546 = vmul.f32 %v3510, %v3514
      %v3547 = vadd.f32 %v3447, %v3515
      %v3548 = vadd.f32 %v3448, %v3516
      %v3549 = vadd.f32 %v3449, %v3517
      %v3550 = vadd.f32 %v3450, %v3518
      %v3551 = vadd.f32 %v3451, %v3519
      %v3552 = vadd.f32 %v3452, %v3520
      %v3553 = vadd.f32 %v3453, %v3521
      %v3554 = vadd.f32 %v3454, %v3522
      %v3555 = vadd.f32 %v3455, %v3523
      %v3556 = vadd.f32 %v3456, %v3524
      %v3557 = vadd.f32 %v3457, %v3525
      %v3558 = vadd.f32 %v3458, %v3526
      %v3559 = vadd.f32 %v3459, %v3527
      %v3560 = vadd.f32 %v3460, %v3528
      %v3561 = vadd.f32 %v3461, %v3529
      %v3562 = vadd.f32 %v3462, %v3530
      %v3563 = vadd.f32 %v3463, %v3531
      %v3564 = vadd.f32 %v3464, %v3532
      %v3565 = vadd.f32 %v3465, %v3533
      %v3566 = vadd.f32 %v3466, %v3534
      %v3567 = vadd.f32 %v3467, %v3535
      %v3568 = vadd.f32 %v3468, %v3536
      %v3569 = vadd.f32 %v3469, %v3537
      %v3570 = vadd.f32 %v3470, %v3538
      %v3571 = vadd.f32 %v3471, %v3539
      %v3572 = vadd.f32 %v3472, %v3540
      %v3573 = vadd.f32 %v3473, %v3541
      %v3574 = vadd.f32 %v3474, %v3542
      %v3575 = vadd.f32 %v3475, %v3543
      %v3576 = vadd.f32 %v3476, %v3544
      %v3577 = vadd.f32 %v3477, %v3545
      %v3578 = vadd.f32 %v3478, %v3546
      %v3579 = vld [vmem:[%s3410 + $0x2] sm:$0xff]
      %v3580 = vld [vmem:[%s3410 + $0x12] sm:$0xff]
      %v3581 = vld [vmem:[%s3410 + $0x22] sm:$0xff]
      %v3582 = vld [vmem:[%s3410 + $0x32] sm:$0xff]
      %v3583 = vld [vmem:[%s3410 + $0x42] sm:$0xff]
      %v3584 = vld [vmem:[%s3410 + $0x52] sm:$0xff]
      %v3585 = vld [vmem:[%s3410 + $0x62] sm:$0xff]
      %v3586 = vld [vmem:[%s3410 + $0x72] sm:$0xff]
      %v3587 = vld [vmem:[%s3410 + $0xa2] sm:$0xff]
      %v3588 = vld [vmem:[%s3410 + $0xb2] sm:$0xff]
      %v3589 = vld [vmem:[%s3410 + $0xc2] sm:$0xff]
      %v3590 = vld [vmem:[%s3410 + $0xd2] sm:$0xff]
      %v3591 = vld [vmem:[%s3410 + $0xe2] sm:$0xff]
      %v3592 = vld [vmem:[%s3410 + $0xf2] sm:$0xff]
      %v3593 = vld [vmem:[%s3410 + $0x102] sm:$0xff]
      %v3594 = vld [vmem:[%s3410 + $0x112] sm:$0xff]
      %v3595 = vld [vmem:[%s3410 + $0x142] sm:$0xff]
      %v3596 = vld [vmem:[%s3410 + $0x152] sm:$0xff]
      %v3597 = vld [vmem:[%s3410 + $0x162] sm:$0xff]
      %v3598 = vld [vmem:[%s3410 + $0x172] sm:$0xff]
      %v3599 = vld [vmem:[%s3410 + $0x182] sm:$0xff]
      %v3600 = vld [vmem:[%s3410 + $0x192] sm:$0xff]
      %v3601 = vld [vmem:[%s3410 + $0x1a2] sm:$0xff]
      %v3602 = vld [vmem:[%s3410 + $0x1b2] sm:$0xff]
      %v3603 = vld [vmem:[%s3410 + $0x1e2] sm:$0xff]
      %v3604 = vld [vmem:[%s3410 + $0x1f2] sm:$0xff]
      %v3605 = vld [vmem:[%s3410 + $0x202] sm:$0xff]
      %v3606 = vld [vmem:[%s3410 + $0x212] sm:$0xff]
      %v3607 = vld [vmem:[%s3410 + $0x222] sm:$0xff]
      %v3608 = vld [vmem:[%s3410 + $0x232] sm:$0xff]
      %v3609 = vld [vmem:[%s3410 + $0x242] sm:$0xff]
      %v3610 = vld [vmem:[%s3410 + $0x252] sm:$0xff]
      %v3611 = vlaneseq
      %v3612 = vshrl.u32 %v3611, 7
      %v3613 = vsub.s32 3, %v3612
      %v3614 = vrot.slane %v2537, %v3613
      %v3615 = vmul.f32 %v3579, %v3614
      %v3616 = vmul.f32 %v3580, %v3614
      %v3617 = vmul.f32 %v3581, %v3614
      %v3618 = vmul.f32 %v3582, %v3614
      %v3619 = vmul.f32 %v3583, %v3614
      %v3620 = vmul.f32 %v3584, %v3614
      %v3621 = vmul.f32 %v3585, %v3614
      %v3622 = vmul.f32 %v3586, %v3614
      %v3623 = vmul.f32 %v3587, %v3614
      %v3624 = vmul.f32 %v3588, %v3614
      %v3625 = vmul.f32 %v3589, %v3614
      %v3626 = vmul.f32 %v3590, %v3614
      %v3627 = vmul.f32 %v3591, %v3614
      %v3628 = vmul.f32 %v3592, %v3614
      %v3629 = vmul.f32 %v3593, %v3614
      %v3630 = vmul.f32 %v3594, %v3614
      %v3631 = vmul.f32 %v3595, %v3614
      %v3632 = vmul.f32 %v3596, %v3614
      %v3633 = vmul.f32 %v3597, %v3614
      %v3634 = vmul.f32 %v3598, %v3614
      %v3635 = vmul.f32 %v3599, %v3614
      %v3636 = vmul.f32 %v3600, %v3614
      %v3637 = vmul.f32 %v3601, %v3614
      %v3638 = vmul.f32 %v3602, %v3614
      %v3639 = vmul.f32 %v3603, %v3614
      %v3640 = vmul.f32 %v3604, %v3614
      %v3641 = vmul.f32 %v3605, %v3614
      %v3642 = vmul.f32 %v3606, %v3614
      %v3643 = vmul.f32 %v3607, %v3614
      %v3644 = vmul.f32 %v3608, %v3614
      %v3645 = vmul.f32 %v3609, %v3614
      %v3646 = vmul.f32 %v3610, %v3614
      %v3647 = vadd.f32 %v3547, %v3615
      %v3648 = vadd.f32 %v3548, %v3616
      %v3649 = vadd.f32 %v3549, %v3617
      %v3650 = vadd.f32 %v3550, %v3618
      %v3651 = vadd.f32 %v3551, %v3619
      %v3652 = vadd.f32 %v3552, %v3620
      %v3653 = vadd.f32 %v3553, %v3621
      %v3654 = vadd.f32 %v3554, %v3622
      %v3655 = vadd.f32 %v3555, %v3623
      %v3656 = vadd.f32 %v3556, %v3624
      %v3657 = vadd.f32 %v3557, %v3625
      %v3658 = vadd.f32 %v3558, %v3626
      %v3659 = vadd.f32 %v3559, %v3627
      %v3660 = vadd.f32 %v3560, %v3628
      %v3661 = vadd.f32 %v3561, %v3629
      %v3662 = vadd.f32 %v3562, %v3630
      %v3663 = vadd.f32 %v3563, %v3631
      %v3664 = vadd.f32 %v3564, %v3632
      %v3665 = vadd.f32 %v3565, %v3633
      %v3666 = vadd.f32 %v3566, %v3634
      %v3667 = vadd.f32 %v3567, %v3635
      %v3668 = vadd.f32 %v3568, %v3636
      %v3669 = vadd.f32 %v3569, %v3637
      %v3670 = vadd.f32 %v3570, %v3638
      %v3671 = vadd.f32 %v3571, %v3639
      %v3672 = vadd.f32 %v3572, %v3640
      %v3673 = vadd.f32 %v3573, %v3641
      %v3674 = vadd.f32 %v3574, %v3642
      %v3675 = vadd.f32 %v3575, %v3643
      %v3676 = vadd.f32 %v3576, %v3644
      %v3677 = vadd.f32 %v3577, %v3645
      %v3678 = vadd.f32 %v3578, %v3646
      %v3679 = vld [vmem:[%s2503] sm:$0xff]
      %v3680 = vld [vmem:[%s2503 + $0x10] sm:$0xff]
      %v3681 = vld [vmem:[%s2503 + $0x20] sm:$0xff]
      %v3682 = vld [vmem:[%s2503 + $0x30] sm:$0xff]
      %v3683 = vld [vmem:[%s2503 + $0x40] sm:$0xff]
      %v3684 = vld [vmem:[%s2503 + $0x50] sm:$0xff]
      %v3685 = vld [vmem:[%s2503 + $0x60] sm:$0xff]
      %v3686 = vld [vmem:[%s2503 + $0x70] sm:$0xff]
      %v3687 = vld [vmem:[%s2503 + $0xa0] sm:$0xff]
      %v3688 = vld [vmem:[%s2503 + $0xb0] sm:$0xff]
      %v3689 = vld [vmem:[%s2503 + $0xc0] sm:$0xff]
      %v3690 = vld [vmem:[%s2503 + $0xd0] sm:$0xff]
      %v3691 = vld [vmem:[%s2503 + $0xe0] sm:$0xff]
      %v3692 = vld [vmem:[%s2503 + $0xf0] sm:$0xff]
      %v3693 = vld [vmem:[%s2503 + $0x100] sm:$0xff]
      %v3694 = vld [vmem:[%s2503 + $0x110] sm:$0xff]
      %v3695 = vld [vmem:[%s2503 + $0x140] sm:$0xff]
      %v3696 = vld [vmem:[%s2503 + $0x150] sm:$0xff]
      %v3697 = vld [vmem:[%s2503 + $0x160] sm:$0xff]
      %v3698 = vld [vmem:[%s2503 + $0x170] sm:$0xff]
      %v3699 = vld [vmem:[%s2503 + $0x180] sm:$0xff]
      %v3700 = vld [vmem:[%s2503 + $0x190] sm:$0xff]
      %v3701 = vld [vmem:[%s2503 + $0x1a0] sm:$0xff]
      %v3702 = vld [vmem:[%s2503 + $0x1b0] sm:$0xff]
      %v3703 = vld [vmem:[%s2503 + $0x1e0] sm:$0xff]
      %v3704 = vld [vmem:[%s2503 + $0x1f0] sm:$0xff]
      %v3705 = vld [vmem:[%s2503 + $0x200] sm:$0xff]
      %v3706 = vld [vmem:[%s2503 + $0x210] sm:$0xff]
      %v3707 = vld [vmem:[%s2503 + $0x220] sm:$0xff]
      %v3708 = vld [vmem:[%s2503 + $0x230] sm:$0xff]
      %v3709 = vld [vmem:[%s2503 + $0x240] sm:$0xff]
      %v3710 = vld [vmem:[%s2503 + $0x250] sm:$0xff]
      %v3711 = vlaneseq
      %v3712 = vshrl.u32 %v3711, 7
      %v3713 = vsub.s32 4, %v3712
      %v3714 = vrot.slane %v2537, %v3713
      %v3715 = vmul.f32 %v3679, %v3714
      %v3716 = vmul.f32 %v3680, %v3714
      %v3717 = vmul.f32 %v3681, %v3714
      %v3718 = vmul.f32 %v3682, %v3714
      %v3719 = vmul.f32 %v3683, %v3714
      %v3720 = vmul.f32 %v3684, %v3714
      %v3721 = vmul.f32 %v3685, %v3714
      %v3722 = vmul.f32 %v3686, %v3714
      %v3723 = vmul.f32 %v3687, %v3714
      %v3724 = vmul.f32 %v3688, %v3714
      %v3725 = vmul.f32 %v3689, %v3714
      %v3726 = vmul.f32 %v3690, %v3714
      %v3727 = vmul.f32 %v3691, %v3714
      %v3728 = vmul.f32 %v3692, %v3714
      %v3729 = vmul.f32 %v3693, %v3714
      %v3730 = vmul.f32 %v3694, %v3714
      %v3731 = vmul.f32 %v3695, %v3714
      %v3732 = vmul.f32 %v3696, %v3714
      %v3733 = vmul.f32 %v3697, %v3714
      %v3734 = vmul.f32 %v3698, %v3714
      %v3735 = vmul.f32 %v3699, %v3714
      %v3736 = vmul.f32 %v3700, %v3714
      %v3737 = vmul.f32 %v3701, %v3714
      %v3738 = vmul.f32 %v3702, %v3714
      %v3739 = vmul.f32 %v3703, %v3714
      %v3740 = vmul.f32 %v3704, %v3714
      %v3741 = vmul.f32 %v3705, %v3714
      %v3742 = vmul.f32 %v3706, %v3714
      %v3743 = vmul.f32 %v3707, %v3714
      %v3744 = vmul.f32 %v3708, %v3714
      %v3745 = vmul.f32 %v3709, %v3714
      %v3746 = vmul.f32 %v3710, %v3714
      %v3747 = vadd.f32 %v3647, %v3715
      %v3748 = vadd.f32 %v3648, %v3716
      %v3749 = vadd.f32 %v3649, %v3717
      %v3750 = vadd.f32 %v3650, %v3718
      %v3751 = vadd.f32 %v3651, %v3719
      %v3752 = vadd.f32 %v3652, %v3720
      %v3753 = vadd.f32 %v3653, %v3721
      %v3754 = vadd.f32 %v3654, %v3722
      %v3755 = vadd.f32 %v3655, %v3723
      %v3756 = vadd.f32 %v3656, %v3724
      %v3757 = vadd.f32 %v3657, %v3725
      %v3758 = vadd.f32 %v3658, %v3726
      %v3759 = vadd.f32 %v3659, %v3727
      %v3760 = vadd.f32 %v3660, %v3728
      %v3761 = vadd.f32 %v3661, %v3729
      %v3762 = vadd.f32 %v3662, %v3730
      %v3763 = vadd.f32 %v3663, %v3731
      %v3764 = vadd.f32 %v3664, %v3732
      %v3765 = vadd.f32 %v3665, %v3733
      %v3766 = vadd.f32 %v3666, %v3734
      %v3767 = vadd.f32 %v3667, %v3735
      %v3768 = vadd.f32 %v3668, %v3736
      %v3769 = vadd.f32 %v3669, %v3737
      %v3770 = vadd.f32 %v3670, %v3738
      %v3771 = vadd.f32 %v3671, %v3739
      %v3772 = vadd.f32 %v3672, %v3740
      %v3773 = vadd.f32 %v3673, %v3741
      %v3774 = vadd.f32 %v3674, %v3742
      %v3775 = vadd.f32 %v3675, %v3743
      %v3776 = vadd.f32 %v3676, %v3744
      %v3777 = vadd.f32 %v3677, %v3745
      %v3778 = vadd.f32 %v3678, %v3746
      %v3779 = vld [vmem:[%s2503 + $0x1] sm:$0xff]
      %v3780 = vld [vmem:[%s2503 + $0x11] sm:$0xff]
      %v3781 = vld [vmem:[%s2503 + $0x21] sm:$0xff]
      %v3782 = vld [vmem:[%s2503 + $0x31] sm:$0xff]
      %v3783 = vld [vmem:[%s2503 + $0x41] sm:$0xff]
      %v3784 = vld [vmem:[%s2503 + $0x51] sm:$0xff]
      %v3785 = vld [vmem:[%s2503 + $0x61] sm:$0xff]
      %v3786 = vld [vmem:[%s2503 + $0x71] sm:$0xff]
      %v3787 = vld [vmem:[%s2503 + $0xa1] sm:$0xff]
      %v3788 = vld [vmem:[%s2503 + $0xb1] sm:$0xff]
      %v3789 = vld [vmem:[%s2503 + $0xc1] sm:$0xff]
      %v3790 = vld [vmem:[%s2503 + $0xd1] sm:$0xff]
      %v3791 = vld [vmem:[%s2503 + $0xe1] sm:$0xff]
      %v3792 = vld [vmem:[%s2503 + $0xf1] sm:$0xff]
      %v3793 = vld [vmem:[%s2503 + $0x101] sm:$0xff]
      %v3794 = vld [vmem:[%s2503 + $0x111] sm:$0xff]
      %v3795 = vld [vmem:[%s2503 + $0x141] sm:$0xff]
      %v3796 = vld [vmem:[%s2503 + $0x151] sm:$0xff]
      %v3797 = vld [vmem:[%s2503 + $0x161] sm:$0xff]
      %v3798 = vld [vmem:[%s2503 + $0x171] sm:$0xff]
      %v3799 = vld [vmem:[%s2503 + $0x181] sm:$0xff]
      %v3800 = vld [vmem:[%s2503 + $0x191] sm:$0xff]
      %v3801 = vld [vmem:[%s2503 + $0x1a1] sm:$0xff]
      %v3802 = vld [vmem:[%s2503 + $0x1b1] sm:$0xff]
      %v3803 = vld [vmem:[%s2503 + $0x1e1] sm:$0xff]
      %v3804 = vld [vmem:[%s2503 + $0x1f1] sm:$0xff]
      %v3805 = vld [vmem:[%s2503 + $0x201] sm:$0xff]
      %v3806 = vld [vmem:[%s2503 + $0x211] sm:$0xff]
      %v3807 = vld [vmem:[%s2503 + $0x221] sm:$0xff]
      %v3808 = vld [vmem:[%s2503 + $0x231] sm:$0xff]
      %v3809 = vld [vmem:[%s2503 + $0x241] sm:$0xff]
      %v3810 = vld [vmem:[%s2503 + $0x251] sm:$0xff]
      %v3811 = vlaneseq
      %v3812 = vshrl.u32 %v3811, 7
      %v3813 = vsub.s32 5, %v3812
      %v3814 = vrot.slane %v2537, %v3813
      %v3815 = vmul.f32 %v3779, %v3814
      %v3816 = vmul.f32 %v3780, %v3814
      %v3817 = vmul.f32 %v3781, %v3814
      %v3818 = vmul.f32 %v3782, %v3814
      %v3819 = vmul.f32 %v3783, %v3814
      %v3820 = vmul.f32 %v3784, %v3814
      %v3821 = vmul.f32 %v3785, %v3814
      %v3822 = vmul.f32 %v3786, %v3814
      %v3823 = vmul.f32 %v3787, %v3814
      %v3824 = vmul.f32 %v3788, %v3814
      %v3825 = vmul.f32 %v3789, %v3814
      %v3826 = vmul.f32 %v3790, %v3814
      %v3827 = vmul.f32 %v3791, %v3814
      %v3828 = vmul.f32 %v3792, %v3814
      %v3829 = vmul.f32 %v3793, %v3814
      %v3830 = vmul.f32 %v3794, %v3814
      %v3831 = vmul.f32 %v3795, %v3814
      %v3832 = vmul.f32 %v3796, %v3814
      %v3833 = vmul.f32 %v3797, %v3814
      %v3834 = vmul.f32 %v3798, %v3814
      %v3835 = vmul.f32 %v3799, %v3814
      %v3836 = vmul.f32 %v3800, %v3814
      %v3837 = vmul.f32 %v3801, %v3814
      %v3838 = vmul.f32 %v3802, %v3814
      %v3839 = vmul.f32 %v3803, %v3814
      %v3840 = vmul.f32 %v3804, %v3814
      %v3841 = vmul.f32 %v3805, %v3814
      %v3842 = vmul.f32 %v3806, %v3814
      %v3843 = vmul.f32 %v3807, %v3814
      %v3844 = vmul.f32 %v3808, %v3814
      %v3845 = vmul.f32 %v3809, %v3814
      %v3846 = vmul.f32 %v3810, %v3814
      %v3847 = vadd.f32 %v3747, %v3815
      %v3848 = vadd.f32 %v3748, %v3816
      %v3849 = vadd.f32 %v3749, %v3817
      %v3850 = vadd.f32 %v3750, %v3818
      %v3851 = vadd.f32 %v3751, %v3819
      %v3852 = vadd.f32 %v3752, %v3820
      %v3853 = vadd.f32 %v3753, %v3821
      %v3854 = vadd.f32 %v3754, %v3822
      %v3855 = vadd.f32 %v3755, %v3823
      %v3856 = vadd.f32 %v3756, %v3824
      %v3857 = vadd.f32 %v3757, %v3825
      %v3858 = vadd.f32 %v3758, %v3826
      %v3859 = vadd.f32 %v3759, %v3827
      %v3860 = vadd.f32 %v3760, %v3828
      %v3861 = vadd.f32 %v3761, %v3829
      %v3862 = vadd.f32 %v3762, %v3830
      %v3863 = vadd.f32 %v3763, %v3831
      %v3864 = vadd.f32 %v3764, %v3832
      %v3865 = vadd.f32 %v3765, %v3833
      %v3866 = vadd.f32 %v3766, %v3834
      %v3867 = vadd.f32 %v3767, %v3835
      %v3868 = vadd.f32 %v3768, %v3836
      %v3869 = vadd.f32 %v3769, %v3837
      %v3870 = vadd.f32 %v3770, %v3838
      %v3871 = vadd.f32 %v3771, %v3839
      %v3872 = vadd.f32 %v3772, %v3840
      %v3873 = vadd.f32 %v3773, %v3841
      %v3874 = vadd.f32 %v3774, %v3842
      %v3875 = vadd.f32 %v3775, %v3843
      %v3876 = vadd.f32 %v3776, %v3844
      %v3877 = vadd.f32 %v3777, %v3845
      %v3878 = vadd.f32 %v3778, %v3846
      %v3879 = vld [vmem:[%s2503 + $0x2] sm:$0xff]
      %v3880 = vld [vmem:[%s2503 + $0x12] sm:$0xff]
      %v3881 = vld [vmem:[%s2503 + $0x22] sm:$0xff]
      %v3882 = vld [vmem:[%s2503 + $0x32] sm:$0xff]
      %v3883 = vld [vmem:[%s2503 + $0x42] sm:$0xff]
      %v3884 = vld [vmem:[%s2503 + $0x52] sm:$0xff]
      %v3885 = vld [vmem:[%s2503 + $0x62] sm:$0xff]
      %v3886 = vld [vmem:[%s2503 + $0x72] sm:$0xff]
      %v3887 = vld [vmem:[%s2503 + $0xa2] sm:$0xff]
      %v3888 = vld [vmem:[%s2503 + $0xb2] sm:$0xff]
      %v3889 = vld [vmem:[%s2503 + $0xc2] sm:$0xff]
      %v3890 = vld [vmem:[%s2503 + $0xd2] sm:$0xff]
      %v3891 = vld [vmem:[%s2503 + $0xe2] sm:$0xff]
      %v3892 = vld [vmem:[%s2503 + $0xf2] sm:$0xff]
      %v3893 = vld [vmem:[%s2503 + $0x102] sm:$0xff]
      %v3894 = vld [vmem:[%s2503 + $0x112] sm:$0xff]
      %v3895 = vld [vmem:[%s2503 + $0x142] sm:$0xff]
      %v3896 = vld [vmem:[%s2503 + $0x152] sm:$0xff]
      %v3897 = vld [vmem:[%s2503 + $0x162] sm:$0xff]
      %v3898 = vld [vmem:[%s2503 + $0x172] sm:$0xff]
      %v3899 = vld [vmem:[%s2503 + $0x182] sm:$0xff]
      %v3900 = vld [vmem:[%s2503 + $0x192] sm:$0xff]
      %v3901 = vld [vmem:[%s2503 + $0x1a2] sm:$0xff]
      %v3902 = vld [vmem:[%s2503 + $0x1b2] sm:$0xff]
      %v3903 = vld [vmem:[%s2503 + $0x1e2] sm:$0xff]
      %v3904 = vld [vmem:[%s2503 + $0x1f2] sm:$0xff]
      %v3905 = vld [vmem:[%s2503 + $0x202] sm:$0xff]
      %v3906 = vld [vmem:[%s2503 + $0x212] sm:$0xff]
      %v3907 = vld [vmem:[%s2503 + $0x222] sm:$0xff]
      %v3908 = vld [vmem:[%s2503 + $0x232] sm:$0xff]
      %v3909 = vld [vmem:[%s2503 + $0x242] sm:$0xff]
      %v3910 = vld [vmem:[%s2503 + $0x252] sm:$0xff]
      %v3911 = vlaneseq
      %v3912 = vshrl.u32 %v3911, 7
      %v3913 = vsub.s32 6, %v3912
      %v3914 = vrot.slane %v2537, %v3913
      %v3915 = vmul.f32 %v3879, %v3914
      %v3916 = vmul.f32 %v3880, %v3914
      %v3917 = vmul.f32 %v3881, %v3914
      %v3918 = vmul.f32 %v3882, %v3914
      %v3919 = vmul.f32 %v3883, %v3914
      %v3920 = vmul.f32 %v3884, %v3914
      %v3921 = vmul.f32 %v3885, %v3914
      %v3922 = vmul.f32 %v3886, %v3914
      %v3923 = vmul.f32 %v3887, %v3914
      %v3924 = vmul.f32 %v3888, %v3914
      %v3925 = vmul.f32 %v3889, %v3914
      %v3926 = vmul.f32 %v3890, %v3914
      %v3927 = vmul.f32 %v3891, %v3914
      %v3928 = vmul.f32 %v3892, %v3914
      %v3929 = vmul.f32 %v3893, %v3914
      %v3930 = vmul.f32 %v3894, %v3914
      %v3931 = vmul.f32 %v3895, %v3914
      %v3932 = vmul.f32 %v3896, %v3914
      %v3933 = vmul.f32 %v3897, %v3914
      %v3934 = vmul.f32 %v3898, %v3914
      %v3935 = vmul.f32 %v3899, %v3914
      %v3936 = vmul.f32 %v3900, %v3914
      %v3937 = vmul.f32 %v3901, %v3914
      %v3938 = vmul.f32 %v3902, %v3914
      %v3939 = vmul.f32 %v3903, %v3914
      %v3940 = vmul.f32 %v3904, %v3914
      %v3941 = vmul.f32 %v3905, %v3914
      %v3942 = vmul.f32 %v3906, %v3914
      %v3943 = vmul.f32 %v3907, %v3914
      %v3944 = vmul.f32 %v3908, %v3914
      %v3945 = vmul.f32 %v3909, %v3914
      %v3946 = vmul.f32 %v3910, %v3914
      %v3947 = vadd.f32 %v3847, %v3915
      %v3948 = vadd.f32 %v3848, %v3916
      %v3949 = vadd.f32 %v3849, %v3917
      %v3950 = vadd.f32 %v3850, %v3918
      %v3951 = vadd.f32 %v3851, %v3919
      %v3952 = vadd.f32 %v3852, %v3920
      %v3953 = vadd.f32 %v3853, %v3921
      %v3954 = vadd.f32 %v3854, %v3922
      %v3955 = vadd.f32 %v3855, %v3923
      %v3956 = vadd.f32 %v3856, %v3924
      %v3957 = vadd.f32 %v3857, %v3925
      %v3958 = vadd.f32 %v3858, %v3926
      %v3959 = vadd.f32 %v3859, %v3927
      %v3960 = vadd.f32 %v3860, %v3928
      %v3961 = vadd.f32 %v3861, %v3929
      %v3962 = vadd.f32 %v3862, %v3930
      %v3963 = vadd.f32 %v3863, %v3931
      %v3964 = vadd.f32 %v3864, %v3932
      %v3965 = vadd.f32 %v3865, %v3933
      %v3966 = vadd.f32 %v3866, %v3934
      %v3967 = vadd.f32 %v3867, %v3935
      %v3968 = vadd.f32 %v3868, %v3936
      %v3969 = vadd.f32 %v3869, %v3937
      %v3970 = vadd.f32 %v3870, %v3938
      %v3971 = vadd.f32 %v3871, %v3939
      %v3972 = vadd.f32 %v3872, %v3940
      %v3973 = vadd.f32 %v3873, %v3941
      %v3974 = vadd.f32 %v3874, %v3942
      %v3975 = vadd.f32 %v3875, %v3943
      %v3976 = vadd.f32 %v3876, %v3944
      %v3977 = vadd.f32 %v3877, %v3945
      %v3978 = vadd.f32 %v3878, %v3946
      %s3979 = scalar_lea.vmem [#allocation2], 192
      %v3980 = vld [vmem:[%s3979] sm:$0xff]
      %v3981 = vld [vmem:[%s3979 + $0x10] sm:$0xff]
      %v3982 = vld [vmem:[%s3979 + $0x20] sm:$0xff]
      %v3983 = vld [vmem:[%s3979 + $0x30] sm:$0xff]
      %v3984 = vld [vmem:[%s3979 + $0x40] sm:$0xff]
      %v3985 = vld [vmem:[%s3979 + $0x50] sm:$0xff]
      %v3986 = vld [vmem:[%s3979 + $0x60] sm:$0xff]
      %v3987 = vld [vmem:[%s3979 + $0x70] sm:$0xff]
      %v3988 = vld [vmem:[%s3979 + $0xa0] sm:$0xff]
      %v3989 = vld [vmem:[%s3979 + $0xb0] sm:$0xff]
      %v3990 = vld [vmem:[%s3979 + $0xc0] sm:$0xff]
      %v3991 = vld [vmem:[%s3979 + $0xd0] sm:$0xff]
      %v3992 = vld [vmem:[%s3979 + $0xe0] sm:$0xff]
      %v3993 = vld [vmem:[%s3979 + $0xf0] sm:$0xff]
      %v3994 = vld [vmem:[%s3979 + $0x100] sm:$0xff]
      %v3995 = vld [vmem:[%s3979 + $0x110] sm:$0xff]
      %v3996 = vld [vmem:[%s3979 + $0x140] sm:$0xff]
      %v3997 = vld [vmem:[%s3979 + $0x150] sm:$0xff]
      %v3998 = vld [vmem:[%s3979 + $0x160] sm:$0xff]
      %v3999 = vld [vmem:[%s3979 + $0x170] sm:$0xff]
      %v4000 = vld [vmem:[%s3979 + $0x180] sm:$0xff]
      %v4001 = vld [vmem:[%s3979 + $0x190] sm:$0xff]
      %v4002 = vld [vmem:[%s3979 + $0x1a0] sm:$0xff]
      %v4003 = vld [vmem:[%s3979 + $0x1b0] sm:$0xff]
      %v4004 = vld [vmem:[%s3979 + $0x1e0] sm:$0xff]
      %v4005 = vld [vmem:[%s3979 + $0x1f0] sm:$0xff]
      %v4006 = vld [vmem:[%s3979 + $0x200] sm:$0xff]
      %v4007 = vld [vmem:[%s3979 + $0x210] sm:$0xff]
      %v4008 = vld [vmem:[%s3979 + $0x220] sm:$0xff]
      %v4009 = vld [vmem:[%s3979 + $0x230] sm:$0xff]
      %v4010 = vld [vmem:[%s3979 + $0x240] sm:$0xff]
      %v4011 = vld [vmem:[%s3979 + $0x250] sm:$0xff]
      %v4012 = vlaneseq
      %v4013 = vshrl.u32 %v4012, 7
      %v4014 = vsub.s32 7, %v4013
      %v4015 = vrot.slane %v2537, %v4014
      %v4016 = vmul.f32 %v3980, %v4015
      %v4017 = vmul.f32 %v3981, %v4015
      %v4018 = vmul.f32 %v3982, %v4015
      %v4019 = vmul.f32 %v3983, %v4015
      %v4020 = vmul.f32 %v3984, %v4015
      %v4021 = vmul.f32 %v3985, %v4015
      %v4022 = vmul.f32 %v3986, %v4015
      %v4023 = vmul.f32 %v3987, %v4015
      %v4024 = vmul.f32 %v3988, %v4015
      %v4025 = vmul.f32 %v3989, %v4015
      %v4026 = vmul.f32 %v3990, %v4015
      %v4027 = vmul.f32 %v3991, %v4015
      %v4028 = vmul.f32 %v3992, %v4015
      %v4029 = vmul.f32 %v3993, %v4015
      %v4030 = vmul.f32 %v3994, %v4015
      %v4031 = vmul.f32 %v3995, %v4015
      %v4032 = vmul.f32 %v3996, %v4015
      %v4033 = vmul.f32 %v3997, %v4015
      %v4034 = vmul.f32 %v3998, %v4015
      %v4035 = vmul.f32 %v3999, %v4015
      %v4036 = vmul.f32 %v4000, %v4015
      %v4037 = vmul.f32 %v4001, %v4015
      %v4038 = vmul.f32 %v4002, %v4015
      %v4039 = vmul.f32 %v4003, %v4015
      %v4040 = vmul.f32 %v4004, %v4015
      %v4041 = vmul.f32 %v4005, %v4015
      %v4042 = vmul.f32 %v4006, %v4015
      %v4043 = vmul.f32 %v4007, %v4015
      %v4044 = vmul.f32 %v4008, %v4015
      %v4045 = vmul.f32 %v4009, %v4015
      %v4046 = vmul.f32 %v4010, %v4015
      %v4047 = vmul.f32 %v4011, %v4015
      %v4048 = vadd.f32 %v3947, %v4016
      %v4049 = vadd.f32 %v3948, %v4017
      %v4050 = vadd.f32 %v3949, %v4018
      %v4051 = vadd.f32 %v3950, %v4019
      %v4052 = vadd.f32 %v3951, %v4020
      %v4053 = vadd.f32 %v3952, %v4021
      %v4054 = vadd.f32 %v3953, %v4022
      %v4055 = vadd.f32 %v3954, %v4023
      %v4056 = vadd.f32 %v3955, %v4024
      %v4057 = vadd.f32 %v3956, %v4025
      %v4058 = vadd.f32 %v3957, %v4026
      %v4059 = vadd.f32 %v3958, %v4027
      %v4060 = vadd.f32 %v3959, %v4028
      %v4061 = vadd.f32 %v3960, %v4029
      %v4062 = vadd.f32 %v3961, %v4030
      %v4063 = vadd.f32 %v3962, %v4031
      %v4064 = vadd.f32 %v3963, %v4032
      %v4065 = vadd.f32 %v3964, %v4033
      %v4066 = vadd.f32 %v3965, %v4034
      %v4067 = vadd.f32 %v3966, %v4035
      %v4068 = vadd.f32 %v3967, %v4036
      %v4069 = vadd.f32 %v3968, %v4037
      %v4070 = vadd.f32 %v3969, %v4038
      %v4071 = vadd.f32 %v3970, %v4039
      %v4072 = vadd.f32 %v3971, %v4040
      %v4073 = vadd.f32 %v3972, %v4041
      %v4074 = vadd.f32 %v3973, %v4042
      %v4075 = vadd.f32 %v3974, %v4043
      %v4076 = vadd.f32 %v3975, %v4044
      %v4077 = vadd.f32 %v3976, %v4045
      %v4078 = vadd.f32 %v3977, %v4046
      %v4079 = vadd.f32 %v3978, %v4047
      %v4080 = vld [vmem:[%s3979 + $0x1] sm:$0xff]
      %v4081 = vld [vmem:[%s3979 + $0x11] sm:$0xff]
      %v4082 = vld [vmem:[%s3979 + $0x21] sm:$0xff]
      %v4083 = vld [vmem:[%s3979 + $0x31] sm:$0xff]
      %v4084 = vld [vmem:[%s3979 + $0x41] sm:$0xff]
      %v4085 = vld [vmem:[%s3979 + $0x51] sm:$0xff]
      %v4086 = vld [vmem:[%s3979 + $0x61] sm:$0xff]
      %v4087 = vld [vmem:[%s3979 + $0x71] sm:$0xff]
      %v4088 = vld [vmem:[%s3979 + $0xa1] sm:$0xff]
      %v4089 = vld [vmem:[%s3979 + $0xb1] sm:$0xff]
      %v4090 = vld [vmem:[%s3979 + $0xc1] sm:$0xff]
      %v4091 = vld [vmem:[%s3979 + $0xd1] sm:$0xff]
      %v4092 = vld [vmem:[%s3979 + $0xe1] sm:$0xff]
      %v4093 = vld [vmem:[%s3979 + $0xf1] sm:$0xff]
      %v4094 = vld [vmem:[%s3979 + $0x101] sm:$0xff]
      %v4095 = vld [vmem:[%s3979 + $0x111] sm:$0xff]
      %v4096 = vld [vmem:[%s3979 + $0x141] sm:$0xff]
      %v4097 = vld [vmem:[%s3979 + $0x151] sm:$0xff]
      %v4098 = vld [vmem:[%s3979 + $0x161] sm:$0xff]
      %v4099 = vld [vmem:[%s3979 + $0x171] sm:$0xff]
      %v4100 = vld [vmem:[%s3979 + $0x181] sm:$0xff]
      %v4101 = vld [vmem:[%s3979 + $0x191] sm:$0xff]
      %v4102 = vld [vmem:[%s3979 + $0x1a1] sm:$0xff]
      %v4103 = vld [vmem:[%s3979 + $0x1b1] sm:$0xff]
      %v4104 = vld [vmem:[%s3979 + $0x1e1] sm:$0xff]
      %v4105 = vld [vmem:[%s3979 + $0x1f1] sm:$0xff]
      %v4106 = vld [vmem:[%s3979 + $0x201] sm:$0xff]
      %v4107 = vld [vmem:[%s3979 + $0x211] sm:$0xff]
      %v4108 = vld [vmem:[%s3979 + $0x221] sm:$0xff]
      %v4109 = vld [vmem:[%s3979 + $0x231] sm:$0xff]
      %v4110 = vld [vmem:[%s3979 + $0x241] sm:$0xff]
      %v4111 = vld [vmem:[%s3979 + $0x251] sm:$0xff]
      %v4112 = vlaneseq
      %v4113 = vshrl.u32 %v4112, 7
      %v4114 = vsub.s32 0, %v4113
      %v4115 = vrot.slane %v2538, %v4114
      %v4116 = vmul.f32 %v4080, %v4115
      %v4117 = vmul.f32 %v4081, %v4115
      %v4118 = vmul.f32 %v4082, %v4115
      %v4119 = vmul.f32 %v4083, %v4115
      %v4120 = vmul.f32 %v4084, %v4115
      %v4121 = vmul.f32 %v4085, %v4115
      %v4122 = vmul.f32 %v4086, %v4115
      %v4123 = vmul.f32 %v4087, %v4115
      %v4124 = vmul.f32 %v4088, %v4115
      %v4125 = vmul.f32 %v4089, %v4115
      %v4126 = vmul.f32 %v4090, %v4115
      %v4127 = vmul.f32 %v4091, %v4115
      %v4128 = vmul.f32 %v4092, %v4115
      %v4129 = vmul.f32 %v4093, %v4115
      %v4130 = vmul.f32 %v4094, %v4115
      %v4131 = vmul.f32 %v4095, %v4115
      %v4132 = vmul.f32 %v4096, %v4115
      %v4133 = vmul.f32 %v4097, %v4115
      %v4134 = vmul.f32 %v4098, %v4115
      %v4135 = vmul.f32 %v4099, %v4115
      %v4136 = vmul.f32 %v4100, %v4115
      %v4137 = vmul.f32 %v4101, %v4115
      %v4138 = vmul.f32 %v4102, %v4115
      %v4139 = vmul.f32 %v4103, %v4115
      %v4140 = vmul.f32 %v4104, %v4115
      %v4141 = vmul.f32 %v4105, %v4115
      %v4142 = vmul.f32 %v4106, %v4115
      %v4143 = vmul.f32 %v4107, %v4115
      %v4144 = vmul.f32 %v4108, %v4115
      %v4145 = vmul.f32 %v4109, %v4115
      %v4146 = vmul.f32 %v4110, %v4115
      %v4147 = vmul.f32 %v4111, %v4115
      %v4148 = vadd.f32 %v4048, %v4116
      %v4149 = vadd.f32 %v4049, %v4117
      %v4150 = vadd.f32 %v4050, %v4118
      %v4151 = vadd.f32 %v4051, %v4119
      %v4152 = vadd.f32 %v4052, %v4120
      %v4153 = vadd.f32 %v4053, %v4121
      %v4154 = vadd.f32 %v4054, %v4122
      %v4155 = vadd.f32 %v4055, %v4123
      %v4156 = vadd.f32 %v4056, %v4124
      %v4157 = vadd.f32 %v4057, %v4125
      %v4158 = vadd.f32 %v4058, %v4126
      %v4159 = vadd.f32 %v4059, %v4127
      %v4160 = vadd.f32 %v4060, %v4128
      %v4161 = vadd.f32 %v4061, %v4129
      %v4162 = vadd.f32 %v4062, %v4130
      %v4163 = vadd.f32 %v4063, %v4131
      %v4164 = vadd.f32 %v4064, %v4132
      %v4165 = vadd.f32 %v4065, %v4133
      %v4166 = vadd.f32 %v4066, %v4134
      %v4167 = vadd.f32 %v4067, %v4135
      %v4168 = vadd.f32 %v4068, %v4136
      %v4169 = vadd.f32 %v4069, %v4137
      %v4170 = vadd.f32 %v4070, %v4138
      %v4171 = vadd.f32 %v4071, %v4139
      %v4172 = vadd.f32 %v4072, %v4140
      %v4173 = vadd.f32 %v4073, %v4141
      %v4174 = vadd.f32 %v4074, %v4142
      %v4175 = vadd.f32 %v4075, %v4143
      %v4176 = vadd.f32 %v4076, %v4144
      %v4177 = vadd.f32 %v4077, %v4145
      %v4178 = vadd.f32 %v4078, %v4146
      %v4179 = vadd.f32 %v4079, %v4147
      %v4180 = vld [vmem:[%s3979 + $0x2] sm:$0xff]
      %v4181 = vld [vmem:[%s3979 + $0x12] sm:$0xff]
      %v4182 = vld [vmem:[%s3979 + $0x22] sm:$0xff]
      %v4183 = vld [vmem:[%s3979 + $0x32] sm:$0xff]
      %v4184 = vld [vmem:[%s3979 + $0x42] sm:$0xff]
      %v4185 = vld [vmem:[%s3979 + $0x52] sm:$0xff]
      %v4186 = vld [vmem:[%s3979 + $0x62] sm:$0xff]
      %v4187 = vld [vmem:[%s3979 + $0x72] sm:$0xff]
      %v4188 = vld [vmem:[%s3979 + $0xa2] sm:$0xff]
      %v4189 = vld [vmem:[%s3979 + $0xb2] sm:$0xff]
      %v4190 = vld [vmem:[%s3979 + $0xc2] sm:$0xff]
      %v4191 = vld [vmem:[%s3979 + $0xd2] sm:$0xff]
      %v4192 = vld [vmem:[%s3979 + $0xe2] sm:$0xff]
      %v4193 = vld [vmem:[%s3979 + $0xf2] sm:$0xff]
      %v4194 = vld [vmem:[%s3979 + $0x102] sm:$0xff]
      %v4195 = vld [vmem:[%s3979 + $0x112] sm:$0xff]
      %v4196 = vld [vmem:[%s3979 + $0x142] sm:$0xff]
      %v4197 = vld [vmem:[%s3979 + $0x152] sm:$0xff]
      %v4198 = vld [vmem:[%s3979 + $0x162] sm:$0xff]
      %v4199 = vld [vmem:[%s3979 + $0x172] sm:$0xff]
      %v4200 = vld [vmem:[%s3979 + $0x182] sm:$0xff]
      %v4201 = vld [vmem:[%s3979 + $0x192] sm:$0xff]
      %v4202 = vld [vmem:[%s3979 + $0x1a2] sm:$0xff]
      %v4203 = vld [vmem:[%s3979 + $0x1b2] sm:$0xff]
      %v4204 = vld [vmem:[%s3979 + $0x1e2] sm:$0xff]
      %v4205 = vld [vmem:[%s3979 + $0x1f2] sm:$0xff]
      %v4206 = vld [vmem:[%s3979 + $0x202] sm:$0xff]
      %v4207 = vld [vmem:[%s3979 + $0x212] sm:$0xff]
      %v4208 = vld [vmem:[%s3979 + $0x222] sm:$0xff]
      %v4209 = vld [vmem:[%s3979 + $0x232] sm:$0xff]
      %v4210 = vld [vmem:[%s3979 + $0x242] sm:$0xff]
      %v4211 = vld [vmem:[%s3979 + $0x252] sm:$0xff]
      %v4212 = vlaneseq
      %v4213 = vshrl.u32 %v4212, 7
      %v4214 = vsub.s32 1, %v4213
      %v4215 = vrot.slane %v2538, %v4214
      %v4216 = vmul.f32 %v4180, %v4215
      %v4217 = vmul.f32 %v4181, %v4215
      %v4218 = vmul.f32 %v4182, %v4215
      %v4219 = vmul.f32 %v4183, %v4215
      %v4220 = vmul.f32 %v4184, %v4215
      %v4221 = vmul.f32 %v4185, %v4215
      %v4222 = vmul.f32 %v4186, %v4215
      %v4223 = vmul.f32 %v4187, %v4215
      %v4224 = vmul.f32 %v4188, %v4215
      %v4225 = vmul.f32 %v4189, %v4215
      %v4226 = vmul.f32 %v4190, %v4215
      %v4227 = vmul.f32 %v4191, %v4215
      %v4228 = vmul.f32 %v4192, %v4215
      %v4229 = vmul.f32 %v4193, %v4215
      %v4230 = vmul.f32 %v4194, %v4215
      %v4231 = vmul.f32 %v4195, %v4215
      %v4232 = vmul.f32 %v4196, %v4215
      %v4233 = vmul.f32 %v4197, %v4215
      %v4234 = vmul.f32 %v4198, %v4215
      %v4235 = vmul.f32 %v4199, %v4215
      %v4236 = vmul.f32 %v4200, %v4215
      %v4237 = vmul.f32 %v4201, %v4215
      %v4238 = vmul.f32 %v4202, %v4215
      %v4239 = vmul.f32 %v4203, %v4215
      %v4240 = vmul.f32 %v4204, %v4215
      %v4241 = vmul.f32 %v4205, %v4215
      %v4242 = vmul.f32 %v4206, %v4215
      %v4243 = vmul.f32 %v4207, %v4215
      %v4244 = vmul.f32 %v4208, %v4215
      %v4245 = vmul.f32 %v4209, %v4215
      %v4246 = vmul.f32 %v4210, %v4215
      %v4247 = vmul.f32 %v4211, %v4215
      %v4248 = vadd.f32 %v4148, %v4216
      %v4249 = vadd.f32 %v4149, %v4217
      %v4250 = vadd.f32 %v4150, %v4218
      %v4251 = vadd.f32 %v4151, %v4219
      %v4252 = vadd.f32 %v4152, %v4220
      %v4253 = vadd.f32 %v4153, %v4221
      %v4254 = vadd.f32 %v4154, %v4222
      %v4255 = vadd.f32 %v4155, %v4223
      %v4256 = vadd.f32 %v4156, %v4224
      %v4257 = vadd.f32 %v4157, %v4225
      %v4258 = vadd.f32 %v4158, %v4226
      %v4259 = vadd.f32 %v4159, %v4227
      %v4260 = vadd.f32 %v4160, %v4228
      %v4261 = vadd.f32 %v4161, %v4229
      %v4262 = vadd.f32 %v4162, %v4230
      %v4263 = vadd.f32 %v4163, %v4231
      %v4264 = vadd.f32 %v4164, %v4232
      %v4265 = vadd.f32 %v4165, %v4233
      %v4266 = vadd.f32 %v4166, %v4234
      %v4267 = vadd.f32 %v4167, %v4235
      %v4268 = vadd.f32 %v4168, %v4236
      %v4269 = vadd.f32 %v4169, %v4237
      %v4270 = vadd.f32 %v4170, %v4238
      %v4271 = vadd.f32 %v4171, %v4239
      %v4272 = vadd.f32 %v4172, %v4240
      %v4273 = vadd.f32 %v4173, %v4241
      %v4274 = vadd.f32 %v4174, %v4242
      %v4275 = vadd.f32 %v4175, %v4243
      %v4276 = vadd.f32 %v4176, %v4244
      %v4277 = vadd.f32 %v4177, %v4245
      %v4278 = vadd.f32 %v4178, %v4246
      %v4279 = vadd.f32 %v4179, %v4247
      %s4280 = scalar_lea.vmem [#allocation2], 320
      %v4281 = vld [vmem:[%s4280] sm:$0xff]
      %v4282 = vld [vmem:[%s4280 + $0x10] sm:$0xff]
      %v4283 = vld [vmem:[%s4280 + $0x20] sm:$0xff]
      %v4284 = vld [vmem:[%s4280 + $0x30] sm:$0xff]
      %v4285 = vld [vmem:[%s4280 + $0x40] sm:$0xff]
      %v4286 = vld [vmem:[%s4280 + $0x50] sm:$0xff]
      %v4287 = vld [vmem:[%s4280 + $0x60] sm:$0xff]
      %v4288 = vld [vmem:[%s4280 + $0x70] sm:$0xff]
      %v4289 = vld [vmem:[%s4280 + $0xa0] sm:$0xff]
      %v4290 = vld [vmem:[%s4280 + $0xb0] sm:$0xff]
      %v4291 = vld [vmem:[%s4280 + $0xc0] sm:$0xff]
      %v4292 = vld [vmem:[%s4280 + $0xd0] sm:$0xff]
      %v4293 = vld [vmem:[%s4280 + $0xe0] sm:$0xff]
      %v4294 = vld [vmem:[%s4280 + $0xf0] sm:$0xff]
      %v4295 = vld [vmem:[%s4280 + $0x100] sm:$0xff]
      %v4296 = vld [vmem:[%s4280 + $0x110] sm:$0xff]
      %v4297 = vld [vmem:[%s4280 + $0x140] sm:$0xff]
      %v4298 = vld [vmem:[%s4280 + $0x150] sm:$0xff]
      %v4299 = vld [vmem:[%s4280 + $0x160] sm:$0xff]
      %v4300 = vld [vmem:[%s4280 + $0x170] sm:$0xff]
      %v4301 = vld [vmem:[%s4280 + $0x180] sm:$0xff]
      %v4302 = vld [vmem:[%s4280 + $0x190] sm:$0xff]
      %v4303 = vld [vmem:[%s4280 + $0x1a0] sm:$0xff]
      %v4304 = vld [vmem:[%s4280 + $0x1b0] sm:$0xff]
      %v4305 = vld [vmem:[%s4280 + $0x1e0] sm:$0xff]
      %v4306 = vld [vmem:[%s4280 + $0x1f0] sm:$0xff]
      %v4307 = vld [vmem:[%s4280 + $0x200] sm:$0xff]
      %v4308 = vld [vmem:[%s4280 + $0x210] sm:$0xff]
      %v4309 = vld [vmem:[%s4280 + $0x220] sm:$0xff]
      %v4310 = vld [vmem:[%s4280 + $0x230] sm:$0xff]
      %v4311 = vld [vmem:[%s4280 + $0x240] sm:$0xff]
      %v4312 = vld [vmem:[%s4280 + $0x250] sm:$0xff]
      %v4313 = vlaneseq
      %v4314 = vshrl.u32 %v4313, 7
      %v4315 = vsub.s32 2, %v4314
      %v4316 = vrot.slane %v2538, %v4315
      %v4317 = vmul.f32 %v4281, %v4316
      %v4318 = vmul.f32 %v4282, %v4316
      %v4319 = vmul.f32 %v4283, %v4316
      %v4320 = vmul.f32 %v4284, %v4316
      %v4321 = vmul.f32 %v4285, %v4316
      %v4322 = vmul.f32 %v4286, %v4316
      %v4323 = vmul.f32 %v4287, %v4316
      %v4324 = vmul.f32 %v4288, %v4316
      %v4325 = vmul.f32 %v4289, %v4316
      %v4326 = vmul.f32 %v4290, %v4316
      %v4327 = vmul.f32 %v4291, %v4316
      %v4328 = vmul.f32 %v4292, %v4316
      %v4329 = vmul.f32 %v4293, %v4316
      %v4330 = vmul.f32 %v4294, %v4316
      %v4331 = vmul.f32 %v4295, %v4316
      %v4332 = vmul.f32 %v4296, %v4316
      %v4333 = vmul.f32 %v4297, %v4316
      %v4334 = vmul.f32 %v4298, %v4316
      %v4335 = vmul.f32 %v4299, %v4316
      %v4336 = vmul.f32 %v4300, %v4316
      %v4337 = vmul.f32 %v4301, %v4316
      %v4338 = vmul.f32 %v4302, %v4316
      %v4339 = vmul.f32 %v4303, %v4316
      %v4340 = vmul.f32 %v4304, %v4316
      %v4341 = vmul.f32 %v4305, %v4316
      %v4342 = vmul.f32 %v4306, %v4316
      %v4343 = vmul.f32 %v4307, %v4316
      %v4344 = vmul.f32 %v4308, %v4316
      %v4345 = vmul.f32 %v4309, %v4316
      %v4346 = vmul.f32 %v4310, %v4316
      %v4347 = vmul.f32 %v4311, %v4316
      %v4348 = vmul.f32 %v4312, %v4316
      %v4349 = vld [vmem:[%s4280 + $0x1] sm:$0xff]
      %v4350 = vld [vmem:[%s4280 + $0x11] sm:$0xff]
      %v4351 = vld [vmem:[%s4280 + $0x21] sm:$0xff]
      %v4352 = vld [vmem:[%s4280 + $0x31] sm:$0xff]
      %v4353 = vld [vmem:[%s4280 + $0x41] sm:$0xff]
      %v4354 = vld [vmem:[%s4280 + $0x51] sm:$0xff]
      %v4355 = vld [vmem:[%s4280 + $0x61] sm:$0xff]
      %v4356 = vld [vmem:[%s4280 + $0x71] sm:$0xff]
      %v4357 = vld [vmem:[%s4280 + $0xa1] sm:$0xff]
      %v4358 = vld [vmem:[%s4280 + $0xb1] sm:$0xff]
      %v4359 = vld [vmem:[%s4280 + $0xc1] sm:$0xff]
      %v4360 = vld [vmem:[%s4280 + $0xd1] sm:$0xff]
      %v4361 = vld [vmem:[%s4280 + $0xe1] sm:$0xff]
      %v4362 = vld [vmem:[%s4280 + $0xf1] sm:$0xff]
      %v4363 = vld [vmem:[%s4280 + $0x101] sm:$0xff]
      %v4364 = vld [vmem:[%s4280 + $0x111] sm:$0xff]
      %v4365 = vld [vmem:[%s4280 + $0x141] sm:$0xff]
      %v4366 = vld [vmem:[%s4280 + $0x151] sm:$0xff]
      %v4367 = vld [vmem:[%s4280 + $0x161] sm:$0xff]
      %v4368 = vld [vmem:[%s4280 + $0x171] sm:$0xff]
      %v4369 = vld [vmem:[%s4280 + $0x181] sm:$0xff]
      %v4370 = vld [vmem:[%s4280 + $0x191] sm:$0xff]
      %v4371 = vld [vmem:[%s4280 + $0x1a1] sm:$0xff]
      %v4372 = vld [vmem:[%s4280 + $0x1b1] sm:$0xff]
      %v4373 = vld [vmem:[%s4280 + $0x1e1] sm:$0xff]
      %v4374 = vld [vmem:[%s4280 + $0x1f1] sm:$0xff]
      %v4375 = vld [vmem:[%s4280 + $0x201] sm:$0xff]
      %v4376 = vld [vmem:[%s4280 + $0x211] sm:$0xff]
      %v4377 = vld [vmem:[%s4280 + $0x221] sm:$0xff]
      %v4378 = vld [vmem:[%s4280 + $0x231] sm:$0xff]
      %v4379 = vld [vmem:[%s4280 + $0x241] sm:$0xff]
      %v4380 = vld [vmem:[%s4280 + $0x251] sm:$0xff]
      %v4381 = vlaneseq
      %v4382 = vshrl.u32 %v4381, 7
      %v4383 = vsub.s32 3, %v4382
      %v4384 = vrot.slane %v2538, %v4383
      %v4385 = vmul.f32 %v4349, %v4384
      %v4386 = vmul.f32 %v4350, %v4384
      %v4387 = vmul.f32 %v4351, %v4384
      %v4388 = vmul.f32 %v4352, %v4384
      %v4389 = vmul.f32 %v4353, %v4384
      %v4390 = vmul.f32 %v4354, %v4384
      %v4391 = vmul.f32 %v4355, %v4384
      %v4392 = vmul.f32 %v4356, %v4384
      %v4393 = vmul.f32 %v4357, %v4384
      %v4394 = vmul.f32 %v4358, %v4384
      %v4395 = vmul.f32 %v4359, %v4384
      %v4396 = vmul.f32 %v4360, %v4384
      %v4397 = vmul.f32 %v4361, %v4384
      %v4398 = vmul.f32 %v4362, %v4384
      %v4399 = vmul.f32 %v4363, %v4384
      %v4400 = vmul.f32 %v4364, %v4384
      %v4401 = vmul.f32 %v4365, %v4384
      %v4402 = vmul.f32 %v4366, %v4384
      %v4403 = vmul.f32 %v4367, %v4384
      %v4404 = vmul.f32 %v4368, %v4384
      %v4405 = vmul.f32 %v4369, %v4384
      %v4406 = vmul.f32 %v4370, %v4384
      %v4407 = vmul.f32 %v4371, %v4384
      %v4408 = vmul.f32 %v4372, %v4384
      %v4409 = vmul.f32 %v4373, %v4384
      %v4410 = vmul.f32 %v4374, %v4384
      %v4411 = vmul.f32 %v4375, %v4384
      %v4412 = vmul.f32 %v4376, %v4384
      %v4413 = vmul.f32 %v4377, %v4384
      %v4414 = vmul.f32 %v4378, %v4384
      %v4415 = vmul.f32 %v4379, %v4384
      %v4416 = vmul.f32 %v4380, %v4384
      %v4417 = vadd.f32 %v4317, %v4385
      %v4418 = vadd.f32 %v4318, %v4386
      %v4419 = vadd.f32 %v4319, %v4387
      %v4420 = vadd.f32 %v4320, %v4388
      %v4421 = vadd.f32 %v4321, %v4389
      %v4422 = vadd.f32 %v4322, %v4390
      %v4423 = vadd.f32 %v4323, %v4391
      %v4424 = vadd.f32 %v4324, %v4392
      %v4425 = vadd.f32 %v4325, %v4393
      %v4426 = vadd.f32 %v4326, %v4394
      %v4427 = vadd.f32 %v4327, %v4395
      %v4428 = vadd.f32 %v4328, %v4396
      %v4429 = vadd.f32 %v4329, %v4397
      %v4430 = vadd.f32 %v4330, %v4398
      %v4431 = vadd.f32 %v4331, %v4399
      %v4432 = vadd.f32 %v4332, %v4400
      %v4433 = vadd.f32 %v4333, %v4401
      %v4434 = vadd.f32 %v4334, %v4402
      %v4435 = vadd.f32 %v4335, %v4403
      %v4436 = vadd.f32 %v4336, %v4404
      %v4437 = vadd.f32 %v4337, %v4405
      %v4438 = vadd.f32 %v4338, %v4406
      %v4439 = vadd.f32 %v4339, %v4407
      %v4440 = vadd.f32 %v4340, %v4408
      %v4441 = vadd.f32 %v4341, %v4409
      %v4442 = vadd.f32 %v4342, %v4410
      %v4443 = vadd.f32 %v4343, %v4411
      %v4444 = vadd.f32 %v4344, %v4412
      %v4445 = vadd.f32 %v4345, %v4413
      %v4446 = vadd.f32 %v4346, %v4414
      %v4447 = vadd.f32 %v4347, %v4415
      %v4448 = vadd.f32 %v4348, %v4416
      %v4449 = vld [vmem:[%s4280 + $0x2] sm:$0xff]
      %v4450 = vld [vmem:[%s4280 + $0x12] sm:$0xff]
      %v4451 = vld [vmem:[%s4280 + $0x22] sm:$0xff]
      %v4452 = vld [vmem:[%s4280 + $0x32] sm:$0xff]
      %v4453 = vld [vmem:[%s4280 + $0x42] sm:$0xff]
      %v4454 = vld [vmem:[%s4280 + $0x52] sm:$0xff]
      %v4455 = vld [vmem:[%s4280 + $0x62] sm:$0xff]
      %v4456 = vld [vmem:[%s4280 + $0x72] sm:$0xff]
      %v4457 = vld [vmem:[%s4280 + $0xa2] sm:$0xff]
      %v4458 = vld [vmem:[%s4280 + $0xb2] sm:$0xff]
      %v4459 = vld [vmem:[%s4280 + $0xc2] sm:$0xff]
      %v4460 = vld [vmem:[%s4280 + $0xd2] sm:$0xff]
      %v4461 = vld [vmem:[%s4280 + $0xe2] sm:$0xff]
      %v4462 = vld [vmem:[%s4280 + $0xf2] sm:$0xff]
      %v4463 = vld [vmem:[%s4280 + $0x102] sm:$0xff]
      %v4464 = vld [vmem:[%s4280 + $0x112] sm:$0xff]
      %v4465 = vld [vmem:[%s4280 + $0x142] sm:$0xff]
      %v4466 = vld [vmem:[%s4280 + $0x152] sm:$0xff]
      %v4467 = vld [vmem:[%s4280 + $0x162] sm:$0xff]
      %v4468 = vld [vmem:[%s4280 + $0x172] sm:$0xff]
      %v4469 = vld [vmem:[%s4280 + $0x182] sm:$0xff]
      %v4470 = vld [vmem:[%s4280 + $0x192] sm:$0xff]
      %v4471 = vld [vmem:[%s4280 + $0x1a2] sm:$0xff]
      %v4472 = vld [vmem:[%s4280 + $0x1b2] sm:$0xff]
      %v4473 = vld [vmem:[%s4280 + $0x1e2] sm:$0xff]
      %v4474 = vld [vmem:[%s4280 + $0x1f2] sm:$0xff]
      %v4475 = vld [vmem:[%s4280 + $0x202] sm:$0xff]
      %v4476 = vld [vmem:[%s4280 + $0x212] sm:$0xff]
      %v4477 = vld [vmem:[%s4280 + $0x222] sm:$0xff]
      %v4478 = vld [vmem:[%s4280 + $0x232] sm:$0xff]
      %v4479 = vld [vmem:[%s4280 + $0x242] sm:$0xff]
      %v4480 = vld [vmem:[%s4280 + $0x252] sm:$0xff]
      %v4481 = vlaneseq
      %v4482 = vshrl.u32 %v4481, 7
      %v4483 = vsub.s32 4, %v4482
      %v4484 = vrot.slane %v2538, %v4483
      %v4485 = vmul.f32 %v4449, %v4484
      %v4486 = vmul.f32 %v4450, %v4484
      %v4487 = vmul.f32 %v4451, %v4484
      %v4488 = vmul.f32 %v4452, %v4484
      %v4489 = vmul.f32 %v4453, %v4484
      %v4490 = vmul.f32 %v4454, %v4484
      %v4491 = vmul.f32 %v4455, %v4484
      %v4492 = vmul.f32 %v4456, %v4484
      %v4493 = vmul.f32 %v4457, %v4484
      %v4494 = vmul.f32 %v4458, %v4484
      %v4495 = vmul.f32 %v4459, %v4484
      %v4496 = vmul.f32 %v4460, %v4484
      %v4497 = vmul.f32 %v4461, %v4484
      %v4498 = vmul.f32 %v4462, %v4484
      %v4499 = vmul.f32 %v4463, %v4484
      %v4500 = vmul.f32 %v4464, %v4484
      %v4501 = vmul.f32 %v4465, %v4484
      %v4502 = vmul.f32 %v4466, %v4484
      %v4503 = vmul.f32 %v4467, %v4484
      %v4504 = vmul.f32 %v4468, %v4484
      %v4505 = vmul.f32 %v4469, %v4484
      %v4506 = vmul.f32 %v4470, %v4484
      %v4507 = vmul.f32 %v4471, %v4484
      %v4508 = vmul.f32 %v4472, %v4484
      %v4509 = vmul.f32 %v4473, %v4484
      %v4510 = vmul.f32 %v4474, %v4484
      %v4511 = vmul.f32 %v4475, %v4484
      %v4512 = vmul.f32 %v4476, %v4484
      %v4513 = vmul.f32 %v4477, %v4484
      %v4514 = vmul.f32 %v4478, %v4484
      %v4515 = vmul.f32 %v4479, %v4484
      %v4516 = vmul.f32 %v4480, %v4484
      %v4517 = vadd.f32 %v4417, %v4485
      %v4518 = vadd.f32 %v4418, %v4486
      %v4519 = vadd.f32 %v4419, %v4487
      %v4520 = vadd.f32 %v4420, %v4488
      %v4521 = vadd.f32 %v4421, %v4489
      %v4522 = vadd.f32 %v4422, %v4490
      %v4523 = vadd.f32 %v4423, %v4491
      %v4524 = vadd.f32 %v4424, %v4492
      %v4525 = vadd.f32 %v4425, %v4493
      %v4526 = vadd.f32 %v4426, %v4494
      %v4527 = vadd.f32 %v4427, %v4495
      %v4528 = vadd.f32 %v4428, %v4496
      %v4529 = vadd.f32 %v4429, %v4497
      %v4530 = vadd.f32 %v4430, %v4498
      %v4531 = vadd.f32 %v4431, %v4499
      %v4532 = vadd.f32 %v4432, %v4500
      %v4533 = vadd.f32 %v4433, %v4501
      %v4534 = vadd.f32 %v4434, %v4502
      %v4535 = vadd.f32 %v4435, %v4503
      %v4536 = vadd.f32 %v4436, %v4504
      %v4537 = vadd.f32 %v4437, %v4505
      %v4538 = vadd.f32 %v4438, %v4506
      %v4539 = vadd.f32 %v4439, %v4507
      %v4540 = vadd.f32 %v4440, %v4508
      %v4541 = vadd.f32 %v4441, %v4509
      %v4542 = vadd.f32 %v4442, %v4510
      %v4543 = vadd.f32 %v4443, %v4511
      %v4544 = vadd.f32 %v4444, %v4512
      %v4545 = vadd.f32 %v4445, %v4513
      %v4546 = vadd.f32 %v4446, %v4514
      %v4547 = vadd.f32 %v4447, %v4515
      %v4548 = vadd.f32 %v4448, %v4516
      %s4549 = scalar_lea.vmem [#allocation2], 336
      %v4550 = vld [vmem:[%s4549] sm:$0xff]
      %v4551 = vld [vmem:[%s4549 + $0x10] sm:$0xff]
      %v4552 = vld [vmem:[%s4549 + $0x20] sm:$0xff]
      %v4553 = vld [vmem:[%s4549 + $0x30] sm:$0xff]
      %v4554 = vld [vmem:[%s4549 + $0x40] sm:$0xff]
      %v4555 = vld [vmem:[%s4549 + $0x50] sm:$0xff]
      %v4556 = vld [vmem:[%s4549 + $0x60] sm:$0xff]
      %v4557 = vld [vmem:[%s4549 + $0x70] sm:$0xff]
      %v4558 = vld [vmem:[%s4549 + $0xa0] sm:$0xff]
      %v4559 = vld [vmem:[%s4549 + $0xb0] sm:$0xff]
      %v4560 = vld [vmem:[%s4549 + $0xc0] sm:$0xff]
      %v4561 = vld [vmem:[%s4549 + $0xd0] sm:$0xff]
      %v4562 = vld [vmem:[%s4549 + $0xe0] sm:$0xff]
      %v4563 = vld [vmem:[%s4549 + $0xf0] sm:$0xff]
      %v4564 = vld [vmem:[%s4549 + $0x100] sm:$0xff]
      %v4565 = vld [vmem:[%s4549 + $0x110] sm:$0xff]
      %v4566 = vld [vmem:[%s4549 + $0x140] sm:$0xff]
      %v4567 = vld [vmem:[%s4549 + $0x150] sm:$0xff]
      %v4568 = vld [vmem:[%s4549 + $0x160] sm:$0xff]
      %v4569 = vld [vmem:[%s4549 + $0x170] sm:$0xff]
      %v4570 = vld [vmem:[%s4549 + $0x180] sm:$0xff]
      %v4571 = vld [vmem:[%s4549 + $0x190] sm:$0xff]
      %v4572 = vld [vmem:[%s4549 + $0x1a0] sm:$0xff]
      %v4573 = vld [vmem:[%s4549 + $0x1b0] sm:$0xff]
      %v4574 = vld [vmem:[%s4549 + $0x1e0] sm:$0xff]
      %v4575 = vld [vmem:[%s4549 + $0x1f0] sm:$0xff]
      %v4576 = vld [vmem:[%s4549 + $0x200] sm:$0xff]
      %v4577 = vld [vmem:[%s4549 + $0x210] sm:$0xff]
      %v4578 = vld [vmem:[%s4549 + $0x220] sm:$0xff]
      %v4579 = vld [vmem:[%s4549 + $0x230] sm:$0xff]
      %v4580 = vld [vmem:[%s4549 + $0x240] sm:$0xff]
      %v4581 = vld [vmem:[%s4549 + $0x250] sm:$0xff]
      %v4582 = vlaneseq
      %v4583 = vshrl.u32 %v4582, 7
      %v4584 = vsub.s32 5, %v4583
      %v4585 = vrot.slane %v2538, %v4584
      %v4586 = vmul.f32 %v4550, %v4585
      %v4587 = vmul.f32 %v4551, %v4585
      %v4588 = vmul.f32 %v4552, %v4585
      %v4589 = vmul.f32 %v4553, %v4585
      %v4590 = vmul.f32 %v4554, %v4585
      %v4591 = vmul.f32 %v4555, %v4585
      %v4592 = vmul.f32 %v4556, %v4585
      %v4593 = vmul.f32 %v4557, %v4585
      %v4594 = vmul.f32 %v4558, %v4585
      %v4595 = vmul.f32 %v4559, %v4585
      %v4596 = vmul.f32 %v4560, %v4585
      %v4597 = vmul.f32 %v4561, %v4585
      %v4598 = vmul.f32 %v4562, %v4585
      %v4599 = vmul.f32 %v4563, %v4585
      %v4600 = vmul.f32 %v4564, %v4585
      %v4601 = vmul.f32 %v4565, %v4585
      %v4602 = vmul.f32 %v4566, %v4585
      %v4603 = vmul.f32 %v4567, %v4585
      %v4604 = vmul.f32 %v4568, %v4585
      %v4605 = vmul.f32 %v4569, %v4585
      %v4606 = vmul.f32 %v4570, %v4585
      %v4607 = vmul.f32 %v4571, %v4585
      %v4608 = vmul.f32 %v4572, %v4585
      %v4609 = vmul.f32 %v4573, %v4585
      %v4610 = vmul.f32 %v4574, %v4585
      %v4611 = vmul.f32 %v4575, %v4585
      %v4612 = vmul.f32 %v4576, %v4585
      %v4613 = vmul.f32 %v4577, %v4585
      %v4614 = vmul.f32 %v4578, %v4585
      %v4615 = vmul.f32 %v4579, %v4585
      %v4616 = vmul.f32 %v4580, %v4585
      %v4617 = vmul.f32 %v4581, %v4585
      %v4618 = vadd.f32 %v4517, %v4586
      %v4619 = vadd.f32 %v4518, %v4587
      %v4620 = vadd.f32 %v4519, %v4588
      %v4621 = vadd.f32 %v4520, %v4589
      %v4622 = vadd.f32 %v4521, %v4590
      %v4623 = vadd.f32 %v4522, %v4591
      %v4624 = vadd.f32 %v4523, %v4592
      %v4625 = vadd.f32 %v4524, %v4593
      %v4626 = vadd.f32 %v4525, %v4594
      %v4627 = vadd.f32 %v4526, %v4595
      %v4628 = vadd.f32 %v4527, %v4596
      %v4629 = vadd.f32 %v4528, %v4597
      %v4630 = vadd.f32 %v4529, %v4598
      %v4631 = vadd.f32 %v4530, %v4599
      %v4632 = vadd.f32 %v4531, %v4600
      %v4633 = vadd.f32 %v4532, %v4601
      %v4634 = vadd.f32 %v4533, %v4602
      %v4635 = vadd.f32 %v4534, %v4603
      %v4636 = vadd.f32 %v4535, %v4604
      %v4637 = vadd.f32 %v4536, %v4605
      %v4638 = vadd.f32 %v4537, %v4606
      %v4639 = vadd.f32 %v4538, %v4607
      %v4640 = vadd.f32 %v4539, %v4608
      %v4641 = vadd.f32 %v4540, %v4609
      %v4642 = vadd.f32 %v4541, %v4610
      %v4643 = vadd.f32 %v4542, %v4611
      %v4644 = vadd.f32 %v4543, %v4612
      %v4645 = vadd.f32 %v4544, %v4613
      %v4646 = vadd.f32 %v4545, %v4614
      %v4647 = vadd.f32 %v4546, %v4615
      %v4648 = vadd.f32 %v4547, %v4616
      %v4649 = vadd.f32 %v4548, %v4617
      %v4650 = vld [vmem:[%s4549 + $0x1] sm:$0xff]
      %v4651 = vld [vmem:[%s4549 + $0x11] sm:$0xff]
      %v4652 = vld [vmem:[%s4549 + $0x21] sm:$0xff]
      %v4653 = vld [vmem:[%s4549 + $0x31] sm:$0xff]
      %v4654 = vld [vmem:[%s4549 + $0x41] sm:$0xff]
      %v4655 = vld [vmem:[%s4549 + $0x51] sm:$0xff]
      %v4656 = vld [vmem:[%s4549 + $0x61] sm:$0xff]
      %v4657 = vld [vmem:[%s4549 + $0x71] sm:$0xff]
      %v4658 = vld [vmem:[%s4549 + $0xa1] sm:$0xff]
      %v4659 = vld [vmem:[%s4549 + $0xb1] sm:$0xff]
      %v4660 = vld [vmem:[%s4549 + $0xc1] sm:$0xff]
      %v4661 = vld [vmem:[%s4549 + $0xd1] sm:$0xff]
      %v4662 = vld [vmem:[%s4549 + $0xe1] sm:$0xff]
      %v4663 = vld [vmem:[%s4549 + $0xf1] sm:$0xff]
      %v4664 = vld [vmem:[%s4549 + $0x101] sm:$0xff]
      %v4665 = vld [vmem:[%s4549 + $0x111] sm:$0xff]
      %v4666 = vld [vmem:[%s4549 + $0x141] sm:$0xff]
      %v4667 = vld [vmem:[%s4549 + $0x151] sm:$0xff]
      %v4668 = vld [vmem:[%s4549 + $0x161] sm:$0xff]
      %v4669 = vld [vmem:[%s4549 + $0x171] sm:$0xff]
      %v4670 = vld [vmem:[%s4549 + $0x181] sm:$0xff]
      %v4671 = vld [vmem:[%s4549 + $0x191] sm:$0xff]
      %v4672 = vld [vmem:[%s4549 + $0x1a1] sm:$0xff]
      %v4673 = vld [vmem:[%s4549 + $0x1b1] sm:$0xff]
      %v4674 = vld [vmem:[%s4549 + $0x1e1] sm:$0xff]
      %v4675 = vld [vmem:[%s4549 + $0x1f1] sm:$0xff]
      %v4676 = vld [vmem:[%s4549 + $0x201] sm:$0xff]
      %v4677 = vld [vmem:[%s4549 + $0x211] sm:$0xff]
      %v4678 = vld [vmem:[%s4549 + $0x221] sm:$0xff]
      %v4679 = vld [vmem:[%s4549 + $0x231] sm:$0xff]
      %v4680 = vld [vmem:[%s4549 + $0x241] sm:$0xff]
      %v4681 = vld [vmem:[%s4549 + $0x251] sm:$0xff]
      %v4682 = vlaneseq
      %v4683 = vshrl.u32 %v4682, 7
      %v4684 = vsub.s32 6, %v4683
      %v4685 = vrot.slane %v2538, %v4684
      %v4686 = vmul.f32 %v4650, %v4685
      %v4687 = vmul.f32 %v4651, %v4685
      %v4688 = vmul.f32 %v4652, %v4685
      %v4689 = vmul.f32 %v4653, %v4685
      %v4690 = vmul.f32 %v4654, %v4685
      %v4691 = vmul.f32 %v4655, %v4685
      %v4692 = vmul.f32 %v4656, %v4685
      %v4693 = vmul.f32 %v4657, %v4685
      %v4694 = vmul.f32 %v4658, %v4685
      %v4695 = vmul.f32 %v4659, %v4685
      %v4696 = vmul.f32 %v4660, %v4685
      %v4697 = vmul.f32 %v4661, %v4685
      %v4698 = vmul.f32 %v4662, %v4685
      %v4699 = vmul.f32 %v4663, %v4685
      %v4700 = vmul.f32 %v4664, %v4685
      %v4701 = vmul.f32 %v4665, %v4685
      %v4702 = vmul.f32 %v4666, %v4685
      %v4703 = vmul.f32 %v4667, %v4685
      %v4704 = vmul.f32 %v4668, %v4685
      %v4705 = vmul.f32 %v4669, %v4685
      %v4706 = vmul.f32 %v4670, %v4685
      %v4707 = vmul.f32 %v4671, %v4685
      %v4708 = vmul.f32 %v4672, %v4685
      %v4709 = vmul.f32 %v4673, %v4685
      %v4710 = vmul.f32 %v4674, %v4685
      %v4711 = vmul.f32 %v4675, %v4685
      %v4712 = vmul.f32 %v4676, %v4685
      %v4713 = vmul.f32 %v4677, %v4685
      %v4714 = vmul.f32 %v4678, %v4685
      %v4715 = vmul.f32 %v4679, %v4685
      %v4716 = vmul.f32 %v4680, %v4685
      %v4717 = vmul.f32 %v4681, %v4685
      %v4718 = vadd.f32 %v4618, %v4686
      %v4719 = vadd.f32 %v4619, %v4687
      %v4720 = vadd.f32 %v4620, %v4688
      %v4721 = vadd.f32 %v4621, %v4689
      %v4722 = vadd.f32 %v4622, %v4690
      %v4723 = vadd.f32 %v4623, %v4691
      %v4724 = vadd.f32 %v4624, %v4692
      %v4725 = vadd.f32 %v4625, %v4693
      %v4726 = vadd.f32 %v4626, %v4694
      %v4727 = vadd.f32 %v4627, %v4695
      %v4728 = vadd.f32 %v4628, %v4696
      %v4729 = vadd.f32 %v4629, %v4697
      %v4730 = vadd.f32 %v4630, %v4698
      %v4731 = vadd.f32 %v4631, %v4699
      %v4732 = vadd.f32 %v4632, %v4700
      %v4733 = vadd.f32 %v4633, %v4701
      %v4734 = vadd.f32 %v4634, %v4702
      %v4735 = vadd.f32 %v4635, %v4703
      %v4736 = vadd.f32 %v4636, %v4704
      %v4737 = vadd.f32 %v4637, %v4705
      %v4738 = vadd.f32 %v4638, %v4706
      %v4739 = vadd.f32 %v4639, %v4707
      %v4740 = vadd.f32 %v4640, %v4708
      %v4741 = vadd.f32 %v4641, %v4709
      %v4742 = vadd.f32 %v4642, %v4710
      %v4743 = vadd.f32 %v4643, %v4711
      %v4744 = vadd.f32 %v4644, %v4712
      %v4745 = vadd.f32 %v4645, %v4713
      %v4746 = vadd.f32 %v4646, %v4714
      %v4747 = vadd.f32 %v4647, %v4715
      %v4748 = vadd.f32 %v4648, %v4716
      %v4749 = vadd.f32 %v4649, %v4717
      %v4750 = vld [vmem:[%s4549 + $0x2] sm:$0xff]
      %v4751 = vld [vmem:[%s4549 + $0x12] sm:$0xff]
      %v4752 = vld [vmem:[%s4549 + $0x22] sm:$0xff]
      %v4753 = vld [vmem:[%s4549 + $0x32] sm:$0xff]
      %v4754 = vld [vmem:[%s4549 + $0x42] sm:$0xff]
      %v4755 = vld [vmem:[%s4549 + $0x52] sm:$0xff]
      %v4756 = vld [vmem:[%s4549 + $0x62] sm:$0xff]
      %v4757 = vld [vmem:[%s4549 + $0x72] sm:$0xff]
      %v4758 = vld [vmem:[%s4549 + $0xa2] sm:$0xff]
      %v4759 = vld [vmem:[%s4549 + $0xb2] sm:$0xff]
      %v4760 = vld [vmem:[%s4549 + $0xc2] sm:$0xff]
      %v4761 = vld [vmem:[%s4549 + $0xd2] sm:$0xff]
      %v4762 = vld [vmem:[%s4549 + $0xe2] sm:$0xff]
      %v4763 = vld [vmem:[%s4549 + $0xf2] sm:$0xff]
      %v4764 = vld [vmem:[%s4549 + $0x102] sm:$0xff]
      %v4765 = vld [vmem:[%s4549 + $0x112] sm:$0xff]
      %v4766 = vld [vmem:[%s4549 + $0x142] sm:$0xff]
      %v4767 = vld [vmem:[%s4549 + $0x152] sm:$0xff]
      %v4768 = vld [vmem:[%s4549 + $0x162] sm:$0xff]
      %v4769 = vld [vmem:[%s4549 + $0x172] sm:$0xff]
      %v4770 = vld [vmem:[%s4549 + $0x182] sm:$0xff]
      %v4771 = vld [vmem:[%s4549 + $0x192] sm:$0xff]
      %v4772 = vld [vmem:[%s4549 + $0x1a2] sm:$0xff]
      %v4773 = vld [vmem:[%s4549 + $0x1b2] sm:$0xff]
      %v4774 = vld [vmem:[%s4549 + $0x1e2] sm:$0xff]
      %v4775 = vld [vmem:[%s4549 + $0x1f2] sm:$0xff]
      %v4776 = vld [vmem:[%s4549 + $0x202] sm:$0xff]
      %v4777 = vld [vmem:[%s4549 + $0x212] sm:$0xff]
      %v4778 = vld [vmem:[%s4549 + $0x222] sm:$0xff]
      %v4779 = vld [vmem:[%s4549 + $0x232] sm:$0xff]
      %v4780 = vld [vmem:[%s4549 + $0x242] sm:$0xff]
      %v4781 = vld [vmem:[%s4549 + $0x252] sm:$0xff]
      %v4782 = vlaneseq
      %v4783 = vshrl.u32 %v4782, 7
      %v4784 = vsub.s32 7, %v4783
      %v4785 = vrot.slane %v2538, %v4784
      %v4786 = vmul.f32 %v4750, %v4785
      %v4787 = vmul.f32 %v4751, %v4785
      %v4788 = vmul.f32 %v4752, %v4785
      %v4789 = vmul.f32 %v4753, %v4785
      %v4790 = vmul.f32 %v4754, %v4785
      %v4791 = vmul.f32 %v4755, %v4785
      %v4792 = vmul.f32 %v4756, %v4785
      %v4793 = vmul.f32 %v4757, %v4785
      %v4794 = vmul.f32 %v4758, %v4785
      %v4795 = vmul.f32 %v4759, %v4785
      %v4796 = vmul.f32 %v4760, %v4785
      %v4797 = vmul.f32 %v4761, %v4785
      %v4798 = vmul.f32 %v4762, %v4785
      %v4799 = vmul.f32 %v4763, %v4785
      %v4800 = vmul.f32 %v4764, %v4785
      %v4801 = vmul.f32 %v4765, %v4785
      %v4802 = vmul.f32 %v4766, %v4785
      %v4803 = vmul.f32 %v4767, %v4785
      %v4804 = vmul.f32 %v4768, %v4785
      %v4805 = vmul.f32 %v4769, %v4785
      %v4806 = vmul.f32 %v4770, %v4785
      %v4807 = vmul.f32 %v4771, %v4785
      %v4808 = vmul.f32 %v4772, %v4785
      %v4809 = vmul.f32 %v4773, %v4785
      %v4810 = vmul.f32 %v4774, %v4785
      %v4811 = vmul.f32 %v4775, %v4785
      %v4812 = vmul.f32 %v4776, %v4785
      %v4813 = vmul.f32 %v4777, %v4785
      %v4814 = vmul.f32 %v4778, %v4785
      %v4815 = vmul.f32 %v4779, %v4785
      %v4816 = vmul.f32 %v4780, %v4785
      %v4817 = vmul.f32 %v4781, %v4785
      %v4818 = vadd.f32 %v4718, %v4786
      %v4819 = vadd.f32 %v4719, %v4787
      %v4820 = vadd.f32 %v4720, %v4788
      %v4821 = vadd.f32 %v4721, %v4789
      %v4822 = vadd.f32 %v4722, %v4790
      %v4823 = vadd.f32 %v4723, %v4791
      %v4824 = vadd.f32 %v4724, %v4792
      %v4825 = vadd.f32 %v4725, %v4793
      %v4826 = vadd.f32 %v4726, %v4794
      %v4827 = vadd.f32 %v4727, %v4795
      %v4828 = vadd.f32 %v4728, %v4796
      %v4829 = vadd.f32 %v4729, %v4797
      %v4830 = vadd.f32 %v4730, %v4798
      %v4831 = vadd.f32 %v4731, %v4799
      %v4832 = vadd.f32 %v4732, %v4800
      %v4833 = vadd.f32 %v4733, %v4801
      %v4834 = vadd.f32 %v4734, %v4802
      %v4835 = vadd.f32 %v4735, %v4803
      %v4836 = vadd.f32 %v4736, %v4804
      %v4837 = vadd.f32 %v4737, %v4805
      %v4838 = vadd.f32 %v4738, %v4806
      %v4839 = vadd.f32 %v4739, %v4807
      %v4840 = vadd.f32 %v4740, %v4808
      %v4841 = vadd.f32 %v4741, %v4809
      %v4842 = vadd.f32 %v4742, %v4810
      %v4843 = vadd.f32 %v4743, %v4811
      %v4844 = vadd.f32 %v4744, %v4812
      %v4845 = vadd.f32 %v4745, %v4813
      %v4846 = vadd.f32 %v4746, %v4814
      %v4847 = vadd.f32 %v4747, %v4815
      %v4848 = vadd.f32 %v4748, %v4816
      %v4849 = vadd.f32 %v4749, %v4817
      %s4850 = scalar_lea.vmem [#allocation2], 352
      %v4851 = vld [vmem:[%s4850] sm:$0xff]
      %v4852 = vld [vmem:[%s4850 + $0x10] sm:$0xff]
      %v4853 = vld [vmem:[%s4850 + $0x20] sm:$0xff]
      %v4854 = vld [vmem:[%s4850 + $0x30] sm:$0xff]
      %v4855 = vld [vmem:[%s4850 + $0x40] sm:$0xff]
      %v4856 = vld [vmem:[%s4850 + $0x50] sm:$0xff]
      %v4857 = vld [vmem:[%s4850 + $0x60] sm:$0xff]
      %v4858 = vld [vmem:[%s4850 + $0x70] sm:$0xff]
      %v4859 = vld [vmem:[%s4850 + $0xa0] sm:$0xff]
      %v4860 = vld [vmem:[%s4850 + $0xb0] sm:$0xff]
      %v4861 = vld [vmem:[%s4850 + $0xc0] sm:$0xff]
      %v4862 = vld [vmem:[%s4850 + $0xd0] sm:$0xff]
      %v4863 = vld [vmem:[%s4850 + $0xe0] sm:$0xff]
      %v4864 = vld [vmem:[%s4850 + $0xf0] sm:$0xff]
      %v4865 = vld [vmem:[%s4850 + $0x100] sm:$0xff]
      %v4866 = vld [vmem:[%s4850 + $0x110] sm:$0xff]
      %v4867 = vld [vmem:[%s4850 + $0x140] sm:$0xff]
      %v4868 = vld [vmem:[%s4850 + $0x150] sm:$0xff]
      %v4869 = vld [vmem:[%s4850 + $0x160] sm:$0xff]
      %v4870 = vld [vmem:[%s4850 + $0x170] sm:$0xff]
      %v4871 = vld [vmem:[%s4850 + $0x180] sm:$0xff]
      %v4872 = vld [vmem:[%s4850 + $0x190] sm:$0xff]
      %v4873 = vld [vmem:[%s4850 + $0x1a0] sm:$0xff]
      %v4874 = vld [vmem:[%s4850 + $0x1b0] sm:$0xff]
      %v4875 = vld [vmem:[%s4850 + $0x1e0] sm:$0xff]
      %v4876 = vld [vmem:[%s4850 + $0x1f0] sm:$0xff]
      %v4877 = vld [vmem:[%s4850 + $0x200] sm:$0xff]
      %v4878 = vld [vmem:[%s4850 + $0x210] sm:$0xff]
      %v4879 = vld [vmem:[%s4850 + $0x220] sm:$0xff]
      %v4880 = vld [vmem:[%s4850 + $0x230] sm:$0xff]
      %v4881 = vld [vmem:[%s4850 + $0x240] sm:$0xff]
      %v4882 = vld [vmem:[%s4850 + $0x250] sm:$0xff]
      %v4883 = vlaneseq
      %v4884 = vshrl.u32 %v4883, 7
      %v4885 = vsub.s32 0, %v4884
      %v4886 = vrot.slane %v2539, %v4885
      %v4887 = vmul.f32 %v4851, %v4886
      %v4888 = vmul.f32 %v4852, %v4886
      %v4889 = vmul.f32 %v4853, %v4886
      %v4890 = vmul.f32 %v4854, %v4886
      %v4891 = vmul.f32 %v4855, %v4886
      %v4892 = vmul.f32 %v4856, %v4886
      %v4893 = vmul.f32 %v4857, %v4886
      %v4894 = vmul.f32 %v4858, %v4886
      %v4895 = vmul.f32 %v4859, %v4886
      %v4896 = vmul.f32 %v4860, %v4886
      %v4897 = vmul.f32 %v4861, %v4886
      %v4898 = vmul.f32 %v4862, %v4886
      %v4899 = vmul.f32 %v4863, %v4886
      %v4900 = vmul.f32 %v4864, %v4886
      %v4901 = vmul.f32 %v4865, %v4886
      %v4902 = vmul.f32 %v4866, %v4886
      %v4903 = vmul.f32 %v4867, %v4886
      %v4904 = vmul.f32 %v4868, %v4886
      %v4905 = vmul.f32 %v4869, %v4886
      %v4906 = vmul.f32 %v4870, %v4886
      %v4907 = vmul.f32 %v4871, %v4886
      %v4908 = vmul.f32 %v4872, %v4886
      %v4909 = vmul.f32 %v4873, %v4886
      %v4910 = vmul.f32 %v4874, %v4886
      %v4911 = vmul.f32 %v4875, %v4886
      %v4912 = vmul.f32 %v4876, %v4886
      %v4913 = vmul.f32 %v4877, %v4886
      %v4914 = vmul.f32 %v4878, %v4886
      %v4915 = vmul.f32 %v4879, %v4886
      %v4916 = vmul.f32 %v4880, %v4886
      %v4917 = vmul.f32 %v4881, %v4886
      %v4918 = vmul.f32 %v4882, %v4886
      %v4919 = vadd.f32 %v4818, %v4887
      %v4920 = vadd.f32 %v4819, %v4888
      %v4921 = vadd.f32 %v4820, %v4889
      %v4922 = vadd.f32 %v4821, %v4890
      %v4923 = vadd.f32 %v4822, %v4891
      %v4924 = vadd.f32 %v4823, %v4892
      %v4925 = vadd.f32 %v4824, %v4893
      %v4926 = vadd.f32 %v4825, %v4894
      %v4927 = vadd.f32 %v4826, %v4895
      %v4928 = vadd.f32 %v4827, %v4896
      %v4929 = vadd.f32 %v4828, %v4897
      %v4930 = vadd.f32 %v4829, %v4898
      %v4931 = vadd.f32 %v4830, %v4899
      %v4932 = vadd.f32 %v4831, %v4900
      %v4933 = vadd.f32 %v4832, %v4901
      %v4934 = vadd.f32 %v4833, %v4902
      %v4935 = vadd.f32 %v4834, %v4903
      %v4936 = vadd.f32 %v4835, %v4904
      %v4937 = vadd.f32 %v4836, %v4905
      %v4938 = vadd.f32 %v4837, %v4906
      %v4939 = vadd.f32 %v4838, %v4907
      %v4940 = vadd.f32 %v4839, %v4908
      %v4941 = vadd.f32 %v4840, %v4909
      %v4942 = vadd.f32 %v4841, %v4910
      %v4943 = vadd.f32 %v4842, %v4911
      %v4944 = vadd.f32 %v4843, %v4912
      %v4945 = vadd.f32 %v4844, %v4913
      %v4946 = vadd.f32 %v4845, %v4914
      %v4947 = vadd.f32 %v4846, %v4915
      %v4948 = vadd.f32 %v4847, %v4916
      %v4949 = vadd.f32 %v4848, %v4917
      %v4950 = vadd.f32 %v4849, %v4918
      %v4951 = vld [vmem:[%s4850 + $0x1] sm:$0xff]
      %v4952 = vld [vmem:[%s4850 + $0x11] sm:$0xff]
      %v4953 = vld [vmem:[%s4850 + $0x21] sm:$0xff]
      %v4954 = vld [vmem:[%s4850 + $0x31] sm:$0xff]
      %v4955 = vld [vmem:[%s4850 + $0x41] sm:$0xff]
      %v4956 = vld [vmem:[%s4850 + $0x51] sm:$0xff]
      %v4957 = vld [vmem:[%s4850 + $0x61] sm:$0xff]
      %v4958 = vld [vmem:[%s4850 + $0x71] sm:$0xff]
      %v4959 = vld [vmem:[%s4850 + $0xa1] sm:$0xff]
      %v4960 = vld [vmem:[%s4850 + $0xb1] sm:$0xff]
      %v4961 = vld [vmem:[%s4850 + $0xc1] sm:$0xff]
      %v4962 = vld [vmem:[%s4850 + $0xd1] sm:$0xff]
      %v4963 = vld [vmem:[%s4850 + $0xe1] sm:$0xff]
      %v4964 = vld [vmem:[%s4850 + $0xf1] sm:$0xff]
      %v4965 = vld [vmem:[%s4850 + $0x101] sm:$0xff]
      %v4966 = vld [vmem:[%s4850 + $0x111] sm:$0xff]
      %v4967 = vld [vmem:[%s4850 + $0x141] sm:$0xff]
      %v4968 = vld [vmem:[%s4850 + $0x151] sm:$0xff]
      %v4969 = vld [vmem:[%s4850 + $0x161] sm:$0xff]
      %v4970 = vld [vmem:[%s4850 + $0x171] sm:$0xff]
      %v4971 = vld [vmem:[%s4850 + $0x181] sm:$0xff]
      %v4972 = vld [vmem:[%s4850 + $0x191] sm:$0xff]
      %v4973 = vld [vmem:[%s4850 + $0x1a1] sm:$0xff]
      %v4974 = vld [vmem:[%s4850 + $0x1b1] sm:$0xff]
      %v4975 = vld [vmem:[%s4850 + $0x1e1] sm:$0xff]
      %v4976 = vld [vmem:[%s4850 + $0x1f1] sm:$0xff]
      %v4977 = vld [vmem:[%s4850 + $0x201] sm:$0xff]
      %v4978 = vld [vmem:[%s4850 + $0x211] sm:$0xff]
      %v4979 = vld [vmem:[%s4850 + $0x221] sm:$0xff]
      %v4980 = vld [vmem:[%s4850 + $0x231] sm:$0xff]
      %v4981 = vld [vmem:[%s4850 + $0x241] sm:$0xff]
      %v4982 = vld [vmem:[%s4850 + $0x251] sm:$0xff]
      %v4983 = vlaneseq
      %v4984 = vshrl.u32 %v4983, 7
      %v4985 = vsub.s32 1, %v4984
      %v4986 = vrot.slane %v2539, %v4985
      %v4987 = vmul.f32 %v4951, %v4986
      %v4988 = vmul.f32 %v4952, %v4986
      %v4989 = vmul.f32 %v4953, %v4986
      %v4990 = vmul.f32 %v4954, %v4986
      %v4991 = vmul.f32 %v4955, %v4986
      %v4992 = vmul.f32 %v4956, %v4986
      %v4993 = vmul.f32 %v4957, %v4986
      %v4994 = vmul.f32 %v4958, %v4986
      %v4995 = vmul.f32 %v4959, %v4986
      %v4996 = vmul.f32 %v4960, %v4986
      %v4997 = vmul.f32 %v4961, %v4986
      %v4998 = vmul.f32 %v4962, %v4986
      %v4999 = vmul.f32 %v4963, %v4986
      %v5000 = vmul.f32 %v4964, %v4986
      %v5001 = vmul.f32 %v4965, %v4986
      %v5002 = vmul.f32 %v4966, %v4986
      %v5003 = vmul.f32 %v4967, %v4986
      %v5004 = vmul.f32 %v4968, %v4986
      %v5005 = vmul.f32 %v4969, %v4986
      %v5006 = vmul.f32 %v4970, %v4986
      %v5007 = vmul.f32 %v4971, %v4986
      %v5008 = vmul.f32 %v4972, %v4986
      %v5009 = vmul.f32 %v4973, %v4986
      %v5010 = vmul.f32 %v4974, %v4986
      %v5011 = vmul.f32 %v4975, %v4986
      %v5012 = vmul.f32 %v4976, %v4986
      %v5013 = vmul.f32 %v4977, %v4986
      %v5014 = vmul.f32 %v4978, %v4986
      %v5015 = vmul.f32 %v4979, %v4986
      %v5016 = vmul.f32 %v4980, %v4986
      %v5017 = vmul.f32 %v4981, %v4986
      %v5018 = vmul.f32 %v4982, %v4986
      %v5019 = vadd.f32 %v4919, %v4987
      %v5020 = vadd.f32 %v4920, %v4988
      %v5021 = vadd.f32 %v4921, %v4989
      %v5022 = vadd.f32 %v4922, %v4990
      %v5023 = vadd.f32 %v4923, %v4991
      %v5024 = vadd.f32 %v4924, %v4992
      %v5025 = vadd.f32 %v4925, %v4993
      %v5026 = vadd.f32 %v4926, %v4994
      %v5027 = vadd.f32 %v4927, %v4995
      %v5028 = vadd.f32 %v4928, %v4996
      %v5029 = vadd.f32 %v4929, %v4997
      %v5030 = vadd.f32 %v4930, %v4998
      %v5031 = vadd.f32 %v4931, %v4999
      %v5032 = vadd.f32 %v4932, %v5000
      %v5033 = vadd.f32 %v4933, %v5001
      %v5034 = vadd.f32 %v4934, %v5002
      %v5035 = vadd.f32 %v4935, %v5003
      %v5036 = vadd.f32 %v4936, %v5004
      %v5037 = vadd.f32 %v4937, %v5005
      %v5038 = vadd.f32 %v4938, %v5006
      %v5039 = vadd.f32 %v4939, %v5007
      %v5040 = vadd.f32 %v4940, %v5008
      %v5041 = vadd.f32 %v4941, %v5009
      %v5042 = vadd.f32 %v4942, %v5010
      %v5043 = vadd.f32 %v4943, %v5011
      %v5044 = vadd.f32 %v4944, %v5012
      %v5045 = vadd.f32 %v4945, %v5013
      %v5046 = vadd.f32 %v4946, %v5014
      %v5047 = vadd.f32 %v4947, %v5015
      %v5048 = vadd.f32 %v4948, %v5016
      %v5049 = vadd.f32 %v4949, %v5017
      %v5050 = vadd.f32 %v4950, %v5018
      %v5051 = vld [vmem:[%s4850 + $0x2] sm:$0xff]
      %v5052 = vld [vmem:[%s4850 + $0x12] sm:$0xff]
      %v5053 = vld [vmem:[%s4850 + $0x22] sm:$0xff]
      %v5054 = vld [vmem:[%s4850 + $0x32] sm:$0xff]
      %v5055 = vld [vmem:[%s4850 + $0x42] sm:$0xff]
      %v5056 = vld [vmem:[%s4850 + $0x52] sm:$0xff]
      %v5057 = vld [vmem:[%s4850 + $0x62] sm:$0xff]
      %v5058 = vld [vmem:[%s4850 + $0x72] sm:$0xff]
      %v5059 = vld [vmem:[%s4850 + $0xa2] sm:$0xff]
      %v5060 = vld [vmem:[%s4850 + $0xb2] sm:$0xff]
      %v5061 = vld [vmem:[%s4850 + $0xc2] sm:$0xff]
      %v5062 = vld [vmem:[%s4850 + $0xd2] sm:$0xff]
      %v5063 = vld [vmem:[%s4850 + $0xe2] sm:$0xff]
      %v5064 = vld [vmem:[%s4850 + $0xf2] sm:$0xff]
      %v5065 = vld [vmem:[%s4850 + $0x102] sm:$0xff]
      %v5066 = vld [vmem:[%s4850 + $0x112] sm:$0xff]
      %v5067 = vld [vmem:[%s4850 + $0x142] sm:$0xff]
      %v5068 = vld [vmem:[%s4850 + $0x152] sm:$0xff]
      %v5069 = vld [vmem:[%s4850 + $0x162] sm:$0xff]
      %v5070 = vld [vmem:[%s4850 + $0x172] sm:$0xff]
      %v5071 = vld [vmem:[%s4850 + $0x182] sm:$0xff]
      %v5072 = vld [vmem:[%s4850 + $0x192] sm:$0xff]
      %v5073 = vld [vmem:[%s4850 + $0x1a2] sm:$0xff]
      %v5074 = vld [vmem:[%s4850 + $0x1b2] sm:$0xff]
      %v5075 = vld [vmem:[%s4850 + $0x1e2] sm:$0xff]
      %v5076 = vld [vmem:[%s4850 + $0x1f2] sm:$0xff]
      %v5077 = vld [vmem:[%s4850 + $0x202] sm:$0xff]
      %v5078 = vld [vmem:[%s4850 + $0x212] sm:$0xff]
      %v5079 = vld [vmem:[%s4850 + $0x222] sm:$0xff]
      %v5080 = vld [vmem:[%s4850 + $0x232] sm:$0xff]
      %v5081 = vld [vmem:[%s4850 + $0x242] sm:$0xff]
      %v5082 = vld [vmem:[%s4850 + $0x252] sm:$0xff]
      %v5083 = vlaneseq
      %v5084 = vshrl.u32 %v5083, 7
      %v5085 = vsub.s32 2, %v5084
      %v5086 = vrot.slane %v2539, %v5085
      %v5087 = vmul.f32 %v5051, %v5086
      %v5088 = vmul.f32 %v5052, %v5086
      %v5089 = vmul.f32 %v5053, %v5086
      %v5090 = vmul.f32 %v5054, %v5086
      %v5091 = vmul.f32 %v5055, %v5086
      %v5092 = vmul.f32 %v5056, %v5086
      %v5093 = vmul.f32 %v5057, %v5086
      %v5094 = vmul.f32 %v5058, %v5086
      %v5095 = vmul.f32 %v5059, %v5086
      %v5096 = vmul.f32 %v5060, %v5086
      %v5097 = vmul.f32 %v5061, %v5086
      %v5098 = vmul.f32 %v5062, %v5086
      %v5099 = vmul.f32 %v5063, %v5086
      %v5100 = vmul.f32 %v5064, %v5086
      %v5101 = vmul.f32 %v5065, %v5086
      %v5102 = vmul.f32 %v5066, %v5086
      %v5103 = vmul.f32 %v5067, %v5086
      %v5104 = vmul.f32 %v5068, %v5086
      %v5105 = vmul.f32 %v5069, %v5086
      %v5106 = vmul.f32 %v5070, %v5086
      %v5107 = vmul.f32 %v5071, %v5086
      %v5108 = vmul.f32 %v5072, %v5086
      %v5109 = vmul.f32 %v5073, %v5086
      %v5110 = vmul.f32 %v5074, %v5086
      %v5111 = vmul.f32 %v5075, %v5086
      %v5112 = vmul.f32 %v5076, %v5086
      %v5113 = vmul.f32 %v5077, %v5086
      %v5114 = vmul.f32 %v5078, %v5086
      %v5115 = vmul.f32 %v5079, %v5086
      %v5116 = vmul.f32 %v5080, %v5086
      %v5117 = vmul.f32 %v5081, %v5086
      %v5118 = vmul.f32 %v5082, %v5086
      %v5119 = vadd.f32 %v5019, %v5087
      %v5120 = vadd.f32 %v5020, %v5088
      %v5121 = vadd.f32 %v5021, %v5089
      %v5122 = vadd.f32 %v5022, %v5090
      %v5123 = vadd.f32 %v5023, %v5091
      %v5124 = vadd.f32 %v5024, %v5092
      %v5125 = vadd.f32 %v5025, %v5093
      %v5126 = vadd.f32 %v5026, %v5094
      %v5127 = vadd.f32 %v5027, %v5095
      %v5128 = vadd.f32 %v5028, %v5096
      %v5129 = vadd.f32 %v5029, %v5097
      %v5130 = vadd.f32 %v5030, %v5098
      %v5131 = vadd.f32 %v5031, %v5099
      %v5132 = vadd.f32 %v5032, %v5100
      %v5133 = vadd.f32 %v5033, %v5101
      %v5134 = vadd.f32 %v5034, %v5102
      %v5135 = vadd.f32 %v5035, %v5103
      %v5136 = vadd.f32 %v5036, %v5104
      %v5137 = vadd.f32 %v5037, %v5105
      %v5138 = vadd.f32 %v5038, %v5106
      %v5139 = vadd.f32 %v5039, %v5107
      %v5140 = vadd.f32 %v5040, %v5108
      %v5141 = vadd.f32 %v5041, %v5109
      %v5142 = vadd.f32 %v5042, %v5110
      %v5143 = vadd.f32 %v5043, %v5111
      %v5144 = vadd.f32 %v5044, %v5112
      %v5145 = vadd.f32 %v5045, %v5113
      %v5146 = vadd.f32 %v5046, %v5114
      %v5147 = vadd.f32 %v5047, %v5115
      %v5148 = vadd.f32 %v5048, %v5116
      %v5149 = vadd.f32 %v5049, %v5117
      %v5150 = vadd.f32 %v5050, %v5118
      %v5151 = vadd.f32 %v3378, %v4248
      %v5152 = vadd.f32 %v3379, %v4249
      %v5153 = vadd.f32 %v3380, %v4250
      %v5154 = vadd.f32 %v3381, %v4251
      %v5155 = vadd.f32 %v3382, %v4252
      %v5156 = vadd.f32 %v3383, %v4253
      %v5157 = vadd.f32 %v3384, %v4254
      %v5158 = vadd.f32 %v3385, %v4255
      %v5159 = vadd.f32 %v3386, %v4256
      %v5160 = vadd.f32 %v3387, %v4257
      %v5161 = vadd.f32 %v3388, %v4258
      %v5162 = vadd.f32 %v3389, %v4259
      %v5163 = vadd.f32 %v3390, %v4260
      %v5164 = vadd.f32 %v3391, %v4261
      %v5165 = vadd.f32 %v3392, %v4262
      %v5166 = vadd.f32 %v3393, %v4263
      %v5167 = vadd.f32 %v3394, %v4264
      %v5168 = vadd.f32 %v3395, %v4265
      %v5169 = vadd.f32 %v3396, %v4266
      %v5170 = vadd.f32 %v3397, %v4267
      %v5171 = vadd.f32 %v3398, %v4268
      %v5172 = vadd.f32 %v3399, %v4269
      %v5173 = vadd.f32 %v3400, %v4270
      %v5174 = vadd.f32 %v3401, %v4271
      %v5175 = vadd.f32 %v3402, %v4272
      %v5176 = vadd.f32 %v3403, %v4273
      %v5177 = vadd.f32 %v3404, %v4274
      %v5178 = vadd.f32 %v3405, %v4275
      %v5179 = vadd.f32 %v3406, %v4276
      %v5180 = vadd.f32 %v3407, %v4277
      %v5181 = vadd.f32 %v3408, %v4278
      %v5182 = vadd.f32 %v3409, %v4279
      %v5183 = vadd.f32 %v5151, %v5119
      %v5184 = vadd.f32 %v5152, %v5120
      %v5185 = vadd.f32 %v5153, %v5121
      %v5186 = vadd.f32 %v5154, %v5122
      %v5187 = vadd.f32 %v5155, %v5123
      %v5188 = vadd.f32 %v5156, %v5124
      %v5189 = vadd.f32 %v5157, %v5125
      %v5190 = vadd.f32 %v5158, %v5126
      %v5191 = vadd.f32 %v5159, %v5127
      %v5192 = vadd.f32 %v5160, %v5128
      %v5193 = vadd.f32 %v5161, %v5129
      %v5194 = vadd.f32 %v5162, %v5130
      %v5195 = vadd.f32 %v5163, %v5131
      %v5196 = vadd.f32 %v5164, %v5132
      %v5197 = vadd.f32 %v5165, %v5133
      %v5198 = vadd.f32 %v5166, %v5134
      %v5199 = vadd.f32 %v5167, %v5135
      %v5200 = vadd.f32 %v5168, %v5136
      %v5201 = vadd.f32 %v5169, %v5137
      %v5202 = vadd.f32 %v5170, %v5138
      %v5203 = vadd.f32 %v5171, %v5139
      %v5204 = vadd.f32 %v5172, %v5140
      %v5205 = vadd.f32 %v5173, %v5141
      %v5206 = vadd.f32 %v5174, %v5142
      %v5207 = vadd.f32 %v5175, %v5143
      %v5208 = vadd.f32 %v5176, %v5144
      %v5209 = vadd.f32 %v5177, %v5145
      %v5210 = vadd.f32 %v5178, %v5146
      %v5211 = vadd.f32 %v5179, %v5147
      %v5212 = vadd.f32 %v5180, %v5148
      %v5213 = vadd.f32 %v5181, %v5149
      %v5214 = vadd.f32 %v5182, %v5150
      %v5215 = vld [vmem:[%s4] sm:$0x1]
      %v5217 = vlaneseq
      %v5218 = vshrl.u32 %v5217, 7
      %v5219 = vsub.s32 0, %v5218
      %v5220 = vrot.slane %v5215, %v5219
      %v5222 = vadd.f32 %v5183, %v5220
      %v5223 = vadd.f32 %v5184, %v5220
      %v5224 = vadd.f32 %v5185, %v5220
      %v5225 = vadd.f32 %v5186, %v5220
      %v5226 = vadd.f32 %v5187, %v5220
      %v5227 = vadd.f32 %v5188, %v5220
      %v5228 = vadd.f32 %v5189, %v5220
      %v5229 = vadd.f32 %v5190, %v5220
      %v5230 = vadd.f32 %v5191, %v5220
      %v5231 = vadd.f32 %v5192, %v5220
      %v5232 = vadd.f32 %v5193, %v5220
      %v5233 = vadd.f32 %v5194, %v5220
      %v5234 = vadd.f32 %v5195, %v5220
      %v5235 = vadd.f32 %v5196, %v5220
      %v5236 = vadd.f32 %v5197, %v5220
      %v5237 = vadd.f32 %v5198, %v5220
      %v5238 = vadd.f32 %v5199, %v5220
      %v5239 = vadd.f32 %v5200, %v5220
      %v5240 = vadd.f32 %v5201, %v5220
      %v5241 = vadd.f32 %v5202, %v5220
      %v5242 = vadd.f32 %v5203, %v5220
      %v5243 = vadd.f32 %v5204, %v5220
      %v5244 = vadd.f32 %v5205, %v5220
      %v5245 = vadd.f32 %v5206, %v5220
      %v5246 = vadd.f32 %v5207, %v5220
      %v5247 = vadd.f32 %v5208, %v5220
      %v5248 = vadd.f32 %v5209, %v5220
      %v5249 = vadd.f32 %v5210, %v5220
      %v5250 = vadd.f32 %v5211, %v5220
      %v5251 = vadd.f32 %v5212, %v5220
      %v5252 = vadd.f32 %v5213, %v5220
      %v5253 = vadd.f32 %v5214, %v5220
      %v5254 = vld [vmem:[%s5] sm:$0xf]
      %v5255 = vld [vmem:[%s6] sm:$0xf]
      %5257 = vset.pattern.permute.xlu0 0
      %5258 = vperm.xlu0 %5257, %v5255
      %v5259 = vpop.permute.xlu0 %5258
      %v5262 = vsel %vm403, %v5254, 0
      %v5265 = vsel %vm403, %v5222, 0
      %v5268 = vsel %vm403, %v5223, 0
      %v5271 = vsel %vm403, %v5224, 0
      %v5274 = vsel %vm403, %v5225, 0
      %v5277 = vsel %vm403, %v5226, 0
      %v5280 = vsel %vm403, %v5227, 0
      %v5283 = vsel %vm403, %v5228, 0
      %v5286 = vsel %vm403, %v5229, 0
      %v5289 = vsel %vm403, %v5230, 0
      %v5292 = vsel %vm403, %v5231, 0
      %v5295 = vsel %vm403, %v5232, 0
      %v5298 = vsel %vm403, %v5233, 0
      %v5301 = vsel %vm403, %v5234, 0
      %v5304 = vsel %vm403, %v5235, 0
      %v5307 = vsel %vm403, %v5236, 0
      %v5310 = vsel %vm403, %v5237, 0
      %v5313 = vsel %vm403, %v5238, 0
      %v5316 = vsel %vm403, %v5239, 0
      %v5319 = vsel %vm403, %v5240, 0
      %v5322 = vsel %vm403, %v5241, 0
      %v5325 = vsel %vm403, %v5242, 0
      %v5328 = vsel %vm403, %v5243, 0
      %v5331 = vsel %vm403, %v5244, 0
      %v5334 = vsel %vm403, %v5245, 0
      %v5337 = vsel %vm403, %v5246, 0
      %v5340 = vsel %vm403, %v5247, 0
      %v5343 = vsel %vm403, %v5248, 0
      %v5346 = vsel %vm403, %v5249, 0
      %v5349 = vsel %vm403, %v5250, 0
      %v5352 = vsel %vm403, %v5251, 0
      %v5355 = vsel %vm403, %v5252, 0
      %v5358 = vsel %vm403, %v5253, 0
      %5360 = vmatprep.subr.mxu0 0.0
      %v5361 = vand.u32 %v5265, 4294901760
      %5362 = vmatpush1.xpose.msra.mxu0 %v5361
      %5363 = vmatprep.subr.mxu0 0.0
      %v5364 = vand.u32 %v5268, 4294901760
      %5365 = vmatpush1.xpose.msra.mxu0 %v5364
      %5366 = vmatprep.subr.mxu0 0.0
      %v5367 = vand.u32 %v5271, 4294901760
      %5368 = vmatpush1.xpose.msra.mxu0 %v5367
      %5369 = vmatprep.subr.mxu0 0.0
      %v5370 = vand.u32 %v5274, 4294901760
      %5371 = vmatpush1.xpose.msra.mxu0 %v5370
      %5372 = vmatprep.subr.mxu0 0.0
      %v5373 = vand.u32 %v5277, 4294901760
      %5374 = vmatpush1.xpose.msra.mxu0 %v5373
      %5375 = vmatprep.subr.mxu0 0.0
      %v5376 = vand.u32 %v5280, 4294901760
      %5377 = vmatpush1.xpose.msra.mxu0 %v5376
      %5378 = vmatprep.subr.mxu0 0.0
      %v5379 = vand.u32 %v5283, 4294901760
      %5380 = vmatpush1.xpose.msra.mxu0 %v5379
      %5381 = vmatprep.subr.mxu0 0.0
      %v5382 = vand.u32 %v5286, 4294901760
      %5383 = vmatpush1.xpose.msra.mxu0 %v5382
      %5384 = vmatprep.subr.mxu0 0.0
      %v5385 = vand.u32 %v5289, 4294901760
      %5386 = vmatpush1.xpose.msra.mxu0 %v5385
      %5387 = vmatprep.subr.mxu0 0.0
      %v5388 = vand.u32 %v5292, 4294901760
      %5389 = vmatpush1.xpose.msra.mxu0 %v5388
      %5390 = vmatprep.subr.mxu0 0.0
      %v5391 = vand.u32 %v5295, 4294901760
      %5392 = vmatpush1.xpose.msra.mxu0 %v5391
      %5393 = vmatprep.subr.mxu0 0.0
      %v5394 = vand.u32 %v5298, 4294901760
      %5395 = vmatpush1.xpose.msra.mxu0 %v5394
      %5396 = vmatprep.subr.mxu0 0.0
      %v5397 = vand.u32 %v5301, 4294901760
      %5398 = vmatpush1.xpose.msra.mxu0 %v5397
      %5399 = vmatprep.subr.mxu0 0.0
      %v5400 = vand.u32 %v5304, 4294901760
      %5401 = vmatpush1.xpose.msra.mxu0 %v5400
      %5402 = vmatprep.subr.mxu0 0.0
      %v5403 = vand.u32 %v5307, 4294901760
      %5404 = vmatpush1.xpose.msra.mxu0 %v5403
      %5405 = vmatprep.subr.mxu0 0.0
      %v5406 = vand.u32 %v5310, 4294901760
      %5407 = vmatpush1.xpose.msra.mxu0 %v5406
      %5408 = vmatprep.subr.mxu0 0.0
      %v5409 = vand.u32 %v5313, 4294901760
      %5410 = vmatpush1.xpose.msra.mxu0 %v5409
      %5411 = vmatprep.subr.mxu0 0.0
      %v5412 = vand.u32 %v5316, 4294901760
      %5413 = vmatpush1.xpose.msra.mxu0 %v5412
      %5414 = vmatprep.subr.mxu0 0.0
      %v5415 = vand.u32 %v5319, 4294901760
      %5416 = vmatpush1.xpose.msra.mxu0 %v5415
      %5417 = vmatprep.subr.mxu0 0.0
      %v5418 = vand.u32 %v5322, 4294901760
      %5419 = vmatpush1.xpose.msra.mxu0 %v5418
      %5420 = vmatprep.subr.mxu0 0.0
      %v5421 = vand.u32 %v5325, 4294901760
      %5422 = vmatpush1.xpose.msra.mxu0 %v5421
      %5423 = vmatprep.subr.mxu0 0.0
      %v5424 = vand.u32 %v5328, 4294901760
      %5425 = vmatpush1.xpose.msra.mxu0 %v5424
      %5426 = vmatprep.subr.mxu0 0.0
      %v5427 = vand.u32 %v5331, 4294901760
      %5428 = vmatpush1.xpose.msra.mxu0 %v5427
      %5429 = vmatprep.subr.mxu0 0.0
      %v5430 = vand.u32 %v5334, 4294901760
      %5431 = vmatpush1.xpose.msra.mxu0 %v5430
      %5432 = vmatprep.subr.mxu0 0.0
      %v5433 = vand.u32 %v5337, 4294901760
      %5434 = vmatpush1.xpose.msra.mxu0 %v5433
      %5435 = vmatprep.subr.mxu0 0.0
      %v5436 = vand.u32 %v5340, 4294901760
      %5437 = vmatpush1.xpose.msra.mxu0 %v5436
      %5438 = vmatprep.subr.mxu0 0.0
      %v5439 = vand.u32 %v5343, 4294901760
      %5440 = vmatpush1.xpose.msra.mxu0 %v5439
      %5441 = vmatprep.subr.mxu0 0.0
      %v5442 = vand.u32 %v5346, 4294901760
      %5443 = vmatpush1.xpose.msra.mxu0 %v5442
      %5444 = vmatprep.subr.mxu0 0.0
      %v5445 = vand.u32 %v5349, 4294901760
      %5446 = vmatpush1.xpose.msra.mxu0 %v5445
      %5447 = vmatprep.subr.mxu0 0.0
      %v5448 = vand.u32 %v5352, 4294901760
      %5449 = vmatpush1.xpose.msra.mxu0 %v5448
      %5450 = vmatprep.subr.mxu0 0.0
      %v5451 = vand.u32 %v5355, 4294901760
      %5452 = vmatpush1.xpose.msra.mxu0 %v5451
      %5453 = vmatprep.subr.mxu0 0.0
      %v5454 = vand.u32 %v5358, 4294901760
      %5455 = vmatpush1.xpose.msra.mxu0 %v5454
      %5456 = vmatprep.mubr.f32.mxu0 0.0
      %v5457 = vand.u32 %v5262, 4294901760
      %v5458 = vsub.f32 %v5262, %v5457
      %v5459 = vand.u32 %v5458, 4294901760
      %v5460 = vsub.f32 %v5458, %v5459
      %v5461 = vand.u32 %v5460, 4294901760
      %5462 = vmatmul.mubr.f32.gmra.mrb[0].mxu0 %v5461
      %v5463 = vpop.f32.mrb[0].mxu0
      %v5464 = vadd.f32 %v5259, %v5463
      %v5465 = vpop.f32.mrb[0].mxu0
      %v5466 = vadd.f32 %v5259, %v5465
      %5467 = vdwg.mxu0
      %5468 = vmatprep.subr.mxu0 0.0
      %v5469 = vand.u32 %v5265, 4294901760
      %v5470 = vsub.f32 %v5265, %v5469
      %v5471 = vand.u32 %v5470, 4294901760
      %v5472 = vsub.f32 %v5470, %v5471
      %v5473 = vand.u32 %v5472, 4294901760
      %5474 = vmatpush1.xpose.msra.mxu0 %v5473
      %5475 = vmatprep.subr.mxu0 0.0
      %v5476 = vand.u32 %v5268, 4294901760
      %v5477 = vsub.f32 %v5268, %v5476
      %v5478 = vand.u32 %v5477, 4294901760
      %v5479 = vsub.f32 %v5477, %v5478
      %v5480 = vand.u32 %v5479, 4294901760
      %5481 = vmatpush1.xpose.msra.mxu0 %v5480
      %5482 = vmatprep.subr.mxu0 0.0
      %v5483 = vand.u32 %v5271, 4294901760
      %v5484 = vsub.f32 %v5271, %v5483
      %v5485 = vand.u32 %v5484, 4294901760
      %v5486 = vsub.f32 %v5484, %v5485
      %v5487 = vand.u32 %v5486, 4294901760
      %5488 = vmatpush1.xpose.msra.mxu0 %v5487
      %5489 = vmatprep.subr.mxu0 0.0
      %v5490 = vand.u32 %v5274, 4294901760
      %v5491 = vsub.f32 %v5274, %v5490
      %v5492 = vand.u32 %v5491, 4294901760
      %v5493 = vsub.f32 %v5491, %v5492
      %v5494 = vand.u32 %v5493, 4294901760
      %5495 = vmatpush1.xpose.msra.mxu0 %v5494
      %5496 = vmatprep.subr.mxu0 0.0
      %v5497 = vand.u32 %v5277, 4294901760
      %v5498 = vsub.f32 %v5277, %v5497
      %v5499 = vand.u32 %v5498, 4294901760
      %v5500 = vsub.f32 %v5498, %v5499
      %v5501 = vand.u32 %v5500, 4294901760
      %5502 = vmatpush1.xpose.msra.mxu0 %v5501
      %5503 = vmatprep.subr.mxu0 0.0
      %v5504 = vand.u32 %v5280, 4294901760
      %v5505 = vsub.f32 %v5280, %v5504
      %v5506 = vand.u32 %v5505, 4294901760
      %v5507 = vsub.f32 %v5505, %v5506
      %v5508 = vand.u32 %v5507, 4294901760
      %5509 = vmatpush1.xpose.msra.mxu0 %v5508
      %5510 = vmatprep.subr.mxu0 0.0
      %v5511 = vand.u32 %v5283, 4294901760
      %v5512 = vsub.f32 %v5283, %v5511
      %v5513 = vand.u32 %v5512, 4294901760
      %v5514 = vsub.f32 %v5512, %v5513
      %v5515 = vand.u32 %v5514, 4294901760
      %5516 = vmatpush1.xpose.msra.mxu0 %v5515
      %5517 = vmatprep.subr.mxu0 0.0
      %v5518 = vand.u32 %v5286, 4294901760
      %v5519 = vsub.f32 %v5286, %v5518
      %v5520 = vand.u32 %v5519, 4294901760
      %v5521 = vsub.f32 %v5519, %v5520
      %v5522 = vand.u32 %v5521, 4294901760
      %5523 = vmatpush1.xpose.msra.mxu0 %v5522
      %5524 = vmatprep.subr.mxu0 0.0
      %v5525 = vand.u32 %v5289, 4294901760
      %v5526 = vsub.f32 %v5289, %v5525
      %v5527 = vand.u32 %v5526, 4294901760
      %v5528 = vsub.f32 %v5526, %v5527
      %v5529 = vand.u32 %v5528, 4294901760
      %5530 = vmatpush1.xpose.msra.mxu0 %v5529
      %5531 = vmatprep.subr.mxu0 0.0
      %v5532 = vand.u32 %v5292, 4294901760
      %v5533 = vsub.f32 %v5292, %v5532
      %v5534 = vand.u32 %v5533, 4294901760
      %v5535 = vsub.f32 %v5533, %v5534
      %v5536 = vand.u32 %v5535, 4294901760
      %5537 = vmatpush1.xpose.msra.mxu0 %v5536
      %5538 = vmatprep.subr.mxu0 0.0
      %v5539 = vand.u32 %v5295, 4294901760
      %v5540 = vsub.f32 %v5295, %v5539
      %v5541 = vand.u32 %v5540, 4294901760
      %v5542 = vsub.f32 %v5540, %v5541
      %v5543 = vand.u32 %v5542, 4294901760
      %5544 = vmatpush1.xpose.msra.mxu0 %v5543
      %5545 = vmatprep.subr.mxu0 0.0
      %v5546 = vand.u32 %v5298, 4294901760
      %v5547 = vsub.f32 %v5298, %v5546
      %v5548 = vand.u32 %v5547, 4294901760
      %v5549 = vsub.f32 %v5547, %v5548
      %v5550 = vand.u32 %v5549, 4294901760
      %5551 = vmatpush1.xpose.msra.mxu0 %v5550
      %5552 = vmatprep.subr.mxu0 0.0
      %v5553 = vand.u32 %v5301, 4294901760
      %v5554 = vsub.f32 %v5301, %v5553
      %v5555 = vand.u32 %v5554, 4294901760
      %v5556 = vsub.f32 %v5554, %v5555
      %v5557 = vand.u32 %v5556, 4294901760
      %5558 = vmatpush1.xpose.msra.mxu0 %v5557
      %5559 = vmatprep.subr.mxu0 0.0
      %v5560 = vand.u32 %v5304, 4294901760
      %v5561 = vsub.f32 %v5304, %v5560
      %v5562 = vand.u32 %v5561, 4294901760
      %v5563 = vsub.f32 %v5561, %v5562
      %v5564 = vand.u32 %v5563, 4294901760
      %5565 = vmatpush1.xpose.msra.mxu0 %v5564
      %5566 = vmatprep.subr.mxu0 0.0
      %v5567 = vand.u32 %v5307, 4294901760
      %v5568 = vsub.f32 %v5307, %v5567
      %v5569 = vand.u32 %v5568, 4294901760
      %v5570 = vsub.f32 %v5568, %v5569
      %v5571 = vand.u32 %v5570, 4294901760
      %5572 = vmatpush1.xpose.msra.mxu0 %v5571
      %5573 = vmatprep.subr.mxu0 0.0
      %v5574 = vand.u32 %v5310, 4294901760
      %v5575 = vsub.f32 %v5310, %v5574
      %v5576 = vand.u32 %v5575, 4294901760
      %v5577 = vsub.f32 %v5575, %v5576
      %v5578 = vand.u32 %v5577, 4294901760
      %5579 = vmatpush1.xpose.msra.mxu0 %v5578
      %5580 = vmatprep.subr.mxu0 0.0
      %v5581 = vand.u32 %v5313, 4294901760
      %v5582 = vsub.f32 %v5313, %v5581
      %v5583 = vand.u32 %v5582, 4294901760
      %v5584 = vsub.f32 %v5582, %v5583
      %v5585 = vand.u32 %v5584, 4294901760
      %5586 = vmatpush1.xpose.msra.mxu0 %v5585
      %5587 = vmatprep.subr.mxu0 0.0
      %v5588 = vand.u32 %v5316, 4294901760
      %v5589 = vsub.f32 %v5316, %v5588
      %v5590 = vand.u32 %v5589, 4294901760
      %v5591 = vsub.f32 %v5589, %v5590
      %v5592 = vand.u32 %v5591, 4294901760
      %5593 = vmatpush1.xpose.msra.mxu0 %v5592
      %5594 = vmatprep.subr.mxu0 0.0
      %v5595 = vand.u32 %v5319, 4294901760
      %v5596 = vsub.f32 %v5319, %v5595
      %v5597 = vand.u32 %v5596, 4294901760
      %v5598 = vsub.f32 %v5596, %v5597
      %v5599 = vand.u32 %v5598, 4294901760
      %5600 = vmatpush1.xpose.msra.mxu0 %v5599
      %5601 = vmatprep.subr.mxu0 0.0
      %v5602 = vand.u32 %v5322, 4294901760
      %v5603 = vsub.f32 %v5322, %v5602
      %v5604 = vand.u32 %v5603, 4294901760
      %v5605 = vsub.f32 %v5603, %v5604
      %v5606 = vand.u32 %v5605, 4294901760
      %5607 = vmatpush1.xpose.msra.mxu0 %v5606
      %5608 = vmatprep.subr.mxu0 0.0
      %v5609 = vand.u32 %v5325, 4294901760
      %v5610 = vsub.f32 %v5325, %v5609
      %v5611 = vand.u32 %v5610, 4294901760
      %v5612 = vsub.f32 %v5610, %v5611
      %v5613 = vand.u32 %v5612, 4294901760
      %5614 = vmatpush1.xpose.msra.mxu0 %v5613
      %5615 = vmatprep.subr.mxu0 0.0
      %v5616 = vand.u32 %v5328, 4294901760
      %v5617 = vsub.f32 %v5328, %v5616
      %v5618 = vand.u32 %v5617, 4294901760
      %v5619 = vsub.f32 %v5617, %v5618
      %v5620 = vand.u32 %v5619, 4294901760
      %5621 = vmatpush1.xpose.msra.mxu0 %v5620
      %5622 = vmatprep.subr.mxu0 0.0
      %v5623 = vand.u32 %v5331, 4294901760
      %v5624 = vsub.f32 %v5331, %v5623
      %v5625 = vand.u32 %v5624, 4294901760
      %v5626 = vsub.f32 %v5624, %v5625
      %v5627 = vand.u32 %v5626, 4294901760
      %5628 = vmatpush1.xpose.msra.mxu0 %v5627
      %5629 = vmatprep.subr.mxu0 0.0
      %v5630 = vand.u32 %v5334, 4294901760
      %v5631 = vsub.f32 %v5334, %v5630
      %v5632 = vand.u32 %v5631, 4294901760
      %v5633 = vsub.f32 %v5631, %v5632
      %v5634 = vand.u32 %v5633, 4294901760
      %5635 = vmatpush1.xpose.msra.mxu0 %v5634
      %5636 = vmatprep.subr.mxu0 0.0
      %v5637 = vand.u32 %v5337, 4294901760
      %v5638 = vsub.f32 %v5337, %v5637
      %v5639 = vand.u32 %v5638, 4294901760
      %v5640 = vsub.f32 %v5638, %v5639
      %v5641 = vand.u32 %v5640, 4294901760
      %5642 = vmatpush1.xpose.msra.mxu0 %v5641
      %5643 = vmatprep.subr.mxu0 0.0
      %v5644 = vand.u32 %v5340, 4294901760
      %v5645 = vsub.f32 %v5340, %v5644
      %v5646 = vand.u32 %v5645, 4294901760
      %v5647 = vsub.f32 %v5645, %v5646
      %v5648 = vand.u32 %v5647, 4294901760
      %5649 = vmatpush1.xpose.msra.mxu0 %v5648
      %5650 = vmatprep.subr.mxu0 0.0
      %v5651 = vand.u32 %v5343, 4294901760
      %v5652 = vsub.f32 %v5343, %v5651
      %v5653 = vand.u32 %v5652, 4294901760
      %v5654 = vsub.f32 %v5652, %v5653
      %v5655 = vand.u32 %v5654, 4294901760
      %5656 = vmatpush1.xpose.msra.mxu0 %v5655
      %5657 = vmatprep.subr.mxu0 0.0
      %v5658 = vand.u32 %v5346, 4294901760
      %v5659 = vsub.f32 %v5346, %v5658
      %v5660 = vand.u32 %v5659, 4294901760
      %v5661 = vsub.f32 %v5659, %v5660
      %v5662 = vand.u32 %v5661, 4294901760
      %5663 = vmatpush1.xpose.msra.mxu0 %v5662
      %5664 = vmatprep.subr.mxu0 0.0
      %v5665 = vand.u32 %v5349, 4294901760
      %v5666 = vsub.f32 %v5349, %v5665
      %v5667 = vand.u32 %v5666, 4294901760
      %v5668 = vsub.f32 %v5666, %v5667
      %v5669 = vand.u32 %v5668, 4294901760
      %5670 = vmatpush1.xpose.msra.mxu0 %v5669
      %5671 = vmatprep.subr.mxu0 0.0
      %v5672 = vand.u32 %v5352, 4294901760
      %v5673 = vsub.f32 %v5352, %v5672
      %v5674 = vand.u32 %v5673, 4294901760
      %v5675 = vsub.f32 %v5673, %v5674
      %v5676 = vand.u32 %v5675, 4294901760
      %5677 = vmatpush1.xpose.msra.mxu0 %v5676
      %5678 = vmatprep.subr.mxu0 0.0
      %v5679 = vand.u32 %v5355, 4294901760
      %v5680 = vsub.f32 %v5355, %v5679
      %v5681 = vand.u32 %v5680, 4294901760
      %v5682 = vsub.f32 %v5680, %v5681
      %v5683 = vand.u32 %v5682, 4294901760
      %5684 = vmatpush1.xpose.msra.mxu0 %v5683
      %5685 = vmatprep.subr.mxu0 0.0
      %v5686 = vand.u32 %v5358, 4294901760
      %v5687 = vsub.f32 %v5358, %v5686
      %v5688 = vand.u32 %v5687, 4294901760
      %v5689 = vsub.f32 %v5687, %v5688
      %v5690 = vand.u32 %v5689, 4294901760
      %5691 = vmatpush1.xpose.msra.mxu0 %v5690
      %5692 = vmatprep.mubr.f32.mxu0 0.0
      %v5693 = vand.u32 %v5262, 4294901760
      %5694 = vmatmul.mubr.f32.gmra.mrb[0].mxu0 %v5693
      %v5695 = vpop.f32.mrb[0].mxu0
      %v5696 = vadd.f32 %v5464, %v5695
      %v5697 = vpop.f32.mrb[0].mxu0
      %v5698 = vadd.f32 %v5466, %v5697
      %5699 = vdwg.mxu0
      %5700 = vmatprep.subr.mxu0 0.0
      %v5701 = vand.u32 %v5265, 4294901760
      %v5702 = vsub.f32 %v5265, %v5701
      %5703 = vmatpush1.xpose.msra.mxu0 %v5702
      %5704 = vmatprep.subr.mxu0 0.0
      %v5705 = vand.u32 %v5268, 4294901760
      %v5706 = vsub.f32 %v5268, %v5705
      %5707 = vmatpush1.xpose.msra.mxu0 %v5706
      %5708 = vmatprep.subr.mxu0 0.0
      %v5709 = vand.u32 %v5271, 4294901760
      %v5710 = vsub.f32 %v5271, %v5709
      %5711 = vmatpush1.xpose.msra.mxu0 %v5710
      %5712 = vmatprep.subr.mxu0 0.0
      %v5713 = vand.u32 %v5274, 4294901760
      %v5714 = vsub.f32 %v5274, %v5713
      %5715 = vmatpush1.xpose.msra.mxu0 %v5714
      %5716 = vmatprep.subr.mxu0 0.0
      %v5717 = vand.u32 %v5277, 4294901760
      %v5718 = vsub.f32 %v5277, %v5717
      %5719 = vmatpush1.xpose.msra.mxu0 %v5718
      %5720 = vmatprep.subr.mxu0 0.0
      %v5721 = vand.u32 %v5280, 4294901760
      %v5722 = vsub.f32 %v5280, %v5721
      %5723 = vmatpush1.xpose.msra.mxu0 %v5722
      %5724 = vmatprep.subr.mxu0 0.0
      %v5725 = vand.u32 %v5283, 4294901760
      %v5726 = vsub.f32 %v5283, %v5725
      %5727 = vmatpush1.xpose.msra.mxu0 %v5726
      %5728 = vmatprep.subr.mxu0 0.0
      %v5729 = vand.u32 %v5286, 4294901760
      %v5730 = vsub.f32 %v5286, %v5729
      %5731 = vmatpush1.xpose.msra.mxu0 %v5730
      %5732 = vmatprep.subr.mxu0 0.0
      %v5733 = vand.u32 %v5289, 4294901760
      %v5734 = vsub.f32 %v5289, %v5733
      %5735 = vmatpush1.xpose.msra.mxu0 %v5734
      %5736 = vmatprep.subr.mxu0 0.0
      %v5737 = vand.u32 %v5292, 4294901760
      %v5738 = vsub.f32 %v5292, %v5737
      %5739 = vmatpush1.xpose.msra.mxu0 %v5738
      %5740 = vmatprep.subr.mxu0 0.0
      %v5741 = vand.u32 %v5295, 4294901760
      %v5742 = vsub.f32 %v5295, %v5741
      %5743 = vmatpush1.xpose.msra.mxu0 %v5742
      %5744 = vmatprep.subr.mxu0 0.0
      %v5745 = vand.u32 %v5298, 4294901760
      %v5746 = vsub.f32 %v5298, %v5745
      %5747 = vmatpush1.xpose.msra.mxu0 %v5746
      %5748 = vmatprep.subr.mxu0 0.0
      %v5749 = vand.u32 %v5301, 4294901760
      %v5750 = vsub.f32 %v5301, %v5749
      %5751 = vmatpush1.xpose.msra.mxu0 %v5750
      %5752 = vmatprep.subr.mxu0 0.0
      %v5753 = vand.u32 %v5304, 4294901760
      %v5754 = vsub.f32 %v5304, %v5753
      %5755 = vmatpush1.xpose.msra.mxu0 %v5754
      %5756 = vmatprep.subr.mxu0 0.0
      %v5757 = vand.u32 %v5307, 4294901760
      %v5758 = vsub.f32 %v5307, %v5757
      %5759 = vmatpush1.xpose.msra.mxu0 %v5758
      %5760 = vmatprep.subr.mxu0 0.0
      %v5761 = vand.u32 %v5310, 4294901760
      %v5762 = vsub.f32 %v5310, %v5761
      %5763 = vmatpush1.xpose.msra.mxu0 %v5762
      %5764 = vmatprep.subr.mxu0 0.0
      %v5765 = vand.u32 %v5313, 4294901760
      %v5766 = vsub.f32 %v5313, %v5765
      %5767 = vmatpush1.xpose.msra.mxu0 %v5766
      %5768 = vmatprep.subr.mxu0 0.0
      %v5769 = vand.u32 %v5316, 4294901760
      %v5770 = vsub.f32 %v5316, %v5769
      %5771 = vmatpush1.xpose.msra.mxu0 %v5770
      %5772 = vmatprep.subr.mxu0 0.0
      %v5773 = vand.u32 %v5319, 4294901760
      %v5774 = vsub.f32 %v5319, %v5773
      %5775 = vmatpush1.xpose.msra.mxu0 %v5774
      %5776 = vmatprep.subr.mxu0 0.0
      %v5777 = vand.u32 %v5322, 4294901760
      %v5778 = vsub.f32 %v5322, %v5777
      %5779 = vmatpush1.xpose.msra.mxu0 %v5778
      %5780 = vmatprep.subr.mxu0 0.0
      %v5781 = vand.u32 %v5325, 4294901760
      %v5782 = vsub.f32 %v5325, %v5781
      %5783 = vmatpush1.xpose.msra.mxu0 %v5782
      %5784 = vmatprep.subr.mxu0 0.0
      %v5785 = vand.u32 %v5328, 4294901760
      %v5786 = vsub.f32 %v5328, %v5785
      %5787 = vmatpush1.xpose.msra.mxu0 %v5786
      %5788 = vmatprep.subr.mxu0 0.0
      %v5789 = vand.u32 %v5331, 4294901760
      %v5790 = vsub.f32 %v5331, %v5789
      %5791 = vmatpush1.xpose.msra.mxu0 %v5790
      %5792 = vmatprep.subr.mxu0 0.0
      %v5793 = vand.u32 %v5334, 4294901760
      %v5794 = vsub.f32 %v5334, %v5793
      %5795 = vmatpush1.xpose.msra.mxu0 %v5794
      %5796 = vmatprep.subr.mxu0 0.0
      %v5797 = vand.u32 %v5337, 4294901760
      %v5798 = vsub.f32 %v5337, %v5797
      %5799 = vmatpush1.xpose.msra.mxu0 %v5798
      %5800 = vmatprep.subr.mxu0 0.0
      %v5801 = vand.u32 %v5340, 4294901760
      %v5802 = vsub.f32 %v5340, %v5801
      %5803 = vmatpush1.xpose.msra.mxu0 %v5802
      %5804 = vmatprep.subr.mxu0 0.0
      %v5805 = vand.u32 %v5343, 4294901760
      %v5806 = vsub.f32 %v5343, %v5805
      %5807 = vmatpush1.xpose.msra.mxu0 %v5806
      %5808 = vmatprep.subr.mxu0 0.0
      %v5809 = vand.u32 %v5346, 4294901760
      %v5810 = vsub.f32 %v5346, %v5809
      %5811 = vmatpush1.xpose.msra.mxu0 %v5810
      %5812 = vmatprep.subr.mxu0 0.0
      %v5813 = vand.u32 %v5349, 4294901760
      %v5814 = vsub.f32 %v5349, %v5813
      %5815 = vmatpush1.xpose.msra.mxu0 %v5814
      %5816 = vmatprep.subr.mxu0 0.0
      %v5817 = vand.u32 %v5352, 4294901760
      %v5818 = vsub.f32 %v5352, %v5817
      %5819 = vmatpush1.xpose.msra.mxu0 %v5818
      %5820 = vmatprep.subr.mxu0 0.0
      %v5821 = vand.u32 %v5355, 4294901760
      %v5822 = vsub.f32 %v5355, %v5821
      %5823 = vmatpush1.xpose.msra.mxu0 %v5822
      %5824 = vmatprep.subr.mxu0 0.0
      %v5825 = vand.u32 %v5358, 4294901760
      %v5826 = vsub.f32 %v5358, %v5825
      %5827 = vmatpush1.xpose.msra.mxu0 %v5826
      %5828 = vmatprep.mubr.f32.mxu0 0.0
      %v5829 = vand.u32 %v5262, 4294901760
      %v5830 = vsub.f32 %v5262, %v5829
      %5831 = vmatmul.mubr.f32.gmra.mrb[0].mxu0 %v5830
      %v5832 = vpop.f32.mrb[0].mxu0
      %v5833 = vadd.f32 %v5696, %v5832
      %v5834 = vpop.f32.mrb[0].mxu0
      %v5835 = vadd.f32 %v5698, %v5834
      %5836 = vdwg.mxu0
      %5837 = vmatprep.subr.mxu0 0.0
      %v5838 = vand.u32 %v5265, 4294901760
      %5839 = vmatpush1.xpose.msra.mxu0 %v5838
      %5840 = vmatprep.subr.mxu0 0.0
      %v5841 = vand.u32 %v5268, 4294901760
      %5842 = vmatpush1.xpose.msra.mxu0 %v5841
      %5843 = vmatprep.subr.mxu0 0.0
      %v5844 = vand.u32 %v5271, 4294901760
      %5845 = vmatpush1.xpose.msra.mxu0 %v5844
      %5846 = vmatprep.subr.mxu0 0.0
      %v5847 = vand.u32 %v5274, 4294901760
      %5848 = vmatpush1.xpose.msra.mxu0 %v5847
      %5849 = vmatprep.subr.mxu0 0.0
      %v5850 = vand.u32 %v5277, 4294901760
      %5851 = vmatpush1.xpose.msra.mxu0 %v5850
      %5852 = vmatprep.subr.mxu0 0.0
      %v5853 = vand.u32 %v5280, 4294901760
      %5854 = vmatpush1.xpose.msra.mxu0 %v5853
      %5855 = vmatprep.subr.mxu0 0.0
      %v5856 = vand.u32 %v5283, 4294901760
      %5857 = vmatpush1.xpose.msra.mxu0 %v5856
      %5858 = vmatprep.subr.mxu0 0.0
      %v5859 = vand.u32 %v5286, 4294901760
      %5860 = vmatpush1.xpose.msra.mxu0 %v5859
      %5861 = vmatprep.subr.mxu0 0.0
      %v5862 = vand.u32 %v5289, 4294901760
      %5863 = vmatpush1.xpose.msra.mxu0 %v5862
      %5864 = vmatprep.subr.mxu0 0.0
      %v5865 = vand.u32 %v5292, 4294901760
      %5866 = vmatpush1.xpose.msra.mxu0 %v5865
      %5867 = vmatprep.subr.mxu0 0.0
      %v5868 = vand.u32 %v5295, 4294901760
      %5869 = vmatpush1.xpose.msra.mxu0 %v5868
      %5870 = vmatprep.subr.mxu0 0.0
      %v5871 = vand.u32 %v5298, 4294901760
      %5872 = vmatpush1.xpose.msra.mxu0 %v5871
      %5873 = vmatprep.subr.mxu0 0.0
      %v5874 = vand.u32 %v5301, 4294901760
      %5875 = vmatpush1.xpose.msra.mxu0 %v5874
      %5876 = vmatprep.subr.mxu0 0.0
      %v5877 = vand.u32 %v5304, 4294901760
      %5878 = vmatpush1.xpose.msra.mxu0 %v5877
      %5879 = vmatprep.subr.mxu0 0.0
      %v5880 = vand.u32 %v5307, 4294901760
      %5881 = vmatpush1.xpose.msra.mxu0 %v5880
      %5882 = vmatprep.subr.mxu0 0.0
      %v5883 = vand.u32 %v5310, 4294901760
      %5884 = vmatpush1.xpose.msra.mxu0 %v5883
      %5885 = vmatprep.subr.mxu0 0.0
      %v5886 = vand.u32 %v5313, 4294901760
      %5887 = vmatpush1.xpose.msra.mxu0 %v5886
      %5888 = vmatprep.subr.mxu0 0.0
      %v5889 = vand.u32 %v5316, 4294901760
      %5890 = vmatpush1.xpose.msra.mxu0 %v5889
      %5891 = vmatprep.subr.mxu0 0.0
      %v5892 = vand.u32 %v5319, 4294901760
      %5893 = vmatpush1.xpose.msra.mxu0 %v5892
      %5894 = vmatprep.subr.mxu0 0.0
      %v5895 = vand.u32 %v5322, 4294901760
      %5896 = vmatpush1.xpose.msra.mxu0 %v5895
      %5897 = vmatprep.subr.mxu0 0.0
      %v5898 = vand.u32 %v5325, 4294901760
      %5899 = vmatpush1.xpose.msra.mxu0 %v5898
      %5900 = vmatprep.subr.mxu0 0.0
      %v5901 = vand.u32 %v5328, 4294901760
      %5902 = vmatpush1.xpose.msra.mxu0 %v5901
      %5903 = vmatprep.subr.mxu0 0.0
      %v5904 = vand.u32 %v5331, 4294901760
      %5905 = vmatpush1.xpose.msra.mxu0 %v5904
      %5906 = vmatprep.subr.mxu0 0.0
      %v5907 = vand.u32 %v5334, 4294901760
      %5908 = vmatpush1.xpose.msra.mxu0 %v5907
      %5909 = vmatprep.subr.mxu0 0.0
      %v5910 = vand.u32 %v5337, 4294901760
      %5911 = vmatpush1.xpose.msra.mxu0 %v5910
      %5912 = vmatprep.subr.mxu0 0.0
      %v5913 = vand.u32 %v5340, 4294901760
      %5914 = vmatpush1.xpose.msra.mxu0 %v5913
      %5915 = vmatprep.subr.mxu0 0.0
      %v5916 = vand.u32 %v5343, 4294901760
      %5917 = vmatpush1.xpose.msra.mxu0 %v5916
      %5918 = vmatprep.subr.mxu0 0.0
      %v5919 = vand.u32 %v5346, 4294901760
      %5920 = vmatpush1.xpose.msra.mxu0 %v5919
      %5921 = vmatprep.subr.mxu0 0.0
      %v5922 = vand.u32 %v5349, 4294901760
      %5923 = vmatpush1.xpose.msra.mxu0 %v5922
      %5924 = vmatprep.subr.mxu0 0.0
      %v5925 = vand.u32 %v5352, 4294901760
      %5926 = vmatpush1.xpose.msra.mxu0 %v5925
      %5927 = vmatprep.subr.mxu0 0.0
      %v5928 = vand.u32 %v5355, 4294901760
      %5929 = vmatpush1.xpose.msra.mxu0 %v5928
      %5930 = vmatprep.subr.mxu0 0.0
      %v5931 = vand.u32 %v5358, 4294901760
      %5932 = vmatpush1.xpose.msra.mxu0 %v5931
      %5933 = vmatprep.mubr.f32.mxu0 0.0
      %v5934 = vand.u32 %v5262, 4294901760
      %v5935 = vsub.f32 %v5262, %v5934
      %v5936 = vand.u32 %v5935, 4294901760
      %5937 = vmatmul.mubr.f32.gmra.mrb[0].mxu0 %v5936
      %v5938 = vpop.f32.mrb[0].mxu0
      %v5939 = vadd.f32 %v5833, %v5938
      %v5940 = vpop.f32.mrb[0].mxu0
      %v5941 = vadd.f32 %v5835, %v5940
      %5942 = vdwg.mxu0
      %5943 = vmatprep.subr.mxu0 0.0
      %v5944 = vand.u32 %v5265, 4294901760
      %v5945 = vsub.f32 %v5265, %v5944
      %v5946 = vand.u32 %v5945, 4294901760
      %5947 = vmatpush1.xpose.msra.mxu0 %v5946
      %5948 = vmatprep.subr.mxu0 0.0
      %v5949 = vand.u32 %v5268, 4294901760
      %v5950 = vsub.f32 %v5268, %v5949
      %v5951 = vand.u32 %v5950, 4294901760
      %5952 = vmatpush1.xpose.msra.mxu0 %v5951
      %5953 = vmatprep.subr.mxu0 0.0
      %v5954 = vand.u32 %v5271, 4294901760
      %v5955 = vsub.f32 %v5271, %v5954
      %v5956 = vand.u32 %v5955, 4294901760
      %5957 = vmatpush1.xpose.msra.mxu0 %v5956
      %5958 = vmatprep.subr.mxu0 0.0
      %v5959 = vand.u32 %v5274, 4294901760
      %v5960 = vsub.f32 %v5274, %v5959
      %v5961 = vand.u32 %v5960, 4294901760
      %5962 = vmatpush1.xpose.msra.mxu0 %v5961
      %5963 = vmatprep.subr.mxu0 0.0
      %v5964 = vand.u32 %v5277, 4294901760
      %v5965 = vsub.f32 %v5277, %v5964
      %v5966 = vand.u32 %v5965, 4294901760
      %5967 = vmatpush1.xpose.msra.mxu0 %v5966
      %5968 = vmatprep.subr.mxu0 0.0
      %v5969 = vand.u32 %v5280, 4294901760
      %v5970 = vsub.f32 %v5280, %v5969
      %v5971 = vand.u32 %v5970, 4294901760
      %5972 = vmatpush1.xpose.msra.mxu0 %v5971
      %5973 = vmatprep.subr.mxu0 0.0
      %v5974 = vand.u32 %v5283, 4294901760
      %v5975 = vsub.f32 %v5283, %v5974
      %v5976 = vand.u32 %v5975, 4294901760
      %5977 = vmatpush1.xpose.msra.mxu0 %v5976
      %5978 = vmatprep.subr.mxu0 0.0
      %v5979 = vand.u32 %v5286, 4294901760
      %v5980 = vsub.f32 %v5286, %v5979
      %v5981 = vand.u32 %v5980, 4294901760
      %5982 = vmatpush1.xpose.msra.mxu0 %v5981
      %5983 = vmatprep.subr.mxu0 0.0
      %v5984 = vand.u32 %v5289, 4294901760
      %v5985 = vsub.f32 %v5289, %v5984
      %v5986 = vand.u32 %v5985, 4294901760
      %5987 = vmatpush1.xpose.msra.mxu0 %v5986
      %5988 = vmatprep.subr.mxu0 0.0
      %v5989 = vand.u32 %v5292, 4294901760
      %v5990 = vsub.f32 %v5292, %v5989
      %v5991 = vand.u32 %v5990, 4294901760
      %5992 = vmatpush1.xpose.msra.mxu0 %v5991
      %5993 = vmatprep.subr.mxu0 0.0
      %v5994 = vand.u32 %v5295, 4294901760
      %v5995 = vsub.f32 %v5295, %v5994
      %v5996 = vand.u32 %v5995, 4294901760
      %5997 = vmatpush1.xpose.msra.mxu0 %v5996
      %5998 = vmatprep.subr.mxu0 0.0
      %v5999 = vand.u32 %v5298, 4294901760
      %v6000 = vsub.f32 %v5298, %v5999
      %v6001 = vand.u32 %v6000, 4294901760
      %6002 = vmatpush1.xpose.msra.mxu0 %v6001
      %6003 = vmatprep.subr.mxu0 0.0
      %v6004 = vand.u32 %v5301, 4294901760
      %v6005 = vsub.f32 %v5301, %v6004
      %v6006 = vand.u32 %v6005, 4294901760
      %6007 = vmatpush1.xpose.msra.mxu0 %v6006
      %6008 = vmatprep.subr.mxu0 0.0
      %v6009 = vand.u32 %v5304, 4294901760
      %v6010 = vsub.f32 %v5304, %v6009
      %v6011 = vand.u32 %v6010, 4294901760
      %6012 = vmatpush1.xpose.msra.mxu0 %v6011
      %6013 = vmatprep.subr.mxu0 0.0
      %v6014 = vand.u32 %v5307, 4294901760
      %v6015 = vsub.f32 %v5307, %v6014
      %v6016 = vand.u32 %v6015, 4294901760
      %6017 = vmatpush1.xpose.msra.mxu0 %v6016
      %6018 = vmatprep.subr.mxu0 0.0
      %v6019 = vand.u32 %v5310, 4294901760
      %v6020 = vsub.f32 %v5310, %v6019
      %v6021 = vand.u32 %v6020, 4294901760
      %6022 = vmatpush1.xpose.msra.mxu0 %v6021
      %6023 = vmatprep.subr.mxu0 0.0
      %v6024 = vand.u32 %v5313, 4294901760
      %v6025 = vsub.f32 %v5313, %v6024
      %v6026 = vand.u32 %v6025, 4294901760
      %6027 = vmatpush1.xpose.msra.mxu0 %v6026
      %6028 = vmatprep.subr.mxu0 0.0
      %v6029 = vand.u32 %v5316, 4294901760
      %v6030 = vsub.f32 %v5316, %v6029
      %v6031 = vand.u32 %v6030, 4294901760
      %6032 = vmatpush1.xpose.msra.mxu0 %v6031
      %6033 = vmatprep.subr.mxu0 0.0
      %v6034 = vand.u32 %v5319, 4294901760
      %v6035 = vsub.f32 %v5319, %v6034
      %v6036 = vand.u32 %v6035, 4294901760
      %6037 = vmatpush1.xpose.msra.mxu0 %v6036
      %6038 = vmatprep.subr.mxu0 0.0
      %v6039 = vand.u32 %v5322, 4294901760
      %v6040 = vsub.f32 %v5322, %v6039
      %v6041 = vand.u32 %v6040, 4294901760
      %6042 = vmatpush1.xpose.msra.mxu0 %v6041
      %6043 = vmatprep.subr.mxu0 0.0
      %v6044 = vand.u32 %v5325, 4294901760
      %v6045 = vsub.f32 %v5325, %v6044
      %v6046 = vand.u32 %v6045, 4294901760
      %6047 = vmatpush1.xpose.msra.mxu0 %v6046
      %6048 = vmatprep.subr.mxu0 0.0
      %v6049 = vand.u32 %v5328, 4294901760
      %v6050 = vsub.f32 %v5328, %v6049
      %v6051 = vand.u32 %v6050, 4294901760
      %6052 = vmatpush1.xpose.msra.mxu0 %v6051
      %6053 = vmatprep.subr.mxu0 0.0
      %v6054 = vand.u32 %v5331, 4294901760
      %v6055 = vsub.f32 %v5331, %v6054
      %v6056 = vand.u32 %v6055, 4294901760
      %6057 = vmatpush1.xpose.msra.mxu0 %v6056
      %6058 = vmatprep.subr.mxu0 0.0
      %v6059 = vand.u32 %v5334, 4294901760
      %v6060 = vsub.f32 %v5334, %v6059
      %v6061 = vand.u32 %v6060, 4294901760
      %6062 = vmatpush1.xpose.msra.mxu0 %v6061
      %6063 = vmatprep.subr.mxu0 0.0
      %v6064 = vand.u32 %v5337, 4294901760
      %v6065 = vsub.f32 %v5337, %v6064
      %v6066 = vand.u32 %v6065, 4294901760
      %6067 = vmatpush1.xpose.msra.mxu0 %v6066
      %6068 = vmatprep.subr.mxu0 0.0
      %v6069 = vand.u32 %v5340, 4294901760
      %v6070 = vsub.f32 %v5340, %v6069
      %v6071 = vand.u32 %v6070, 4294901760
      %6072 = vmatpush1.xpose.msra.mxu0 %v6071
      %6073 = vmatprep.subr.mxu0 0.0
      %v6074 = vand.u32 %v5343, 4294901760
      %v6075 = vsub.f32 %v5343, %v6074
      %v6076 = vand.u32 %v6075, 4294901760
      %6077 = vmatpush1.xpose.msra.mxu0 %v6076
      %6078 = vmatprep.subr.mxu0 0.0
      %v6079 = vand.u32 %v5346, 4294901760
      %v6080 = vsub.f32 %v5346, %v6079
      %v6081 = vand.u32 %v6080, 4294901760
      %6082 = vmatpush1.xpose.msra.mxu0 %v6081
      %6083 = vmatprep.subr.mxu0 0.0
      %v6084 = vand.u32 %v5349, 4294901760
      %v6085 = vsub.f32 %v5349, %v6084
      %v6086 = vand.u32 %v6085, 4294901760
      %6087 = vmatpush1.xpose.msra.mxu0 %v6086
      %6088 = vmatprep.subr.mxu0 0.0
      %v6089 = vand.u32 %v5352, 4294901760
      %v6090 = vsub.f32 %v5352, %v6089
      %v6091 = vand.u32 %v6090, 4294901760
      %6092 = vmatpush1.xpose.msra.mxu0 %v6091
      %6093 = vmatprep.subr.mxu0 0.0
      %v6094 = vand.u32 %v5355, 4294901760
      %v6095 = vsub.f32 %v5355, %v6094
      %v6096 = vand.u32 %v6095, 4294901760
      %6097 = vmatpush1.xpose.msra.mxu0 %v6096
      %6098 = vmatprep.subr.mxu0 0.0
      %v6099 = vand.u32 %v5358, 4294901760
      %v6100 = vsub.f32 %v5358, %v6099
      %v6101 = vand.u32 %v6100, 4294901760
      %6102 = vmatpush1.xpose.msra.mxu0 %v6101
      %6103 = vmatprep.mubr.f32.mxu0 0.0
      %v6104 = vand.u32 %v5262, 4294901760
      %6105 = vmatmul.mubr.f32.gmra.mrb[0].mxu0 %v6104
      %v6106 = vpop.f32.mrb[0].mxu0
      %v6107 = vadd.f32 %v5939, %v6106
      %v6108 = vpop.f32.mrb[0].mxu0
      %v6109 = vadd.f32 %v5941, %v6108
      %6110 = vdwg.mxu0
      %6111 = vmatprep.subr.mxu0 0.0
      %v6112 = vand.u32 %v5265, 4294901760
      %6113 = vmatpush1.xpose.msra.mxu0 %v6112
      %6114 = vmatprep.subr.mxu0 0.0
      %v6115 = vand.u32 %v5268, 4294901760
      %6116 = vmatpush1.xpose.msra.mxu0 %v6115
      %6117 = vmatprep.subr.mxu0 0.0
      %v6118 = vand.u32 %v5271, 4294901760
      %6119 = vmatpush1.xpose.msra.mxu0 %v6118
      %6120 = vmatprep.subr.mxu0 0.0
      %v6121 = vand.u32 %v5274, 4294901760
      %6122 = vmatpush1.xpose.msra.mxu0 %v6121
      %6123 = vmatprep.subr.mxu0 0.0
      %v6124 = vand.u32 %v5277, 4294901760
      %6125 = vmatpush1.xpose.msra.mxu0 %v6124
      %6126 = vmatprep.subr.mxu0 0.0
      %v6127 = vand.u32 %v5280, 4294901760
      %6128 = vmatpush1.xpose.msra.mxu0 %v6127
      %6129 = vmatprep.subr.mxu0 0.0
      %v6130 = vand.u32 %v5283, 4294901760
      %6131 = vmatpush1.xpose.msra.mxu0 %v6130
      %6132 = vmatprep.subr.mxu0 0.0
      %v6133 = vand.u32 %v5286, 4294901760
      %6134 = vmatpush1.xpose.msra.mxu0 %v6133
      %6135 = vmatprep.subr.mxu0 0.0
      %v6136 = vand.u32 %v5289, 4294901760
      %6137 = vmatpush1.xpose.msra.mxu0 %v6136
      %6138 = vmatprep.subr.mxu0 0.0
      %v6139 = vand.u32 %v5292, 4294901760
      %6140 = vmatpush1.xpose.msra.mxu0 %v6139
      %6141 = vmatprep.subr.mxu0 0.0
      %v6142 = vand.u32 %v5295, 4294901760
      %6143 = vmatpush1.xpose.msra.mxu0 %v6142
      %6144 = vmatprep.subr.mxu0 0.0
      %v6145 = vand.u32 %v5298, 4294901760
      %6146 = vmatpush1.xpose.msra.mxu0 %v6145
      %6147 = vmatprep.subr.mxu0 0.0
      %v6148 = vand.u32 %v5301, 4294901760
      %6149 = vmatpush1.xpose.msra.mxu0 %v6148
      %6150 = vmatprep.subr.mxu0 0.0
      %v6151 = vand.u32 %v5304, 4294901760
      %6152 = vmatpush1.xpose.msra.mxu0 %v6151
      %6153 = vmatprep.subr.mxu0 0.0
      %v6154 = vand.u32 %v5307, 4294901760
      %6155 = vmatpush1.xpose.msra.mxu0 %v6154
      %6156 = vmatprep.subr.mxu0 0.0
      %v6157 = vand.u32 %v5310, 4294901760
      %6158 = vmatpush1.xpose.msra.mxu0 %v6157
      %6159 = vmatprep.subr.mxu0 0.0
      %v6160 = vand.u32 %v5313, 4294901760
      %6161 = vmatpush1.xpose.msra.mxu0 %v6160
      %6162 = vmatprep.subr.mxu0 0.0
      %v6163 = vand.u32 %v5316, 4294901760
      %6164 = vmatpush1.xpose.msra.mxu0 %v6163
      %6165 = vmatprep.subr.mxu0 0.0
      %v6166 = vand.u32 %v5319, 4294901760
      %6167 = vmatpush1.xpose.msra.mxu0 %v6166
      %6168 = vmatprep.subr.mxu0 0.0
      %v6169 = vand.u32 %v5322, 4294901760
      %6170 = vmatpush1.xpose.msra.mxu0 %v6169
      %6171 = vmatprep.subr.mxu0 0.0
      %v6172 = vand.u32 %v5325, 4294901760
      %6173 = vmatpush1.xpose.msra.mxu0 %v6172
      %6174 = vmatprep.subr.mxu0 0.0
      %v6175 = vand.u32 %v5328, 4294901760
      %6176 = vmatpush1.xpose.msra.mxu0 %v6175
      %6177 = vmatprep.subr.mxu0 0.0
      %v6178 = vand.u32 %v5331, 4294901760
      %6179 = vmatpush1.xpose.msra.mxu0 %v6178
      %6180 = vmatprep.subr.mxu0 0.0
      %v6181 = vand.u32 %v5334, 4294901760
      %6182 = vmatpush1.xpose.msra.mxu0 %v6181
      %6183 = vmatprep.subr.mxu0 0.0
      %v6184 = vand.u32 %v5337, 4294901760
      %6185 = vmatpush1.xpose.msra.mxu0 %v6184
      %6186 = vmatprep.subr.mxu0 0.0
      %v6187 = vand.u32 %v5340, 4294901760
      %6188 = vmatpush1.xpose.msra.mxu0 %v6187
      %6189 = vmatprep.subr.mxu0 0.0
      %v6190 = vand.u32 %v5343, 4294901760
      %6191 = vmatpush1.xpose.msra.mxu0 %v6190
      %6192 = vmatprep.subr.mxu0 0.0
      %v6193 = vand.u32 %v5346, 4294901760
      %6194 = vmatpush1.xpose.msra.mxu0 %v6193
      %6195 = vmatprep.subr.mxu0 0.0
      %v6196 = vand.u32 %v5349, 4294901760
      %6197 = vmatpush1.xpose.msra.mxu0 %v6196
      %6198 = vmatprep.subr.mxu0 0.0
      %v6199 = vand.u32 %v5352, 4294901760
      %6200 = vmatpush1.xpose.msra.mxu0 %v6199
      %6201 = vmatprep.subr.mxu0 0.0
      %v6202 = vand.u32 %v5355, 4294901760
      %6203 = vmatpush1.xpose.msra.mxu0 %v6202
      %6204 = vmatprep.subr.mxu0 0.0
      %v6205 = vand.u32 %v5358, 4294901760
      %6206 = vmatpush1.xpose.msra.mxu0 %v6205
      %6207 = vmatprep.mubr.f32.mxu0 0.0
      %v6208 = vand.u32 %v5262, 4294901760
      %6209 = vmatmul.mubr.f32.gmra.mrb[0].mxu0 %v6208
      %v6210 = vpop.f32.mrb[0].mxu0
      %v6211 = vadd.f32 %v6107, %v6210
      %v6212 = vpop.f32.mrb[0].mxu0
      %v6213 = vadd.f32 %v6109, %v6212
      %6214 = vdwg.mxu0
      %v6215 = vmax.f32 %v6211, 0.0
      %v6216 = vmax.f32 %v6213, 0.0
      %v6219 = vcombine.low %v6215, %v6216
      %v6221 = vunpack.c.l.s4 1966171168
      %v6222 = vunpack.c.0.s8 %v6221
      %v6223 = vlaneseq
      %v6224 = vshrl.u32 %v6223, 7
      %v6225 = vsub.s32 %v6222, %v6224
      %v6226 = vrot.slane %v6219, %v6225
      %v6227 = vcombine.high %v6226, %v6226
      %v6229 = vunpack.c.l.s4 1966171168
      %v6230 = vunpack.c.0.s8 %v6229
      %v6231 = vlaneseq
      %v6232 = vshrl.u32 %v6231, 7
      %v6233 = vsub.s32 %v6230, %v6232
      %v6234 = vrot.slane %v6226, %v6233
      %v6236 = vunpack.c.l.s4 1966171168
      %v6237 = vunpack.c.0.s8 %v6236
      %v6238 = vlaneseq
      %v6239 = vshrl.u32 %v6238, 7
      %v6240 = vsub.s32 %v6237, %v6239
      %v6241 = vrot.slane %v6227, %v6240
      %v6242 = vcombine.high %v6234, %v6234
      %v6243 = vcombine.high %v6241, %v6241
      %s6248 = scalar_lea.vmem %s278, 1
      %6249 = vst.msk [vmem:[%s6248] ss:$2 sm:$0x3] %vm315, %v6234
      %s6250 = scalar_lea.vmem %s278, 5
      %6251 = vst.msk [vmem:[%s6250] ss:$2 sm:$0x3] %vm315, %v6241
      %s6252 = scalar_lea.vmem %s278, 9
      %6253 = vst.msk [vmem:[%s6252] ss:$2 sm:$0x3] %vm315, %v6242
      %s6254 = scalar_lea.vmem %s278, 13
      %6255 = vst.msk [vmem:[%s6254] ss:$2 sm:$0x3] %vm315, %v6243
      %p6256 = scmp.lt.s32.totalorder %s18, 1
      %s6257 = scalar_select %p6256, %s18, 1
      %s6258 = smul.addr %s6257, 8
      %s6259 = smul.addr %s6258, 2
      %s6260 = scalar_lea.vmem %s7, %s6259
      // Predicated region
      $region49: #{inverted_residual_forward.1} parent=47 // pred_check
        %p6261 = pneg %p188
      $region50: #{inverted_residual_forward.1} parent=47 // pred_check_branch
        %6263 = sbr.rel (%p6261) target = $region52
      $region51: #{inverted_residual_forward.1} parent=47 // pred_region
        _
      $region52: #{inverted_residual_forward.1} parent=47 // pred_fallthru
        _
    $region48: #{inverted_residual_forward.1} parent=5 // pred_fallthru
      _
    %p6264 = scmp.le.s32.totalorder 2, %s13
    // Predicated region
    $region53: #{inverted_residual_forward.1} parent=5 // pred_check
      %p6265 = pneg %p6264
    $region54: #{inverted_residual_forward.1} parent=5 // pred_check_branch
      %6267 = sbr.rel (%p6265) target = $region56
    $region55: #{inverted_residual_forward.1} parent=5 // pred_region
      %s6268 = ssub.s32 %s13, 2
      // Predicated region
      $region57: #{inverted_residual_forward.1} parent=55 // pred_check
        %p6269 = pneg %p194
      $region58: #{inverted_residual_forward.1} parent=55 // pred_check_branch
        %6271 = sbr.rel (%p6269) target = $region60
      $region59: #{inverted_residual_forward.1} parent=55 // pred_region
        %p6272 = scmp.lt.s32.totalorder %s19, 1
        %s6273 = scalar_select %p6272, %s19, 1
        %s6274 = smul.addr %s6273, 8
        %s6275 = smul.addr %s6274, 2
        %s6276 = scalar_lea.vmem %s7, %s6275
      $region60: #{inverted_residual_forward.1} parent=55 // pred_fallthru
        _
    $region56: #{inverted_residual_forward.1} parent=5 // pred_fallthru
      _
  $region6: #{inverted_residual_forward.1} parent=0 // loop_footer
    %s17 = sadd.s32 1, %s13
  $region7: #{inverted_residual_forward.1} parent=0 // loop_footer_branch
    %12 = sbr.rel target = $region3
  $region8: #{inverted_residual_forward.1} parent=0 // loop_exit
    _

</llo_original>
